<compile_context>
chip_gen: v6e
topology: v6e:2x2x1
jax: 0.10.0
libtpu: 0.0.40
codegen_flags: <defaults>
</compile_context>

<pallas_src>
import functools

import jax
import jax.numpy as jnp
from jax import lax
from jax.experimental import pallas as pl
from jax.experimental.pallas import tpu as pltpu

_EPS = 1e-6

# Static description of the three MultiscaleLSK branches:
#   (axis, K, dilation, padding) -- matches the PyTorch Conv2d arguments.
BRANCH_SPECS = {
    "b11": (("w", 3, 1, 1), ("h", 3, 1, 1), ("w", 5, 2, 4), ("h", 5, 2, 4)),
    "b23": (("w", 5, 1, 2), ("h", 5, 1, 2), ("w", 7, 3, 9), ("h", 7, 3, 9)),
    "b35": (("w", 5, 1, 2), ("h", 5, 1, 2), ("w", 11, 3, 15), ("h", 11, 3, 15)),
}


def _gelu_exact(x):
    # erf-based GELU == torch.nn.GELU() default (kept exact: matches reference).
    return 0.5 * x * (1.0 + lax.erf(x * 0.7071067811865476))


def _round_up(x, m):
    return ((x + m - 1) // m) * m


def _pick_tile(n):
    """Largest row tile (<=512) that still yields >=2 grid steps when possible."""
    for t in (512, 256, 128, 64, 32, 16, 8):
        if n >= 2 * t:
            return t
    return 8


@functools.lru_cache(maxsize=None)
def _vmem_limit_bytes():
    try:
        cap = int(getattr(pltpu.get_tpu_info(), "vmem_capacity_bytes", 0) or 0)
    except Exception:
        cap = 0
    if cap <= 0:
        cap = 64 * 1024 * 1024          # conservative default (v7x per-TC VMEM)
    return max(32 * 1024 * 1024, min((cap * 3) // 4, 96 * 1024 * 1024))


def _compiler_params():
    return pltpu.CompilerParams(dimension_semantics=("parallel",),
                                vmem_limit_bytes=_vmem_limit_bytes())


def _pad_rows(x, multiple):
    pad = (-x.shape[0]) % multiple
    if pad:
        x = jnp.pad(x, ((0, pad), (0, 0)))
    return x


# ----------------------------------------------------------------------------
# Pallas kernels
# ----------------------------------------------------------------------------
def _ln_av_kernel(x_ref, lnw_ref, lnb_ref, wav_ref, bav_ref,
                  aid_ref, a1_ref, a2_ref, a3_ref, v_ref, *, C, cid, gc, eps):
    """channels_first LayerNorm + fused [a|v] 1x1 conv (bf16 MXU, f32 acc).

    GELU is applied only to the 'a' half; the result is written out already
    split into (identity, branch1, branch2, branch3, v) so no XLA-side slice
    or concat is needed downstream.
    """
    x = x_ref[...]                                        # (TILE, C) f32
    u = jnp.mean(x, axis=-1, keepdims=True)
    xc = x - u
    s = jnp.mean(xc * xc, axis=-1, keepdims=True)
    xn = xc * lax.rsqrt(s + eps) * lnw_ref[...] + lnb_ref[...]
    y = jnp.dot(xn.astype(jnp.bfloat16), wav_ref[...],
                preferred_element_type=jnp.float32) + bav_ref[...]   # (TILE, 2C)
    a = _gelu_exact(y[:, :C])                             # GELU on 'a' half only
    aid_ref[...] = a[:, :cid]
    a1_ref[...] = a[:, cid:cid + gc]
    a2_ref[...] = a[:, cid + gc:cid + 2 * gc]
    a3_ref[...] = a[:, cid + 2 * gc:]
    v_ref[...] = y[:, C:]


def _mul_proj_kernel(aid_ref, y1_ref, y2_ref, y3_ref, v_ref,
                     wid_ref, w1_ref, w2_ref, w3_ref, b_ref, o_ref, *, cid, gc):
    """(a * v) @ W_proj + b_proj with 'a' assembled from its four channel slabs.

    Implemented as four partial bf16 matmuls (one per slab) accumulated in
    f32 — this avoids both the HBM concat of 'a' and any in-kernel lane
    concatenation / unaligned weight slicing.
    """
    v = v_ref[...]                                        # (TILE, C) f32

    def part(a_ref, w_ref, off, width):
        av = (a_ref[...] * v[:, off:off + width]).astype(jnp.bfloat16)
        return jnp.dot(av, w_ref[...], preferred_element_type=jnp.float32)

    acc = part(aid_ref, wid_ref, 0, cid)
    acc = acc + part(y1_ref, w1_ref, cid, gc)
    acc = acc + part(y2_ref, w2_ref, cid + gc, gc)
    acc = acc + part(y3_ref, w3_ref, cid + 2 * gc, gc)
    o_ref[...] = acc + b_ref[...]


def _lska_branch_kernel(x_ref, w1_ref, b1_ref, w2_ref, b2_ref,
                        w3_ref, b3_ref, w4_ref, b4_ref, o_ref,
                        sa_ref, sb_ref, *, H, W, gc, PT, PL, convs):
    """Four fused depthwise convs of one MultiscaleLSK branch.

    Data is channels-last flattened to (H, W*gc).  The branch image stays
    resident in zero-bordered VMEM scratch; W-taps are lane-offset slices and
    H-taps are sublane slices.  The interior window starts at the (8,128)-
    aligned offsets (PT, PL) so interior loads/stores are unmasked, and only
    the border strips are zeroed (not the whole buffer).
    """
    Wg = W * gc
    Hp, WL = sa_ref.shape

    # Zero only the borders; the interior is fully overwritten below and the
    # borders are never written afterwards, so every conv of the chain sees
    # zero padding.  (Done every grid step so it stays megacore-safe.)
    zt = jnp.zeros((PT, WL), jnp.float32)
    zb = jnp.zeros((Hp - PT - H, WL), jnp.float32)
    zl = jnp.zeros((H, PL), jnp.float32)
    zr = jnp.zeros((H, WL - PL - Wg), jnp.float32)
    for s in (sa_ref, sb_ref):
        s[0:PT, :] = zt
        s[PT + H:, :] = zb
        s[PT:PT + H, 0:PL] = zl
        s[PT:PT + H, PL + Wg:] = zr

    sa_ref[PT:PT + H, PL:PL + Wg] = x_ref[0]

    wrefs = ((w1_ref, b1_ref), (w2_ref, b2_ref),
             (w3_ref, b3_ref), (w4_ref, b4_ref))
    src, dst = sa_ref, sb_ref
    last = len(convs) - 1
    for ci, (axis, K, dil, pad) in enumerate(convs):
        w_full = wrefs[ci][0][...]                        # (K, W*gc), load once
        acc = jnp.zeros((H, Wg), jnp.float32)
        for k in range(K):
            d = k * dil - pad                             # static tap offset
            if axis == "w":
                xwin = src[PT:PT + H, PL + d * gc:PL + d * gc + Wg]
            else:
                xwin = src[PT + d:PT + d + H, PL:PL + Wg]
            acc = acc + xwin * w_full[k:k + 1, :]
        acc = acc + wrefs[ci][1][...]
        if ci == last:
            o_ref[0] = acc                                # last conv -> straight out
        else:
            dst[PT:PT + H, PL:PL + Wg] = acc
            src, dst = dst, src


# ----------------------------------------------------------------------------
# pallas_call wrappers
# ----------------------------------------------------------------------------
def fused_ln_av(x2d, ln_w, ln_b, w_av_bf16, b_av, cid, gc, eps=_EPS):
    """x2d: (N, C) tokens -> (a_id, a_b1, a_b2, a_b3, v) already channel-split."""
    N, C = x2d.shape
    tile = _pick_tile(N)
    xp = _pad_rows(x2d, tile)
    Np = xp.shape[0]
    outs = pl.pallas_call(
        functools.partial(_ln_av_kernel, C=C, cid=cid, gc=gc, eps=eps),
        grid=(Np // tile,),
        in_specs=[
            pl.BlockSpec((tile, C), lambda i: (i, 0)),
            pl.BlockSpec((1, C), lambda i: (0, 0)),
            pl.BlockSpec((1, C), lambda i: (0, 0)),
            pl.BlockSpec((C, 2 * C), lambda i: (0, 0)),
            pl.BlockSpec((1, 2 * C), lambda i: (0, 0)),
        ],
        out_specs=(
            pl.BlockSpec((tile, cid), lambda i: (i, 0)),
            pl.BlockSpec((tile, gc), lambda i: (i, 0)),
            pl.BlockSpec((tile, gc), lambda i: (i, 0)),
            pl.BlockSpec((tile, gc), lambda i: (i, 0)),
            pl.BlockSpec((tile, C), lambda i: (i, 0)),
        ),
        out_shape=(
            jax.ShapeDtypeStruct((Np, cid), jnp.float32),
            jax.ShapeDtypeStruct((Np, gc), jnp.float32),
            jax.ShapeDtypeStruct((Np, gc), jnp.float32),
            jax.ShapeDtypeStruct((Np, gc), jnp.float32),
            jax.ShapeDtypeStruct((Np, C), jnp.float32),
        ),
        compiler_params=_compiler_params(),
    )(xp, ln_w.reshape(1, C), ln_b.reshape(1, C),
      w_av_bf16, b_av.reshape(1, 2 * C))
    return tuple(o[:N] for o in outs)


def fused_mul_proj(a_id, y1, y2, y3, v, w_id, w1, w2, w3, b_proj):
    """proj(a * v) with a = [a_id | y1 | y2 | y3] assembled inside the kernel."""
    N, C = v.shape
    cid = a_id.shape[1]
    gc = y1.shape[1]
    tile = _pick_tile(N)
    acts = [_pad_rows(t, tile) for t in (a_id, y1, y2, y3, v)]
    Np = acts[0].shape[0]
    out = pl.pallas_call(
        functools.partial(_mul_proj_kernel, cid=cid, gc=gc),
        grid=(Np // tile,),
        in_specs=[
            pl.BlockSpec((tile, cid), lambda i: (i, 0)),
            pl.BlockSpec((tile, gc), lambda i: (i, 0)),
            pl.BlockSpec((tile, gc), lambda i: (i, 0)),
            pl.BlockSpec((tile, gc), lambda i: (i, 0)),
            pl.BlockSpec((tile, C), lambda i: (i, 0)),
            pl.BlockSpec((cid, C), lambda i: (0, 0)),
            pl.BlockSpec((gc, C), lambda i: (0, 0)),
            pl.BlockSpec((gc, C), lambda i: (0, 0)),
            pl.BlockSpec((gc, C), lambda i: (0, 0)),
            pl.BlockSpec((1, C), lambda i: (0, 0)),
        ],
        out_specs=pl.BlockSpec((tile, C), lambda i: (i, 0)),
        out_shape=jax.ShapeDtypeStruct((Np, C), jnp.float32),
        compiler_params=_compiler_params(),
    )(*acts, w_id, w1, w2, w3, b_proj.reshape(1, C))
    return out[:N]


def lska_branch(x_b, weights, convs, H, W, gc):
    """x_b: (B, H, W*gc); weights: 4 pairs of (tiled w (K, W*gc), tiled b (1, W*gc))."""
    B = x_b.shape[0]
    Wg = W * gc
    P = max(p for (_, _, _, p) in convs)
    PT = _round_up(P, 8)                     # aligned top border (sublanes)
    PL = _round_up(P * gc, 128)              # aligned left border (lanes)
    Hp = _round_up(PT + H + P, 8)
    WL = _round_up(PL + Wg + P * gc, 128)
    in_specs = [pl.BlockSpec((1, H, Wg), lambda b: (b, 0, 0))]
    args = [x_b]
    for wt, bt in weights:
        in_specs.append(pl.BlockSpec(wt.shape, lambda b: (0, 0)))
        in_specs.append(pl.BlockSpec(bt.shape, lambda b: (0, 0)))
        args.extend((wt, bt))
    return pl.pallas_call(
        functools.partial(_lska_branch_kernel, H=H, W=W, gc=gc,
                          PT=PT, PL=PL, convs=convs),
        grid=(B,),
        in_specs=in_specs,
        out_specs=pl.BlockSpec((1, H, Wg), lambda b: (b, 0, 0)),
        out_shape=jax.ShapeDtypeStruct((B, H, Wg), jnp.float32),
        scratch_shapes=[pltpu.VMEM((Hp, WL), jnp.float32),
                        pltpu.VMEM((Hp, WL), jnp.float32)],
        compiler_params=_compiler_params(),
    )(*args)


# ----------------------------------------------------------------------------
# ConvMod forward (JAX glue around the kernels)
# ----------------------------------------------------------------------------
def _conv1x1_mat(p):
    return p["w"][:, :, 0, 0].T, p["b"]          # (Cin, Cout), (Cout,)


def _tiled_dw_weights(prm, axis, W):
    if axis == "w":
        wt = prm["w"][:, 0, 0, :].T               # (K, gc)
    else:
        wt = prm["w"][:, 0, :, 0].T               # (K, gc)
    gc = wt.shape[1]
    return jnp.tile(wt, (1, W)), jnp.tile(prm["b"], W).reshape(1, W * gc)


def convmod_forward(params, x_nchw):
    B, C, H, W = x_nchw.shape
    N = B * H * W
    gc = params["mslsk"]["gc"]
    cid = C - 3 * gc
    x = jnp.transpose(x_nchw, (0, 2, 3, 1)).reshape(N, C)     # NCHW -> tokens

    wa, ba = _conv1x1_mat(params["a"])
    wv, bv = _conv1x1_mat(params["v"])
    w_av = jnp.concatenate([wa, wv], axis=1).astype(jnp.bfloat16)   # (C, 2C) bf16
    b_av = jnp.concatenate([ba, bv])                                # (2C,) f32

    a_id, a1, a2, a3, v = fused_ln_av(x, params["norm_w"], params["norm_b"],
                                      w_av, b_av, cid, gc)

    ys = []
    for bi, (name, a_b) in enumerate(zip(("b11", "b23", "b35"), (a1, a2, a3))):
        convs = BRANCH_SPECS[name]
        xi = a_b.reshape(B, H, W * gc)                              # free reshape
        weights = [_tiled_dw_weights(prm, spec[0], W)
                   for prm, spec in zip(params["mslsk"][name], convs)]
        yi = lska_branch(xi, weights, convs, H, W, gc)
        ys.append(yi.reshape(N, gc))                                # free reshape

    wp, bp = _conv1x1_mat(params["proj"])
    wp = wp.astype(jnp.bfloat16)
    w_id = wp[:cid]
    w1 = wp[cid:cid + gc]
    w2 = wp[cid + gc:cid + 2 * gc]
    w3 = wp[cid + 2 * gc:]
    out = fused_mul_proj(a_id, ys[0], ys[1], ys[2], v, w_id, w1, w2, w3, bp)
    return jnp.transpose(out.reshape(B, H, W, C), (0, 3, 1, 2))


# ----------------------------------------------------------------------------
# Deterministic parameter init (shapes follow the PyTorch __init__)
# ----------------------------------------------------------------------------
class KeyGen:
    def __init__(self, seed=0):
        self._key = jax.random.PRNGKey(seed)

    def __call__(self):
        self._key, sub = jax.random.split(self._key)
        return sub


def _init_conv1x1(kg, cout, cin, wscale=0.05):
    return {"w": jax.random.normal(kg(), (cout, cin, 1, 1), jnp.float32) * wscale,
            "b": jax.random.normal(kg(), (cout,), jnp.float32) * 0.01}


def _init_dw(kg, c, kh, kw, wscale=0.1):
    return {"w": jax.random.normal(kg(), (c, 1, kh, kw), jnp.float32) * wscale,
            "b": jax.random.normal(kg(), (c,), jnp.float32) * 0.01}


def init_convmod(seed, dim):
    kg = KeyGen(seed)
    gc = int(dim * 0.25)

    def branch(convs):
        out = []
        for axis, K, _dil, _pad in convs:
            kh, kw = (1, K) if axis == "w" else (K, 1)
            out.append(_init_dw(kg, gc, kh, kw))
        return out

    return {
        "norm_w": jnp.ones((dim,), jnp.float32),
        "norm_b": jnp.zeros((dim,), jnp.float32),
        "a": _init_conv1x1(kg, dim, dim),
        "v": _init_conv1x1(kg, dim, dim),
        "proj": _init_conv1x1(kg, dim, dim),
        "mslsk": {"gc": gc,
                  "b11": branch(BRANCH_SPECS["b11"]),
                  "b23": branch(BRANCH_SPECS["b23"]),
                  "b35": branch(BRANCH_SPECS["b35"])},
    }


# ----------------------------------------------------------------------------
# Pure-JAX (XLA) reference for correctness checking
# ----------------------------------------------------------------------------
def _conv1x1_ref(x, p):
    y = lax.conv_general_dilated(x, p["w"], (1, 1), "VALID",
                                 dimension_numbers=("NCHW", "OIHW", "NCHW"))
    return y + p["b"].reshape(1, -1, 1, 1)


def _dw_ref(x, p, axis, dil, pad):
    padding = ((pad, pad), (0, 0)) if axis == "h" else ((0, 0), (pad, pad))
    rhs_dil = (dil, 1) if axis == "h" else (1, dil)
    y = lax.conv_general_dilated(x, p["w"], (1, 1), padding,
                                 rhs_dilation=rhs_dil,
                                 dimension_numbers=("NCHW", "OIHW", "NCHW"),
                                 feature_group_count=x.shape[1])
    return y + p["b"].reshape(1, -1, 1, 1)


def convmod_reference(p, x):
    C = x.shape[1]
    u = jnp.mean(x, axis=1, keepdims=True)
    s = jnp.mean((x - u) ** 2, axis=1, keepdims=True)
    xn = (x - u) / jnp.sqrt(s + _EPS)
    xn = p["norm_w"].reshape(1, -1, 1, 1) * xn + p["norm_b"].reshape(1, -1, 1, 1)

    a = _gelu_exact(_conv1x1_ref(xn, p["a"]))
    gc = p["mslsk"]["gc"]
    cid = C - 3 * gc
    parts = [a[:, :cid]]
    for bi, name in enumerate(("b11", "b23", "b35")):
        xi = a[:, cid + bi * gc: cid + (bi + 1) * gc]
        for prm, (axis, _K, dil, pad) in zip(p["mslsk"][name], BRANCH_SPECS[name]):
            xi = _dw_ref(xi, prm, axis, dil, pad)
        parts.append(xi)
    a = jnp.concatenate(parts, axis=1)
    v = _conv1x1_ref(xn, p["v"])
    return _conv1x1_ref(a * v, p["proj"])


if __name__ == "__main__":
    dim, B, H, W = 64, 2, 16, 16           # gc=16 -> branch rows are 256 lanes wide
    params = init_convmod(0, dim)
    x = jax.random.uniform(jax.random.PRNGKey(0), (B, dim, H, W), jnp.float32)

    fwd = jax.jit(lambda inp: convmod_forward(params, inp))
    out = jax.block_until_ready(fwd(x))
    assert out.shape == (B, dim, H, W), out.shape
    assert bool(jnp.all(jnp.isfinite(out)))

    ref = jax.block_until_ready(convmod_reference(params, x))
    err = float(jnp.max(jnp.abs(out - ref)))
    # bf16 MXU operands (f32 accumulation) shift numerics slightly vs the f32
    # reference; measured error is ~2e-4 at these shapes, gate with margin.
    assert err < 2e-3, f"max abs err {err}"
    print("KERNEL_OK")
</pallas_src>

<mosaic_0001>
module attributes {stable_mosaic.version = 11 : i64} {
  func.func @_lska_branch_kernel(%arg0: i32, %arg1: memref<1x16x256xf32, #tpu.memory_space<vmem>>, %arg2: memref<3x256xf32, #tpu.memory_space<vmem>>, %arg3: memref<1x256xf32, #tpu.memory_space<vmem>>, %arg4: memref<3x256xf32, #tpu.memory_space<vmem>>, %arg5: memref<1x256xf32, #tpu.memory_space<vmem>>, %arg6: memref<5x256xf32, #tpu.memory_space<vmem>>, %arg7: memref<1x256xf32, #tpu.memory_space<vmem>>, %arg8: memref<5x256xf32, #tpu.memory_space<vmem>>, %arg9: memref<1x256xf32, #tpu.memory_space<vmem>>, %arg10: memref<1x16x256xf32, #tpu.memory_space<vmem>>, %arg11: memref<32x512xf32, #tpu.memory_space<vmem>>, %arg12: memref<32x512xf32, #tpu.memory_space<vmem>>) attributes {dimension_semantics = [#tpu.dimension_semantics<parallel>], iteration_bounds = array<i64: 2>, scalar_prefetch = 0 : i64, scratch_operands = 2 : i64, tpu.core_type = #tpu.core_type<tc>, window_params = [{transform_indices = @transform_0, window_bounds = array<i64: 1, 16, 256>}, {pipeline_mode = #tpu.pipeline_mode<synchronous>, transform_indices = @transform_1, window_bounds = array<i64: 3, 256>}, {pipeline_mode = #tpu.pipeline_mode<synchronous>, transform_indices = @transform_2, window_bounds = array<i64: 1, 256>}, {pipeline_mode = #tpu.pipeline_mode<synchronous>, transform_indices = @transform_3, window_bounds = array<i64: 3, 256>}, {pipeline_mode = #tpu.pipeline_mode<synchronous>, transform_indices = @transform_4, window_bounds = array<i64: 1, 256>}, {pipeline_mode = #tpu.pipeline_mode<synchronous>, transform_indices = @transform_5, window_bounds = array<i64: 5, 256>}, {pipeline_mode = #tpu.pipeline_mode<synchronous>, transform_indices = @transform_6, window_bounds = array<i64: 1, 256>}, {pipeline_mode = #tpu.pipeline_mode<synchronous>, transform_indices = @transform_7, window_bounds = array<i64: 5, 256>}, {pipeline_mode = #tpu.pipeline_mode<synchronous>, transform_indices = @transform_8, window_bounds = array<i64: 1, 256>}, {transform_indices = @transform_9, window_bounds = array<i64: 1, 16, 256>}]} {
    %cst = arith.constant 0.000000e+00 : f32
    %0 = vector.broadcast %cst : f32 to vector<8x512xf32>
    %cst_0 = arith.constant 0.000000e+00 : f32
    %1 = vector.broadcast %cst_0 : f32 to vector<8x512xf32>
    %cst_1 = arith.constant 0.000000e+00 : f32
    %2 = vector.broadcast %cst_1 : f32 to vector<16x128xf32>
    %cst_2 = arith.constant 0.000000e+00 : f32
    %3 = vector.broadcast %cst_2 : f32 to vector<16x128xf32>
    %c0 = arith.constant 0 : index
    %c0_3 = arith.constant 0 : index
    %4 = vector.load %arg11[%c0, %c0_3] : memref<32x512xf32, #tpu.memory_space<vmem>>, vector<8x512xf32>
    tpu.vector_store %arg11[%c0, %c0_3], %0 {strides = array<i32>} : memref<32x512xf32, #tpu.memory_space<vmem>>, vector<8x512xf32>,
    %c24 = arith.constant 24 : index
    %c0_4 = arith.constant 0 : index
    %5 = vector.load %arg11[%c24, %c0_4] : memref<32x512xf32, #tpu.memory_space<vmem>>, vector<8x512xf32>
    tpu.vector_store %arg11[%c24, %c0_4], %1 {strides = array<i32>} : memref<32x512xf32, #tpu.memory_space<vmem>>, vector<8x512xf32>,
    %c8 = arith.constant 8 : index
    %c0_5 = arith.constant 0 : index
    %6 = vector.load %arg11[%c8, %c0_5] : memref<32x512xf32, #tpu.memory_space<vmem>>, vector<16x128xf32>
    tpu.vector_store %arg11[%c8, %c0_5], %2 {strides = array<i32>} : memref<32x512xf32, #tpu.memory_space<vmem>>, vector<16x128xf32>,
    %c8_6 = arith.constant 8 : index
    %c384 = arith.constant 384 : index
    %7 = vector.load %arg11[%c8_6, %c384] : memref<32x512xf32, #tpu.memory_space<vmem>>, vector<16x128xf32>
    tpu.vector_store %arg11[%c8_6, %c384], %3 {strides = array<i32>} : memref<32x512xf32, #tpu.memory_space<vmem>>, vector<16x128xf32>,
    %c0_7 = arith.constant 0 : index
    %c0_8 = arith.constant 0 : index
    %8 = vector.load %arg12[%c0_7, %c0_8] : memref<32x512xf32, #tpu.memory_space<vmem>>, vector<8x512xf32>
    tpu.vector_store %arg12[%c0_7, %c0_8], %0 {strides = array<i32>} : memref<32x512xf32, #tpu.memory_space<vmem>>, vector<8x512xf32>,
    %c24_9 = arith.constant 24 : index
    %c0_10 = arith.constant 0 : index
    %9 = vector.load %arg12[%c24_9, %c0_10] : memref<32x512xf32, #tpu.memory_space<vmem>>, vector<8x512xf32>
    tpu.vector_store %arg12[%c24_9, %c0_10], %1 {strides = array<i32>} : memref<32x512xf32, #tpu.memory_space<vmem>>, vector<8x512xf32>,
    %c8_11 = arith.constant 8 : index
    %c0_12 = arith.constant 0 : index
    %10 = vector.load %arg12[%c8_11, %c0_12] : memref<32x512xf32, #tpu.memory_space<vmem>>, vector<16x128xf32>
    tpu.vector_store %arg12[%c8_11, %c0_12], %2 {strides = array<i32>} : memref<32x512xf32, #tpu.memory_space<vmem>>, vector<16x128xf32>,
    %c8_13 = arith.constant 8 : index
    %c384_14 = arith.constant 384 : index
    %11 = vector.load %arg12[%c8_13, %c384_14] : memref<32x512xf32, #tpu.memory_space<vmem>>, vector<16x128xf32>
    tpu.vector_store %arg12[%c8_13, %c384_14], %3 {strides = array<i32>} : memref<32x512xf32, #tpu.memory_space<vmem>>, vector<16x128xf32>,
    %c0_15 = arith.constant 0 : index
    %c0_16 = arith.constant 0 : index
    %c0_17 = arith.constant 0 : index
    %12 = vector.load %arg1[%c0_15, %c0_16, %c0_17] : memref<1x16x256xf32, #tpu.memory_space<vmem>>, vector<1x16x256xf32>
    %13 = vector.shape_cast %12 : vector<1x16x256xf32> to vector<16x256xf32>
    %c8_18 = arith.constant 8 : index
    %c128 = arith.constant 128 : index
    %14 = vector.load %arg11[%c8_18, %c128] : memref<32x512xf32, #tpu.memory_space<vmem>>, vector<16x256xf32>
    tpu.vector_store %arg11[%c8_18, %c128], %13 {strides = array<i32>} : memref<32x512xf32, #tpu.memory_space<vmem>>, vector<16x256xf32>,
    %c0_19 = arith.constant 0 : index
    %c0_20 = arith.constant 0 : index
    %15 = vector.load %arg2[%c0_19, %c0_20] : memref<3x256xf32, #tpu.memory_space<vmem>>, vector<3x256xf32>
    %cst_21 = arith.constant 0.000000e+00 : f32
    %16 = vector.broadcast %cst_21 : f32 to vector<16x256xf32>
    %c8_22 = arith.constant 8 : index
    %c112 = arith.constant 112 : index
    %17 = vector.load %arg11[%c8_22, %c112] : memref<32x512xf32, #tpu.memory_space<vmem>>, vector<16x256xf32>
    %18 = vector.extract_strided_slice %15 {offsets = [0, 0], sizes = [1, 256], strides = [1, 1]} : vector<3x256xf32> to vector<1x256xf32>
    %19 = vector.broadcast %18 : vector<1x256xf32> to vector<16x256xf32>
    %20 = arith.mulf %17, %19 : vector<16x256xf32>
    %21 = arith.addf %16, %20 : vector<16x256xf32>
    %c8_23 = arith.constant 8 : index
    %c128_24 = arith.constant 128 : index
    %22 = vector.load %arg11[%c8_23, %c128_24] : memref<32x512xf32, #tpu.memory_space<vmem>>, vector<16x256xf32>
    %23 = vector.extract_strided_slice %15 {offsets = [1, 0], sizes = [1, 256], strides = [1, 1]} : vector<3x256xf32> to vector<1x256xf32>
    %24 = vector.broadcast %23 : vector<1x256xf32> to vector<16x256xf32>
    %25 = arith.mulf %22, %24 : vector<16x256xf32>
    %26 = arith.addf %21, %25 : vector<16x256xf32>
    %c8_25 = arith.constant 8 : index
    %c144 = arith.constant 144 : index
    %27 = vector.load %arg11[%c8_25, %c144] : memref<32x512xf32, #tpu.memory_space<vmem>>, vector<16x256xf32>
    %28 = vector.extract_strided_slice %15 {offsets = [2, 0], sizes = [1, 256], strides = [1, 1]} : vector<3x256xf32> to vector<1x256xf32>
    %29 = vector.broadcast %28 : vector<1x256xf32> to vector<16x256xf32>
    %30 = arith.mulf %27, %29 : vector<16x256xf32>
    %31 = arith.addf %26, %30 : vector<16x256xf32>
    %c0_26 = arith.constant 0 : index
    %c0_27 = arith.constant 0 : index
    %32 = vector.load %arg3[%c0_26, %c0_27] : memref<1x256xf32, #tpu.memory_space<vmem>>, vector<1x256xf32>
    %33 = vector.broadcast %32 : vector<1x256xf32> to vector<16x256xf32>
    %34 = arith.addf %31, %33 : vector<16x256xf32>
    %c8_28 = arith.constant 8 : index
    %c128_29 = arith.constant 128 : index
    %35 = vector.load %arg12[%c8_28, %c128_29] : memref<32x512xf32, #tpu.memory_space<vmem>>, vector<16x256xf32>
    tpu.vector_store %arg12[%c8_28, %c128_29], %34 {strides = array<i32>} : memref<32x512xf32, #tpu.memory_space<vmem>>, vector<16x256xf32>,
    %c0_30 = arith.constant 0 : index
    %c0_31 = arith.constant 0 : index
    %36 = vector.load %arg4[%c0_30, %c0_31] : memref<3x256xf32, #tpu.memory_space<vmem>>, vector<3x256xf32>
    %cst_32 = arith.constant 0.000000e+00 : f32
    %37 = vector.broadcast %cst_32 : f32 to vector<16x256xf32>
    %c7 = arith.constant 7 : index
    %c128_33 = arith.constant 128 : index
    %38 = vector.load %arg12[%c7, %c128_33] : memref<32x512xf32, #tpu.memory_space<vmem>>, vector<16x256xf32>
    %39 = vector.extract_strided_slice %36 {offsets = [0, 0], sizes = [1, 256], strides = [1, 1]} : vector<3x256xf32> to vector<1x256xf32>
    %40 = vector.broadcast %39 : vector<1x256xf32> to vector<16x256xf32>
    %41 = arith.mulf %38, %40 : vector<16x256xf32>
    %42 = arith.addf %37, %41 : vector<16x256xf32>
    %c8_34 = arith.constant 8 : index
    %c128_35 = arith.constant 128 : index
    %43 = vector.load %arg12[%c8_34, %c128_35] : memref<32x512xf32, #tpu.memory_space<vmem>>, vector<16x256xf32>
    %44 = vector.extract_strided_slice %36 {offsets = [1, 0], sizes = [1, 256], strides = [1, 1]} : vector<3x256xf32> to vector<1x256xf32>
    %45 = vector.broadcast %44 : vector<1x256xf32> to vector<16x256xf32>
    %46 = arith.mulf %43, %45 : vector<16x256xf32>
    %47 = arith.addf %42, %46 : vector<16x256xf32>
    %c9 = arith.constant 9 : index
    %c128_36 = arith.constant 128 : index
    %48 = vector.load %arg12[%c9, %c128_36] : memref<32x512xf32, #tpu.memory_space<vmem>>, vector<16x256xf32>
    %49 = vector.extract_strided_slice %36 {offsets = [2, 0], sizes = [1, 256], strides = [1, 1]} : vector<3x256xf32> to vector<1x256xf32>
    %50 = vector.broadcast %49 : vector<1x256xf32> to vector<16x256xf32>
    %51 = arith.mulf %48, %50 : vector<16x256xf32>
    %52 = arith.addf %47, %51 : vector<16x256xf32>
    %c0_37 = arith.constant 0 : index
    %c0_38 = arith.constant 0 : index
    %53 = vector.load %arg5[%c0_37, %c0_38] : memref<1x256xf32, #tpu.memory_space<vmem>>, vector<1x256xf32>
    %54 = vector.broadcast %53 : vector<1x256xf32> to vector<16x256xf32>
    %55 = arith.addf %52, %54 : vector<16x256xf32>
    %c8_39 = arith.constant 8 : index
    %c128_40 = arith.constant 128 : index
    %56 = vector.load %arg11[%c8_39, %c128_40] : memref<32x512xf32, #tpu.memory_space<vmem>>, vector<16x256xf32>
    tpu.vector_store %arg11[%c8_39, %c128_40], %55 {strides = array<i32>} : memref<32x512xf32, #tpu.memory_space<vmem>>, vector<16x256xf32>,
    %c0_41 = arith.constant 0 : index
    %c0_42 = arith.constant 0 : index
    %57 = vector.load %arg6[%c0_41, %c0_42] : memref<5x256xf32, #tpu.memory_space<vmem>>, vector<5x256xf32>
    %cst_43 = arith.constant 0.000000e+00 : f32
    %58 = vector.broadcast %cst_43 : f32 to vector<16x256xf32>
    %c8_44 = arith.constant 8 : index
    %c64 = arith.constant 64 : index
    %59 = vector.load %arg11[%c8_44, %c64] : memref<32x512xf32, #tpu.memory_space<vmem>>, vector<16x256xf32>
    %60 = vector.extract_strided_slice %57 {offsets = [0, 0], sizes = [1, 256], strides = [1, 1]} : vector<5x256xf32> to vector<1x256xf32>
    %61 = vector.broadcast %60 : vector<1x256xf32> to vector<16x256xf32>
    %62 = arith.mulf %59, %61 : vector<16x256xf32>
    %63 = arith.addf %58, %62 : vector<16x256xf32>
    %c8_45 = arith.constant 8 : index
    %c96 = arith.constant 96 : index
    %64 = vector.load %arg11[%c8_45, %c96] : memref<32x512xf32, #tpu.memory_space<vmem>>, vector<16x256xf32>
    %65 = vector.extract_strided_slice %57 {offsets = [1, 0], sizes = [1, 256], strides = [1, 1]} : vector<5x256xf32> to vector<1x256xf32>
    %66 = vector.broadcast %65 : vector<1x256xf32> to vector<16x256xf32>
    %67 = arith.mulf %64, %66 : vector<16x256xf32>
    %68 = arith.addf %63, %67 : vector<16x256xf32>
    %c8_46 = arith.constant 8 : index
    %c128_47 = arith.constant 128 : index
    %69 = vector.load %arg11[%c8_46, %c128_47] : memref<32x512xf32, #tpu.memory_space<vmem>>, vector<16x256xf32>
    %70 = vector.extract_strided_slice %57 {offsets = [2, 0], sizes = [1, 256], strides = [1, 1]} : vector<5x256xf32> to vector<1x256xf32>
    %71 = vector.broadcast %70 : vector<1x256xf32> to vector<16x256xf32>
    %72 = arith.mulf %69, %71 : vector<16x256xf32>
    %73 = arith.addf %68, %72 : vector<16x256xf32>
    %c8_48 = arith.constant 8 : index
    %c160 = arith.constant 160 : index
    %74 = vector.load %arg11[%c8_48, %c160] : memref<32x512xf32, #tpu.memory_space<vmem>>, vector<16x256xf32>
    %75 = vector.extract_strided_slice %57 {offsets = [3, 0], sizes = [1, 256], strides = [1, 1]} : vector<5x256xf32> to vector<1x256xf32>
    %76 = vector.broadcast %75 : vector<1x256xf32> to vector<16x256xf32>
    %77 = arith.mulf %74, %76 : vector<16x256xf32>
    %78 = arith.addf %73, %77 : vector<16x256xf32>
    %c8_49 = arith.constant 8 : index
    %c192 = arith.constant 192 : index
    %79 = vector.load %arg11[%c8_49, %c192] : memref<32x512xf32, #tpu.memory_space<vmem>>, vector<16x256xf32>
    %80 = vector.extract_strided_slice %57 {offsets = [4, 0], sizes = [1, 256], strides = [1, 1]} : vector<5x256xf32> to vector<1x256xf32>
    %81 = vector.broadcast %80 : vector<1x256xf32> to vector<16x256xf32>
    %82 = arith.mulf %79, %81 : vector<16x256xf32>
    %83 = arith.addf %78, %82 : vector<16x256xf32>
    %c0_50 = arith.constant 0 : index
    %c0_51 = arith.constant 0 : index
    %84 = vector.load %arg7[%c0_50, %c0_51] : memref<1x256xf32, #tpu.memory_space<vmem>>, vector<1x256xf32>
    %85 = vector.broadcast %84 : vector<1x256xf32> to vector<16x256xf32>
    %86 = arith.addf %83, %85 : vector<16x256xf32>
    %c8_52 = arith.constant 8 : index
    %c128_53 = arith.constant 128 : index
    %87 = vector.load %arg12[%c8_52, %c128_53] : memref<32x512xf32, #tpu.memory_space<vmem>>, vector<16x256xf32>
    tpu.vector_store %arg12[%c8_52, %c128_53], %86 {strides = array<i32>} : memref<32x512xf32, #tpu.memory_space<vmem>>, vector<16x256xf32>,
    %c0_54 = arith.constant 0 : index
    %c0_55 = arith.constant 0 : index
    %88 = vector.load %arg8[%c0_54, %c0_55] : memref<5x256xf32, #tpu.memory_space<vmem>>, vector<5x256xf32>
    %cst_56 = arith.constant 0.000000e+00 : f32
    %89 = vector.broadcast %cst_56 : f32 to vector<16x256xf32>
    %c4 = arith.constant 4 : index
    %c128_57 = arith.constant 128 : index
    %90 = vector.load %arg12[%c4, %c128_57] : memref<32x512xf32, #tpu.memory_space<vmem>>, vector<16x256xf32>
    %91 = vector.extract_strided_slice %88 {offsets = [0, 0], sizes = [1, 256], strides = [1, 1]} : vector<5x256xf32> to vector<1x256xf32>
    %92 = vector.broadcast %91 : vector<1x256xf32> to vector<16x256xf32>
    %93 = arith.mulf %90, %92 : vector<16x256xf32>
    %94 = arith.addf %89, %93 : vector<16x256xf32>
    %c6 = arith.constant 6 : index
    %c128_58 = arith.constant 128 : index
    %95 = vector.load %arg12[%c6, %c128_58] : memref<32x512xf32, #tpu.memory_space<vmem>>, vector<16x256xf32>
    %96 = vector.extract_strided_slice %88 {offsets = [1, 0], sizes = [1, 256], strides = [1, 1]} : vector<5x256xf32> to vector<1x256xf32>
    %97 = vector.broadcast %96 : vector<1x256xf32> to vector<16x256xf32>
    %98 = arith.mulf %95, %97 : vector<16x256xf32>
    %99 = arith.addf %94, %98 : vector<16x256xf32>
    %c8_59 = arith.constant 8 : index
    %c128_60 = arith.constant 128 : index
    %100 = vector.load %arg12[%c8_59, %c128_60] : memref<32x512xf32, #tpu.memory_space<vmem>>, vector<16x256xf32>
    %101 = vector.extract_strided_slice %88 {offsets = [2, 0], sizes = [1, 256], strides = [1, 1]} : vector<5x256xf32> to vector<1x256xf32>
    %102 = vector.broadcast %101 : vector<1x256xf32> to vector<16x256xf32>
    %103 = arith.mulf %100, %102 : vector<16x256xf32>
    %104 = arith.addf %99, %103 : vector<16x256xf32>
    %c10 = arith.constant 10 : index
    %c128_61 = arith.constant 128 : index
    %105 = vector.load %arg12[%c10, %c128_61] : memref<32x512xf32, #tpu.memory_space<vmem>>, vector<16x256xf32>
    %106 = vector.extract_strided_slice %88 {offsets = [3, 0], sizes = [1, 256], strides = [1, 1]} : vector<5x256xf32> to vector<1x256xf32>
    %107 = vector.broadcast %106 : vector<1x256xf32> to vector<16x256xf32>
    %108 = arith.mulf %105, %107 : vector<16x256xf32>
    %109 = arith.addf %104, %108 : vector<16x256xf32>
    %c12 = arith.constant 12 : index
    %c128_62 = arith.constant 128 : index
    %110 = vector.load %arg12[%c12, %c128_62] : memref<32x512xf32, #tpu.memory_space<vmem>>, vector<16x256xf32>
    %111 = vector.extract_strided_slice %88 {offsets = [4, 0], sizes = [1, 256], strides = [1, 1]} : vector<5x256xf32> to vector<1x256xf32>
    %112 = vector.broadcast %111 : vector<1x256xf32> to vector<16x256xf32>
    %113 = arith.mulf %110, %112 : vector<16x256xf32>
    %114 = arith.addf %109, %113 : vector<16x256xf32>
    %c0_63 = arith.constant 0 : index
    %c0_64 = arith.constant 0 : index
    %115 = vector.load %arg9[%c0_63, %c0_64] : memref<1x256xf32, #tpu.memory_space<vmem>>, vector<1x256xf32>
    %116 = vector.broadcast %115 : vector<1x256xf32> to vector<16x256xf32>
    %117 = arith.addf %114, %116 : vector<16x256xf32>
    %c0_65 = arith.constant 0 : index
    %c0_66 = arith.constant 0 : index
    %c0_67 = arith.constant 0 : index
    %118 = vector.load %arg10[%c0_65, %c0_66, %c0_67] : memref<1x16x256xf32, #tpu.memory_space<vmem>>, vector<1x16x256xf32>
    %119 = vector.shape_cast %118 : vector<1x16x256xf32> to vector<16x256xf32>
    %120 = vector.shape_cast %117 : vector<16x256xf32> to vector<1x16x256xf32>
    tpu.vector_store %arg10[%c0_65, %c0_66, %c0_67], %120 {strides = array<i32>} : memref<1x16x256xf32, #tpu.memory_space<vmem>>, vector<1x16x256xf32>,
    return
  }
  func.func @transform_0(%arg0: i32) -> (i32, i32, i32) {
    %c0_i32 = arith.constant 0 : i32
    %c0_i32_0 = arith.constant 0 : i32
    %c0_i32_1 = arith.constant 0 : i32
    return %arg0, %c0_i32, %c0_i32_0 : i32, i32, i32
  }
  func.func @transform_1(%arg0: i32) -> (i32, i32) {
    %c0_i32 = arith.constant 0 : i32
    %c0_i32_0 = arith.constant 0 : i32
    %c0_i32_1 = arith.constant 0 : i32
    return %c0_i32, %c0_i32_0 : i32, i32
  }
  func.func @transform_2(%arg0: i32) -> (i32, i32) {
    %c0_i32 = arith.constant 0 : i32
    %c0_i32_0 = arith.constant 0 : i32
    %c0_i32_1 = arith.constant 0 : i32
    return %c0_i32, %c0_i32_0 : i32, i32
  }
  func.func @transform_3(%arg0: i32) -> (i32, i32) {
    %c0_i32 = arith.constant 0 : i32
    %c0_i32_0 = arith.constant 0 : i32
    %c0_i32_1 = arith.constant 0 : i32
    return %c0_i32, %c0_i32_0 : i32, i32
  }
  func.func @transform_4(%arg0: i32) -> (i32, i32) {
    %c0_i32 = arith.constant 0 : i32
    %c0_i32_0 = arith.constant 0 : i32
    %c0_i32_1 = arith.constant 0 : i32
    return %c0_i32, %c0_i32_0 : i32, i32
  }
  func.func @transform_5(%arg0: i32) -> (i32, i32) {
    %c0_i32 = arith.constant 0 : i32
    %c0_i32_0 = arith.constant 0 : i32
    %c0_i32_1 = arith.constant 0 : i32
    return %c0_i32, %c0_i32_0 : i32, i32
  }
  func.func @transform_6(%arg0: i32) -> (i32, i32) {
    %c0_i32 = arith.constant 0 : i32
    %c0_i32_0 = arith.constant 0 : i32
    %c0_i32_1 = arith.constant 0 : i32
    return %c0_i32, %c0_i32_0 : i32, i32
  }
  func.func @transform_7(%arg0: i32) -> (i32, i32) {
    %c0_i32 = arith.constant 0 : i32
    %c0_i32_0 = arith.constant 0 : i32
    %c0_i32_1 = arith.constant 0 : i32
    return %c0_i32, %c0_i32_0 : i32, i32
  }
  func.func @transform_8(%arg0: i32) -> (i32, i32) {
    %c0_i32 = arith.constant 0 : i32
    %c0_i32_0 = arith.constant 0 : i32
    %c0_i32_1 = arith.constant 0 : i32
    return %c0_i32, %c0_i32_0 : i32, i32
  }
  func.func @transform_9(%arg0: i32) -> (i32, i32, i32) {
    %c0_i32 = arith.constant 0 : i32
    %c0_i32_0 = arith.constant 0 : i32
    %c0_i32_1 = arith.constant 0 : i32
    return %arg0, %c0_i32, %c0_i32_0 : i32, i32, i32
  }
}

module attributes {stable_mosaic.version = 11 : i64} {
  func.func @_ln_av_kernel(%arg0: i32, %arg1: memref<256x64xf32, #tpu.memory_space<vmem>>, %arg2: memref<1x64xf32, #tpu.memory_space<vmem>>, %arg3: memref<1x64xf32, #tpu.memory_space<vmem>>, %arg4: memref<64x128xbf16, #tpu.memory_space<vmem>>, %arg5: memref<1x128xf32, #tpu.memory_space<vmem>>, %arg6: memref<256x16xf32, #tpu.memory_space<vmem>>, %arg7: memref<256x16xf32, #tpu.memory_space<vmem>>, %arg8: memref<256x16xf32, #tpu.memory_space<vmem>>, %arg9: memref<256x16xf32, #tpu.memory_space<vmem>>, %arg10: memref<256x64xf32, #tpu.memory_space<vmem>>) attributes {dimension_semantics = [#tpu.dimension_semantics<parallel>], iteration_bounds = array<i64: 2>, scalar_prefetch = 0 : i64, scratch_operands = 0 : i64, tpu.core_type = #tpu.core_type<tc>, window_params = [{transform_indices = @transform_0, window_bounds = array<i64: 256, 64>}, {pipeline_mode = #tpu.pipeline_mode<synchronous>, transform_indices = @transform_1, window_bounds = array<i64: 1, 64>}, {pipeline_mode = #tpu.pipeline_mode<synchronous>, transform_indices = @transform_2, window_bounds = array<i64: 1, 64>}, {pipeline_mode = #tpu.pipeline_mode<synchronous>, transform_indices = @transform_3, window_bounds = array<i64: 64, 128>}, {pipeline_mode = #tpu.pipeline_mode<synchronous>, transform_indices = @transform_4, window_bounds = array<i64: 1, 128>}, {transform_indices = @transform_5, window_bounds = array<i64: 256, 16>}, {transform_indices = @transform_6, window_bounds = array<i64: 256, 16>}, {transform_indices = @transform_7, window_bounds = array<i64: 256, 16>}, {transform_indices = @transform_8, window_bounds = array<i64: 256, 16>}, {transform_indices = @transform_9, window_bounds = array<i64: 256, 64>}]} {
    %c0 = arith.constant 0 : index
    %c0_0 = arith.constant 0 : index
    %0 = vector.load %arg1[%c0, %c0_0] : memref<256x64xf32, #tpu.memory_space<vmem>>, vector<256x64xf32>
    %cst = arith.constant dense<0.000000e+00> : vector<256xf32>
    %1 = vector.multi_reduction <add>, %0, %cst [1] : vector<256x64xf32> to vector<256xf32>
    %2 = vector.shape_cast %1 : vector<256xf32> to vector<256x1xf32>
    %cst_1 = arith.constant 6.400000e+01 : f32
    %3 = vector.broadcast %cst_1 : f32 to vector<256x1xf32>
    %4 = arith.divf %2, %3 : vector<256x1xf32>
    %5 = vector.broadcast %4 : vector<256x1xf32> to vector<256x64xf32>
    %6 = arith.subf %0, %5 : vector<256x64xf32>
    %7 = arith.mulf %6, %6 : vector<256x64xf32>
    %cst_2 = arith.constant dense<0.000000e+00> : vector<256xf32>
    %8 = vector.multi_reduction <add>, %7, %cst_2 [1] : vector<256x64xf32> to vector<256xf32>
    %9 = vector.shape_cast %8 : vector<256xf32> to vector<256x1xf32>
    %cst_3 = arith.constant 6.400000e+01 : f32
    %10 = vector.broadcast %cst_3 : f32 to vector<256x1xf32>
    %11 = arith.divf %9, %10 : vector<256x1xf32>
    %cst_4 = arith.constant 9.99999997E-7 : f32
    %12 = vector.broadcast %cst_4 : f32 to vector<256x1xf32>
    %13 = arith.addf %11, %12 : vector<256x1xf32>
    %14 = math.rsqrt %13 : vector<256x1xf32>
    %15 = vector.broadcast %14 : vector<256x1xf32> to vector<256x64xf32>
    %16 = arith.mulf %6, %15 : vector<256x64xf32>
    %c0_5 = arith.constant 0 : index
    %c0_6 = arith.constant 0 : index
    %17 = vector.load %arg2[%c0_5, %c0_6] : memref<1x64xf32, #tpu.memory_space<vmem>>, vector<1x64xf32>
    %18 = vector.broadcast %17 : vector<1x64xf32> to vector<256x64xf32>
    %19 = arith.mulf %16, %18 : vector<256x64xf32>
    %c0_7 = arith.constant 0 : index
    %c0_8 = arith.constant 0 : index
    %20 = vector.load %arg3[%c0_7, %c0_8] : memref<1x64xf32, #tpu.memory_space<vmem>>, vector<1x64xf32>
    %21 = vector.broadcast %20 : vector<1x64xf32> to vector<256x64xf32>
    %22 = arith.addf %19, %21 : vector<256x64xf32>
    %23 = arith.truncf %22 : vector<256x64xf32> to vector<256x64xbf16>
    %c0_9 = arith.constant 0 : index
    %c0_10 = arith.constant 0 : index
    %24 = vector.load %arg4[%c0_9, %c0_10] : memref<64x128xbf16, #tpu.memory_space<vmem>>, vector<64x128xbf16>
    %cst_11 = arith.constant dense<0.000000e+00> : vector<256x128xf32>
    %25 = tpu.matmul %23, %24, %cst_11 {dimension_numbers = #tpu.dot_dimension_numbers<[1], [0], [0], [1], [0, 0, 1, 1], [], []>} : vector<256x64xbf16>, vector<64x128xbf16>, vector<256x128xf32> -> vector<256x128xf32>
    %c0_12 = arith.constant 0 : index
    %c0_13 = arith.constant 0 : index
    %26 = vector.load %arg5[%c0_12, %c0_13] : memref<1x128xf32, #tpu.memory_space<vmem>>, vector<1x128xf32>
    %27 = vector.broadcast %26 : vector<1x128xf32> to vector<256x128xf32>
    %28 = arith.addf %25, %27 : vector<256x128xf32>
    %29 = vector.extract_strided_slice %28 {offsets = [0, 0], sizes = [256, 64], strides = [1, 1]} : vector<256x128xf32> to vector<256x64xf32>
    %cst_14 = arith.constant 5.000000e-01 : f32
    %30 = vector.broadcast %cst_14 : f32 to vector<256x64xf32>
    %31 = arith.mulf %30, %29 : vector<256x64xf32>
    %cst_15 = arith.constant 0.707106769 : f32
    %32 = vector.broadcast %cst_15 : f32 to vector<256x64xf32>
    %33 = arith.mulf %29, %32 : vector<256x64xf32>
    %34 = math.erf %33 : vector<256x64xf32>
    %cst_16 = arith.constant 1.000000e+00 : f32
    %35 = vector.broadcast %cst_16 : f32 to vector<256x64xf32>
    %36 = arith.addf %35, %34 : vector<256x64xf32>
    %37 = arith.mulf %31, %36 : vector<256x64xf32>
    %38 = vector.extract_strided_slice %37 {offsets = [0, 0], sizes = [256, 16], strides = [1, 1]} : vector<256x64xf32> to vector<256x16xf32>
    %c0_17 = arith.constant 0 : index
    %c0_18 = arith.constant 0 : index
    %39 = vector.load %arg6[%c0_17, %c0_18] : memref<256x16xf32, #tpu.memory_space<vmem>>, vector<256x16xf32>
    tpu.vector_store %arg6[%c0_17, %c0_18], %38 {strides = array<i32>} : memref<256x16xf32, #tpu.memory_space<vmem>>, vector<256x16xf32>,
    %40 = vector.extract_strided_slice %37 {offsets = [0, 16], sizes = [256, 16], strides = [1, 1]} : vector<256x64xf32> to vector<256x16xf32>
    %c0_19 = arith.constant 0 : index
    %c0_20 = arith.constant 0 : index
    %41 = vector.load %arg7[%c0_19, %c0_20] : memref<256x16xf32, #tpu.memory_space<vmem>>, vector<256x16xf32>
    tpu.vector_store %arg7[%c0_19, %c0_20], %40 {strides = array<i32>} : memref<256x16xf32, #tpu.memory_space<vmem>>, vector<256x16xf32>,
    %42 = vector.extract_strided_slice %37 {offsets = [0, 32], sizes = [256, 16], strides = [1, 1]} : vector<256x64xf32> to vector<256x16xf32>
    %c0_21 = arith.constant 0 : index
    %c0_22 = arith.constant 0 : index
    %43 = vector.load %arg8[%c0_21, %c0_22] : memref<256x16xf32, #tpu.memory_space<vmem>>, vector<256x16xf32>
    tpu.vector_store %arg8[%c0_21, %c0_22], %42 {strides = array<i32>} : memref<256x16xf32, #tpu.memory_space<vmem>>, vector<256x16xf32>,
    %44 = vector.extract_strided_slice %37 {offsets = [0, 48], sizes = [256, 16], strides = [1, 1]} : vector<256x64xf32> to vector<256x16xf32>
    %c0_23 = arith.constant 0 : index
    %c0_24 = arith.constant 0 : index
    %45 = vector.load %arg9[%c0_23, %c0_24] : memref<256x16xf32, #tpu.memory_space<vmem>>, vector<256x16xf32>
    tpu.vector_store %arg9[%c0_23, %c0_24], %44 {strides = array<i32>} : memref<256x16xf32, #tpu.memory_space<vmem>>, vector<256x16xf32>,
    %46 = vector.extract_strided_slice %28 {offsets = [0, 64], sizes = [256, 64], strides = [1, 1]} : vector<256x128xf32> to vector<256x64xf32>
    %c0_25 = arith.constant 0 : index
    %c0_26 = arith.constant 0 : index
    %47 = vector.load %arg10[%c0_25, %c0_26] : memref<256x64xf32, #tpu.memory_space<vmem>>, vector<256x64xf32>
    tpu.vector_store %arg10[%c0_25, %c0_26], %46 {strides = array<i32>} : memref<256x64xf32, #tpu.memory_space<vmem>>, vector<256x64xf32>,
    return
  }
  func.func @transform_0(%arg0: i32) -> (i32, i32) {
    %c0_i32 = arith.constant 0 : i32
    %c0_i32_0 = arith.constant 0 : i32
    return %arg0, %c0_i32 : i32, i32
  }
  func.func @transform_1(%arg0: i32) -> (i32, i32) {
    %c0_i32 = arith.constant 0 : i32
    %c0_i32_0 = arith.constant 0 : i32
    %c0_i32_1 = arith.constant 0 : i32
    return %c0_i32, %c0_i32_0 : i32, i32
  }
  func.func @transform_2(%arg0: i32) -> (i32, i32) {
    %c0_i32 = arith.constant 0 : i32
    %c0_i32_0 = arith.constant 0 : i32
    %c0_i32_1 = arith.constant 0 : i32
    return %c0_i32, %c0_i32_0 : i32, i32
  }
  func.func @transform_3(%arg0: i32) -> (i32, i32) {
    %c0_i32 = arith.constant 0 : i32
    %c0_i32_0 = arith.constant 0 : i32
    %c0_i32_1 = arith.constant 0 : i32
    return %c0_i32, %c0_i32_0 : i32, i32
  }
  func.func @transform_4(%arg0: i32) -> (i32, i32) {
    %c0_i32 = arith.constant 0 : i32
    %c0_i32_0 = arith.constant 0 : i32
    %c0_i32_1 = arith.constant 0 : i32
    return %c0_i32, %c0_i32_0 : i32, i32
  }
  func.func @transform_5(%arg0: i32) -> (i32, i32) {
    %c0_i32 = arith.constant 0 : i32
    %c0_i32_0 = arith.constant 0 : i32
    return %arg0, %c0_i32 : i32, i32
  }
  func.func @transform_6(%arg0: i32) -> (i32, i32) {
    %c0_i32 = arith.constant 0 : i32
    %c0_i32_0 = arith.constant 0 : i32
    return %arg0, %c0_i32 : i32, i32
  }
  func.func @transform_7(%arg0: i32) -> (i32, i32) {
    %c0_i32 = arith.constant 0 : i32
    %c0_i32_0 = arith.constant 0 : i32
    return %arg0, %c0_i32 : i32, i32
  }
  func.func @transform_8(%arg0: i32) -> (i32, i32) {
    %c0_i32 = arith.constant 0 : i32
    %c0_i32_0 = arith.constant 0 : i32
    return %arg0, %c0_i32 : i32, i32
  }
  func.func @transform_9(%arg0: i32) -> (i32, i32) {
    %c0_i32 = arith.constant 0 : i32
    %c0_i32_0 = arith.constant 0 : i32
    return %arg0, %c0_i32 : i32, i32
  }
}

module attributes {stable_mosaic.version = 11 : i64} {
  func.func @_lska_branch_kernel(%arg0: i32, %arg1: memref<1x16x256xf32, #tpu.memory_space<vmem>>, %arg2: memref<5x256xf32, #tpu.memory_space<vmem>>, %arg3: memref<1x256xf32, #tpu.memory_space<vmem>>, %arg4: memref<5x256xf32, #tpu.memory_space<vmem>>, %arg5: memref<1x256xf32, #tpu.memory_space<vmem>>, %arg6: memref<7x256xf32, #tpu.memory_space<vmem>>, %arg7: memref<1x256xf32, #tpu.memory_space<vmem>>, %arg8: memref<7x256xf32, #tpu.memory_space<vmem>>, %arg9: memref<1x256xf32, #tpu.memory_space<vmem>>, %arg10: memref<1x16x256xf32, #tpu.memory_space<vmem>>, %arg11: memref<48x768xf32, #tpu.memory_space<vmem>>, %arg12: memref<48x768xf32, #tpu.memory_space<vmem>>) attributes {dimension_semantics = [#tpu.dimension_semantics<parallel>], iteration_bounds = array<i64: 2>, scalar_prefetch = 0 : i64, scratch_operands = 2 : i64, tpu.core_type = #tpu.core_type<tc>, window_params = [{transform_indices = @transform_0, window_bounds = array<i64: 1, 16, 256>}, {pipeline_mode = #tpu.pipeline_mode<synchronous>, transform_indices = @transform_1, window_bounds = array<i64: 5, 256>}, {pipeline_mode = #tpu.pipeline_mode<synchronous>, transform_indices = @transform_2, window_bounds = array<i64: 1, 256>}, {pipeline_mode = #tpu.pipeline_mode<synchronous>, transform_indices = @transform_3, window_bounds = array<i64: 5, 256>}, {pipeline_mode = #tpu.pipeline_mode<synchronous>, transform_indices = @transform_4, window_bounds = array<i64: 1, 256>}, {pipeline_mode = #tpu.pipeline_mode<synchronous>, transform_indices = @transform_5, window_bounds = array<i64: 7, 256>}, {pipeline_mode = #tpu.pipeline_mode<synchronous>, transform_indices = @transform_6, window_bounds = array<i64: 1, 256>}, {pipeline_mode = #tpu.pipeline_mode<synchronous>, transform_indices = @transform_7, window_bounds = array<i64: 7, 256>}, {pipeline_mode = #tpu.pipeline_mode<synchronous>, transform_indices = @transform_8, window_bounds = array<i64: 1, 256>}, {transform_indices = @transform_9, window_bounds = array<i64: 1, 16, 256>}]} {
    %cst = arith.constant 0.000000e+00 : f32
    %0 = vector.broadcast %cst : f32 to vector<16x768xf32>
    %cst_0 = arith.constant 0.000000e+00 : f32
    %1 = vector.broadcast %cst_0 : f32 to vector<16x768xf32>
    %cst_1 = arith.constant 0.000000e+00 : f32
    %2 = vector.broadcast %cst_1 : f32 to vector<16x256xf32>
    %cst_2 = arith.constant 0.000000e+00 : f32
    %3 = vector.broadcast %cst_2 : f32 to vector<16x256xf32>
    %c0 = arith.constant 0 : index
    %c0_3 = arith.constant 0 : index
    %4 = vector.load %arg11[%c0, %c0_3] : memref<48x768xf32, #tpu.memory_space<vmem>>, vector<16x768xf32>
    tpu.vector_store %arg11[%c0, %c0_3], %0 {strides = array<i32>} : memref<48x768xf32, #tpu.memory_space<vmem>>, vector<16x768xf32>,
    %c32 = arith.constant 32 : index
    %c0_4 = arith.constant 0 : index
    %5 = vector.load %arg11[%c32, %c0_4] : memref<48x768xf32, #tpu.memory_space<vmem>>, vector<16x768xf32>
    tpu.vector_store %arg11[%c32, %c0_4], %1 {strides = array<i32>} : memref<48x768xf32, #tpu.memory_space<vmem>>, vector<16x768xf32>,
    %c16 = arith.constant 16 : index
    %c0_5 = arith.constant 0 : index
    %6 = vector.load %arg11[%c16, %c0_5] : memref<48x768xf32, #tpu.memory_space<vmem>>, vector<16x256xf32>
    tpu.vector_store %arg11[%c16, %c0_5], %2 {strides = array<i32>} : memref<48x768xf32, #tpu.memory_space<vmem>>, vector<16x256xf32>,
    %c16_6 = arith.constant 16 : index
    %c512 = arith.constant 512 : index
    %7 = vector.load %arg11[%c16_6, %c512] : memref<48x768xf32, #tpu.memory_space<vmem>>, vector<16x256xf32>
    tpu.vector_store %arg11[%c16_6, %c512], %3 {strides = array<i32>} : memref<48x768xf32, #tpu.memory_space<vmem>>, vector<16x256xf32>,
    %c0_7 = arith.constant 0 : index
    %c0_8 = arith.constant 0 : index
    %8 = vector.load %arg12[%c0_7, %c0_8] : memref<48x768xf32, #tpu.memory_space<vmem>>, vector<16x768xf32>
    tpu.vector_store %arg12[%c0_7, %c0_8], %0 {strides = array<i32>} : memref<48x768xf32, #tpu.memory_space<vmem>>, vector<16x768xf32>,
    %c32_9 = arith.constant 32 : index
    %c0_10 = arith.constant 0 : index
    %9 = vector.load %arg12[%c32_9, %c0_10] : memref<48x768xf32, #tpu.memory_space<vmem>>, vector<16x768xf32>
    tpu.vector_store %arg12[%c32_9, %c0_10], %1 {strides = array<i32>} : memref<48x768xf32, #tpu.memory_space<vmem>>, vector<16x768xf32>,
    %c16_11 = arith.constant 16 : index
    %c0_12 = arith.constant 0 : index
    %10 = vector.load %arg12[%c16_11, %c0_12] : memref<48x768xf32, #tpu.memory_space<vmem>>, vector<16x256xf32>
    tpu.vector_store %arg12[%c16_11, %c0_12], %2 {strides = array<i32>} : memref<48x768xf32, #tpu.memory_space<vmem>>, vector<16x256xf32>,
    %c16_13 = arith.constant 16 : index
    %c512_14 = arith.constant 512 : index
    %11 = vector.load %arg12[%c16_13, %c512_14] : memref<48x768xf32, #tpu.memory_space<vmem>>, vector<16x256xf32>
    tpu.vector_store %arg12[%c16_13, %c512_14], %3 {strides = array<i32>} : memref<48x768xf32, #tpu.memory_space<vmem>>, vector<16x256xf32>,
    %c0_15 = arith.constant 0 : index
    %c0_16 = arith.constant 0 : index
    %c0_17 = arith.constant 0 : index
    %12 = vector.load %arg1[%c0_15, %c0_16, %c0_17] : memref<1x16x256xf32, #tpu.memory_space<vmem>>, vector<1x16x256xf32>
    %13 = vector.shape_cast %12 : vector<1x16x256xf32> to vector<16x256xf32>
    %c16_18 = arith.constant 16 : index
    %c256 = arith.constant 256 : index
    %14 = vector.load %arg11[%c16_18, %c256] : memref<48x768xf32, #tpu.memory_space<vmem>>, vector<16x256xf32>
    tpu.vector_store %arg11[%c16_18, %c256], %13 {strides = array<i32>} : memref<48x768xf32, #tpu.memory_space<vmem>>, vector<16x256xf32>,
    %c0_19 = arith.constant 0 : index
    %c0_20 = arith.constant 0 : index
    %15 = vector.load %arg2[%c0_19, %c0_20] : memref<5x256xf32, #tpu.memory_space<vmem>>, vector<5x256xf32>
    %cst_21 = arith.constant 0.000000e+00 : f32
    %16 = vector.broadcast %cst_21 : f32 to vector<16x256xf32>
    %c16_22 = arith.constant 16 : index
    %c224 = arith.constant 224 : index
    %17 = vector.load %arg11[%c16_22, %c224] : memref<48x768xf32, #tpu.memory_space<vmem>>, vector<16x256xf32>
    %18 = vector.extract_strided_slice %15 {offsets = [0, 0], sizes = [1, 256], strides = [1, 1]} : vector<5x256xf32> to vector<1x256xf32>
    %19 = vector.broadcast %18 : vector<1x256xf32> to vector<16x256xf32>
    %20 = arith.mulf %17, %19 : vector<16x256xf32>
    %21 = arith.addf %16, %20 : vector<16x256xf32>
    %c16_23 = arith.constant 16 : index
    %c240 = arith.constant 240 : index
    %22 = vector.load %arg11[%c16_23, %c240] : memref<48x768xf32, #tpu.memory_space<vmem>>, vector<16x256xf32>
    %23 = vector.extract_strided_slice %15 {offsets = [1, 0], sizes = [1, 256], strides = [1, 1]} : vector<5x256xf32> to vector<1x256xf32>
    %24 = vector.broadcast %23 : vector<1x256xf32> to vector<16x256xf32>
    %25 = arith.mulf %22, %24 : vector<16x256xf32>
    %26 = arith.addf %21, %25 : vector<16x256xf32>
    %c16_24 = arith.constant 16 : index
    %c256_25 = arith.constant 256 : index
    %27 = vector.load %arg11[%c16_24, %c256_25] : memref<48x768xf32, #tpu.memory_space<vmem>>, vector<16x256xf32>
    %28 = vector.extract_strided_slice %15 {offsets = [2, 0], sizes = [1, 256], strides = [1, 1]} : vector<5x256xf32> to vector<1x256xf32>
    %29 = vector.broadcast %28 : vector<1x256xf32> to vector<16x256xf32>
    %30 = arith.mulf %27, %29 : vector<16x256xf32>
    %31 = arith.addf %26, %30 : vector<16x256xf32>
    %c16_26 = arith.constant 16 : index
    %c272 = arith.constant 272 : index
    %32 = vector.load %arg11[%c16_26, %c272] : memref<48x768xf32, #tpu.memory_space<vmem>>, vector<16x256xf32>
    %33 = vector.extract_strided_slice %15 {offsets = [3, 0], sizes = [1, 256], strides = [1, 1]} : vector<5x256xf32> to vector<1x256xf32>
    %34 = vector.broadcast %33 : vector<1x256xf32> to vector<16x256xf32>
    %35 = arith.mulf %32, %34 : vector<16x256xf32>
    %36 = arith.addf %31, %35 : vector<16x256xf32>
    %c16_27 = arith.constant 16 : index
    %c288 = arith.constant 288 : index
    %37 = vector.load %arg11[%c16_27, %c288] : memref<48x768xf32, #tpu.memory_space<vmem>>, vector<16x256xf32>
    %38 = vector.extract_strided_slice %15 {offsets = [4, 0], sizes = [1, 256], strides = [1, 1]} : vector<5x256xf32> to vector<1x256xf32>
    %39 = vector.broadcast %38 : vector<1x256xf32> to vector<16x256xf32>
    %40 = arith.mulf %37, %39 : vector<16x256xf32>
    %41 = arith.addf %36, %40 : vector<16x256xf32>
    %c0_28 = arith.constant 0 : index
    %c0_29 = arith.constant 0 : index
    %42 = vector.load %arg3[%c0_28, %c0_29] : memref<1x256xf32, #tpu.memory_space<vmem>>, vector<1x256xf32>
    %43 = vector.broadcast %42 : vector<1x256xf32> to vector<16x256xf32>
    %44 = arith.addf %41, %43 : vector<16x256xf32>
    %c16_30 = arith.constant 16 : index
    %c256_31 = arith.constant 256 : index
    %45 = vector.load %arg12[%c16_30, %c256_31] : memref<48x768xf32, #tpu.memory_space<vmem>>, vector<16x256xf32>
    tpu.vector_store %arg12[%c16_30, %c256_31], %44 {strides = array<i32>} : memref<48x768xf32, #tpu.memory_space<vmem>>, vector<16x256xf32>,
    %c0_32 = arith.constant 0 : index
    %c0_33 = arith.constant 0 : index
    %46 = vector.load %arg4[%c0_32, %c0_33] : memref<5x256xf32, #tpu.memory_space<vmem>>, vector<5x256xf32>
    %cst_34 = arith.constant 0.000000e+00 : f32
    %47 = vector.broadcast %cst_34 : f32 to vector<16x256xf32>
    %c14 = arith.constant 14 : index
    %c256_35 = arith.constant 256 : index
    %48 = vector.load %arg12[%c14, %c256_35] : memref<48x768xf32, #tpu.memory_space<vmem>>, vector<16x256xf32>
    %49 = vector.extract_strided_slice %46 {offsets = [0, 0], sizes = [1, 256], strides = [1, 1]} : vector<5x256xf32> to vector<1x256xf32>
    %50 = vector.broadcast %49 : vector<1x256xf32> to vector<16x256xf32>
    %51 = arith.mulf %48, %50 : vector<16x256xf32>
    %52 = arith.addf %47, %51 : vector<16x256xf32>
    %c15 = arith.constant 15 : index
    %c256_36 = arith.constant 256 : index
    %53 = vector.load %arg12[%c15, %c256_36] : memref<48x768xf32, #tpu.memory_space<vmem>>, vector<16x256xf32>
    %54 = vector.extract_strided_slice %46 {offsets = [1, 0], sizes = [1, 256], strides = [1, 1]} : vector<5x256xf32> to vector<1x256xf32>
    %55 = vector.broadcast %54 : vector<1x256xf32> to vector<16x256xf32>
    %56 = arith.mulf %53, %55 : vector<16x256xf32>
    %57 = arith.addf %52, %56 : vector<16x256xf32>
    %c16_37 = arith.constant 16 : index
    %c256_38 = arith.constant 256 : index
    %58 = vector.load %arg12[%c16_37, %c256_38] : memref<48x768xf32, #tpu.memory_space<vmem>>, vector<16x256xf32>
    %59 = vector.extract_strided_slice %46 {offsets = [2, 0], sizes = [1, 256], strides = [1, 1]} : vector<5x256xf32> to vector<1x256xf32>
    %60 = vector.broadcast %59 : vector<1x256xf32> to vector<16x256xf32>
    %61 = arith.mulf %58, %60 : vector<16x256xf32>
    %62 = arith.addf %57, %61 : vector<16x256xf32>
    %c17 = arith.constant 17 : index
    %c256_39 = arith.constant 256 : index
    %63 = vector.load %arg12[%c17, %c256_39] : memref<48x768xf32, #tpu.memory_space<vmem>>, vector<16x256xf32>
    %64 = vector.extract_strided_slice %46 {offsets = [3, 0], sizes = [1, 256], strides = [1, 1]} : vector<5x256xf32> to vector<1x256xf32>
    %65 = vector.broadcast %64 : vector<1x256xf32> to vector<16x256xf32>
    %66 = arith.mulf %63, %65 : vector<16x256xf32>
    %67 = arith.addf %62, %66 : vector<16x256xf32>
    %c18 = arith.constant 18 : index
    %c256_40 = arith.constant 256 : index
    %68 = vector.load %arg12[%c18, %c256_40] : memref<48x768xf32, #tpu.memory_space<vmem>>, vector<16x256xf32>
    %69 = vector.extract_strided_slice %46 {offsets = [4, 0], sizes = [1, 256], strides = [1, 1]} : vector<5x256xf32> to vector<1x256xf32>
    %70 = vector.broadcast %69 : vector<1x256xf32> to vector<16x256xf32>
    %71 = arith.mulf %68, %70 : vector<16x256xf32>
    %72 = arith.addf %67, %71 : vector<16x256xf32>
    %c0_41 = arith.constant 0 : index
    %c0_42 = arith.constant 0 : index
    %73 = vector.load %arg5[%c0_41, %c0_42] : memref<1x256xf32, #tpu.memory_space<vmem>>, vector<1x256xf32>
    %74 = vector.broadcast %73 : vector<1x256xf32> to vector<16x256xf32>
    %75 = arith.addf %72, %74 : vector<16x256xf32>
    %c16_43 = arith.constant 16 : index
    %c256_44 = arith.constant 256 : index
    %76 = vector.load %arg11[%c16_43, %c256_44] : memref<48x768xf32, #tpu.memory_space<vmem>>, vector<16x256xf32>
    tpu.vector_store %arg11[%c16_43, %c256_44], %75 {strides = array<i32>} : memref<48x768xf32, #tpu.memory_space<vmem>>, vector<16x256xf32>,
    %c0_45 = arith.constant 0 : index
    %c0_46 = arith.constant 0 : index
    %77 = vector.load %arg6[%c0_45, %c0_46] : memref<7x256xf32, #tpu.memory_space<vmem>>, vector<7x256xf32>
    %cst_47 = arith.constant 0.000000e+00 : f32
    %78 = vector.broadcast %cst_47 : f32 to vector<16x256xf32>
    %c16_48 = arith.constant 16 : index
    %c112 = arith.constant 112 : index
    %79 = vector.load %arg11[%c16_48, %c112] : memref<48x768xf32, #tpu.memory_space<vmem>>, vector<16x256xf32>
    %80 = vector.extract_strided_slice %77 {offsets = [0, 0], sizes = [1, 256], strides = [1, 1]} : vector<7x256xf32> to vector<1x256xf32>
    %81 = vector.broadcast %80 : vector<1x256xf32> to vector<16x256xf32>
    %82 = arith.mulf %79, %81 : vector<16x256xf32>
    %83 = arith.addf %78, %82 : vector<16x256xf32>
    %c16_49 = arith.constant 16 : index
    %c160 = arith.constant 160 : index
    %84 = vector.load %arg11[%c16_49, %c160] : memref<48x768xf32, #tpu.memory_space<vmem>>, vector<16x256xf32>
    %85 = vector.extract_strided_slice %77 {offsets = [1, 0], sizes = [1, 256], strides = [1, 1]} : vector<7x256xf32> to vector<1x256xf32>
    %86 = vector.broadcast %85 : vector<1x256xf32> to vector<16x256xf32>
    %87 = arith.mulf %84, %86 : vector<16x256xf32>
    %88 = arith.addf %83, %87 : vector<16x256xf32>
    %c16_50 = arith.constant 16 : index
    %c208 = arith.constant 208 : index
    %89 = vector.load %arg11[%c16_50, %c208] : memref<48x768xf32, #tpu.memory_space<vmem>>, vector<16x256xf32>
    %90 = vector.extract_strided_slice %77 {offsets = [2, 0], sizes = [1, 256], strides = [1, 1]} : vector<7x256xf32> to vector<1x256xf32>
    %91 = vector.broadcast %90 : vector<1x256xf32> to vector<16x256xf32>
    %92 = arith.mulf %89, %91 : vector<16x256xf32>
    %93 = arith.addf %88, %92 : vector<16x256xf32>
    %c16_51 = arith.constant 16 : index
    %c256_52 = arith.constant 256 : index
    %94 = vector.load %arg11[%c16_51, %c256_52] : memref<48x768xf32, #tpu.memory_space<vmem>>, vector<16x256xf32>
    %95 = vector.extract_strided_slice %77 {offsets = [3, 0], sizes = [1, 256], strides = [1, 1]} : vector<7x256xf32> to vector<1x256xf32>
    %96 = vector.broadcast %95 : vector<1x256xf32> to vector<16x256xf32>
    %97 = arith.mulf %94, %96 : vector<16x256xf32>
    %98 = arith.addf %93, %97 : vector<16x256xf32>
    %c16_53 = arith.constant 16 : index
    %c304 = arith.constant 304 : index
    %99 = vector.load %arg11[%c16_53, %c304] : memref<48x768xf32, #tpu.memory_space<vmem>>, vector<16x256xf32>
    %100 = vector.extract_strided_slice %77 {offsets = [4, 0], sizes = [1, 256], strides = [1, 1]} : vector<7x256xf32> to vector<1x256xf32>
    %101 = vector.broadcast %100 : vector<1x256xf32> to vector<16x256xf32>
    %102 = arith.mulf %99, %101 : vector<16x256xf32>
    %103 = arith.addf %98, %102 : vector<16x256xf32>
    %c16_54 = arith.constant 16 : index
    %c352 = arith.constant 352 : index
    %104 = vector.load %arg11[%c16_54, %c352] : memref<48x768xf32, #tpu.memory_space<vmem>>, vector<16x256xf32>
    %105 = vector.extract_strided_slice %77 {offsets = [5, 0], sizes = [1, 256], strides = [1, 1]} : vector<7x256xf32> to vector<1x256xf32>
    %106 = vector.broadcast %105 : vector<1x256xf32> to vector<16x256xf32>
    %107 = arith.mulf %104, %106 : vector<16x256xf32>
    %108 = arith.addf %103, %107 : vector<16x256xf32>
    %c16_55 = arith.constant 16 : index
    %c400 = arith.constant 400 : index
    %109 = vector.load %arg11[%c16_55, %c400] : memref<48x768xf32, #tpu.memory_space<vmem>>, vector<16x256xf32>
    %110 = vector.extract_strided_slice %77 {offsets = [6, 0], sizes = [1, 256], strides = [1, 1]} : vector<7x256xf32> to vector<1x256xf32>
    %111 = vector.broadcast %110 : vector<1x256xf32> to vector<16x256xf32>
    %112 = arith.mulf %109, %111 : vector<16x256xf32>
    %113 = arith.addf %108, %112 : vector<16x256xf32>
    %c0_56 = arith.constant 0 : index
    %c0_57 = arith.constant 0 : index
    %114 = vector.load %arg7[%c0_56, %c0_57] : memref<1x256xf32, #tpu.memory_space<vmem>>, vector<1x256xf32>
    %115 = vector.broadcast %114 : vector<1x256xf32> to vector<16x256xf32>
    %116 = arith.addf %113, %115 : vector<16x256xf32>
    %c16_58 = arith.constant 16 : index
    %c256_59 = arith.constant 256 : index
    %117 = vector.load %arg12[%c16_58, %c256_59] : memref<48x768xf32, #tpu.memory_space<vmem>>, vector<16x256xf32>
    tpu.vector_store %arg12[%c16_58, %c256_59], %116 {strides = array<i32>} : memref<48x768xf32, #tpu.memory_space<vmem>>, vector<16x256xf32>,
    %c0_60 = arith.constant 0 : index
    %c0_61 = arith.constant 0 : index
    %118 = vector.load %arg8[%c0_60, %c0_61] : memref<7x256xf32, #tpu.memory_space<vmem>>, vector<7x256xf32>
    %cst_62 = arith.constant 0.000000e+00 : f32
    %119 = vector.broadcast %cst_62 : f32 to vector<16x256xf32>
    %c7 = arith.constant 7 : index
    %c256_63 = arith.constant 256 : index
    %120 = vector.load %arg12[%c7, %c256_63] : memref<48x768xf32, #tpu.memory_space<vmem>>, vector<16x256xf32>
    %121 = vector.extract_strided_slice %118 {offsets = [0, 0], sizes = [1, 256], strides = [1, 1]} : vector<7x256xf32> to vector<1x256xf32>
    %122 = vector.broadcast %121 : vector<1x256xf32> to vector<16x256xf32>
    %123 = arith.mulf %120, %122 : vector<16x256xf32>
    %124 = arith.addf %119, %123 : vector<16x256xf32>
    %c10 = arith.constant 10 : index
    %c256_64 = arith.constant 256 : index
    %125 = vector.load %arg12[%c10, %c256_64] : memref<48x768xf32, #tpu.memory_space<vmem>>, vector<16x256xf32>
    %126 = vector.extract_strided_slice %118 {offsets = [1, 0], sizes = [1, 256], strides = [1, 1]} : vector<7x256xf32> to vector<1x256xf32>
    %127 = vector.broadcast %126 : vector<1x256xf32> to vector<16x256xf32>
    %128 = arith.mulf %125, %127 : vector<16x256xf32>
    %129 = arith.addf %124, %128 : vector<16x256xf32>
    %c13 = arith.constant 13 : index
    %c256_65 = arith.constant 256 : index
    %130 = vector.load %arg12[%c13, %c256_65] : memref<48x768xf32, #tpu.memory_space<vmem>>, vector<16x256xf32>
    %131 = vector.extract_strided_slice %118 {offsets = [2, 0], sizes = [1, 256], strides = [1, 1]} : vector<7x256xf32> to vector<1x256xf32>
    %132 = vector.broadcast %131 : vector<1x256xf32> to vector<16x256xf32>
    %133 = arith.mulf %130, %132 : vector<16x256xf32>
    %134 = arith.addf %129, %133 : vector<16x256xf32>
    %c16_66 = arith.constant 16 : index
    %c256_67 = arith.constant 256 : index
    %135 = vector.load %arg12[%c16_66, %c256_67] : memref<48x768xf32, #tpu.memory_space<vmem>>, vector<16x256xf32>
    %136 = vector.extract_strided_slice %118 {offsets = [3, 0], sizes = [1, 256], strides = [1, 1]} : vector<7x256xf32> to vector<1x256xf32>
    %137 = vector.broadcast %136 : vector<1x256xf32> to vector<16x256xf32>
    %138 = arith.mulf %135, %137 : vector<16x256xf32>
    %139 = arith.addf %134, %138 : vector<16x256xf32>
    %c19 = arith.constant 19 : index
    %c256_68 = arith.constant 256 : index
    %140 = vector.load %arg12[%c19, %c256_68] : memref<48x768xf32, #tpu.memory_space<vmem>>, vector<16x256xf32>
    %141 = vector.extract_strided_slice %118 {offsets = [4, 0], sizes = [1, 256], strides = [1, 1]} : vector<7x256xf32> to vector<1x256xf32>
    %142 = vector.broadcast %141 : vector<1x256xf32> to vector<16x256xf32>
    %143 = arith.mulf %140, %142 : vector<16x256xf32>
    %144 = arith.addf %139, %143 : vector<16x256xf32>
    %c22 = arith.constant 22 : index
    %c256_69 = arith.constant 256 : index
    %145 = vector.load %arg12[%c22, %c256_69] : memref<48x768xf32, #tpu.memory_space<vmem>>, vector<16x256xf32>
    %146 = vector.extract_strided_slice %118 {offsets = [5, 0], sizes = [1, 256], strides = [1, 1]} : vector<7x256xf32> to vector<1x256xf32>
    %147 = vector.broadcast %146 : vector<1x256xf32> to vector<16x256xf32>
    %148 = arith.mulf %145, %147 : vector<16x256xf32>
    %149 = arith.addf %144, %148 : vector<16x256xf32>
    %c25 = arith.constant 25 : index
    %c256_70 = arith.constant 256 : index
    %150 = vector.load %arg12[%c25, %c256_70] : memref<48x768xf32, #tpu.memory_space<vmem>>, vector<16x256xf32>
    %151 = vector.extract_strided_slice %118 {offsets = [6, 0], sizes = [1, 256], strides = [1, 1]} : vector<7x256xf32> to vector<1x256xf32>
    %152 = vector.broadcast %151 : vector<1x256xf32> to vector<16x256xf32>
    %153 = arith.mulf %150, %152 : vector<16x256xf32>
    %154 = arith.addf %149, %153 : vector<16x256xf32>
    %c0_71 = arith.constant 0 : index
    %c0_72 = arith.constant 0 : index
    %155 = vector.load %arg9[%c0_71, %c0_72] : memref<1x256xf32, #tpu.memory_space<vmem>>, vector<1x256xf32>
    %156 = vector.broadcast %155 : vector<1x256xf32> to vector<16x256xf32>
    %157 = arith.addf %154, %156 : vector<16x256xf32>
    %c0_73 = arith.constant 0 : index
    %c0_74 = arith.constant 0 : index
    %c0_75 = arith.constant 0 : index
    %158 = vector.load %arg10[%c0_73, %c0_74, %c0_75] : memref<1x16x256xf32, #tpu.memory_space<vmem>>, vector<1x16x256xf32>
    %159 = vector.shape_cast %158 : vector<1x16x256xf32> to vector<16x256xf32>
    %160 = vector.shape_cast %157 : vector<16x256xf32> to vector<1x16x256xf32>
    tpu.vector_store %arg10[%c0_73, %c0_74, %c0_75], %160 {strides = array<i32>} : memref<1x16x256xf32, #tpu.memory_space<vmem>>, vector<1x16x256xf32>,
    return
  }
  func.func @transform_0(%arg0: i32) -> (i32, i32, i32) {
    %c0_i32 = arith.constant 0 : i32
    %c0_i32_0 = arith.constant 0 : i32
    %c0_i32_1 = arith.constant 0 : i32
    return %arg0, %c0_i32, %c0_i32_0 : i32, i32, i32
  }
  func.func @transform_1(%arg0: i32) -> (i32, i32) {
    %c0_i32 = arith.constant 0 : i32
    %c0_i32_0 = arith.constant 0 : i32
    %c0_i32_1 = arith.constant 0 : i32
    return %c0_i32, %c0_i32_0 : i32, i32
  }
  func.func @transform_2(%arg0: i32) -> (i32, i32) {
    %c0_i32 = arith.constant 0 : i32
    %c0_i32_0 = arith.constant 0 : i32
    %c0_i32_1 = arith.constant 0 : i32
    return %c0_i32, %c0_i32_0 : i32, i32
  }
  func.func @transform_3(%arg0: i32) -> (i32, i32) {
    %c0_i32 = arith.constant 0 : i32
    %c0_i32_0 = arith.constant 0 : i32
    %c0_i32_1 = arith.constant 0 : i32
    return %c0_i32, %c0_i32_0 : i32, i32
  }
  func.func @transform_4(%arg0: i32) -> (i32, i32) {
    %c0_i32 = arith.constant 0 : i32
    %c0_i32_0 = arith.constant 0 : i32
    %c0_i32_1 = arith.constant 0 : i32
    return %c0_i32, %c0_i32_0 : i32, i32
  }
  func.func @transform_5(%arg0: i32) -> (i32, i32) {
    %c0_i32 = arith.constant 0 : i32
    %c0_i32_0 = arith.constant 0 : i32
    %c0_i32_1 = arith.constant 0 : i32
    return %c0_i32, %c0_i32_0 : i32, i32
  }
  func.func @transform_6(%arg0: i32) -> (i32, i32) {
    %c0_i32 = arith.constant 0 : i32
    %c0_i32_0 = arith.constant 0 : i32
    %c0_i32_1 = arith.constant 0 : i32
    return %c0_i32, %c0_i32_0 : i32, i32
  }
  func.func @transform_7(%arg0: i32) -> (i32, i32) {
    %c0_i32 = arith.constant 0 : i32
    %c0_i32_0 = arith.constant 0 : i32
    %c0_i32_1 = arith.constant 0 : i32
    return %c0_i32, %c0_i32_0 : i32, i32
  }
  func.func @transform_8(%arg0: i32) -> (i32, i32) {
    %c0_i32 = arith.constant 0 : i32
    %c0_i32_0 = arith.constant 0 : i32
    %c0_i32_1 = arith.constant 0 : i32
    return %c0_i32, %c0_i32_0 : i32, i32
  }
  func.func @transform_9(%arg0: i32) -> (i32, i32, i32) {
    %c0_i32 = arith.constant 0 : i32
    %c0_i32_0 = arith.constant 0 : i32
    %c0_i32_1 = arith.constant 0 : i32
    return %arg0, %c0_i32, %c0_i32_0 : i32, i32, i32
  }
}

module attributes {stable_mosaic.version = 11 : i64} {
  func.func @_lska_branch_kernel(%arg0: i32, %arg1: memref<1x16x256xf32, #tpu.memory_space<vmem>>, %arg2: memref<5x256xf32, #tpu.memory_space<vmem>>, %arg3: memref<1x256xf32, #tpu.memory_space<vmem>>, %arg4: memref<5x256xf32, #tpu.memory_space<vmem>>, %arg5: memref<1x256xf32, #tpu.memory_space<vmem>>, %arg6: memref<11x256xf32, #tpu.memory_space<vmem>>, %arg7: memref<1x256xf32, #tpu.memory_space<vmem>>, %arg8: memref<11x256xf32, #tpu.memory_space<vmem>>, %arg9: memref<1x256xf32, #tpu.memory_space<vmem>>, %arg10: memref<1x16x256xf32, #tpu.memory_space<vmem>>, %arg11: memref<48x768xf32, #tpu.memory_space<vmem>>, %arg12: memref<48x768xf32, #tpu.memory_space<vmem>>) attributes {dimension_semantics = [#tpu.dimension_semantics<parallel>], iteration_bounds = array<i64: 2>, scalar_prefetch = 0 : i64, scratch_operands = 2 : i64, tpu.core_type = #tpu.core_type<tc>, window_params = [{transform_indices = @transform_0, window_bounds = array<i64: 1, 16, 256>}, {pipeline_mode = #tpu.pipeline_mode<synchronous>, transform_indices = @transform_1, window_bounds = array<i64: 5, 256>}, {pipeline_mode = #tpu.pipeline_mode<synchronous>, transform_indices = @transform_2, window_bounds = array<i64: 1, 256>}, {pipeline_mode = #tpu.pipeline_mode<synchronous>, transform_indices = @transform_3, window_bounds = array<i64: 5, 256>}, {pipeline_mode = #tpu.pipeline_mode<synchronous>, transform_indices = @transform_4, window_bounds = array<i64: 1, 256>}, {pipeline_mode = #tpu.pipeline_mode<synchronous>, transform_indices = @transform_5, window_bounds = array<i64: 11, 256>}, {pipeline_mode = #tpu.pipeline_mode<synchronous>, transform_indices = @transform_6, window_bounds = array<i64: 1, 256>}, {pipeline_mode = #tpu.pipeline_mode<synchronous>, transform_indices = @transform_7, window_bounds = array<i64: 11, 256>}, {pipeline_mode = #tpu.pipeline_mode<synchronous>, transform_indices = @transform_8, window_bounds = array<i64: 1, 256>}, {transform_indices = @transform_9, window_bounds = array<i64: 1, 16, 256>}]} {
    %cst = arith.constant 0.000000e+00 : f32
    %0 = vector.broadcast %cst : f32 to vector<16x768xf32>
    %cst_0 = arith.constant 0.000000e+00 : f32
    %1 = vector.broadcast %cst_0 : f32 to vector<16x768xf32>
    %cst_1 = arith.constant 0.000000e+00 : f32
    %2 = vector.broadcast %cst_1 : f32 to vector<16x256xf32>
    %cst_2 = arith.constant 0.000000e+00 : f32
    %3 = vector.broadcast %cst_2 : f32 to vector<16x256xf32>
    %c0 = arith.constant 0 : index
    %c0_3 = arith.constant 0 : index
    %4 = vector.load %arg11[%c0, %c0_3] : memref<48x768xf32, #tpu.memory_space<vmem>>, vector<16x768xf32>
    tpu.vector_store %arg11[%c0, %c0_3], %0 {strides = array<i32>} : memref<48x768xf32, #tpu.memory_space<vmem>>, vector<16x768xf32>,
    %c32 = arith.constant 32 : index
    %c0_4 = arith.constant 0 : index
    %5 = vector.load %arg11[%c32, %c0_4] : memref<48x768xf32, #tpu.memory_space<vmem>>, vector<16x768xf32>
    tpu.vector_store %arg11[%c32, %c0_4], %1 {strides = array<i32>} : memref<48x768xf32, #tpu.memory_space<vmem>>, vector<16x768xf32>,
    %c16 = arith.constant 16 : index
    %c0_5 = arith.constant 0 : index
    %6 = vector.load %arg11[%c16, %c0_5] : memref<48x768xf32, #tpu.memory_space<vmem>>, vector<16x256xf32>
    tpu.vector_store %arg11[%c16, %c0_5], %2 {strides = array<i32>} : memref<48x768xf32, #tpu.memory_space<vmem>>, vector<16x256xf32>,
    %c16_6 = arith.constant 16 : index
    %c512 = arith.constant 512 : index
    %7 = vector.load %arg11[%c16_6, %c512] : memref<48x768xf32, #tpu.memory_space<vmem>>, vector<16x256xf32>
    tpu.vector_store %arg11[%c16_6, %c512], %3 {strides = array<i32>} : memref<48x768xf32, #tpu.memory_space<vmem>>, vector<16x256xf32>,
    %c0_7 = arith.constant 0 : index
    %c0_8 = arith.constant 0 : index
    %8 = vector.load %arg12[%c0_7, %c0_8] : memref<48x768xf32, #tpu.memory_space<vmem>>, vector<16x768xf32>
    tpu.vector_store %arg12[%c0_7, %c0_8], %0 {strides = array<i32>} : memref<48x768xf32, #tpu.memory_space<vmem>>, vector<16x768xf32>,
    %c32_9 = arith.constant 32 : index
    %c0_10 = arith.constant 0 : index
    %9 = vector.load %arg12[%c32_9, %c0_10] : memref<48x768xf32, #tpu.memory_space<vmem>>, vector<16x768xf32>
    tpu.vector_store %arg12[%c32_9, %c0_10], %1 {strides = array<i32>} : memref<48x768xf32, #tpu.memory_space<vmem>>, vector<16x768xf32>,
    %c16_11 = arith.constant 16 : index
    %c0_12 = arith.constant 0 : index
    %10 = vector.load %arg12[%c16_11, %c0_12] : memref<48x768xf32, #tpu.memory_space<vmem>>, vector<16x256xf32>
    tpu.vector_store %arg12[%c16_11, %c0_12], %2 {strides = array<i32>} : memref<48x768xf32, #tpu.memory_space<vmem>>, vector<16x256xf32>,
    %c16_13 = arith.constant 16 : index
    %c512_14 = arith.constant 512 : index
    %11 = vector.load %arg12[%c16_13, %c512_14] : memref<48x768xf32, #tpu.memory_space<vmem>>, vector<16x256xf32>
    tpu.vector_store %arg12[%c16_13, %c512_14], %3 {strides = array<i32>} : memref<48x768xf32, #tpu.memory_space<vmem>>, vector<16x256xf32>,
    %c0_15 = arith.constant 0 : index
    %c0_16 = arith.constant 0 : index
    %c0_17 = arith.constant 0 : index
    %12 = vector.load %arg1[%c0_15, %c0_16, %c0_17] : memref<1x16x256xf32, #tpu.memory_space<vmem>>, vector<1x16x256xf32>
    %13 = vector.shape_cast %12 : vector<1x16x256xf32> to vector<16x256xf32>
    %c16_18 = arith.constant 16 : index
    %c256 = arith.constant 256 : index
    %14 = vector.load %arg11[%c16_18, %c256] : memref<48x768xf32, #tpu.memory_space<vmem>>, vector<16x256xf32>
    tpu.vector_store %arg11[%c16_18, %c256], %13 {strides = array<i32>} : memref<48x768xf32, #tpu.memory_space<vmem>>, vector<16x256xf32>,
    %c0_19 = arith.constant 0 : index
    %c0_20 = arith.constant 0 : index
    %15 = vector.load %arg2[%c0_19, %c0_20] : memref<5x256xf32, #tpu.memory_space<vmem>>, vector<5x256xf32>
    %cst_21 = arith.constant 0.000000e+00 : f32
    %16 = vector.broadcast %cst_21 : f32 to vector<16x256xf32>
    %c16_22 = arith.constant 16 : index
    %c224 = arith.constant 224 : index
    %17 = vector.load %arg11[%c16_22, %c224] : memref<48x768xf32, #tpu.memory_space<vmem>>, vector<16x256xf32>
    %18 = vector.extract_strided_slice %15 {offsets = [0, 0], sizes = [1, 256], strides = [1, 1]} : vector<5x256xf32> to vector<1x256xf32>
    %19 = vector.broadcast %18 : vector<1x256xf32> to vector<16x256xf32>
    %20 = arith.mulf %17, %19 : vector<16x256xf32>
    %21 = arith.addf %16, %20 : vector<16x256xf32>
    %c16_23 = arith.constant 16 : index
    %c240 = arith.constant 240 : index
    %22 = vector.load %arg11[%c16_23, %c240] : memref<48x768xf32, #tpu.memory_space<vmem>>, vector<16x256xf32>
    %23 = vector.extract_strided_slice %15 {offsets = [1, 0], sizes = [1, 256], strides = [1, 1]} : vector<5x256xf32> to vector<1x256xf32>
    %24 = vector.broadcast %23 : vector<1x256xf32> to vector<16x256xf32>
    %25 = arith.mulf %22, %24 : vector<16x256xf32>
    %26 = arith.addf %21, %25 : vector<16x256xf32>
    %c16_24 = arith.constant 16 : index
    %c256_25 = arith.constant 256 : index
    %27 = vector.load %arg11[%c16_24, %c256_25] : memref<48x768xf32, #tpu.memory_space<vmem>>, vector<16x256xf32>
    %28 = vector.extract_strided_slice %15 {offsets = [2, 0], sizes = [1, 256], strides = [1, 1]} : vector<5x256xf32> to vector<1x256xf32>
    %29 = vector.broadcast %28 : vector<1x256xf32> to vector<16x256xf32>
    %30 = arith.mulf %27, %29 : vector<16x256xf32>
    %31 = arith.addf %26, %30 : vector<16x256xf32>
    %c16_26 = arith.constant 16 : index
    %c272 = arith.constant 272 : index
    %32 = vector.load %arg11[%c16_26, %c272] : memref<48x768xf32, #tpu.memory_space<vmem>>, vector<16x256xf32>
    %33 = vector.extract_strided_slice %15 {offsets = [3, 0], sizes = [1, 256], strides = [1, 1]} : vector<5x256xf32> to vector<1x256xf32>
    %34 = vector.broadcast %33 : vector<1x256xf32> to vector<16x256xf32>
    %35 = arith.mulf %32, %34 : vector<16x256xf32>
    %36 = arith.addf %31, %35 : vector<16x256xf32>
    %c16_27 = arith.constant 16 : index
    %c288 = arith.constant 288 : index
    %37 = vector.load %arg11[%c16_27, %c288] : memref<48x768xf32, #tpu.memory_space<vmem>>, vector<16x256xf32>
    %38 = vector.extract_strided_slice %15 {offsets = [4, 0], sizes = [1, 256], strides = [1, 1]} : vector<5x256xf32> to vector<1x256xf32>
    %39 = vector.broadcast %38 : vector<1x256xf32> to vector<16x256xf32>
    %40 = arith.mulf %37, %39 : vector<16x256xf32>
    %41 = arith.addf %36, %40 : vector<16x256xf32>
    %c0_28 = arith.constant 0 : index
    %c0_29 = arith.constant 0 : index
    %42 = vector.load %arg3[%c0_28, %c0_29] : memref<1x256xf32, #tpu.memory_space<vmem>>, vector<1x256xf32>
    %43 = vector.broadcast %42 : vector<1x256xf32> to vector<16x256xf32>
    %44 = arith.addf %41, %43 : vector<16x256xf32>
    %c16_30 = arith.constant 16 : index
    %c256_31 = arith.constant 256 : index
    %45 = vector.load %arg12[%c16_30, %c256_31] : memref<48x768xf32, #tpu.memory_space<vmem>>, vector<16x256xf32>
    tpu.vector_store %arg12[%c16_30, %c256_31], %44 {strides = array<i32>} : memref<48x768xf32, #tpu.memory_space<vmem>>, vector<16x256xf32>,
    %c0_32 = arith.constant 0 : index
    %c0_33 = arith.constant 0 : index
    %46 = vector.load %arg4[%c0_32, %c0_33] : memref<5x256xf32, #tpu.memory_space<vmem>>, vector<5x256xf32>
    %cst_34 = arith.constant 0.000000e+00 : f32
    %47 = vector.broadcast %cst_34 : f32 to vector<16x256xf32>
    %c14 = arith.constant 14 : index
    %c256_35 = arith.constant 256 : index
    %48 = vector.load %arg12[%c14, %c256_35] : memref<48x768xf32, #tpu.memory_space<vmem>>, vector<16x256xf32>
    %49 = vector.extract_strided_slice %46 {offsets = [0, 0], sizes = [1, 256], strides = [1, 1]} : vector<5x256xf32> to vector<1x256xf32>
    %50 = vector.broadcast %49 : vector<1x256xf32> to vector<16x256xf32>
    %51 = arith.mulf %48, %50 : vector<16x256xf32>
    %52 = arith.addf %47, %51 : vector<16x256xf32>
    %c15 = arith.constant 15 : index
    %c256_36 = arith.constant 256 : index
    %53 = vector.load %arg12[%c15, %c256_36] : memref<48x768xf32, #tpu.memory_space<vmem>>, vector<16x256xf32>
    %54 = vector.extract_strided_slice %46 {offsets = [1, 0], sizes = [1, 256], strides = [1, 1]} : vector<5x256xf32> to vector<1x256xf32>
    %55 = vector.broadcast %54 : vector<1x256xf32> to vector<16x256xf32>
    %56 = arith.mulf %53, %55 : vector<16x256xf32>
    %57 = arith.addf %52, %56 : vector<16x256xf32>
    %c16_37 = arith.constant 16 : index
    %c256_38 = arith.constant 256 : index
    %58 = vector.load %arg12[%c16_37, %c256_38] : memref<48x768xf32, #tpu.memory_space<vmem>>, vector<16x256xf32>
    %59 = vector.extract_strided_slice %46 {offsets = [2, 0], sizes = [1, 256], strides = [1, 1]} : vector<5x256xf32> to vector<1x256xf32>
    %60 = vector.broadcast %59 : vector<1x256xf32> to vector<16x256xf32>
    %61 = arith.mulf %58, %60 : vector<16x256xf32>
    %62 = arith.addf %57, %61 : vector<16x256xf32>
    %c17 = arith.constant 17 : index
    %c256_39 = arith.constant 256 : index
    %63 = vector.load %arg12[%c17, %c256_39] : memref<48x768xf32, #tpu.memory_space<vmem>>, vector<16x256xf32>
    %64 = vector.extract_strided_slice %46 {offsets = [3, 0], sizes = [1, 256], strides = [1, 1]} : vector<5x256xf32> to vector<1x256xf32>
    %65 = vector.broadcast %64 : vector<1x256xf32> to vector<16x256xf32>
    %66 = arith.mulf %63, %65 : vector<16x256xf32>
    %67 = arith.addf %62, %66 : vector<16x256xf32>
    %c18 = arith.constant 18 : index
    %c256_40 = arith.constant 256 : index
    %68 = vector.load %arg12[%c18, %c256_40] : memref<48x768xf32, #tpu.memory_space<vmem>>, vector<16x256xf32>
    %69 = vector.extract_strided_slice %46 {offsets = [4, 0], sizes = [1, 256], strides = [1, 1]} : vector<5x256xf32> to vector<1x256xf32>
    %70 = vector.broadcast %69 : vector<1x256xf32> to vector<16x256xf32>
    %71 = arith.mulf %68, %70 : vector<16x256xf32>
    %72 = arith.addf %67, %71 : vector<16x256xf32>
    %c0_41 = arith.constant 0 : index
    %c0_42 = arith.constant 0 : index
    %73 = vector.load %arg5[%c0_41, %c0_42] : memref<1x256xf32, #tpu.memory_space<vmem>>, vector<1x256xf32>
    %74 = vector.broadcast %73 : vector<1x256xf32> to vector<16x256xf32>
    %75 = arith.addf %72, %74 : vector<16x256xf32>
    %c16_43 = arith.constant 16 : index
    %c256_44 = arith.constant 256 : index
    %76 = vector.load %arg11[%c16_43, %c256_44] : memref<48x768xf32, #tpu.memory_space<vmem>>, vector<16x256xf32>
    tpu.vector_store %arg11[%c16_43, %c256_44], %75 {strides = array<i32>} : memref<48x768xf32, #tpu.memory_space<vmem>>, vector<16x256xf32>,
    %c0_45 = arith.constant 0 : index
    %c0_46 = arith.constant 0 : index
    %77 = vector.load %arg6[%c0_45, %c0_46] : memref<11x256xf32, #tpu.memory_space<vmem>>, vector<11x256xf32>
    %cst_47 = arith.constant 0.000000e+00 : f32
    %78 = vector.broadcast %cst_47 : f32 to vector<16x256xf32>
    %c16_48 = arith.constant 16 : index
    %c16_49 = arith.constant 16 : index
    %79 = vector.load %arg11[%c16_48, %c16_49] : memref<48x768xf32, #tpu.memory_space<vmem>>, vector<16x256xf32>
    %80 = vector.extract_strided_slice %77 {offsets = [0, 0], sizes = [1, 256], strides = [1, 1]} : vector<11x256xf32> to vector<1x256xf32>
    %81 = vector.broadcast %80 : vector<1x256xf32> to vector<16x256xf32>
    %82 = arith.mulf %79, %81 : vector<16x256xf32>
    %83 = arith.addf %78, %82 : vector<16x256xf32>
    %c16_50 = arith.constant 16 : index
    %c64 = arith.constant 64 : index
    %84 = vector.load %arg11[%c16_50, %c64] : memref<48x768xf32, #tpu.memory_space<vmem>>, vector<16x256xf32>
    %85 = vector.extract_strided_slice %77 {offsets = [1, 0], sizes = [1, 256], strides = [1, 1]} : vector<11x256xf32> to vector<1x256xf32>
    %86 = vector.broadcast %85 : vector<1x256xf32> to vector<16x256xf32>
    %87 = arith.mulf %84, %86 : vector<16x256xf32>
    %88 = arith.addf %83, %87 : vector<16x256xf32>
    %c16_51 = arith.constant 16 : index
    %c112 = arith.constant 112 : index
    %89 = vector.load %arg11[%c16_51, %c112] : memref<48x768xf32, #tpu.memory_space<vmem>>, vector<16x256xf32>
    %90 = vector.extract_strided_slice %77 {offsets = [2, 0], sizes = [1, 256], strides = [1, 1]} : vector<11x256xf32> to vector<1x256xf32>
    %91 = vector.broadcast %90 : vector<1x256xf32> to vector<16x256xf32>
    %92 = arith.mulf %89, %91 : vector<16x256xf32>
    %93 = arith.addf %88, %92 : vector<16x256xf32>
    %c16_52 = arith.constant 16 : index
    %c160 = arith.constant 160 : index
    %94 = vector.load %arg11[%c16_52, %c160] : memref<48x768xf32, #tpu.memory_space<vmem>>, vector<16x256xf32>
    %95 = vector.extract_strided_slice %77 {offsets = [3, 0], sizes = [1, 256], strides = [1, 1]} : vector<11x256xf32> to vector<1x256xf32>
    %96 = vector.broadcast %95 : vector<1x256xf32> to vector<16x256xf32>
    %97 = arith.mulf %94, %96 : vector<16x256xf32>
    %98 = arith.addf %93, %97 : vector<16x256xf32>
    %c16_53 = arith.constant 16 : index
    %c208 = arith.constant 208 : index
    %99 = vector.load %arg11[%c16_53, %c208] : memref<48x768xf32, #tpu.memory_space<vmem>>, vector<16x256xf32>
    %100 = vector.extract_strided_slice %77 {offsets = [4, 0], sizes = [1, 256], strides = [1, 1]} : vector<11x256xf32> to vector<1x256xf32>
    %101 = vector.broadcast %100 : vector<1x256xf32> to vector<16x256xf32>
    %102 = arith.mulf %99, %101 : vector<16x256xf32>
    %103 = arith.addf %98, %102 : vector<16x256xf32>
    %c16_54 = arith.constant 16 : index
    %c256_55 = arith.constant 256 : index
    %104 = vector.load %arg11[%c16_54, %c256_55] : memref<48x768xf32, #tpu.memory_space<vmem>>, vector<16x256xf32>
    %105 = vector.extract_strided_slice %77 {offsets = [5, 0], sizes = [1, 256], strides = [1, 1]} : vector<11x256xf32> to vector<1x256xf32>
    %106 = vector.broadcast %105 : vector<1x256xf32> to vector<16x256xf32>
    %107 = arith.mulf %104, %106 : vector<16x256xf32>
    %108 = arith.addf %103, %107 : vector<16x256xf32>
    %c16_56 = arith.constant 16 : index
    %c304 = arith.constant 304 : index
    %109 = vector.load %arg11[%c16_56, %c304] : memref<48x768xf32, #tpu.memory_space<vmem>>, vector<16x256xf32>
    %110 = vector.extract_strided_slice %77 {offsets = [6, 0], sizes = [1, 256], strides = [1, 1]} : vector<11x256xf32> to vector<1x256xf32>
    %111 = vector.broadcast %110 : vector<1x256xf32> to vector<16x256xf32>
    %112 = arith.mulf %109, %111 : vector<16x256xf32>
    %113 = arith.addf %108, %112 : vector<16x256xf32>
    %c16_57 = arith.constant 16 : index
    %c352 = arith.constant 352 : index
    %114 = vector.load %arg11[%c16_57, %c352] : memref<48x768xf32, #tpu.memory_space<vmem>>, vector<16x256xf32>
    %115 = vector.extract_strided_slice %77 {offsets = [7, 0], sizes = [1, 256], strides = [1, 1]} : vector<11x256xf32> to vector<1x256xf32>
    %116 = vector.broadcast %115 : vector<1x256xf32> to vector<16x256xf32>
    %117 = arith.mulf %114, %116 : vector<16x256xf32>
    %118 = arith.addf %113, %117 : vector<16x256xf32>
    %c16_58 = arith.constant 16 : index
    %c400 = arith.constant 400 : index
    %119 = vector.load %arg11[%c16_58, %c400] : memref<48x768xf32, #tpu.memory_space<vmem>>, vector<16x256xf32>
    %120 = vector.extract_strided_slice %77 {offsets = [8, 0], sizes = [1, 256], strides = [1, 1]} : vector<11x256xf32> to vector<1x256xf32>
    %121 = vector.broadcast %120 : vector<1x256xf32> to vector<16x256xf32>
    %122 = arith.mulf %119, %121 : vector<16x256xf32>
    %123 = arith.addf %118, %122 : vector<16x256xf32>
    %c16_59 = arith.constant 16 : index
    %c448 = arith.constant 448 : index
    %124 = vector.load %arg11[%c16_59, %c448] : memref<48x768xf32, #tpu.memory_space<vmem>>, vector<16x256xf32>
    %125 = vector.extract_strided_slice %77 {offsets = [9, 0], sizes = [1, 256], strides = [1, 1]} : vector<11x256xf32> to vector<1x256xf32>
    %126 = vector.broadcast %125 : vector<1x256xf32> to vector<16x256xf32>
    %127 = arith.mulf %124, %126 : vector<16x256xf32>
    %128 = arith.addf %123, %127 : vector<16x256xf32>
    %c16_60 = arith.constant 16 : index
    %c496 = arith.constant 496 : index
    %129 = vector.load %arg11[%c16_60, %c496] : memref<48x768xf32, #tpu.memory_space<vmem>>, vector<16x256xf32>
    %130 = vector.extract_strided_slice %77 {offsets = [10, 0], sizes = [1, 256], strides = [1, 1]} : vector<11x256xf32> to vector<1x256xf32>
    %131 = vector.broadcast %130 : vector<1x256xf32> to vector<16x256xf32>
    %132 = arith.mulf %129, %131 : vector<16x256xf32>
    %133 = arith.addf %128, %132 : vector<16x256xf32>
    %c0_61 = arith.constant 0 : index
    %c0_62 = arith.constant 0 : index
    %134 = vector.load %arg7[%c0_61, %c0_62] : memref<1x256xf32, #tpu.memory_space<vmem>>, vector<1x256xf32>
    %135 = vector.broadcast %134 : vector<1x256xf32> to vector<16x256xf32>
    %136 = arith.addf %133, %135 : vector<16x256xf32>
    %c16_63 = arith.constant 16 : index
    %c256_64 = arith.constant 256 : index
    %137 = vector.load %arg12[%c16_63, %c256_64] : memref<48x768xf32, #tpu.memory_space<vmem>>, vector<16x256xf32>
    tpu.vector_store %arg12[%c16_63, %c256_64], %136 {strides = array<i32>} : memref<48x768xf32, #tpu.memory_space<vmem>>, vector<16x256xf32>,
    %c0_65 = arith.constant 0 : index
    %c0_66 = arith.constant 0 : index
    %138 = vector.load %arg8[%c0_65, %c0_66] : memref<11x256xf32, #tpu.memory_space<vmem>>, vector<11x256xf32>
    %cst_67 = arith.constant 0.000000e+00 : f32
    %139 = vector.broadcast %cst_67 : f32 to vector<16x256xf32>
    %c1 = arith.constant 1 : index
    %c256_68 = arith.constant 256 : index
    %140 = vector.load %arg12[%c1, %c256_68] : memref<48x768xf32, #tpu.memory_space<vmem>>, vector<16x256xf32>
    %141 = vector.extract_strided_slice %138 {offsets = [0, 0], sizes = [1, 256], strides = [1, 1]} : vector<11x256xf32> to vector<1x256xf32>
    %142 = vector.broadcast %141 : vector<1x256xf32> to vector<16x256xf32>
    %143 = arith.mulf %140, %142 : vector<16x256xf32>
    %144 = arith.addf %139, %143 : vector<16x256xf32>
    %c4 = arith.constant 4 : index
    %c256_69 = arith.constant 256 : index
    %145 = vector.load %arg12[%c4, %c256_69] : memref<48x768xf32, #tpu.memory_space<vmem>>, vector<16x256xf32>
    %146 = vector.extract_strided_slice %138 {offsets = [1, 0], sizes = [1, 256], strides = [1, 1]} : vector<11x256xf32> to vector<1x256xf32>
    %147 = vector.broadcast %146 : vector<1x256xf32> to vector<16x256xf32>
    %148 = arith.mulf %145, %147 : vector<16x256xf32>
    %149 = arith.addf %144, %148 : vector<16x256xf32>
    %c7 = arith.constant 7 : index
    %c256_70 = arith.constant 256 : index
    %150 = vector.load %arg12[%c7, %c256_70] : memref<48x768xf32, #tpu.memory_space<vmem>>, vector<16x256xf32>
    %151 = vector.extract_strided_slice %138 {offsets = [2, 0], sizes = [1, 256], strides = [1, 1]} : vector<11x256xf32> to vector<1x256xf32>
    %152 = vector.broadcast %151 : vector<1x256xf32> to vector<16x256xf32>
    %153 = arith.mulf %150, %152 : vector<16x256xf32>
    %154 = arith.addf %149, %153 : vector<16x256xf32>
    %c10 = arith.constant 10 : index
    %c256_71 = arith.constant 256 : index
    %155 = vector.load %arg12[%c10, %c256_71] : memref<48x768xf32, #tpu.memory_space<vmem>>, vector<16x256xf32>
    %156 = vector.extract_strided_slice %138 {offsets = [3, 0], sizes = [1, 256], strides = [1, 1]} : vector<11x256xf32> to vector<1x256xf32>
    %157 = vector.broadcast %156 : vector<1x256xf32> to vector<16x256xf32>
    %158 = arith.mulf %155, %157 : vector<16x256xf32>
    %159 = arith.addf %154, %158 : vector<16x256xf32>
    %c13 = arith.constant 13 : index
    %c256_72 = arith.constant 256 : index
    %160 = vector.load %arg12[%c13, %c256_72] : memref<48x768xf32, #tpu.memory_space<vmem>>, vector<16x256xf32>
    %161 = vector.extract_strided_slice %138 {offsets = [4, 0], sizes = [1, 256], strides = [1, 1]} : vector<11x256xf32> to vector<1x256xf32>
    %162 = vector.broadcast %161 : vector<1x256xf32> to vector<16x256xf32>
    %163 = arith.mulf %160, %162 : vector<16x256xf32>
    %164 = arith.addf %159, %163 : vector<16x256xf32>
    %c16_73 = arith.constant 16 : index
    %c256_74 = arith.constant 256 : index
    %165 = vector.load %arg12[%c16_73, %c256_74] : memref<48x768xf32, #tpu.memory_space<vmem>>, vector<16x256xf32>
    %166 = vector.extract_strided_slice %138 {offsets = [5, 0], sizes = [1, 256], strides = [1, 1]} : vector<11x256xf32> to vector<1x256xf32>
    %167 = vector.broadcast %166 : vector<1x256xf32> to vector<16x256xf32>
    %168 = arith.mulf %165, %167 : vector<16x256xf32>
    %169 = arith.addf %164, %168 : vector<16x256xf32>
    %c19 = arith.constant 19 : index
    %c256_75 = arith.constant 256 : index
    %170 = vector.load %arg12[%c19, %c256_75] : memref<48x768xf32, #tpu.memory_space<vmem>>, vector<16x256xf32>
    %171 = vector.extract_strided_slice %138 {offsets = [6, 0], sizes = [1, 256], strides = [1, 1]} : vector<11x256xf32> to vector<1x256xf32>
    %172 = vector.broadcast %171 : vector<1x256xf32> to vector<16x256xf32>
    %173 = arith.mulf %170, %172 : vector<16x256xf32>
    %174 = arith.addf %169, %173 : vector<16x256xf32>
    %c22 = arith.constant 22 : index
    %c256_76 = arith.constant 256 : index
    %175 = vector.load %arg12[%c22, %c256_76] : memref<48x768xf32, #tpu.memory_space<vmem>>, vector<16x256xf32>
    %176 = vector.extract_strided_slice %138 {offsets = [7, 0], sizes = [1, 256], strides = [1, 1]} : vector<11x256xf32> to vector<1x256xf32>
    %177 = vector.broadcast %176 : vector<1x256xf32> to vector<16x256xf32>
    %178 = arith.mulf %175, %177 : vector<16x256xf32>
    %179 = arith.addf %174, %178 : vector<16x256xf32>
    %c25 = arith.constant 25 : index
    %c256_77 = arith.constant 256 : index
    %180 = vector.load %arg12[%c25, %c256_77] : memref<48x768xf32, #tpu.memory_space<vmem>>, vector<16x256xf32>
    %181 = vector.extract_strided_slice %138 {offsets = [8, 0], sizes = [1, 256], strides = [1, 1]} : vector<11x256xf32> to vector<1x256xf32>
    %182 = vector.broadcast %181 : vector<1x256xf32> to vector<16x256xf32>
    %183 = arith.mulf %180, %182 : vector<16x256xf32>
    %184 = arith.addf %179, %183 : vector<16x256xf32>
    %c28 = arith.constant 28 : index
    %c256_78 = arith.constant 256 : index
    %185 = vector.load %arg12[%c28, %c256_78] : memref<48x768xf32, #tpu.memory_space<vmem>>, vector<16x256xf32>
    %186 = vector.extract_strided_slice %138 {offsets = [9, 0], sizes = [1, 256], strides = [1, 1]} : vector<11x256xf32> to vector<1x256xf32>
    %187 = vector.broadcast %186 : vector<1x256xf32> to vector<16x256xf32>
    %188 = arith.mulf %185, %187 : vector<16x256xf32>
    %189 = arith.addf %184, %188 : vector<16x256xf32>
    %c31 = arith.constant 31 : index
    %c256_79 = arith.constant 256 : index
    %190 = vector.load %arg12[%c31, %c256_79] : memref<48x768xf32, #tpu.memory_space<vmem>>, vector<16x256xf32>
    %191 = vector.extract_strided_slice %138 {offsets = [10, 0], sizes = [1, 256], strides = [1, 1]} : vector<11x256xf32> to vector<1x256xf32>
    %192 = vector.broadcast %191 : vector<1x256xf32> to vector<16x256xf32>
    %193 = arith.mulf %190, %192 : vector<16x256xf32>
    %194 = arith.addf %189, %193 : vector<16x256xf32>
    %c0_80 = arith.constant 0 : index
    %c0_81 = arith.constant 0 : index
    %195 = vector.load %arg9[%c0_80, %c0_81] : memref<1x256xf32, #tpu.memory_space<vmem>>, vector<1x256xf32>
    %196 = vector.broadcast %195 : vector<1x256xf32> to vector<16x256xf32>
    %197 = arith.addf %194, %196 : vector<16x256xf32>
    %c0_82 = arith.constant 0 : index
    %c0_83 = arith.constant 0 : index
    %c0_84 = arith.constant 0 : index
    %198 = vector.load %arg10[%c0_82, %c0_83, %c0_84] : memref<1x16x256xf32, #tpu.memory_space<vmem>>, vector<1x16x256xf32>
    %199 = vector.shape_cast %198 : vector<1x16x256xf32> to vector<16x256xf32>
    %200 = vector.shape_cast %197 : vector<16x256xf32> to vector<1x16x256xf32>
    tpu.vector_store %arg10[%c0_82, %c0_83, %c0_84], %200 {strides = array<i32>} : memref<1x16x256xf32, #tpu.memory_space<vmem>>, vector<1x16x256xf32>,
    return
  }
  func.func @transform_0(%arg0: i32) -> (i32, i32, i32) {
    %c0_i32 = arith.constant 0 : i32
    %c0_i32_0 = arith.constant 0 : i32
    %c0_i32_1 = arith.constant 0 : i32
    return %arg0, %c0_i32, %c0_i32_0 : i32, i32, i32
  }
  func.func @transform_1(%arg0: i32) -> (i32, i32) {
    %c0_i32 = arith.constant 0 : i32
    %c0_i32_0 = arith.constant 0 : i32
    %c0_i32_1 = arith.constant 0 : i32
    return %c0_i32, %c0_i32_0 : i32, i32
  }
  func.func @transform_2(%arg0: i32) -> (i32, i32) {
    %c0_i32 = arith.constant 0 : i32
    %c0_i32_0 = arith.constant 0 : i32
    %c0_i32_1 = arith.constant 0 : i32
    return %c0_i32, %c0_i32_0 : i32, i32
  }
  func.func @transform_3(%arg0: i32) -> (i32, i32) {
    %c0_i32 = arith.constant 0 : i32
    %c0_i32_0 = arith.constant 0 : i32
    %c0_i32_1 = arith.constant 0 : i32
    return %c0_i32, %c0_i32_0 : i32, i32
  }
  func.func @transform_4(%arg0: i32) -> (i32, i32) {
    %c0_i32 = arith.constant 0 : i32
    %c0_i32_0 = arith.constant 0 : i32
    %c0_i32_1 = arith.constant 0 : i32
    return %c0_i32, %c0_i32_0 : i32, i32
  }
  func.func @transform_5(%arg0: i32) -> (i32, i32) {
    %c0_i32 = arith.constant 0 : i32
    %c0_i32_0 = arith.constant 0 : i32
    %c0_i32_1 = arith.constant 0 : i32
    return %c0_i32, %c0_i32_0 : i32, i32
  }
  func.func @transform_6(%arg0: i32) -> (i32, i32) {
    %c0_i32 = arith.constant 0 : i32
    %c0_i32_0 = arith.constant 0 : i32
    %c0_i32_1 = arith.constant 0 : i32
    return %c0_i32, %c0_i32_0 : i32, i32
  }
  func.func @transform_7(%arg0: i32) -> (i32, i32) {
    %c0_i32 = arith.constant 0 : i32
    %c0_i32_0 = arith.constant 0 : i32
    %c0_i32_1 = arith.constant 0 : i32
    return %c0_i32, %c0_i32_0 : i32, i32
  }
  func.func @transform_8(%arg0: i32) -> (i32, i32) {
    %c0_i32 = arith.constant 0 : i32
    %c0_i32_0 = arith.constant 0 : i32
    %c0_i32_1 = arith.constant 0 : i32
    return %c0_i32, %c0_i32_0 : i32, i32
  }
  func.func @transform_9(%arg0: i32) -> (i32, i32, i32) {
    %c0_i32 = arith.constant 0 : i32
    %c0_i32_0 = arith.constant 0 : i32
    %c0_i32_1 = arith.constant 0 : i32
    return %arg0, %c0_i32, %c0_i32_0 : i32, i32, i32
  }
}

module attributes {stable_mosaic.version = 11 : i64} {
  func.func @_mul_proj_kernel(%arg0: i32, %arg1: memref<256x16xf32, #tpu.memory_space<vmem>>, %arg2: memref<256x16xf32, #tpu.memory_space<vmem>>, %arg3: memref<256x16xf32, #tpu.memory_space<vmem>>, %arg4: memref<256x16xf32, #tpu.memory_space<vmem>>, %arg5: memref<256x64xf32, #tpu.memory_space<vmem>>, %arg6: memref<16x64xbf16, #tpu.memory_space<vmem>>, %arg7: memref<16x64xbf16, #tpu.memory_space<vmem>>, %arg8: memref<16x64xbf16, #tpu.memory_space<vmem>>, %arg9: memref<16x64xbf16, #tpu.memory_space<vmem>>, %arg10: memref<1x64xf32, #tpu.memory_space<vmem>>, %arg11: memref<256x64xf32, #tpu.memory_space<vmem>>) attributes {dimension_semantics = [#tpu.dimension_semantics<parallel>], iteration_bounds = array<i64: 2>, scalar_prefetch = 0 : i64, scratch_operands = 0 : i64, tpu.core_type = #tpu.core_type<tc>, window_params = [{transform_indices = @transform_0, window_bounds = array<i64: 256, 16>}, {transform_indices = @transform_1, window_bounds = array<i64: 256, 16>}, {transform_indices = @transform_2, window_bounds = array<i64: 256, 16>}, {transform_indices = @transform_3, window_bounds = array<i64: 256, 16>}, {transform_indices = @transform_4, window_bounds = array<i64: 256, 64>}, {pipeline_mode = #tpu.pipeline_mode<synchronous>, transform_indices = @transform_5, window_bounds = array<i64: 16, 64>}, {pipeline_mode = #tpu.pipeline_mode<synchronous>, transform_indices = @transform_6, window_bounds = array<i64: 16, 64>}, {pipeline_mode = #tpu.pipeline_mode<synchronous>, transform_indices = @transform_7, window_bounds = array<i64: 16, 64>}, {pipeline_mode = #tpu.pipeline_mode<synchronous>, transform_indices = @transform_8, window_bounds = array<i64: 16, 64>}, {pipeline_mode = #tpu.pipeline_mode<synchronous>, transform_indices = @transform_9, window_bounds = array<i64: 1, 64>}, {transform_indices = @transform_10, window_bounds = array<i64: 256, 64>}]} {
    %c0 = arith.constant 0 : index
    %c0_0 = arith.constant 0 : index
    %0 = vector.load %arg5[%c0, %c0_0] : memref<256x64xf32, #tpu.memory_space<vmem>>, vector<256x64xf32>
    %c0_1 = arith.constant 0 : index
    %c0_2 = arith.constant 0 : index
    %1 = vector.load %arg1[%c0_1, %c0_2] : memref<256x16xf32, #tpu.memory_space<vmem>>, vector<256x16xf32>
    %2 = vector.extract_strided_slice %0 {offsets = [0, 0], sizes = [256, 16], strides = [1, 1]} : vector<256x64xf32> to vector<256x16xf32>
    %3 = arith.mulf %1, %2 : vector<256x16xf32>
    %4 = arith.truncf %3 : vector<256x16xf32> to vector<256x16xbf16>
    %c0_3 = arith.constant 0 : index
    %c0_4 = arith.constant 0 : index
    %5 = vector.load %arg6[%c0_3, %c0_4] : memref<16x64xbf16, #tpu.memory_space<vmem>>, vector<16x64xbf16>
    %cst = arith.constant dense<0.000000e+00> : vector<256x64xf32>
    %6 = tpu.matmul %4, %5, %cst {dimension_numbers = #tpu.dot_dimension_numbers<[1], [0], [0], [1], [0, 0, 1, 1], [], []>} : vector<256x16xbf16>, vector<16x64xbf16>, vector<256x64xf32> -> vector<256x64xf32>
    %c0_5 = arith.constant 0 : index
    %c0_6 = arith.constant 0 : index
    %7 = vector.load %arg2[%c0_5, %c0_6] : memref<256x16xf32, #tpu.memory_space<vmem>>, vector<256x16xf32>
    %8 = vector.extract_strided_slice %0 {offsets = [0, 16], sizes = [256, 16], strides = [1, 1]} : vector<256x64xf32> to vector<256x16xf32>
    %9 = arith.mulf %7, %8 : vector<256x16xf32>
    %10 = arith.truncf %9 : vector<256x16xf32> to vector<256x16xbf16>
    %c0_7 = arith.constant 0 : index
    %c0_8 = arith.constant 0 : index
    %11 = vector.load %arg7[%c0_7, %c0_8] : memref<16x64xbf16, #tpu.memory_space<vmem>>, vector<16x64xbf16>
    %cst_9 = arith.constant dense<0.000000e+00> : vector<256x64xf32>
    %12 = tpu.matmul %10, %11, %cst_9 {dimension_numbers = #tpu.dot_dimension_numbers<[1], [0], [0], [1], [0, 0, 1, 1], [], []>} : vector<256x16xbf16>, vector<16x64xbf16>, vector<256x64xf32> -> vector<256x64xf32>
    %13 = arith.addf %6, %12 : vector<256x64xf32>
    %c0_10 = arith.constant 0 : index
    %c0_11 = arith.constant 0 : index
    %14 = vector.load %arg3[%c0_10, %c0_11] : memref<256x16xf32, #tpu.memory_space<vmem>>, vector<256x16xf32>
    %15 = vector.extract_strided_slice %0 {offsets = [0, 32], sizes = [256, 16], strides = [1, 1]} : vector<256x64xf32> to vector<256x16xf32>
    %16 = arith.mulf %14, %15 : vector<256x16xf32>
    %17 = arith.truncf %16 : vector<256x16xf32> to vector<256x16xbf16>
    %c0_12 = arith.constant 0 : index
    %c0_13 = arith.constant 0 : index
    %18 = vector.load %arg8[%c0_12, %c0_13] : memref<16x64xbf16, #tpu.memory_space<vmem>>, vector<16x64xbf16>
    %cst_14 = arith.constant dense<0.000000e+00> : vector<256x64xf32>
    %19 = tpu.matmul %17, %18, %cst_14 {dimension_numbers = #tpu.dot_dimension_numbers<[1], [0], [0], [1], [0, 0, 1, 1], [], []>} : vector<256x16xbf16>, vector<16x64xbf16>, vector<256x64xf32> -> vector<256x64xf32>
    %20 = arith.addf %13, %19 : vector<256x64xf32>
    %c0_15 = arith.constant 0 : index
    %c0_16 = arith.constant 0 : index
    %21 = vector.load %arg4[%c0_15, %c0_16] : memref<256x16xf32, #tpu.memory_space<vmem>>, vector<256x16xf32>
    %22 = vector.extract_strided_slice %0 {offsets = [0, 48], sizes = [256, 16], strides = [1, 1]} : vector<256x64xf32> to vector<256x16xf32>
    %23 = arith.mulf %21, %22 : vector<256x16xf32>
    %24 = arith.truncf %23 : vector<256x16xf32> to vector<256x16xbf16>
    %c0_17 = arith.constant 0 : index
    %c0_18 = arith.constant 0 : index
    %25 = vector.load %arg9[%c0_17, %c0_18] : memref<16x64xbf16, #tpu.memory_space<vmem>>, vector<16x64xbf16>
    %cst_19 = arith.constant dense<0.000000e+00> : vector<256x64xf32>
    %26 = tpu.matmul %24, %25, %cst_19 {dimension_numbers = #tpu.dot_dimension_numbers<[1], [0], [0], [1], [0, 0, 1, 1], [], []>} : vector<256x16xbf16>, vector<16x64xbf16>, vector<256x64xf32> -> vector<256x64xf32>
    %27 = arith.addf %20, %26 : vector<256x64xf32>
    %c0_20 = arith.constant 0 : index
    %c0_21 = arith.constant 0 : index
    %28 = vector.load %arg10[%c0_20, %c0_21] : memref<1x64xf32, #tpu.memory_space<vmem>>, vector<1x64xf32>
    %29 = vector.broadcast %28 : vector<1x64xf32> to vector<256x64xf32>
    %30 = arith.addf %27, %29 : vector<256x64xf32>
    %c0_22 = arith.constant 0 : index
    %c0_23 = arith.constant 0 : index
    %31 = vector.load %arg11[%c0_22, %c0_23] : memref<256x64xf32, #tpu.memory_space<vmem>>, vector<256x64xf32>
    tpu.vector_store %arg11[%c0_22, %c0_23], %30 {strides = array<i32>} : memref<256x64xf32, #tpu.memory_space<vmem>>, vector<256x64xf32>,
    return
  }
  func.func @transform_0(%arg0: i32) -> (i32, i32) {
    %c0_i32 = arith.constant 0 : i32
    %c0_i32_0 = arith.constant 0 : i32
    return %arg0, %c0_i32 : i32, i32
  }
  func.func @transform_1(%arg0: i32) -> (i32, i32) {
    %c0_i32 = arith.constant 0 : i32
    %c0_i32_0 = arith.constant 0 : i32
    return %arg0, %c0_i32 : i32, i32
  }
  func.func @transform_2(%arg0: i32) -> (i32, i32) {
    %c0_i32 = arith.constant 0 : i32
    %c0_i32_0 = arith.constant 0 : i32
    return %arg0, %c0_i32 : i32, i32
  }
  func.func @transform_3(%arg0: i32) -> (i32, i32) {
    %c0_i32 = arith.constant 0 : i32
    %c0_i32_0 = arith.constant 0 : i32
    return %arg0, %c0_i32 : i32, i32
  }
  func.func @transform_4(%arg0: i32) -> (i32, i32) {
    %c0_i32 = arith.constant 0 : i32
    %c0_i32_0 = arith.constant 0 : i32
    return %arg0, %c0_i32 : i32, i32
  }
  func.func @transform_5(%arg0: i32) -> (i32, i32) {
    %c0_i32 = arith.constant 0 : i32
    %c0_i32_0 = arith.constant 0 : i32
    %c0_i32_1 = arith.constant 0 : i32
    return %c0_i32, %c0_i32_0 : i32, i32
  }
  func.func @transform_6(%arg0: i32) -> (i32, i32) {
    %c0_i32 = arith.constant 0 : i32
    %c0_i32_0 = arith.constant 0 : i32
    %c0_i32_1 = arith.constant 0 : i32
    return %c0_i32, %c0_i32_0 : i32, i32
  }
  func.func @transform_7(%arg0: i32) -> (i32, i32) {
    %c0_i32 = arith.constant 0 : i32
    %c0_i32_0 = arith.constant 0 : i32
    %c0_i32_1 = arith.constant 0 : i32
    return %c0_i32, %c0_i32_0 : i32, i32
  }
  func.func @transform_8(%arg0: i32) -> (i32, i32) {
    %c0_i32 = arith.constant 0 : i32
    %c0_i32_0 = arith.constant 0 : i32
    %c0_i32_1 = arith.constant 0 : i32
    return %c0_i32, %c0_i32_0 : i32, i32
  }
  func.func @transform_9(%arg0: i32) -> (i32, i32) {
    %c0_i32 = arith.constant 0 : i32
    %c0_i32_0 = arith.constant 0 : i32
    %c0_i32_1 = arith.constant 0 : i32
    return %c0_i32, %c0_i32_0 : i32, i32
  }
  func.func @transform_10(%arg0: i32) -> (i32, i32) {
    %c0_i32 = arith.constant 0 : i32
    %c0_i32_0 = arith.constant 0 : i32
    return %arg0, %c0_i32 : i32, i32
  }
}

</mosaic_0001>

<llo_original>
// kernel: tile.102
$region0: #{tile.102}
  #allocation0 [shape = 's32[1]{0}', space=sflag, size = 0x4, scoped, tag = 'scoped memory for tile.102']
  %s0 = inlined_call_operand.vmem [shape: f32[16], index: 0, kind: input, shape index: {}]
  %s1 = inlined_call_operand.vmem [shape: f32[16,16], index: 1, kind: output, shape index: {}]
  // Predicated region
  $region2: #{tile.102} parent=0 // pred_check
    _
  $region3: #{tile.102} parent=0 // pred_check_branch
    %3 = sbr.rel (0) target = $region5
  $region4: #{tile.102} parent=0 // pred_region
    _
  $region5: #{tile.102} parent=0 // pred_fallthru
    _
  %v4 = vld [vmem:[%s0] ss:$0 sm:$0xff]
  %5 = vst [vmem:[%s1] sm:$0xff] %v4
  %s6 = scalar_lea.vmem %s1, 8
  %7 = vst [vmem:[%s6] sm:$0xff] %v4

// kernel: tile.103
$region0: #{tile.103}
  %s0 = inlined_call_operand.vmem [shape: f32[16,16], index: 0, kind: input, shape index: {}]
  %s1 = inlined_call_operand.vmem [shape: f32[1,256], index: 1, kind: output, shape index: {}]
  $region1: #{tile.103} parent=0
    #allocation0 [shape = 'u8[8192]{0}', space=vmem, size = 0x2000, scoped, tag = 'scoped mem for output reshape']
    %s2 = smov 3
    %v3 = vld [vmem:[%s0] ss:$8 sm:%s2]
    %vm4 = vcmask 130048
    %5 = vst.msk [vmem:[#allocation0] ss:$8 sm:$0x3] %vm4, %v3
    %s6 = scalar_lea.vmem %s0, 7
    %s7 = smov 3
    %v8 = vld [vmem:[%s6] ss:$8 sm:%s7]
    %9 = vrot.lane.b32.xlu0 %v8, 112
    %v10 = vpop.permute.xlu0 %9
    %vm11 = vcmask 1048448
    %12 = vst.msk [vmem:[#allocation0] ss:$8 sm:$0x3] %vm11, %v10
    %s13 = scalar_lea.vmem %s0, 6
    %s14 = smov 3
    %v15 = vld [vmem:[%s13] ss:$8 sm:%s14]
    %16 = vrot.lane.b32.xlu0 %v15, 96
    %v17 = vpop.permute.xlu0 %16
    %vm18 = vcmask 917248
    %19 = vst.msk [vmem:[#allocation0] ss:$8 sm:$0x3] %vm18, %v17
    %s20 = scalar_lea.vmem %s0, 5
    %s21 = smov 3
    %v22 = vld [vmem:[%s20] ss:$8 sm:%s21]
    %23 = vrot.lane.b32.xlu0 %v22, 80
    %v24 = vpop.permute.xlu0 %23
    %vm25 = vcmask 786048
    %26 = vst.msk [vmem:[#allocation0] ss:$8 sm:$0x3] %vm25, %v24
    %s27 = scalar_lea.vmem %s0, 4
    %s28 = smov 3
    %v29 = vld [vmem:[%s27] ss:$8 sm:%s28]
    %30 = vrot.lane.b32.xlu0 %v29, 64
    %v31 = vpop.permute.xlu0 %30
    %vm32 = vcmask 654848
    %33 = vst.msk [vmem:[#allocation0] ss:$8 sm:$0x3] %vm32, %v31
    %s34 = scalar_lea.vmem %s0, 3
    %s35 = smov 3
    %v36 = vld [vmem:[%s34] ss:$8 sm:%s35]
    %37 = vrot.lane.b32.xlu0 %v36, 48
    %v38 = vpop.permute.xlu0 %37
    %vm39 = vcmask 523648
    %40 = vst.msk [vmem:[#allocation0] ss:$8 sm:$0x3] %vm39, %v38
    %s41 = scalar_lea.vmem %s0, 2
    %s42 = smov 3
    %v43 = vld [vmem:[%s41] ss:$8 sm:%s42]
    %44 = vrot.lane.b32.xlu0 %v43, 32
    %v45 = vpop.permute.xlu0 %44
    %vm46 = vcmask 392448
    %47 = vst.msk [vmem:[#allocation0] ss:$8 sm:$0x3] %vm46, %v45
    %s48 = scalar_lea.vmem %s0, 1
    %s49 = smov 3
    %v50 = vld [vmem:[%s48] ss:$8 sm:%s49]
    %51 = vrot.lane.b32.xlu0 %v50, 16
    %v52 = vpop.permute.xlu0 %51
    %vm53 = vcmask 261248
    %54 = vst.msk [vmem:[#allocation0] ss:$8 sm:$0x3] %vm53, %v52
    %s56 = sshll.u32 1, 1
    %s57 = ssub.s32 %s56, 1
    %v59 = vld [vmem:[#allocation0] sm:%s57]
    %s60 = sshll.u32 1, 1
    %s61 = ssub.s32 %s60, 1
    %62 = vst [vmem:[%s1] sm:%s61] %v59
    %s63 = scalar_lea.vmem [#allocation0], 8
    %v64 = vld [vmem:[%s63] sm:%s57]
    %s65 = sshll.u32 1, 1
    %s66 = ssub.s32 %s65, 1
    %s67 = scalar_lea.vmem %s1, 1
    %68 = vst [vmem:[%s67] sm:%s66] %v64

// kernel: tile.99
$region0: #{tile.99}
  %s0 = inlined_call_operand.vmem [shape: f32[3,16,16], index: 0, kind: input, shape index: {}]
  %s1 = inlined_call_operand.vmem [shape: f32[3,256], index: 1, kind: output, shape index: {}]
  $region1: #{tile.99} parent=0
    #allocation0 [shape = 'u8[8192]{0}', space=vmem, size = 0x2000, scoped, tag = 'scoped mem for output reshape']
    %v2 = vld [vmem:[%s0] ss:$8 sm:$0xf]
    %s3 = smov 48
    %v4 = vld [vmem:[%s0] ss:$8 sm:%s3]
    %vm5 = vcmask 1045508
    %v6 = vsel %vm5, %v4, %v2
    %vm7 = vcmask 130048
    %8 = vst.msk [vmem:[#allocation0] ss:$8 sm:$0x3] %vm7, %v6
    %s9 = scalar_lea.vmem [#allocation0], 4294967281
    %10 = vst.msk [vmem:[%s9] ss:$8 sm:$0xc] %vm7, %v6
    %s11 = scalar_lea.vmem [#allocation0], 4294967266
    %12 = vst.msk [vmem:[%s11] ss:$8 sm:$0x30] %vm7, %v6
    %s13 = scalar_lea.vmem %s0, 7
    %s14 = smov 3
    %v15 = vld [vmem:[%s13] ss:$16 sm:%s14]
    %s16 = scalar_lea.vmem %s0, 87
    %s17 = smov 12
    %v18 = vld [vmem:[%s16] ss:$-24 sm:%s17]
    %vm19 = vcmask 1043458
    %v20 = vsel %vm19, %v18, %v15
    %s21 = scalar_lea.vmem %s0, 4294967263
    %s22 = smov 48
    %v23 = vld [vmem:[%s21] ss:$16 sm:%s22]
    %vm24 = vcmask 1045508
    %v25 = vsel %vm24, %v23, %v20
    %26 = vrot.lane.b32.xlu0 %v25, 112
    %v27 = vpop.permute.xlu0 %26
    %vm28 = vcmask 1048448
    %29 = vst.msk [vmem:[#allocation0] sm:$0x7] %vm28, %v27
    %s30 = scalar_lea.vmem [#allocation0], 5
    %31 = vst.msk [vmem:[%s30] sm:$0x38] %vm28, %v27
    %s32 = scalar_lea.vmem %s0, 6
    %s33 = smov 3
    %v34 = vld [vmem:[%s32] ss:$16 sm:%s33]
    %s35 = scalar_lea.vmem %s0, 86
    %s36 = smov 12
    %v37 = vld [vmem:[%s35] ss:$-24 sm:%s36]
    %vm38 = vcmask 1043458
    %v39 = vsel %vm38, %v37, %v34
    %s40 = scalar_lea.vmem %s0, 4294967262
    %s41 = smov 48
    %v42 = vld [vmem:[%s40] ss:$16 sm:%s41]
    %vm43 = vcmask 1045508
    %v44 = vsel %vm43, %v42, %v39
    %45 = vrot.lane.b32.xlu0 %v44, 96
    %v46 = vpop.permute.xlu0 %45
    %vm47 = vcmask 917248
    %48 = vst.msk [vmem:[#allocation0] sm:$0x7] %vm47, %v46
    %s49 = scalar_lea.vmem [#allocation0], 5
    %50 = vst.msk [vmem:[%s49] sm:$0x38] %vm47, %v46
    %s51 = scalar_lea.vmem %s0, 5
    %s52 = smov 3
    %v53 = vld [vmem:[%s51] ss:$16 sm:%s52]
    %s54 = scalar_lea.vmem %s0, 85
    %s55 = smov 12
    %v56 = vld [vmem:[%s54] ss:$-24 sm:%s55]
    %vm57 = vcmask 1043458
    %v58 = vsel %vm57, %v56, %v53
    %s59 = scalar_lea.vmem %s0, 4294967261
    %s60 = smov 48
    %v61 = vld [vmem:[%s59] ss:$16 sm:%s60]
    %vm62 = vcmask 1045508
    %v63 = vsel %vm62, %v61, %v58
    %64 = vrot.lane.b32.xlu0 %v63, 80
    %v65 = vpop.permute.xlu0 %64
    %vm66 = vcmask 786048
    %67 = vst.msk [vmem:[#allocation0] sm:$0x7] %vm66, %v65
    %s68 = scalar_lea.vmem [#allocation0], 5
    %69 = vst.msk [vmem:[%s68] sm:$0x38] %vm66, %v65
    %s70 = scalar_lea.vmem %s0, 4
    %s71 = smov 3
    %v72 = vld [vmem:[%s70] ss:$16 sm:%s71]
    %s73 = scalar_lea.vmem %s0, 84
    %s74 = smov 12
    %v75 = vld [vmem:[%s73] ss:$-24 sm:%s74]
    %vm76 = vcmask 1043458
    %v77 = vsel %vm76, %v75, %v72
    %s78 = scalar_lea.vmem %s0, 4294967260
    %s79 = smov 48
    %v80 = vld [vmem:[%s78] ss:$16 sm:%s79]
    %vm81 = vcmask 1045508
    %v82 = vsel %vm81, %v80, %v77
    %83 = vrot.lane.b32.xlu0 %v82, 64
    %v84 = vpop.permute.xlu0 %83
    %vm85 = vcmask 654848
    %86 = vst.msk [vmem:[#allocation0] sm:$0x7] %vm85, %v84
    %s87 = scalar_lea.vmem [#allocation0], 5
    %88 = vst.msk [vmem:[%s87] sm:$0x38] %vm85, %v84
    %s89 = scalar_lea.vmem %s0, 3
    %s90 = smov 3
    %v91 = vld [vmem:[%s89] ss:$16 sm:%s90]
    %s92 = scalar_lea.vmem %s0, 83
    %s93 = smov 12
    %v94 = vld [vmem:[%s92] ss:$-24 sm:%s93]
    %vm95 = vcmask 1043458
    %v96 = vsel %vm95, %v94, %v91
    %s97 = scalar_lea.vmem %s0, 4294967259
    %s98 = smov 48
    %v99 = vld [vmem:[%s97] ss:$16 sm:%s98]
    %vm100 = vcmask 1045508
    %v101 = vsel %vm100, %v99, %v96
    %102 = vrot.lane.b32.xlu0 %v101, 48
    %v103 = vpop.permute.xlu0 %102
    %vm104 = vcmask 523648
    %105 = vst.msk [vmem:[#allocation0] sm:$0x7] %vm104, %v103
    %s106 = scalar_lea.vmem [#allocation0], 5
    %107 = vst.msk [vmem:[%s106] sm:$0x38] %vm104, %v103
    %s108 = scalar_lea.vmem %s0, 2
    %s109 = smov 3
    %v110 = vld [vmem:[%s108] ss:$16 sm:%s109]
    %s111 = scalar_lea.vmem %s0, 82
    %s112 = smov 12
    %v113 = vld [vmem:[%s111] ss:$-24 sm:%s112]
    %vm114 = vcmask 1043458
    %v115 = vsel %vm114, %v113, %v110
    %s116 = scalar_lea.vmem %s0, 4294967258
    %s117 = smov 48
    %v118 = vld [vmem:[%s116] ss:$16 sm:%s117]
    %vm119 = vcmask 1045508
    %v120 = vsel %vm119, %v118, %v115
    %121 = vrot.lane.b32.xlu0 %v120, 32
    %v122 = vpop.permute.xlu0 %121
    %vm123 = vcmask 392448
    %124 = vst.msk [vmem:[#allocation0] sm:$0x7] %vm123, %v122
    %s125 = scalar_lea.vmem [#allocation0], 5
    %126 = vst.msk [vmem:[%s125] sm:$0x38] %vm123, %v122
    %s127 = scalar_lea.vmem %s0, 1
    %s128 = smov 3
    %v129 = vld [vmem:[%s127] ss:$16 sm:%s128]
    %s130 = scalar_lea.vmem %s0, 81
    %s131 = smov 12
    %v132 = vld [vmem:[%s130] ss:$-24 sm:%s131]
    %vm133 = vcmask 1043458
    %v134 = vsel %vm133, %v132, %v129
    %s135 = scalar_lea.vmem %s0, 4294967257
    %s136 = smov 48
    %v137 = vld [vmem:[%s135] ss:$16 sm:%s136]
    %vm138 = vcmask 1045508
    %v139 = vsel %vm138, %v137, %v134
    %140 = vrot.lane.b32.xlu0 %v139, 16
    %v141 = vpop.permute.xlu0 %140
    %vm142 = vcmask 261248
    %143 = vst.msk [vmem:[#allocation0] sm:$0x7] %vm142, %v141
    %s144 = scalar_lea.vmem [#allocation0], 5
    %145 = vst.msk [vmem:[%s144] sm:$0x38] %vm142, %v141
    %s147 = sshll.u32 1, 4
    %s148 = ssub.s32 %s147, 1
    %v150 = vld [vmem:[#allocation0] sm:%s148]
    %s151 = sshll.u32 1, 4
    %s152 = ssub.s32 %s151, 1
    %153 = vst [vmem:[%s1] sm:%s152] %v150
    %s154 = scalar_lea.vmem [#allocation0], 8
    %v155 = vld [vmem:[%s154] sm:%s148]
    %s156 = sshll.u32 1, 4
    %s157 = ssub.s32 %s156, 1
    %s158 = scalar_lea.vmem %s1, 4
    %159 = vst [vmem:[%s158] sm:%s157] %v155

// kernel: tile.115
$region0: #{tile.115}
  %s0 = inlined_call_operand.vmem [shape: f32[5,16,16], index: 0, kind: input, shape index: {}]
  %s1 = inlined_call_operand.vmem [shape: f32[5,256], index: 1, kind: output, shape index: {}]
  %v2 = vld [vmem:[%s0] ss:$8 sm:$0xf]
  %v3 = vld [vmem:[%s0] ss:$8 sm:$0xf0]
  %vm4 = vcmask 1047556
  %v5 = vsel %vm4, %v3, %v2
  %vm6 = vcmask 130048
  %7 = vst.msk [vmem:[%s1] ss:$8 sm:$0x3] %vm6, %v5
  %s8 = scalar_lea.vmem %s1, 4294967281
  %9 = vst.msk [vmem:[%s8] ss:$8 sm:$0xc] %vm6, %v5
  %s10 = scalar_lea.vmem %s1, 4294967266
  %11 = vst.msk [vmem:[%s10] ss:$8 sm:$0x30] %vm6, %v5
  %s12 = scalar_lea.vmem %s1, 4294967251
  %13 = vst.msk [vmem:[%s12] ss:$8 sm:$0xc0] %vm6, %v5
  %s14 = scalar_lea.vmem %s0, 64
  %s15 = smov 3
  %v16 = vld [vmem:[%s14] ss:$8 sm:%s15]
  %vm17 = vcmask 130048
  %s18 = scalar_lea.vmem %s1, 4
  %19 = vst.msk [vmem:[%s18] ss:$8 sm:$0x3] %vm17, %v16
  %s20 = scalar_lea.vmem %s0, 7
  %s21 = smov 3
  %v22 = vld [vmem:[%s20] ss:$16 sm:%s21]
  %s23 = scalar_lea.vmem %s0, 7
  %s24 = smov 12
  %v25 = vld [vmem:[%s23] ss:$16 sm:%s24]
  %vm26 = vcmask 1043458
  %v27 = vsel %vm26, %v25, %v22
  %s28 = scalar_lea.vmem %s0, 295
  %s29 = smov 48
  %v30 = vld [vmem:[%s28] ss:$-56 sm:%s29]
  %vm31 = vcmask 1045508
  %v32 = vsel %vm31, %v30, %v27
  %s33 = scalar_lea.vmem %s0, 4294967231
  %s34 = smov 192
  %v35 = vld [vmem:[%s33] ss:$16 sm:%s34]
  %vm36 = vcmask 1047558
  %v37 = vsel %vm36, %v35, %v32
  %38 = vrot.lane.b32.xlu0 %v37, 112
  %v39 = vpop.permute.xlu0 %38
  %vm40 = vcmask 1048448
  %41 = vst.msk [vmem:[%s1] sm:$0x1f] %vm40, %v39
  %s42 = scalar_lea.vmem %s1, 3
  %43 = vst.msk [vmem:[%s42] sm:$0xe0] %vm40, %v39
  %s44 = scalar_lea.vmem %s0, 63
  %s45 = smov 3
  %v46 = vld [vmem:[%s44] ss:$16 sm:%s45]
  %47 = vrot.lane.b32.xlu0 %v46, 112
  %v48 = vpop.permute.xlu0 %47
  %vm49 = vcmask 1048448
  %s50 = scalar_lea.vmem %s1, 11
  %51 = vst.msk [vmem:[%s50] sm:$0x3] %vm49, %v48
  %s52 = scalar_lea.vmem %s0, 6
  %s53 = smov 3
  %v54 = vld [vmem:[%s52] ss:$16 sm:%s53]
  %s55 = scalar_lea.vmem %s0, 6
  %s56 = smov 12
  %v57 = vld [vmem:[%s55] ss:$16 sm:%s56]
  %vm58 = vcmask 1043458
  %v59 = vsel %vm58, %v57, %v54
  %s60 = scalar_lea.vmem %s0, 294
  %s61 = smov 48
  %v62 = vld [vmem:[%s60] ss:$-56 sm:%s61]
  %vm63 = vcmask 1045508
  %v64 = vsel %vm63, %v62, %v59
  %s65 = scalar_lea.vmem %s0, 4294967230
  %s66 = smov 192
  %v67 = vld [vmem:[%s65] ss:$16 sm:%s66]
  %vm68 = vcmask 1047558
  %v69 = vsel %vm68, %v67, %v64
  %70 = vrot.lane.b32.xlu0 %v69, 96
  %v71 = vpop.permute.xlu0 %70
  %vm72 = vcmask 917248
  %73 = vst.msk [vmem:[%s1] sm:$0x1f] %vm72, %v71
  %s74 = scalar_lea.vmem %s1, 3
  %75 = vst.msk [vmem:[%s74] sm:$0xe0] %vm72, %v71
  %s76 = scalar_lea.vmem %s0, 62
  %s77 = smov 3
  %v78 = vld [vmem:[%s76] ss:$16 sm:%s77]
  %79 = vrot.lane.b32.xlu0 %v78, 96
  %v80 = vpop.permute.xlu0 %79
  %vm81 = vcmask 917248
  %s82 = scalar_lea.vmem %s1, 11
  %83 = vst.msk [vmem:[%s82] sm:$0x3] %vm81, %v80
  %s84 = scalar_lea.vmem %s0, 5
  %s85 = smov 3
  %v86 = vld [vmem:[%s84] ss:$16 sm:%s85]
  %s87 = scalar_lea.vmem %s0, 5
  %s88 = smov 12
  %v89 = vld [vmem:[%s87] ss:$16 sm:%s88]
  %vm90 = vcmask 1043458
  %v91 = vsel %vm90, %v89, %v86
  %s92 = scalar_lea.vmem %s0, 293
  %s93 = smov 48
  %v94 = vld [vmem:[%s92] ss:$-56 sm:%s93]
  %vm95 = vcmask 1045508
  %v96 = vsel %vm95, %v94, %v91
  %s97 = scalar_lea.vmem %s0, 4294967229
  %s98 = smov 192
  %v99 = vld [vmem:[%s97] ss:$16 sm:%s98]
  %vm100 = vcmask 1047558
  %v101 = vsel %vm100, %v99, %v96
  %102 = vrot.lane.b32.xlu0 %v101, 80
  %v103 = vpop.permute.xlu0 %102
  %vm104 = vcmask 786048
  %105 = vst.msk [vmem:[%s1] sm:$0x1f] %vm104, %v103
  %s106 = scalar_lea.vmem %s1, 3
  %107 = vst.msk [vmem:[%s106] sm:$0xe0] %vm104, %v103
  %s108 = scalar_lea.vmem %s0, 61
  %s109 = smov 3
  %v110 = vld [vmem:[%s108] ss:$16 sm:%s109]
  %111 = vrot.lane.b32.xlu0 %v110, 80
  %v112 = vpop.permute.xlu0 %111
  %vm113 = vcmask 786048
  %s114 = scalar_lea.vmem %s1, 11
  %115 = vst.msk [vmem:[%s114] sm:$0x3] %vm113, %v112
  %s116 = scalar_lea.vmem %s0, 4
  %s117 = smov 3
  %v118 = vld [vmem:[%s116] ss:$16 sm:%s117]
  %s119 = scalar_lea.vmem %s0, 4
  %s120 = smov 12
  %v121 = vld [vmem:[%s119] ss:$16 sm:%s120]
  %vm122 = vcmask 1043458
  %v123 = vsel %vm122, %v121, %v118
  %s124 = scalar_lea.vmem %s0, 292
  %s125 = smov 48
  %v126 = vld [vmem:[%s124] ss:$-56 sm:%s125]
  %vm127 = vcmask 1045508
  %v128 = vsel %vm127, %v126, %v123
  %s129 = scalar_lea.vmem %s0, 4294967228
  %s130 = smov 192
  %v131 = vld [vmem:[%s129] ss:$16 sm:%s130]
  %vm132 = vcmask 1047558
  %v133 = vsel %vm132, %v131, %v128
  %134 = vrot.lane.b32.xlu0 %v133, 64
  %v135 = vpop.permute.xlu0 %134
  %vm136 = vcmask 654848
  %137 = vst.msk [vmem:[%s1] sm:$0x1f] %vm136, %v135
  %s138 = scalar_lea.vmem %s1, 3
  %139 = vst.msk [vmem:[%s138] sm:$0xe0] %vm136, %v135
  %s140 = scalar_lea.vmem %s0, 60
  %s141 = smov 3
  %v142 = vld [vmem:[%s140] ss:$16 sm:%s141]
  %143 = vrot.lane.b32.xlu0 %v142, 64
  %v144 = vpop.permute.xlu0 %143
  %vm145 = vcmask 654848
  %s146 = scalar_lea.vmem %s1, 11
  %147 = vst.msk [vmem:[%s146] sm:$0x3] %vm145, %v144
  %s148 = scalar_lea.vmem %s0, 3
  %s149 = smov 3
  %v150 = vld [vmem:[%s148] ss:$16 sm:%s149]
  %s151 = scalar_lea.vmem %s0, 3
  %s152 = smov 12
  %v153 = vld [vmem:[%s151] ss:$16 sm:%s152]
  %vm154 = vcmask 1043458
  %v155 = vsel %vm154, %v153, %v150
  %s156 = scalar_lea.vmem %s0, 291
  %s157 = smov 48
  %v158 = vld [vmem:[%s156] ss:$-56 sm:%s157]
  %vm159 = vcmask 1045508
  %v160 = vsel %vm159, %v158, %v155
  %s161 = scalar_lea.vmem %s0, 4294967227
  %s162 = smov 192
  %v163 = vld [vmem:[%s161] ss:$16 sm:%s162]
  %vm164 = vcmask 1047558
  %v165 = vsel %vm164, %v163, %v160
  %166 = vrot.lane.b32.xlu0 %v165, 48
  %v167 = vpop.permute.xlu0 %166
  %vm168 = vcmask 523648
  %169 = vst.msk [vmem:[%s1] sm:$0x1f] %vm168, %v167
  %s170 = scalar_lea.vmem %s1, 3
  %171 = vst.msk [vmem:[%s170] sm:$0xe0] %vm168, %v167
  %s172 = scalar_lea.vmem %s0, 59
  %s173 = smov 3
  %v174 = vld [vmem:[%s172] ss:$16 sm:%s173]
  %175 = vrot.lane.b32.xlu0 %v174, 48
  %v176 = vpop.permute.xlu0 %175
  %vm177 = vcmask 523648
  %s178 = scalar_lea.vmem %s1, 11
  %179 = vst.msk [vmem:[%s178] sm:$0x3] %vm177, %v176
  %s180 = scalar_lea.vmem %s0, 2
  %s181 = smov 3
  %v182 = vld [vmem:[%s180] ss:$16 sm:%s181]
  %s183 = scalar_lea.vmem %s0, 2
  %s184 = smov 12
  %v185 = vld [vmem:[%s183] ss:$16 sm:%s184]
  %vm186 = vcmask 1043458
  %v187 = vsel %vm186, %v185, %v182
  %s188 = scalar_lea.vmem %s0, 290
  %s189 = smov 48
  %v190 = vld [vmem:[%s188] ss:$-56 sm:%s189]
  %vm191 = vcmask 1045508
  %v192 = vsel %vm191, %v190, %v187
  %s193 = scalar_lea.vmem %s0, 4294967226
  %s194 = smov 192
  %v195 = vld [vmem:[%s193] ss:$16 sm:%s194]
  %vm196 = vcmask 1047558
  %v197 = vsel %vm196, %v195, %v192
  %198 = vrot.lane.b32.xlu0 %v197, 32
  %v199 = vpop.permute.xlu0 %198
  %vm200 = vcmask 392448
  %201 = vst.msk [vmem:[%s1] sm:$0x1f] %vm200, %v199
  %s202 = scalar_lea.vmem %s1, 3
  %203 = vst.msk [vmem:[%s202] sm:$0xe0] %vm200, %v199
  %s204 = scalar_lea.vmem %s0, 58
  %s205 = smov 3
  %v206 = vld [vmem:[%s204] ss:$16 sm:%s205]
  %207 = vrot.lane.b32.xlu0 %v206, 32
  %v208 = vpop.permute.xlu0 %207
  %vm209 = vcmask 392448
  %s210 = scalar_lea.vmem %s1, 11
  %211 = vst.msk [vmem:[%s210] sm:$0x3] %vm209, %v208
  %s212 = scalar_lea.vmem %s0, 1
  %s213 = smov 3
  %v214 = vld [vmem:[%s212] ss:$16 sm:%s213]
  %s215 = scalar_lea.vmem %s0, 1
  %s216 = smov 12
  %v217 = vld [vmem:[%s215] ss:$16 sm:%s216]
  %vm218 = vcmask 1043458
  %v219 = vsel %vm218, %v217, %v214
  %s220 = scalar_lea.vmem %s0, 289
  %s221 = smov 48
  %v222 = vld [vmem:[%s220] ss:$-56 sm:%s221]
  %vm223 = vcmask 1045508
  %v224 = vsel %vm223, %v222, %v219
  %s225 = scalar_lea.vmem %s0, 4294967225
  %s226 = smov 192
  %v227 = vld [vmem:[%s225] ss:$16 sm:%s226]
  %vm228 = vcmask 1047558
  %v229 = vsel %vm228, %v227, %v224
  %230 = vrot.lane.b32.xlu0 %v229, 16
  %v231 = vpop.permute.xlu0 %230
  %vm232 = vcmask 261248
  %233 = vst.msk [vmem:[%s1] sm:$0x1f] %vm232, %v231
  %s234 = scalar_lea.vmem %s1, 3
  %235 = vst.msk [vmem:[%s234] sm:$0xe0] %vm232, %v231
  %s236 = scalar_lea.vmem %s0, 57
  %s237 = smov 3
  %v238 = vld [vmem:[%s236] ss:$16 sm:%s237]
  %239 = vrot.lane.b32.xlu0 %v238, 16
  %v240 = vpop.permute.xlu0 %239
  %vm241 = vcmask 261248
  %s242 = scalar_lea.vmem %s1, 11
  %243 = vst.msk [vmem:[%s242] sm:$0x3] %vm241, %v240

// kernel: tile.147
$region0: #{tile.147}
  %s0 = inlined_call_operand.vmem [shape: f32[7,16,16], index: 0, kind: input, shape index: {}]
  %s1 = inlined_call_operand.vmem [shape: f32[7,256], index: 1, kind: output, shape index: {}]
  %v2 = vld [vmem:[%s0] ss:$8 sm:$0xf]
  %v3 = vld [vmem:[%s0] ss:$8 sm:$0xf0]
  %vm4 = vcmask 1047556
  %v5 = vsel %vm4, %v3, %v2
  %vm6 = vcmask 130048
  %7 = vst.msk [vmem:[%s1] ss:$8 sm:$0x3] %vm6, %v5
  %s8 = scalar_lea.vmem %s1, 4294967281
  %9 = vst.msk [vmem:[%s8] ss:$8 sm:$0xc] %vm6, %v5
  %s10 = scalar_lea.vmem %s1, 4294967266
  %11 = vst.msk [vmem:[%s10] ss:$8 sm:$0x30] %vm6, %v5
  %s12 = scalar_lea.vmem %s1, 4294967251
  %13 = vst.msk [vmem:[%s12] ss:$8 sm:$0xc0] %vm6, %v5
  %s14 = scalar_lea.vmem %s0, 64
  %v15 = vld [vmem:[%s14] ss:$8 sm:$0xf]
  %s16 = scalar_lea.vmem %s0, 64
  %s17 = smov 48
  %v18 = vld [vmem:[%s16] ss:$8 sm:%s17]
  %vm19 = vcmask 1045508
  %v20 = vsel %vm19, %v18, %v15
  %vm21 = vcmask 130048
  %s22 = scalar_lea.vmem %s1, 4
  %23 = vst.msk [vmem:[%s22] ss:$8 sm:$0x3] %vm21, %v20
  %s24 = scalar_lea.vmem %s1, 4294967285
  %25 = vst.msk [vmem:[%s24] ss:$8 sm:$0xc] %vm21, %v20
  %s26 = scalar_lea.vmem %s1, 4294967270
  %27 = vst.msk [vmem:[%s26] ss:$8 sm:$0x30] %vm21, %v20
  %s28 = scalar_lea.vmem %s0, 7
  %s29 = smov 3
  %v30 = vld [vmem:[%s28] ss:$16 sm:%s29]
  %s31 = scalar_lea.vmem %s0, 7
  %s32 = smov 12
  %v33 = vld [vmem:[%s31] ss:$16 sm:%s32]
  %vm34 = vcmask 1043458
  %v35 = vsel %vm34, %v33, %v30
  %s36 = scalar_lea.vmem %s0, 7
  %s37 = smov 48
  %v38 = vld [vmem:[%s36] ss:$16 sm:%s37]
  %vm39 = vcmask 1045508
  %v40 = vsel %vm39, %v38, %v35
  %s41 = scalar_lea.vmem %s0, 631
  %s42 = smov 192
  %v43 = vld [vmem:[%s41] ss:$-88 sm:%s42]
  %vm44 = vcmask 1047558
  %v45 = vsel %vm44, %v43, %v40
  %46 = vrot.lane.b32.xlu0 %v45, 112
  %v47 = vpop.permute.xlu0 %46
  %vm48 = vcmask 1048448
  %49 = vst.msk [vmem:[%s1] sm:$0x7f] %vm48, %v47
  %s50 = scalar_lea.vmem %s1, 1
  %51 = vst.msk [vmem:[%s50] sm:$0x80] %vm48, %v47
  %s52 = scalar_lea.vmem %s0, 31
  %s53 = smov 3
  %v54 = vld [vmem:[%s52] ss:$16 sm:%s53]
  %s55 = scalar_lea.vmem %s0, 31
  %s56 = smov 12
  %v57 = vld [vmem:[%s55] ss:$16 sm:%s56]
  %vm58 = vcmask 1043458
  %v59 = vsel %vm58, %v57, %v54
  %s60 = scalar_lea.vmem %s0, 31
  %s61 = smov 48
  %v62 = vld [vmem:[%s60] ss:$16 sm:%s61]
  %vm63 = vcmask 1045508
  %v64 = vsel %vm63, %v62, %v59
  %65 = vrot.lane.b32.xlu0 %v64, 112
  %v66 = vpop.permute.xlu0 %65
  %vm67 = vcmask 1048448
  %s68 = scalar_lea.vmem %s1, 9
  %69 = vst.msk [vmem:[%s68] sm:$0x3f] %vm67, %v66
  %s70 = scalar_lea.vmem %s0, 6
  %s71 = smov 3
  %v72 = vld [vmem:[%s70] ss:$16 sm:%s71]
  %s73 = scalar_lea.vmem %s0, 6
  %s74 = smov 12
  %v75 = vld [vmem:[%s73] ss:$16 sm:%s74]
  %vm76 = vcmask 1043458
  %v77 = vsel %vm76, %v75, %v72
  %s78 = scalar_lea.vmem %s0, 6
  %s79 = smov 48
  %v80 = vld [vmem:[%s78] ss:$16 sm:%s79]
  %vm81 = vcmask 1045508
  %v82 = vsel %vm81, %v80, %v77
  %s83 = scalar_lea.vmem %s0, 630
  %s84 = smov 192
  %v85 = vld [vmem:[%s83] ss:$-88 sm:%s84]
  %vm86 = vcmask 1047558
  %v87 = vsel %vm86, %v85, %v82
  %88 = vrot.lane.b32.xlu0 %v87, 96
  %v89 = vpop.permute.xlu0 %88
  %vm90 = vcmask 917248
  %91 = vst.msk [vmem:[%s1] sm:$0x7f] %vm90, %v89
  %s92 = scalar_lea.vmem %s1, 1
  %93 = vst.msk [vmem:[%s92] sm:$0x80] %vm90, %v89
  %s94 = scalar_lea.vmem %s0, 30
  %s95 = smov 3
  %v96 = vld [vmem:[%s94] ss:$16 sm:%s95]
  %s97 = scalar_lea.vmem %s0, 30
  %s98 = smov 12
  %v99 = vld [vmem:[%s97] ss:$16 sm:%s98]
  %vm100 = vcmask 1043458
  %v101 = vsel %vm100, %v99, %v96
  %s102 = scalar_lea.vmem %s0, 30
  %s103 = smov 48
  %v104 = vld [vmem:[%s102] ss:$16 sm:%s103]
  %vm105 = vcmask 1045508
  %v106 = vsel %vm105, %v104, %v101
  %107 = vrot.lane.b32.xlu0 %v106, 96
  %v108 = vpop.permute.xlu0 %107
  %vm109 = vcmask 917248
  %s110 = scalar_lea.vmem %s1, 9
  %111 = vst.msk [vmem:[%s110] sm:$0x3f] %vm109, %v108
  %s112 = scalar_lea.vmem %s0, 5
  %s113 = smov 3
  %v114 = vld [vmem:[%s112] ss:$16 sm:%s113]
  %s115 = scalar_lea.vmem %s0, 5
  %s116 = smov 12
  %v117 = vld [vmem:[%s115] ss:$16 sm:%s116]
  %vm118 = vcmask 1043458
  %v119 = vsel %vm118, %v117, %v114
  %s120 = scalar_lea.vmem %s0, 5
  %s121 = smov 48
  %v122 = vld [vmem:[%s120] ss:$16 sm:%s121]
  %vm123 = vcmask 1045508
  %v124 = vsel %vm123, %v122, %v119
  %s125 = scalar_lea.vmem %s0, 629
  %s126 = smov 192
  %v127 = vld [vmem:[%s125] ss:$-88 sm:%s126]
  %vm128 = vcmask 1047558
  %v129 = vsel %vm128, %v127, %v124
  %130 = vrot.lane.b32.xlu0 %v129, 80
  %v131 = vpop.permute.xlu0 %130
  %vm132 = vcmask 786048
  %133 = vst.msk [vmem:[%s1] sm:$0x7f] %vm132, %v131
  %s134 = scalar_lea.vmem %s1, 1
  %135 = vst.msk [vmem:[%s134] sm:$0x80] %vm132, %v131
  %s136 = scalar_lea.vmem %s0, 29
  %s137 = smov 3
  %v138 = vld [vmem:[%s136] ss:$16 sm:%s137]
  %s139 = scalar_lea.vmem %s0, 29
  %s140 = smov 12
  %v141 = vld [vmem:[%s139] ss:$16 sm:%s140]
  %vm142 = vcmask 1043458
  %v143 = vsel %vm142, %v141, %v138
  %s144 = scalar_lea.vmem %s0, 29
  %s145 = smov 48
  %v146 = vld [vmem:[%s144] ss:$16 sm:%s145]
  %vm147 = vcmask 1045508
  %v148 = vsel %vm147, %v146, %v143
  %149 = vrot.lane.b32.xlu0 %v148, 80
  %v150 = vpop.permute.xlu0 %149
  %vm151 = vcmask 786048
  %s152 = scalar_lea.vmem %s1, 9
  %153 = vst.msk [vmem:[%s152] sm:$0x3f] %vm151, %v150
  %s154 = scalar_lea.vmem %s0, 4
  %s155 = smov 3
  %v156 = vld [vmem:[%s154] ss:$16 sm:%s155]
  %s157 = scalar_lea.vmem %s0, 4
  %s158 = smov 12
  %v159 = vld [vmem:[%s157] ss:$16 sm:%s158]
  %vm160 = vcmask 1043458
  %v161 = vsel %vm160, %v159, %v156
  %s162 = scalar_lea.vmem %s0, 4
  %s163 = smov 48
  %v164 = vld [vmem:[%s162] ss:$16 sm:%s163]
  %vm165 = vcmask 1045508
  %v166 = vsel %vm165, %v164, %v161
  %s167 = scalar_lea.vmem %s0, 628
  %s168 = smov 192
  %v169 = vld [vmem:[%s167] ss:$-88 sm:%s168]
  %vm170 = vcmask 1047558
  %v171 = vsel %vm170, %v169, %v166
  %172 = vrot.lane.b32.xlu0 %v171, 64
  %v173 = vpop.permute.xlu0 %172
  %vm174 = vcmask 654848
  %175 = vst.msk [vmem:[%s1] sm:$0x7f] %vm174, %v173
  %s176 = scalar_lea.vmem %s1, 1
  %177 = vst.msk [vmem:[%s176] sm:$0x80] %vm174, %v173
  %s178 = scalar_lea.vmem %s0, 28
  %s179 = smov 3
  %v180 = vld [vmem:[%s178] ss:$16 sm:%s179]
  %s181 = scalar_lea.vmem %s0, 28
  %s182 = smov 12
  %v183 = vld [vmem:[%s181] ss:$16 sm:%s182]
  %vm184 = vcmask 1043458
  %v185 = vsel %vm184, %v183, %v180
  %s186 = scalar_lea.vmem %s0, 28
  %s187 = smov 48
  %v188 = vld [vmem:[%s186] ss:$16 sm:%s187]
  %vm189 = vcmask 1045508
  %v190 = vsel %vm189, %v188, %v185
  %191 = vrot.lane.b32.xlu0 %v190, 64
  %v192 = vpop.permute.xlu0 %191
  %vm193 = vcmask 654848
  %s194 = scalar_lea.vmem %s1, 9
  %195 = vst.msk [vmem:[%s194] sm:$0x3f] %vm193, %v192
  %s196 = scalar_lea.vmem %s0, 3
  %s197 = smov 3
  %v198 = vld [vmem:[%s196] ss:$16 sm:%s197]
  %s199 = scalar_lea.vmem %s0, 3
  %s200 = smov 12
  %v201 = vld [vmem:[%s199] ss:$16 sm:%s200]
  %vm202 = vcmask 1043458
  %v203 = vsel %vm202, %v201, %v198
  %s204 = scalar_lea.vmem %s0, 3
  %s205 = smov 48
  %v206 = vld [vmem:[%s204] ss:$16 sm:%s205]
  %vm207 = vcmask 1045508
  %v208 = vsel %vm207, %v206, %v203
  %s209 = scalar_lea.vmem %s0, 627
  %s210 = smov 192
  %v211 = vld [vmem:[%s209] ss:$-88 sm:%s210]
  %vm212 = vcmask 1047558
  %v213 = vsel %vm212, %v211, %v208
  %214 = vrot.lane.b32.xlu0 %v213, 48
  %v215 = vpop.permute.xlu0 %214
  %vm216 = vcmask 523648
  %217 = vst.msk [vmem:[%s1] sm:$0x7f] %vm216, %v215
  %s218 = scalar_lea.vmem %s1, 1
  %219 = vst.msk [vmem:[%s218] sm:$0x80] %vm216, %v215
  %s220 = scalar_lea.vmem %s0, 27
  %s221 = smov 3
  %v222 = vld [vmem:[%s220] ss:$16 sm:%s221]
  %s223 = scalar_lea.vmem %s0, 27
  %s224 = smov 12
  %v225 = vld [vmem:[%s223] ss:$16 sm:%s224]
  %vm226 = vcmask 1043458
  %v227 = vsel %vm226, %v225, %v222
  %s228 = scalar_lea.vmem %s0, 27
  %s229 = smov 48
  %v230 = vld [vmem:[%s228] ss:$16 sm:%s229]
  %vm231 = vcmask 1045508
  %v232 = vsel %vm231, %v230, %v227
  %233 = vrot.lane.b32.xlu0 %v232, 48
  %v234 = vpop.permute.xlu0 %233
  %vm235 = vcmask 523648
  %s236 = scalar_lea.vmem %s1, 9
  %237 = vst.msk [vmem:[%s236] sm:$0x3f] %vm235, %v234
  %s238 = scalar_lea.vmem %s0, 2
  %s239 = smov 3
  %v240 = vld [vmem:[%s238] ss:$16 sm:%s239]
  %s241 = scalar_lea.vmem %s0, 2
  %s242 = smov 12
  %v243 = vld [vmem:[%s241] ss:$16 sm:%s242]
  %vm244 = vcmask 1043458
  %v245 = vsel %vm244, %v243, %v240
  %s246 = scalar_lea.vmem %s0, 2
  %s247 = smov 48
  %v248 = vld [vmem:[%s246] ss:$16 sm:%s247]
  %vm249 = vcmask 1045508
  %v250 = vsel %vm249, %v248, %v245
  %s251 = scalar_lea.vmem %s0, 626
  %s252 = smov 192
  %v253 = vld [vmem:[%s251] ss:$-88 sm:%s252]
  %vm254 = vcmask 1047558
  %v255 = vsel %vm254, %v253, %v250
  %256 = vrot.lane.b32.xlu0 %v255, 32
  %v257 = vpop.permute.xlu0 %256
  %vm258 = vcmask 392448
  %259 = vst.msk [vmem:[%s1] sm:$0x7f] %vm258, %v257
  %s260 = scalar_lea.vmem %s1, 1
  %261 = vst.msk [vmem:[%s260] sm:$0x80] %vm258, %v257
  %s262 = scalar_lea.vmem %s0, 26
  %s263 = smov 3
  %v264 = vld [vmem:[%s262] ss:$16 sm:%s263]
  %s265 = scalar_lea.vmem %s0, 26
  %s266 = smov 12
  %v267 = vld [vmem:[%s265] ss:$16 sm:%s266]
  %vm268 = vcmask 1043458
  %v269 = vsel %vm268, %v267, %v264
  %s270 = scalar_lea.vmem %s0, 26
  %s271 = smov 48
  %v272 = vld [vmem:[%s270] ss:$16 sm:%s271]
  %vm273 = vcmask 1045508
  %v274 = vsel %vm273, %v272, %v269
  %275 = vrot.lane.b32.xlu0 %v274, 32
  %v276 = vpop.permute.xlu0 %275
  %vm277 = vcmask 392448
  %s278 = scalar_lea.vmem %s1, 9
  %279 = vst.msk [vmem:[%s278] sm:$0x3f] %vm277, %v276
  %s280 = scalar_lea.vmem %s0, 1
  %s281 = smov 3
  %v282 = vld [vmem:[%s280] ss:$16 sm:%s281]
  %s283 = scalar_lea.vmem %s0, 1
  %s284 = smov 12
  %v285 = vld [vmem:[%s283] ss:$16 sm:%s284]
  %vm286 = vcmask 1043458
  %v287 = vsel %vm286, %v285, %v282
  %s288 = scalar_lea.vmem %s0, 1
  %s289 = smov 48
  %v290 = vld [vmem:[%s288] ss:$16 sm:%s289]
  %vm291 = vcmask 1045508
  %v292 = vsel %vm291, %v290, %v287
  %s293 = scalar_lea.vmem %s0, 625
  %s294 = smov 192
  %v295 = vld [vmem:[%s293] ss:$-88 sm:%s294]
  %vm296 = vcmask 1047558
  %v297 = vsel %vm296, %v295, %v292
  %298 = vrot.lane.b32.xlu0 %v297, 16
  %v299 = vpop.permute.xlu0 %298
  %vm300 = vcmask 261248
  %301 = vst.msk [vmem:[%s1] sm:$0x7f] %vm300, %v299
  %s302 = scalar_lea.vmem %s1, 1
  %303 = vst.msk [vmem:[%s302] sm:$0x80] %vm300, %v299
  %s304 = scalar_lea.vmem %s0, 25
  %s305 = smov 3
  %v306 = vld [vmem:[%s304] ss:$16 sm:%s305]
  %s307 = scalar_lea.vmem %s0, 25
  %s308 = smov 12
  %v309 = vld [vmem:[%s307] ss:$16 sm:%s308]
  %vm310 = vcmask 1043458
  %v311 = vsel %vm310, %v309, %v306
  %s312 = scalar_lea.vmem %s0, 25
  %s313 = smov 48
  %v314 = vld [vmem:[%s312] ss:$16 sm:%s313]
  %vm315 = vcmask 1045508
  %v316 = vsel %vm315, %v314, %v311
  %317 = vrot.lane.b32.xlu0 %v316, 16
  %v318 = vpop.permute.xlu0 %317
  %vm319 = vcmask 261248
  %s320 = scalar_lea.vmem %s1, 9
  %321 = vst.msk [vmem:[%s320] sm:$0x3f] %vm319, %v318

// kernel: tile.179
$region0: #{tile.179}
  %s0 = inlined_call_operand.vmem [shape: f32[11,16,16], index: 0, kind: input, shape index: {}]
  %s1 = inlined_call_operand.vmem [shape: f32[11,256], index: 1, kind: output, shape index: {}]
  %v2 = vld [vmem:[%s0] ss:$8 sm:$0xf]
  %v3 = vld [vmem:[%s0] ss:$8 sm:$0xf0]
  %vm4 = vcmask 1047556
  %v5 = vsel %vm4, %v3, %v2
  %vm6 = vcmask 130048
  %7 = vst.msk [vmem:[%s1] ss:$8 sm:$0x3] %vm6, %v5
  %s8 = scalar_lea.vmem %s1, 4294967281
  %9 = vst.msk [vmem:[%s8] ss:$8 sm:$0xc] %vm6, %v5
  %s10 = scalar_lea.vmem %s1, 4294967266
  %11 = vst.msk [vmem:[%s10] ss:$8 sm:$0x30] %vm6, %v5
  %s12 = scalar_lea.vmem %s1, 4294967251
  %13 = vst.msk [vmem:[%s12] ss:$8 sm:$0xc0] %vm6, %v5
  %s14 = scalar_lea.vmem %s0, 64
  %v15 = vld [vmem:[%s14] ss:$8 sm:$0xf]
  %s16 = scalar_lea.vmem %s0, 64
  %v17 = vld [vmem:[%s16] ss:$8 sm:$0xf0]
  %vm18 = vcmask 1047556
  %v19 = vsel %vm18, %v17, %v15
  %vm20 = vcmask 130048
  %s21 = scalar_lea.vmem %s1, 4
  %22 = vst.msk [vmem:[%s21] ss:$8 sm:$0x3] %vm20, %v19
  %s23 = scalar_lea.vmem %s1, 4294967285
  %24 = vst.msk [vmem:[%s23] ss:$8 sm:$0xc] %vm20, %v19
  %s25 = scalar_lea.vmem %s1, 4294967270
  %26 = vst.msk [vmem:[%s25] ss:$8 sm:$0x30] %vm20, %v19
  %s27 = scalar_lea.vmem %s1, 4294967255
  %28 = vst.msk [vmem:[%s27] ss:$8 sm:$0xc0] %vm20, %v19
  %s29 = scalar_lea.vmem %s0, 128
  %v30 = vld [vmem:[%s29] ss:$8 sm:$0xf]
  %s31 = scalar_lea.vmem %s0, 128
  %s32 = smov 48
  %v33 = vld [vmem:[%s31] ss:$8 sm:%s32]
  %vm34 = vcmask 1045508
  %v35 = vsel %vm34, %v33, %v30
  %vm36 = vcmask 130048
  %s37 = scalar_lea.vmem %s1, 16
  %38 = vst.msk [vmem:[%s37] ss:$8 sm:$0x3] %vm36, %v35
  %s39 = scalar_lea.vmem %s1, 1
  %40 = vst.msk [vmem:[%s39] ss:$8 sm:$0xc] %vm36, %v35
  %s41 = scalar_lea.vmem %s1, 4294967282
  %42 = vst.msk [vmem:[%s41] ss:$8 sm:$0x30] %vm36, %v35
  %s43 = scalar_lea.vmem %s0, 7
  %s44 = smov 3
  %v45 = vld [vmem:[%s43] ss:$16 sm:%s44]
  %s46 = scalar_lea.vmem %s0, 7
  %s47 = smov 12
  %v48 = vld [vmem:[%s46] ss:$16 sm:%s47]
  %vm49 = vcmask 1043458
  %v50 = vsel %vm49, %v48, %v45
  %s51 = scalar_lea.vmem %s0, 7
  %s52 = smov 48
  %v53 = vld [vmem:[%s51] ss:$16 sm:%s52]
  %vm54 = vcmask 1045508
  %v55 = vsel %vm54, %v53, %v50
  %s56 = scalar_lea.vmem %s0, 7
  %s57 = smov 192
  %v58 = vld [vmem:[%s56] ss:$16 sm:%s57]
  %vm59 = vcmask 1047558
  %v60 = vsel %vm59, %v58, %v55
  %61 = vrot.lane.b32.xlu0 %v60, 112
  %v62 = vpop.permute.xlu0 %61
  %vm63 = vcmask 1048448
  %64 = vst.msk [vmem:[%s1] sm:$0xff] %vm63, %v62
  %s65 = scalar_lea.vmem %s0, 15
  %s66 = smov 3
  %v67 = vld [vmem:[%s65] ss:$16 sm:%s66]
  %s68 = scalar_lea.vmem %s0, 15
  %s69 = smov 12
  %v70 = vld [vmem:[%s68] ss:$16 sm:%s69]
  %vm71 = vcmask 1043458
  %v72 = vsel %vm71, %v70, %v67
  %s73 = scalar_lea.vmem %s0, 15
  %s74 = smov 48
  %v75 = vld [vmem:[%s73] ss:$16 sm:%s74]
  %vm76 = vcmask 1045508
  %v77 = vsel %vm76, %v75, %v72
  %s78 = scalar_lea.vmem %s0, 15
  %s79 = smov 192
  %v80 = vld [vmem:[%s78] ss:$16 sm:%s79]
  %vm81 = vcmask 1047558
  %v82 = vsel %vm81, %v80, %v77
  %83 = vrot.lane.b32.xlu0 %v82, 112
  %v84 = vpop.permute.xlu0 %83
  %vm85 = vcmask 1048448
  %s86 = scalar_lea.vmem %s1, 8
  %87 = vst.msk [vmem:[%s86] sm:$0xff] %vm85, %v84
  %s88 = scalar_lea.vmem %s0, 135
  %s89 = smov 3
  %v90 = vld [vmem:[%s88] ss:$16 sm:%s89]
  %s91 = scalar_lea.vmem %s0, 215
  %s92 = smov 12
  %v93 = vld [vmem:[%s91] ss:$-24 sm:%s92]
  %vm94 = vcmask 1043458
  %v95 = vsel %vm94, %v93, %v90
  %s96 = scalar_lea.vmem %s0, 95
  %s97 = smov 48
  %v98 = vld [vmem:[%s96] ss:$16 sm:%s97]
  %vm99 = vcmask 1045508
  %v100 = vsel %vm99, %v98, %v95
  %101 = vrot.lane.b32.xlu0 %v100, 112
  %v102 = vpop.permute.xlu0 %101
  %vm103 = vcmask 1048448
  %s104 = scalar_lea.vmem %s1, 16
  %105 = vst.msk [vmem:[%s104] sm:$0x7] %vm103, %v102
  %s106 = scalar_lea.vmem %s1, 21
  %107 = vst.msk [vmem:[%s106] sm:$0x38] %vm103, %v102
  %s108 = scalar_lea.vmem %s0, 6
  %s109 = smov 3
  %v110 = vld [vmem:[%s108] ss:$16 sm:%s109]
  %s111 = scalar_lea.vmem %s0, 6
  %s112 = smov 12
  %v113 = vld [vmem:[%s111] ss:$16 sm:%s112]
  %vm114 = vcmask 1043458
  %v115 = vsel %vm114, %v113, %v110
  %s116 = scalar_lea.vmem %s0, 6
  %s117 = smov 48
  %v118 = vld [vmem:[%s116] ss:$16 sm:%s117]
  %vm119 = vcmask 1045508
  %v120 = vsel %vm119, %v118, %v115
  %s121 = scalar_lea.vmem %s0, 6
  %s122 = smov 192
  %v123 = vld [vmem:[%s121] ss:$16 sm:%s122]
  %vm124 = vcmask 1047558
  %v125 = vsel %vm124, %v123, %v120
  %126 = vrot.lane.b32.xlu0 %v125, 96
  %v127 = vpop.permute.xlu0 %126
  %vm128 = vcmask 917248
  %129 = vst.msk [vmem:[%s1] sm:$0xff] %vm128, %v127
  %s130 = scalar_lea.vmem %s0, 14
  %s131 = smov 3
  %v132 = vld [vmem:[%s130] ss:$16 sm:%s131]
  %s133 = scalar_lea.vmem %s0, 14
  %s134 = smov 12
  %v135 = vld [vmem:[%s133] ss:$16 sm:%s134]
  %vm136 = vcmask 1043458
  %v137 = vsel %vm136, %v135, %v132
  %s138 = scalar_lea.vmem %s0, 14
  %s139 = smov 48
  %v140 = vld [vmem:[%s138] ss:$16 sm:%s139]
  %vm141 = vcmask 1045508
  %v142 = vsel %vm141, %v140, %v137
  %s143 = scalar_lea.vmem %s0, 14
  %s144 = smov 192
  %v145 = vld [vmem:[%s143] ss:$16 sm:%s144]
  %vm146 = vcmask 1047558
  %v147 = vsel %vm146, %v145, %v142
  %148 = vrot.lane.b32.xlu0 %v147, 96
  %v149 = vpop.permute.xlu0 %148
  %vm150 = vcmask 917248
  %s151 = scalar_lea.vmem %s1, 8
  %152 = vst.msk [vmem:[%s151] sm:$0xff] %vm150, %v149
  %s153 = scalar_lea.vmem %s0, 134
  %s154 = smov 3
  %v155 = vld [vmem:[%s153] ss:$16 sm:%s154]
  %s156 = scalar_lea.vmem %s0, 214
  %s157 = smov 12
  %v158 = vld [vmem:[%s156] ss:$-24 sm:%s157]
  %vm159 = vcmask 1043458
  %v160 = vsel %vm159, %v158, %v155
  %s161 = scalar_lea.vmem %s0, 94
  %s162 = smov 48
  %v163 = vld [vmem:[%s161] ss:$16 sm:%s162]
  %vm164 = vcmask 1045508
  %v165 = vsel %vm164, %v163, %v160
  %166 = vrot.lane.b32.xlu0 %v165, 96
  %v167 = vpop.permute.xlu0 %166
  %vm168 = vcmask 917248
  %s169 = scalar_lea.vmem %s1, 16
  %170 = vst.msk [vmem:[%s169] sm:$0x7] %vm168, %v167
  %s171 = scalar_lea.vmem %s1, 21
  %172 = vst.msk [vmem:[%s171] sm:$0x38] %vm168, %v167
  %s173 = scalar_lea.vmem %s0, 5
  %s174 = smov 3
  %v175 = vld [vmem:[%s173] ss:$16 sm:%s174]
  %s176 = scalar_lea.vmem %s0, 5
  %s177 = smov 12
  %v178 = vld [vmem:[%s176] ss:$16 sm:%s177]
  %vm179 = vcmask 1043458
  %v180 = vsel %vm179, %v178, %v175
  %s181 = scalar_lea.vmem %s0, 5
  %s182 = smov 48
  %v183 = vld [vmem:[%s181] ss:$16 sm:%s182]
  %vm184 = vcmask 1045508
  %v185 = vsel %vm184, %v183, %v180
  %s186 = scalar_lea.vmem %s0, 5
  %s187 = smov 192
  %v188 = vld [vmem:[%s186] ss:$16 sm:%s187]
  %vm189 = vcmask 1047558
  %v190 = vsel %vm189, %v188, %v185
  %191 = vrot.lane.b32.xlu0 %v190, 80
  %v192 = vpop.permute.xlu0 %191
  %vm193 = vcmask 786048
  %194 = vst.msk [vmem:[%s1] sm:$0xff] %vm193, %v192
  %s195 = scalar_lea.vmem %s0, 13
  %s196 = smov 3
  %v197 = vld [vmem:[%s195] ss:$16 sm:%s196]
  %s198 = scalar_lea.vmem %s0, 13
  %s199 = smov 12
  %v200 = vld [vmem:[%s198] ss:$16 sm:%s199]
  %vm201 = vcmask 1043458
  %v202 = vsel %vm201, %v200, %v197
  %s203 = scalar_lea.vmem %s0, 13
  %s204 = smov 48
  %v205 = vld [vmem:[%s203] ss:$16 sm:%s204]
  %vm206 = vcmask 1045508
  %v207 = vsel %vm206, %v205, %v202
  %s208 = scalar_lea.vmem %s0, 13
  %s209 = smov 192
  %v210 = vld [vmem:[%s208] ss:$16 sm:%s209]
  %vm211 = vcmask 1047558
  %v212 = vsel %vm211, %v210, %v207
  %213 = vrot.lane.b32.xlu0 %v212, 80
  %v214 = vpop.permute.xlu0 %213
  %vm215 = vcmask 786048
  %s216 = scalar_lea.vmem %s1, 8
  %217 = vst.msk [vmem:[%s216] sm:$0xff] %vm215, %v214
  %s218 = scalar_lea.vmem %s0, 133
  %s219 = smov 3
  %v220 = vld [vmem:[%s218] ss:$16 sm:%s219]
  %s221 = scalar_lea.vmem %s0, 213
  %s222 = smov 12
  %v223 = vld [vmem:[%s221] ss:$-24 sm:%s222]
  %vm224 = vcmask 1043458
  %v225 = vsel %vm224, %v223, %v220
  %s226 = scalar_lea.vmem %s0, 93
  %s227 = smov 48
  %v228 = vld [vmem:[%s226] ss:$16 sm:%s227]
  %vm229 = vcmask 1045508
  %v230 = vsel %vm229, %v228, %v225
  %231 = vrot.lane.b32.xlu0 %v230, 80
  %v232 = vpop.permute.xlu0 %231
  %vm233 = vcmask 786048
  %s234 = scalar_lea.vmem %s1, 16
  %235 = vst.msk [vmem:[%s234] sm:$0x7] %vm233, %v232
  %s236 = scalar_lea.vmem %s1, 21
  %237 = vst.msk [vmem:[%s236] sm:$0x38] %vm233, %v232
  %s238 = scalar_lea.vmem %s0, 4
  %s239 = smov 3
  %v240 = vld [vmem:[%s238] ss:$16 sm:%s239]
  %s241 = scalar_lea.vmem %s0, 4
  %s242 = smov 12
  %v243 = vld [vmem:[%s241] ss:$16 sm:%s242]
  %vm244 = vcmask 1043458
  %v245 = vsel %vm244, %v243, %v240
  %s246 = scalar_lea.vmem %s0, 4
  %s247 = smov 48
  %v248 = vld [vmem:[%s246] ss:$16 sm:%s247]
  %vm249 = vcmask 1045508
  %v250 = vsel %vm249, %v248, %v245
  %s251 = scalar_lea.vmem %s0, 4
  %s252 = smov 192
  %v253 = vld [vmem:[%s251] ss:$16 sm:%s252]
  %vm254 = vcmask 1047558
  %v255 = vsel %vm254, %v253, %v250
  %256 = vrot.lane.b32.xlu0 %v255, 64
  %v257 = vpop.permute.xlu0 %256
  %vm258 = vcmask 654848
  %259 = vst.msk [vmem:[%s1] sm:$0xff] %vm258, %v257
  %s260 = scalar_lea.vmem %s0, 12
  %s261 = smov 3
  %v262 = vld [vmem:[%s260] ss:$16 sm:%s261]
  %s263 = scalar_lea.vmem %s0, 12
  %s264 = smov 12
  %v265 = vld [vmem:[%s263] ss:$16 sm:%s264]
  %vm266 = vcmask 1043458
  %v267 = vsel %vm266, %v265, %v262
  %s268 = scalar_lea.vmem %s0, 12
  %s269 = smov 48
  %v270 = vld [vmem:[%s268] ss:$16 sm:%s269]
  %vm271 = vcmask 1045508
  %v272 = vsel %vm271, %v270, %v267
  %s273 = scalar_lea.vmem %s0, 12
  %s274 = smov 192
  %v275 = vld [vmem:[%s273] ss:$16 sm:%s274]
  %vm276 = vcmask 1047558
  %v277 = vsel %vm276, %v275, %v272
  %278 = vrot.lane.b32.xlu0 %v277, 64
  %v279 = vpop.permute.xlu0 %278
  %vm280 = vcmask 654848
  %s281 = scalar_lea.vmem %s1, 8
  %282 = vst.msk [vmem:[%s281] sm:$0xff] %vm280, %v279
  %s283 = scalar_lea.vmem %s0, 132
  %s284 = smov 3
  %v285 = vld [vmem:[%s283] ss:$16 sm:%s284]
  %s286 = scalar_lea.vmem %s0, 212
  %s287 = smov 12
  %v288 = vld [vmem:[%s286] ss:$-24 sm:%s287]
  %vm289 = vcmask 1043458
  %v290 = vsel %vm289, %v288, %v285
  %s291 = scalar_lea.vmem %s0, 92
  %s292 = smov 48
  %v293 = vld [vmem:[%s291] ss:$16 sm:%s292]
  %vm294 = vcmask 1045508
  %v295 = vsel %vm294, %v293, %v290
  %296 = vrot.lane.b32.xlu0 %v295, 64
  %v297 = vpop.permute.xlu0 %296
  %vm298 = vcmask 654848
  %s299 = scalar_lea.vmem %s1, 16
  %300 = vst.msk [vmem:[%s299] sm:$0x7] %vm298, %v297
  %s301 = scalar_lea.vmem %s1, 21
  %302 = vst.msk [vmem:[%s301] sm:$0x38] %vm298, %v297
  %s303 = scalar_lea.vmem %s0, 3
  %s304 = smov 3
  %v305 = vld [vmem:[%s303] ss:$16 sm:%s304]
  %s306 = scalar_lea.vmem %s0, 3
  %s307 = smov 12
  %v308 = vld [vmem:[%s306] ss:$16 sm:%s307]
  %vm309 = vcmask 1043458
  %v310 = vsel %vm309, %v308, %v305
  %s311 = scalar_lea.vmem %s0, 3
  %s312 = smov 48
  %v313 = vld [vmem:[%s311] ss:$16 sm:%s312]
  %vm314 = vcmask 1045508
  %v315 = vsel %vm314, %v313, %v310
  %s316 = scalar_lea.vmem %s0, 3
  %s317 = smov 192
  %v318 = vld [vmem:[%s316] ss:$16 sm:%s317]
  %vm319 = vcmask 1047558
  %v320 = vsel %vm319, %v318, %v315
  %321 = vrot.lane.b32.xlu0 %v320, 48
  %v322 = vpop.permute.xlu0 %321
  %vm323 = vcmask 523648
  %324 = vst.msk [vmem:[%s1] sm:$0xff] %vm323, %v322
  %s325 = scalar_lea.vmem %s0, 11
  %s326 = smov 3
  %v327 = vld [vmem:[%s325] ss:$16 sm:%s326]
  %s328 = scalar_lea.vmem %s0, 11
  %s329 = smov 12
  %v330 = vld [vmem:[%s328] ss:$16 sm:%s329]
  %vm331 = vcmask 1043458
  %v332 = vsel %vm331, %v330, %v327
  %s333 = scalar_lea.vmem %s0, 11
  %s334 = smov 48
  %v335 = vld [vmem:[%s333] ss:$16 sm:%s334]
  %vm336 = vcmask 1045508
  %v337 = vsel %vm336, %v335, %v332
  %s338 = scalar_lea.vmem %s0, 11
  %s339 = smov 192
  %v340 = vld [vmem:[%s338] ss:$16 sm:%s339]
  %vm341 = vcmask 1047558
  %v342 = vsel %vm341, %v340, %v337
  %343 = vrot.lane.b32.xlu0 %v342, 48
  %v344 = vpop.permute.xlu0 %343
  %vm345 = vcmask 523648
  %s346 = scalar_lea.vmem %s1, 8
  %347 = vst.msk [vmem:[%s346] sm:$0xff] %vm345, %v344
  %s348 = scalar_lea.vmem %s0, 131
  %s349 = smov 3
  %v350 = vld [vmem:[%s348] ss:$16 sm:%s349]
  %s351 = scalar_lea.vmem %s0, 211
  %s352 = smov 12
  %v353 = vld [vmem:[%s351] ss:$-24 sm:%s352]
  %vm354 = vcmask 1043458
  %v355 = vsel %vm354, %v353, %v350
  %s356 = scalar_lea.vmem %s0, 91
  %s357 = smov 48
  %v358 = vld [vmem:[%s356] ss:$16 sm:%s357]
  %vm359 = vcmask 1045508
  %v360 = vsel %vm359, %v358, %v355
  %361 = vrot.lane.b32.xlu0 %v360, 48
  %v362 = vpop.permute.xlu0 %361
  %vm363 = vcmask 523648
  %s364 = scalar_lea.vmem %s1, 16
  %365 = vst.msk [vmem:[%s364] sm:$0x7] %vm363, %v362
  %s366 = scalar_lea.vmem %s1, 21
  %367 = vst.msk [vmem:[%s366] sm:$0x38] %vm363, %v362
  %s368 = scalar_lea.vmem %s0, 2
  %s369 = smov 3
  %v370 = vld [vmem:[%s368] ss:$16 sm:%s369]
  %s371 = scalar_lea.vmem %s0, 2
  %s372 = smov 12
  %v373 = vld [vmem:[%s371] ss:$16 sm:%s372]
  %vm374 = vcmask 1043458
  %v375 = vsel %vm374, %v373, %v370
  %s376 = scalar_lea.vmem %s0, 2
  %s377 = smov 48
  %v378 = vld [vmem:[%s376] ss:$16 sm:%s377]
  %vm379 = vcmask 1045508
  %v380 = vsel %vm379, %v378, %v375
  %s381 = scalar_lea.vmem %s0, 2
  %s382 = smov 192
  %v383 = vld [vmem:[%s381] ss:$16 sm:%s382]
  %vm384 = vcmask 1047558
  %v385 = vsel %vm384, %v383, %v380
  %386 = vrot.lane.b32.xlu0 %v385, 32
  %v387 = vpop.permute.xlu0 %386
  %vm388 = vcmask 392448
  %389 = vst.msk [vmem:[%s1] sm:$0xff] %vm388, %v387
  %s390 = scalar_lea.vmem %s0, 10
  %s391 = smov 3
  %v392 = vld [vmem:[%s390] ss:$16 sm:%s391]
  %s393 = scalar_lea.vmem %s0, 10
  %s394 = smov 12
  %v395 = vld [vmem:[%s393] ss:$16 sm:%s394]
  %vm396 = vcmask 1043458
  %v397 = vsel %vm396, %v395, %v392
  %s398 = scalar_lea.vmem %s0, 10
  %s399 = smov 48
  %v400 = vld [vmem:[%s398] ss:$16 sm:%s399]
  %vm401 = vcmask 1045508
  %v402 = vsel %vm401, %v400, %v397
  %s403 = scalar_lea.vmem %s0, 10
  %s404 = smov 192
  %v405 = vld [vmem:[%s403] ss:$16 sm:%s404]
  %vm406 = vcmask 1047558
  %v407 = vsel %vm406, %v405, %v402
  %408 = vrot.lane.b32.xlu0 %v407, 32
  %v409 = vpop.permute.xlu0 %408
  %vm410 = vcmask 392448
  %s411 = scalar_lea.vmem %s1, 8
  %412 = vst.msk [vmem:[%s411] sm:$0xff] %vm410, %v409
  %s413 = scalar_lea.vmem %s0, 130
  %s414 = smov 3
  %v415 = vld [vmem:[%s413] ss:$16 sm:%s414]
  %s416 = scalar_lea.vmem %s0, 210
  %s417 = smov 12
  %v418 = vld [vmem:[%s416] ss:$-24 sm:%s417]
  %vm419 = vcmask 1043458
  %v420 = vsel %vm419, %v418, %v415
  %s421 = scalar_lea.vmem %s0, 90
  %s422 = smov 48
  %v423 = vld [vmem:[%s421] ss:$16 sm:%s422]
  %vm424 = vcmask 1045508
  %v425 = vsel %vm424, %v423, %v420
  %426 = vrot.lane.b32.xlu0 %v425, 32
  %v427 = vpop.permute.xlu0 %426
  %vm428 = vcmask 392448
  %s429 = scalar_lea.vmem %s1, 16
  %430 = vst.msk [vmem:[%s429] sm:$0x7] %vm428, %v427
  %s431 = scalar_lea.vmem %s1, 21
  %432 = vst.msk [vmem:[%s431] sm:$0x38] %vm428, %v427
  %s433 = scalar_lea.vmem %s0, 1
  %s434 = smov 3
  %v435 = vld [vmem:[%s433] ss:$16 sm:%s434]
  %s436 = scalar_lea.vmem %s0, 1
  %s437 = smov 12
  %v438 = vld [vmem:[%s436] ss:$16 sm:%s437]
  %vm439 = vcmask 1043458
  %v440 = vsel %vm439, %v438, %v435
  %s441 = scalar_lea.vmem %s0, 1
  %s442 = smov 48
  %v443 = vld [vmem:[%s441] ss:$16 sm:%s442]
  %vm444 = vcmask 1045508
  %v445 = vsel %vm444, %v443, %v440
  %s446 = scalar_lea.vmem %s0, 1
  %s447 = smov 192
  %v448 = vld [vmem:[%s446] ss:$16 sm:%s447]
  %vm449 = vcmask 1047558
  %v450 = vsel %vm449, %v448, %v445
  %451 = vrot.lane.b32.xlu0 %v450, 16
  %v452 = vpop.permute.xlu0 %451
  %vm453 = vcmask 261248
  %454 = vst.msk [vmem:[%s1] sm:$0xff] %vm453, %v452
  %s455 = scalar_lea.vmem %s0, 9
  %s456 = smov 3
  %v457 = vld [vmem:[%s455] ss:$16 sm:%s456]
  %s458 = scalar_lea.vmem %s0, 9
  %s459 = smov 12
  %v460 = vld [vmem:[%s458] ss:$16 sm:%s459]
  %vm461 = vcmask 1043458
  %v462 = vsel %vm461, %v460, %v457
  %s463 = scalar_lea.vmem %s0, 9
  %s464 = smov 48
  %v465 = vld [vmem:[%s463] ss:$16 sm:%s464]
  %vm466 = vcmask 1045508
  %v467 = vsel %vm466, %v465, %v462
  %s468 = scalar_lea.vmem %s0, 9
  %s469 = smov 192
  %v470 = vld [vmem:[%s468] ss:$16 sm:%s469]
  %vm471 = vcmask 1047558
  %v472 = vsel %vm471, %v470, %v467
  %473 = vrot.lane.b32.xlu0 %v472, 16
  %v474 = vpop.permute.xlu0 %473
  %vm475 = vcmask 261248
  %s476 = scalar_lea.vmem %s1, 8
  %477 = vst.msk [vmem:[%s476] sm:$0xff] %vm475, %v474
  %s478 = scalar_lea.vmem %s0, 129
  %s479 = smov 3
  %v480 = vld [vmem:[%s478] ss:$16 sm:%s479]
  %s481 = scalar_lea.vmem %s0, 209
  %s482 = smov 12
  %v483 = vld [vmem:[%s481] ss:$-24 sm:%s482]
  %vm484 = vcmask 1043458
  %v485 = vsel %vm484, %v483, %v480
  %s486 = scalar_lea.vmem %s0, 89
  %s487 = smov 48
  %v488 = vld [vmem:[%s486] ss:$16 sm:%s487]
  %vm489 = vcmask 1045508
  %v490 = vsel %vm489, %v488, %v485
  %491 = vrot.lane.b32.xlu0 %v490, 16
  %v492 = vpop.permute.xlu0 %491
  %vm493 = vcmask 261248
  %s494 = scalar_lea.vmem %s1, 16
  %495 = vst.msk [vmem:[%s494] sm:$0x7] %vm493, %v492
  %s496 = scalar_lea.vmem %s1, 21
  %497 = vst.msk [vmem:[%s496] sm:$0x38] %vm493, %v492

// kernel: _lambda_.6
$region0: #{_lambda_.6}
  #allocation0 [shape = 'u32[]', space=smem, size = 0x4, offset = 0x4, fixed_abs, tag = 'smem constant byte address 0x4 - core index']
  #allocation1 [shape = 'u32[144,128]{1,0:T(1,128)}', space=vmem, size = 0x12000, scoped, tag = 'internal scratch']
  #allocation2 [shape = 'f32[32,512]{1,0:T(8,128)}', space=vmem, size = 0x10000, scoped, tag = 'scratch operand']
  #allocation3 [shape = 'f32[32,512]{1,0:T(8,128)}', space=vmem, size = 0x10000, scoped, tag = 'scratch operand']
  %s0 = inlined_call_operand.vmem [shape: f32[2,16,256], index: 0, kind: input, shape index: {}]
  %s1 = inlined_call_operand.vmem [shape: f32[3,256], index: 1, kind: input, shape index: {}]
  %s2 = inlined_call_operand.vmem [shape: f32[1,256], index: 2, kind: input, shape index: {}]
  %s3 = inlined_call_operand.vmem [shape: f32[3,256], index: 3, kind: input, shape index: {}]
  %s4 = inlined_call_operand.vmem [shape: f32[1,256], index: 4, kind: input, shape index: {}]
  %s5 = inlined_call_operand.vmem [shape: f32[5,256], index: 5, kind: input, shape index: {}]
  %s6 = inlined_call_operand.vmem [shape: f32[1,256], index: 6, kind: input, shape index: {}]
  %s7 = inlined_call_operand.vmem [shape: f32[5,256], index: 7, kind: input, shape index: {}]
  %s8 = inlined_call_operand.vmem [shape: f32[1,256], index: 8, kind: input, shape index: {}]
  %s9 = inlined_call_operand.vmem [shape: f32[2,16,256], index: 9, kind: output, shape index: {}]
  %s10 = sld [smem:[#allocation0]]
  $region69: #{_lambda_.6} parent=0
    _
  %s12 = ssub.s32 1, %s10
  %s13 = scalar_select 0, %s12, %s10
  loop: start=0, step=1, limit=4
  $region2: #{_lambda_.6} parent=0 // loop_pre_header
    _
  $region3: #{_lambda_.6} parent=0 // loop_header
    %s15 = sphi 0, %s19
    %p16 = scmp.ge.s32.totalorder %s15, 4
    %s25 = sphi 0, %s27
    %s28 = sphi 0, %s25
    %s29 = sphi 0, %s28
    %s45 = sphi 0, %s29
    %s49 = sphi 0, %s49
    %s51 = sphi 0, %s49
    %s52 = sphi 0, %s51
    %s66 = sphi 0, %s52
    %s70 = sphi 0, %s70
    %s72 = sphi 0, %s70
    %s73 = sphi 0, %s72
    %s87 = sphi 0, %s73
    %s91 = sphi 0, %s91
    %s93 = sphi 0, %s91
    %s94 = sphi 0, %s93
    %s108 = sphi 0, %s94
    %s112 = sphi 0, %s112
    %s114 = sphi 0, %s112
    %s115 = sphi 0, %s114
    %s129 = sphi 0, %s115
    %s133 = sphi 0, %s133
    %s135 = sphi 0, %s133
    %s136 = sphi 0, %s135
    %s150 = sphi 0, %s136
    %s154 = sphi 0, %s154
    %s156 = sphi 0, %s154
    %s157 = sphi 0, %s156
    %s171 = sphi 0, %s157
    %s175 = sphi 0, %s175
    %s177 = sphi 0, %s175
    %s178 = sphi 0, %s177
    %s192 = sphi 0, %s178
    %s196 = sphi 0, %s196
    %s198 = sphi 0, %s196
    %s199 = sphi 0, %s198
    %s213 = sphi 0, %s199
    %s219 = sphi 0, %s221
    %s222 = sphi 0, %s219
    %s223 = sphi 0, %s222
    %s239 = sphi 0, %s223
  $region4: #{_lambda_.6} parent=0 // loop_header_branch
    %18 = sbr.rel (%p16) target = $region8
  $region5: #{_lambda_.6} parent=0 // loop_body
    %s20 = ssub.s32 %s15, 1
    %s21 = ssub.s32 %s15, 2
    %s22 = sadd.s32 %s15, 1
    %s23 = ssub.s32 %s15, %s22
    %p24 = scmp.eq.s32.totalorder %s23, 0
    %s26 = sadd.s32 %s25, 1
    %s27 = scalar_select %p24, %s25, %s26
    %p30 = pneg %p24
    %p31 = scmp.eq.s32.totalorder %s15, 1
    %p32 = por %p30, %p31
    %p33 = scmp.ne.s32.totalorder %s25, %s28
    %p34 = scmp.eq.s32.totalorder %s15, 0
    %p35 = por %p33, %p34
    %p36 = scmp.ne.s32.totalorder %s25, %s28
    %p37 = scmp.eq.s32.totalorder %s20, 1
    %p38 = por %p36, %p37
    %p39 = scmp.ne.s32.totalorder %s28, %s29
    %p40 = scmp.eq.s32.totalorder %s20, 0
    %p41 = por %p39, %p40
    %p42 = scmp.ne.s32.totalorder %s28, %s29
    %p43 = scmp.eq.s32.totalorder %s21, 1
    %p44 = por %p42, %p43
    %p46 = scmp.ne.s32.totalorder %s29, %s45
    %p47 = scmp.eq.s32.totalorder %s21, 0
    %p48 = por %p46, %p47
    %s50 = sadd.s32 %s49, 1
    %p53 = scmp.eq.s32.totalorder %s15, 1
    %p54 = scmp.ne.s32.totalorder %s49, %s51
    %p55 = scmp.eq.s32.totalorder %s15, 0
    %p56 = por %p54, %p55
    %p57 = scmp.ne.s32.totalorder %s49, %s51
    %p58 = scmp.eq.s32.totalorder %s20, 1
    %p59 = por %p57, %p58
    %p60 = scmp.ne.s32.totalorder %s51, %s52
    %p61 = scmp.eq.s32.totalorder %s20, 0
    %p62 = por %p60, %p61
    %p63 = scmp.ne.s32.totalorder %s51, %s52
    %p64 = scmp.eq.s32.totalorder %s21, 1
    %p65 = por %p63, %p64
    %p67 = scmp.ne.s32.totalorder %s52, %s66
    %p68 = scmp.eq.s32.totalorder %s21, 0
    %p69 = por %p67, %p68
    %s71 = sadd.s32 %s70, 1
    %p74 = scmp.eq.s32.totalorder %s15, 1
    %p75 = scmp.ne.s32.totalorder %s70, %s72
    %p76 = scmp.eq.s32.totalorder %s15, 0
    %p77 = por %p75, %p76
    %p78 = scmp.ne.s32.totalorder %s70, %s72
    %p79 = scmp.eq.s32.totalorder %s20, 1
    %p80 = por %p78, %p79
    %p81 = scmp.ne.s32.totalorder %s72, %s73
    %p82 = scmp.eq.s32.totalorder %s20, 0
    %p83 = por %p81, %p82
    %p84 = scmp.ne.s32.totalorder %s72, %s73
    %p85 = scmp.eq.s32.totalorder %s21, 1
    %p86 = por %p84, %p85
    %p88 = scmp.ne.s32.totalorder %s73, %s87
    %p89 = scmp.eq.s32.totalorder %s21, 0
    %p90 = por %p88, %p89
    %s92 = sadd.s32 %s91, 1
    %p95 = scmp.eq.s32.totalorder %s15, 1
    %p96 = scmp.ne.s32.totalorder %s91, %s93
    %p97 = scmp.eq.s32.totalorder %s15, 0
    %p98 = por %p96, %p97
    %p99 = scmp.ne.s32.totalorder %s91, %s93
    %p100 = scmp.eq.s32.totalorder %s20, 1
    %p101 = por %p99, %p100
    %p102 = scmp.ne.s32.totalorder %s93, %s94
    %p103 = scmp.eq.s32.totalorder %s20, 0
    %p104 = por %p102, %p103
    %p105 = scmp.ne.s32.totalorder %s93, %s94
    %p106 = scmp.eq.s32.totalorder %s21, 1
    %p107 = por %p105, %p106
    %p109 = scmp.ne.s32.totalorder %s94, %s108
    %p110 = scmp.eq.s32.totalorder %s21, 0
    %p111 = por %p109, %p110
    %s113 = sadd.s32 %s112, 1
    %p116 = scmp.eq.s32.totalorder %s15, 1
    %p117 = scmp.ne.s32.totalorder %s112, %s114
    %p118 = scmp.eq.s32.totalorder %s15, 0
    %p119 = por %p117, %p118
    %p120 = scmp.ne.s32.totalorder %s112, %s114
    %p121 = scmp.eq.s32.totalorder %s20, 1
    %p122 = por %p120, %p121
    %p123 = scmp.ne.s32.totalorder %s114, %s115
    %p124 = scmp.eq.s32.totalorder %s20, 0
    %p125 = por %p123, %p124
    %p126 = scmp.ne.s32.totalorder %s114, %s115
    %p127 = scmp.eq.s32.totalorder %s21, 1
    %p128 = por %p126, %p127
    %p130 = scmp.ne.s32.totalorder %s115, %s129
    %p131 = scmp.eq.s32.totalorder %s21, 0
    %p132 = por %p130, %p131
    %s134 = sadd.s32 %s133, 1
    %p137 = scmp.eq.s32.totalorder %s15, 1
    %p138 = scmp.ne.s32.totalorder %s133, %s135
    %p139 = scmp.eq.s32.totalorder %s15, 0
    %p140 = por %p138, %p139
    %p141 = scmp.ne.s32.totalorder %s133, %s135
    %p142 = scmp.eq.s32.totalorder %s20, 1
    %p143 = por %p141, %p142
    %p144 = scmp.ne.s32.totalorder %s135, %s136
    %p145 = scmp.eq.s32.totalorder %s20, 0
    %p146 = por %p144, %p145
    %p147 = scmp.ne.s32.totalorder %s135, %s136
    %p148 = scmp.eq.s32.totalorder %s21, 1
    %p149 = por %p147, %p148
    %p151 = scmp.ne.s32.totalorder %s136, %s150
    %p152 = scmp.eq.s32.totalorder %s21, 0
    %p153 = por %p151, %p152
    %s155 = sadd.s32 %s154, 1
    %p158 = scmp.eq.s32.totalorder %s15, 1
    %p159 = scmp.ne.s32.totalorder %s154, %s156
    %p160 = scmp.eq.s32.totalorder %s15, 0
    %p161 = por %p159, %p160
    %p162 = scmp.ne.s32.totalorder %s154, %s156
    %p163 = scmp.eq.s32.totalorder %s20, 1
    %p164 = por %p162, %p163
    %p165 = scmp.ne.s32.totalorder %s156, %s157
    %p166 = scmp.eq.s32.totalorder %s20, 0
    %p167 = por %p165, %p166
    %p168 = scmp.ne.s32.totalorder %s156, %s157
    %p169 = scmp.eq.s32.totalorder %s21, 1
    %p170 = por %p168, %p169
    %p172 = scmp.ne.s32.totalorder %s157, %s171
    %p173 = scmp.eq.s32.totalorder %s21, 0
    %p174 = por %p172, %p173
    %s176 = sadd.s32 %s175, 1
    %p179 = scmp.eq.s32.totalorder %s15, 1
    %p180 = scmp.ne.s32.totalorder %s175, %s177
    %p181 = scmp.eq.s32.totalorder %s15, 0
    %p182 = por %p180, %p181
    %p183 = scmp.ne.s32.totalorder %s175, %s177
    %p184 = scmp.eq.s32.totalorder %s20, 1
    %p185 = por %p183, %p184
    %p186 = scmp.ne.s32.totalorder %s177, %s178
    %p187 = scmp.eq.s32.totalorder %s20, 0
    %p188 = por %p186, %p187
    %p189 = scmp.ne.s32.totalorder %s177, %s178
    %p190 = scmp.eq.s32.totalorder %s21, 1
    %p191 = por %p189, %p190
    %p193 = scmp.ne.s32.totalorder %s178, %s192
    %p194 = scmp.eq.s32.totalorder %s21, 0
    %p195 = por %p193, %p194
    %s197 = sadd.s32 %s196, 1
    %p200 = scmp.eq.s32.totalorder %s15, 1
    %p201 = scmp.ne.s32.totalorder %s196, %s198
    %p202 = scmp.eq.s32.totalorder %s15, 0
    %p203 = por %p201, %p202
    %p204 = scmp.ne.s32.totalorder %s196, %s198
    %p205 = scmp.eq.s32.totalorder %s20, 1
    %p206 = por %p204, %p205
    %p207 = scmp.ne.s32.totalorder %s198, %s199
    %p208 = scmp.eq.s32.totalorder %s20, 0
    %p209 = por %p207, %p208
    %p210 = scmp.ne.s32.totalorder %s198, %s199
    %p211 = scmp.eq.s32.totalorder %s21, 1
    %p212 = por %p210, %p211
    %p214 = scmp.ne.s32.totalorder %s199, %s213
    %p215 = scmp.eq.s32.totalorder %s21, 0
    %p216 = por %p214, %p215
    %s217 = ssub.s32 %s15, %s22
    %p218 = scmp.eq.s32.totalorder %s217, 0
    %s220 = sadd.s32 %s219, 1
    %s221 = scalar_select %p218, %s219, %s220
    %p224 = pneg %p218
    %p225 = scmp.eq.s32.totalorder %s15, 1
    %p226 = por %p224, %p225
    %p227 = scmp.ne.s32.totalorder %s219, %s222
    %p228 = scmp.eq.s32.totalorder %s15, 0
    %p229 = por %p227, %p228
    %p230 = scmp.ne.s32.totalorder %s219, %s222
    %p231 = scmp.eq.s32.totalorder %s20, 1
    %p232 = por %p230, %p231
    %p233 = scmp.ne.s32.totalorder %s222, %s223
    %p234 = scmp.eq.s32.totalorder %s20, 0
    %p235 = por %p233, %p234
    %p236 = scmp.ne.s32.totalorder %s222, %s223
    %p237 = scmp.eq.s32.totalorder %s21, 1
    %p238 = por %p236, %p237
    %p240 = scmp.ne.s32.totalorder %s223, %s239
    %p241 = scmp.eq.s32.totalorder %s21, 0
    %p242 = por %p240, %p241
    %p243 = scmp.le.s32.totalorder 1, %s15
    %p244 = scmp.lt.s32.totalorder %s15, 3
    %p245 = pnand %p243, %p244
    %p246 = pneg %p245
    // Predicated region
    $region9: #{_lambda_.6} parent=5 // pred_check
      _
    $region10: #{_lambda_.6} parent=5 // pred_check_branch
      %248 = sbr.rel (%p245) target = $region12
    $region11: #{_lambda_.6} parent=5 // pred_region
      %s249 = ssub.s32 %s15, 1
      // Predicated region
      $region13: #{_lambda_.6} parent=11 // pred_check
        %p250 = pneg %p62
      $region14: #{_lambda_.6} parent=11 // pred_check_branch
        %252 = sbr.rel (%p250) target = $region16
      $region15: #{_lambda_.6} parent=11 // pred_region
        _
      $region16: #{_lambda_.6} parent=11 // pred_fallthru
        _
      // Predicated region
      $region17: #{_lambda_.6} parent=11 // pred_check
        %p253 = pneg %p83
      $region18: #{_lambda_.6} parent=11 // pred_check_branch
        %255 = sbr.rel (%p253) target = $region20
      $region19: #{_lambda_.6} parent=11 // pred_region
        _
      $region20: #{_lambda_.6} parent=11 // pred_fallthru
        _
      // Predicated region
      $region21: #{_lambda_.6} parent=11 // pred_check
        %p256 = pneg %p104
      $region22: #{_lambda_.6} parent=11 // pred_check_branch
        %258 = sbr.rel (%p256) target = $region24
      $region23: #{_lambda_.6} parent=11 // pred_region
        _
      $region24: #{_lambda_.6} parent=11 // pred_fallthru
        _
      // Predicated region
      $region25: #{_lambda_.6} parent=11 // pred_check
        %p259 = pneg %p125
      $region26: #{_lambda_.6} parent=11 // pred_check_branch
        %261 = sbr.rel (%p259) target = $region28
      $region27: #{_lambda_.6} parent=11 // pred_region
        _
      $region28: #{_lambda_.6} parent=11 // pred_fallthru
        _
      // Predicated region
      $region29: #{_lambda_.6} parent=11 // pred_check
        %p262 = pneg %p146
      $region30: #{_lambda_.6} parent=11 // pred_check_branch
        %264 = sbr.rel (%p262) target = $region32
      $region31: #{_lambda_.6} parent=11 // pred_region
        _
      $region32: #{_lambda_.6} parent=11 // pred_fallthru
        _
      // Predicated region
      $region33: #{_lambda_.6} parent=11 // pred_check
        %p265 = pneg %p167
      $region34: #{_lambda_.6} parent=11 // pred_check_branch
        %267 = sbr.rel (%p265) target = $region36
      $region35: #{_lambda_.6} parent=11 // pred_region
        _
      $region36: #{_lambda_.6} parent=11 // pred_fallthru
        _
      // Predicated region
      $region37: #{_lambda_.6} parent=11 // pred_check
        %p268 = pneg %p188
      $region38: #{_lambda_.6} parent=11 // pred_check_branch
        %270 = sbr.rel (%p268) target = $region40
      $region39: #{_lambda_.6} parent=11 // pred_region
        _
      $region40: #{_lambda_.6} parent=11 // pred_fallthru
        _
      // Predicated region
      $region41: #{_lambda_.6} parent=11 // pred_check
        %p271 = pneg %p209
      $region42: #{_lambda_.6} parent=11 // pred_check_branch
        %273 = sbr.rel (%p271) target = $region44
      $region43: #{_lambda_.6} parent=11 // pred_region
        _
      $region44: #{_lambda_.6} parent=11 // pred_fallthru
        _
    $region12: #{_lambda_.6} parent=5 // pred_fallthru
      _
    %p274 = scmp.lt.s32.totalorder %s15, 2
    // Predicated region
    $region45: #{_lambda_.6} parent=5 // pred_check
      %p275 = pneg %p274
    $region46: #{_lambda_.6} parent=5 // pred_check_branch
      %277 = sbr.rel (%p275) target = $region48
    $region47: #{_lambda_.6} parent=5 // pred_region
      // Predicated region
      $region49: #{_lambda_.6} parent=47 // pred_check
        %p278 = pneg %p35
      $region50: #{_lambda_.6} parent=47 // pred_check_branch
        %280 = sbr.rel (%p278) target = $region52
      $region51: #{_lambda_.6} parent=47 // pred_region
        %p281 = scmp.lt.s32.totalorder %s15, 1
        %s282 = scalar_select %p281, %s15, 1
        %s283 = smul.addr %s282, 4
        %s284 = smul.addr %s283, 8
        %s285 = scalar_lea.vmem %s0, %s284
      $region52: #{_lambda_.6} parent=47 // pred_fallthru
        _
    $region48: #{_lambda_.6} parent=5 // pred_fallthru
      _
    %p286 = scmp.le.s32.totalorder 1, %s15
    %p287 = scmp.lt.s32.totalorder %s15, 3
    %p288 = pnand %p286, %p287
    %p289 = pneg %p288
    // Predicated region
    $region53: #{_lambda_.6} parent=5 // pred_check
      _
    $region54: #{_lambda_.6} parent=5 // pred_check_branch
      %291 = sbr.rel (%p288) target = $region56
    $region55: #{_lambda_.6} parent=5 // pred_region
      %s292 = ssub.s32 %s15, 1
      %p293 = scmp.lt.s32.totalorder %s20, 1
      %s294 = scalar_select %p293, %s20, 1
      %s295 = smul.addr %s294, 4
      %s296 = smul.addr %s295, 8
      %s297 = scalar_lea.vmem %s0, %s296
      %p298 = pneg %p41
      %p299 = pneg %p38
      %p300 = pneg %p62
      %p301 = pneg %p59
      %p302 = pneg %p83
      %p303 = pneg %p80
      %p304 = pneg %p104
      %p305 = pneg %p101
      %p306 = pneg %p125
      %p307 = pneg %p122
      %p308 = pneg %p146
      %p309 = pneg %p143
      %p310 = pneg %p167
      %p311 = pneg %p164
      %p312 = pneg %p188
      %p313 = pneg %p185
      %p314 = pneg %p209
      %p315 = pneg %p206
      %p316 = pneg %p235
      %p317 = pneg %p232
      %p318 = scmp.lt.s32.totalorder %s20, 1
      %s319 = scalar_select %p318, %s20, 1
      %s320 = smul.addr %s319, 4
      %s321 = smul.addr %s320, 8
      %s322 = scalar_lea.vmem %s9, %s321
      %p323 = scmp.lt.s32.totalorder %s20, 1
      %s324 = scalar_select %p323, %s20, 1
      %s325 = smul.addr %s324, 4
      %s326 = smul.addr %s325, 8
      %s327 = scalar_lea.vmem %s0, %s326
      %p328 = scmp.lt.s32.totalorder %s20, 1
      %s329 = scalar_select %p328, %s20, 1
      %s330 = smul.addr %s329, 4
      %s331 = smul.addr %s330, 8
      %s332 = scalar_lea.vmem %s9, %s331
      %333 = vst [vmem:[#allocation2] sm:$0xff] 0.0
      %334 = vst [vmem:[#allocation2 + $0x8] sm:$0xff] 0.0
      %335 = vst [vmem:[#allocation2 + $0x10] sm:$0xff] 0.0
      %336 = vst [vmem:[#allocation2 + $0x18] sm:$0xff] 0.0
      %337 = vst [vmem:[#allocation2 + $0x60] sm:$0xff] 0.0
      %338 = vst [vmem:[#allocation2 + $0x68] sm:$0xff] 0.0
      %339 = vst [vmem:[#allocation2 + $0x70] sm:$0xff] 0.0
      %340 = vst [vmem:[#allocation2 + $0x78] sm:$0xff] 0.0
      %341 = vst [vmem:[#allocation2 + $0x20] sm:$0xff] 0.0
      %342 = vst [vmem:[#allocation2 + $0x40] sm:$0xff] 0.0
      %343 = vst [vmem:[#allocation2 + $0x38] sm:$0xff] 0.0
      %344 = vst [vmem:[#allocation2 + $0x58] sm:$0xff] 0.0
      %345 = vst [vmem:[#allocation3] sm:$0xff] 0.0
      %346 = vst [vmem:[#allocation3 + $0x8] sm:$0xff] 0.0
      %347 = vst [vmem:[#allocation3 + $0x10] sm:$0xff] 0.0
      %348 = vst [vmem:[#allocation3 + $0x18] sm:$0xff] 0.0
      %349 = vst [vmem:[#allocation3 + $0x60] sm:$0xff] 0.0
      %350 = vst [vmem:[#allocation3 + $0x68] sm:$0xff] 0.0
      %351 = vst [vmem:[#allocation3 + $0x70] sm:$0xff] 0.0
      %352 = vst [vmem:[#allocation3 + $0x78] sm:$0xff] 0.0
      %353 = vst [vmem:[#allocation3 + $0x20] sm:$0xff] 0.0
      %354 = vst [vmem:[#allocation3 + $0x40] sm:$0xff] 0.0
      %355 = vst [vmem:[#allocation3 + $0x38] sm:$0xff] 0.0
      %356 = vst [vmem:[#allocation3 + $0x58] sm:$0xff] 0.0
      %v357 = vld [vmem:[%s327] sm:$0xff]
      %v358 = vld [vmem:[%s327 + $0x8] sm:$0xff]
      %v359 = vld [vmem:[%s327 + $0x10] sm:$0xff]
      %v360 = vld [vmem:[%s327 + $0x18] sm:$0xff]
      %361 = vst [vmem:[#allocation2 + $0x28] sm:$0xff] %v357
      %362 = vst [vmem:[#allocation2 + $0x30] sm:$0xff] %v358
      %363 = vst [vmem:[#allocation2 + $0x48] sm:$0xff] %v359
      %364 = vst [vmem:[#allocation2 + $0x50] sm:$0xff] %v360
      %v365 = vld [vmem:[%s1] sm:$0x77]
      %v366 = vld [vmem:[#allocation2 + $0x20] sm:$0xff]
      %v367 = vld [vmem:[#allocation2 + $0x28] sm:$0xff]
      %v368 = vld [vmem:[#allocation2 + $0x30] sm:$0xff]
      %v369 = vld [vmem:[#allocation2 + $0x40] sm:$0xff]
      %v370 = vld [vmem:[#allocation2 + $0x48] sm:$0xff]
      %v371 = vld [vmem:[#allocation2 + $0x50] sm:$0xff]
      %v373 = vlaneseq
      %v374 = vshrl.u32 %v373, 7
      %v375 = vsub.s32 0, %v374
      %v376 = vrot.slane %v365, %v375
      %v377 = vlaneseq
      %v378 = vshrl.u32 %v377, 7
      %v379 = vsub.s32 4, %v378
      %v380 = vrot.slane %v365, %v379
      %v383 = vlaneseq
      %v384 = vshrl.u32 %v383, 7
      %v385 = vsub.s32 0, %v384
      %v386 = vrot.slane %v376, %v385
      %v387 = vlaneseq
      %v388 = vshrl.u32 %v387, 7
      %v389 = vsub.s32 0, %v388
      %v390 = vrot.slane %v380, %v389
      %393 = vrot.lane.b32.xlu0 %v386, 112
      %v394 = vpop.permute.xlu0 %393
      %395 = vrot.lane.b32.xlu0 %v390, 112
      %v396 = vpop.permute.xlu0 %395
      %vm397 = vcmask 916480
      %v398 = vsel %vm397, %v394, %v396
      %v402 = vmul.f32 %v366, %v394
      %v403 = vmul.f32 %v367, %v398
      %v404 = vmul.f32 %v368, %v396
      %v405 = vmul.f32 %v369, %v394
      %v406 = vmul.f32 %v370, %v398
      %v407 = vmul.f32 %v371, %v396
      %v408 = vadd.f32 %v402, 0.0
      %v409 = vadd.f32 %v403, 0.0
      %v410 = vadd.f32 %v404, 0.0
      %v411 = vadd.f32 %v405, 0.0
      %v412 = vadd.f32 %v406, 0.0
      %v413 = vadd.f32 %v407, 0.0
      %v414 = vlaneseq
      %v415 = vshrl.u32 %v414, 7
      %v416 = vsub.s32 1, %v415
      %v417 = vrot.slane %v365, %v416
      %v418 = vlaneseq
      %v419 = vshrl.u32 %v418, 7
      %v420 = vsub.s32 5, %v419
      %v421 = vrot.slane %v365, %v420
      %v424 = vlaneseq
      %v425 = vshrl.u32 %v424, 7
      %v426 = vsub.s32 1, %v425
      %v427 = vrot.slane %v417, %v426
      %v428 = vlaneseq
      %v429 = vshrl.u32 %v428, 7
      %v430 = vsub.s32 1, %v429
      %v431 = vrot.slane %v421, %v430
      %v432 = vmul.f32 %v367, %v427
      %v433 = vmul.f32 %v368, %v431
      %v434 = vmul.f32 %v370, %v427
      %v435 = vmul.f32 %v371, %v431
      %440 = vrot.lane.b32.xlu0 %v432, 112
      %v441 = vpop.permute.xlu0 %440
      %442 = vrot.lane.b32.xlu0 %v433, 112
      %v443 = vpop.permute.xlu0 %442
      %444 = vrot.lane.b32.xlu0 %v434, 112
      %v445 = vpop.permute.xlu0 %444
      %446 = vrot.lane.b32.xlu0 %v435, 112
      %v447 = vpop.permute.xlu0 %446
      %v448 = vsel %vm397, %v441, %v443
      %v449 = vsel %vm397, %v445, %v447
      %v456 = vadd.f32 %v408, %v441
      %v457 = vadd.f32 %v409, %v448
      %v458 = vadd.f32 %v410, %v443
      %v459 = vadd.f32 %v411, %v445
      %v460 = vadd.f32 %v412, %v449
      %v461 = vadd.f32 %v413, %v447
      %v462 = vld [vmem:[#allocation2 + $0x38] sm:$0xff]
      %v463 = vld [vmem:[#allocation2 + $0x58] sm:$0xff]
      %v464 = vlaneseq
      %v465 = vshrl.u32 %v464, 7
      %v466 = vsub.s32 2, %v465
      %v467 = vrot.slane %v365, %v466
      %v468 = vlaneseq
      %v469 = vshrl.u32 %v468, 7
      %v470 = vsub.s32 6, %v469
      %v471 = vrot.slane %v365, %v470
      %v474 = vlaneseq
      %v475 = vshrl.u32 %v474, 7
      %v476 = vsub.s32 2, %v475
      %v477 = vrot.slane %v467, %v476
      %v478 = vlaneseq
      %v479 = vshrl.u32 %v478, 7
      %v480 = vsub.s32 2, %v479
      %v481 = vrot.slane %v471, %v480
      %484 = vrot.lane.b32.xlu0 %v477, 16
      %v485 = vpop.permute.xlu0 %484
      %486 = vrot.lane.b32.xlu0 %v481, 16
      %v487 = vpop.permute.xlu0 %486
      %vm488 = vcmask 130048
      %v489 = vsel %vm488, %v485, %v487
      %v493 = vmul.f32 %v367, %v485
      %v494 = vmul.f32 %v368, %v489
      %v495 = vmul.f32 %v462, %v487
      %v496 = vmul.f32 %v370, %v485
      %v497 = vmul.f32 %v371, %v489
      %v498 = vmul.f32 %v463, %v487
      %505 = vrot.lane.b32.xlu0 %v493, 96
      %v506 = vpop.permute.xlu0 %505
      %507 = vrot.lane.b32.xlu0 %v494, 96
      %v508 = vpop.permute.xlu0 %507
      %509 = vrot.lane.b32.xlu0 %v495, 96
      %v510 = vpop.permute.xlu0 %509
      %511 = vrot.lane.b32.xlu0 %v496, 96
      %v512 = vpop.permute.xlu0 %511
      %513 = vrot.lane.b32.xlu0 %v497, 96
      %v514 = vpop.permute.xlu0 %513
      %515 = vrot.lane.b32.xlu0 %v498, 96
      %v516 = vpop.permute.xlu0 %515
      %vm517 = vcmask 785408
      %v518 = vsel %vm517, %v506, %v508
      %v519 = vsel %vm517, %v508, %v510
      %v520 = vsel %vm517, %v512, %v514
      %v521 = vsel %vm517, %v514, %v516
      %v528 = vadd.f32 %v456, %v506
      %v529 = vadd.f32 %v457, %v518
      %v530 = vadd.f32 %v458, %v519
      %v531 = vadd.f32 %v459, %v512
      %v532 = vadd.f32 %v460, %v520
      %v533 = vadd.f32 %v461, %v521
      %v534 = vld [vmem:[%s2] sm:$0x3]
      %v536 = vlaneseq
      %v537 = vshrl.u32 %v536, 7
      %v538 = vsub.s32 0, %v537
      %v539 = vrot.slane %v534, %v538
      %v540 = vlaneseq
      %v541 = vshrl.u32 %v540, 7
      %v542 = vsub.s32 1, %v541
      %v543 = vrot.slane %v534, %v542
      %544 = vrot.lane.b32.xlu0 %v539, 112
      %v545 = vpop.permute.xlu0 %544
      %546 = vrot.lane.b32.xlu0 %v543, 112
      %v547 = vpop.permute.xlu0 %546
      %v548 = vsel %vm397, %v545, %v547
      %v552 = vadd.f32 %v528, %v545
      %v553 = vadd.f32 %v529, %v548
      %v554 = vadd.f32 %v530, %v547
      %v555 = vadd.f32 %v531, %v545
      %v556 = vadd.f32 %v532, %v548
      %v557 = vadd.f32 %v533, %v547
      %564 = vrot.lane.b32.xlu0 %v552, 16
      %v565 = vpop.permute.xlu0 %564
      %566 = vrot.lane.b32.xlu0 %v553, 16
      %v567 = vpop.permute.xlu0 %566
      %568 = vrot.lane.b32.xlu0 %v554, 16
      %v569 = vpop.permute.xlu0 %568
      %570 = vrot.lane.b32.xlu0 %v555, 16
      %v571 = vpop.permute.xlu0 %570
      %572 = vrot.lane.b32.xlu0 %v556, 16
      %v573 = vpop.permute.xlu0 %572
      %574 = vrot.lane.b32.xlu0 %v557, 16
      %v575 = vpop.permute.xlu0 %574
      %v576 = vsel %vm488, %v565, %v567
      %v577 = vsel %vm488, %v567, %v569
      %v578 = vsel %vm488, %v571, %v573
      %v579 = vsel %vm488, %v573, %v575
      %584 = vst [vmem:[#allocation3 + $0x28] sm:$0xff] %v576
      %585 = vst [vmem:[#allocation3 + $0x30] sm:$0xff] %v577
      %586 = vst [vmem:[#allocation3 + $0x48] sm:$0xff] %v578
      %587 = vst [vmem:[#allocation3 + $0x50] sm:$0xff] %v579
      %v588 = vld [vmem:[%s3] sm:$0x77]
      %v589 = vld [vmem:[#allocation3 + $0x8] sm:$0x80]
      %v590 = vld [vmem:[#allocation3 + $0x10] sm:$0x80]
      %v591 = vld [vmem:[#allocation3 + $0x28] sm:$0xff]
      %v592 = vld [vmem:[#allocation3 + $0x30] sm:$0xff]
      %v593 = vld [vmem:[#allocation3 + $0x48] sm:$0x7f]
      %v594 = vld [vmem:[#allocation3 + $0x50] sm:$0x7f]
      %v596 = vlaneseq
      %v597 = vshrl.u32 %v596, 7
      %v598 = vsub.s32 0, %v597
      %v599 = vrot.slane %v588, %v598
      %v600 = vlaneseq
      %v601 = vshrl.u32 %v600, 7
      %v602 = vsub.s32 4, %v601
      %v603 = vrot.slane %v588, %v602
      %v606 = vlaneseq
      %v607 = vshrl.u32 %v606, 7
      %v608 = vsub.s32 0, %v607
      %v609 = vrot.slane %v599, %v608
      %v610 = vlaneseq
      %v611 = vshrl.u32 %v610, 7
      %v612 = vsub.s32 0, %v611
      %v613 = vrot.slane %v603, %v612
      %v614 = vmul.f32 %v589, %v609
      %v615 = vmul.f32 %v590, %v613
      %v616 = vmul.f32 %v591, %v609
      %v617 = vmul.f32 %v592, %v613
      %v618 = vmul.f32 %v593, %v609
      %v619 = vmul.f32 %v594, %v613
      %v620 = vadd.f32 %v614, 0.0
      %v621 = vadd.f32 %v615, 0.0
      %v622 = vadd.f32 %v616, 0.0
      %v623 = vadd.f32 %v617, 0.0
      %v624 = vadd.f32 %v618, 0.0
      %v625 = vadd.f32 %v619, 0.0
      %v626 = vld [vmem:[#allocation3 + $0x48] sm:$0xff]
      %v627 = vld [vmem:[#allocation3 + $0x50] sm:$0xff]
      %v628 = vlaneseq
      %v629 = vshrl.u32 %v628, 7
      %v630 = vsub.s32 1, %v629
      %v631 = vrot.slane %v588, %v630
      %v632 = vlaneseq
      %v633 = vshrl.u32 %v632, 7
      %v634 = vsub.s32 5, %v633
      %v635 = vrot.slane %v588, %v634
      %v638 = vlaneseq
      %v639 = vshrl.u32 %v638, 7
      %v640 = vsub.s32 1, %v639
      %v641 = vrot.slane %v631, %v640
      %v642 = vlaneseq
      %v643 = vshrl.u32 %v642, 7
      %v644 = vsub.s32 1, %v643
      %v645 = vrot.slane %v635, %v644
      %v646 = vmul.f32 %v591, %v641
      %v647 = vmul.f32 %v592, %v645
      %v648 = vmul.f32 %v626, %v641
      %v649 = vmul.f32 %v627, %v645
      %vm654 = vcmask 1046528
      %v655 = vrot.slane %v646, 1
      %v656 = vrot.slane %v647, 1
      %v657 = vrot.slane %v648, 1
      %v658 = vsel %vm654, %v655, %v657
      %v659 = vrot.slane %v649, 1
      %v660 = vsel %vm654, %v656, %v659
      %v667 = vadd.f32 %v620, %v655
      %v668 = vadd.f32 %v621, %v656
      %v669 = vadd.f32 %v622, %v658
      %v670 = vadd.f32 %v623, %v660
      %v671 = vadd.f32 %v624, %v657
      %v672 = vadd.f32 %v625, %v659
      %v673 = vld [vmem:[#allocation3 + $0x28] sm:$0xfe]
      %v674 = vld [vmem:[#allocation3 + $0x30] sm:$0xfe]
      %v675 = vld [vmem:[#allocation3 + $0x68] sm:$0x1]
      %v676 = vld [vmem:[#allocation3 + $0x70] sm:$0x1]
      %v677 = vlaneseq
      %v678 = vshrl.u32 %v677, 7
      %v679 = vsub.s32 2, %v678
      %v680 = vrot.slane %v588, %v679
      %v681 = vlaneseq
      %v682 = vshrl.u32 %v681, 7
      %v683 = vsub.s32 6, %v682
      %v684 = vrot.slane %v588, %v683
      %v687 = vlaneseq
      %v688 = vshrl.u32 %v687, 7
      %v689 = vsub.s32 2, %v688
      %v690 = vrot.slane %v680, %v689
      %v691 = vlaneseq
      %v692 = vshrl.u32 %v691, 7
      %v693 = vsub.s32 2, %v692
      %v694 = vrot.slane %v684, %v693
      %v695 = vmul.f32 %v673, %v690
      %v696 = vmul.f32 %v674, %v694
      %v697 = vmul.f32 %v626, %v690
      %v698 = vmul.f32 %v627, %v694
      %v699 = vmul.f32 %v675, %v690
      %v700 = vmul.f32 %v676, %v694
      %vm707 = vcmask 1045504
      %v708 = vrot.slane %v695, 2
      %v709 = vrot.slane %v696, 2
      %v710 = vrot.slane %v697, 2
      %v711 = vsel %vm707, %v708, %v710
      %v712 = vrot.slane %v698, 2
      %v713 = vsel %vm707, %v709, %v712
      %v714 = vrot.slane %v699, 2
      %v715 = vsel %vm707, %v710, %v714
      %v716 = vrot.slane %v700, 2
      %v717 = vsel %vm707, %v712, %v716
      %v724 = vadd.f32 %v667, %v708
      %v725 = vadd.f32 %v668, %v709
      %v726 = vadd.f32 %v669, %v711
      %v727 = vadd.f32 %v670, %v713
      %v728 = vadd.f32 %v671, %v715
      %v729 = vadd.f32 %v672, %v717
      %v730 = vld [vmem:[%s4] sm:$0x3]
      %v732 = vlaneseq
      %v733 = vshrl.u32 %v732, 7
      %v734 = vsub.s32 0, %v733
      %v735 = vrot.slane %v730, %v734
      %v736 = vlaneseq
      %v737 = vshrl.u32 %v736, 7
      %v738 = vsub.s32 1, %v737
      %v739 = vrot.slane %v730, %v738
      %v742 = vadd.f32 %v724, %v735
      %v743 = vadd.f32 %v725, %v739
      %v744 = vadd.f32 %v726, %v735
      %v745 = vadd.f32 %v727, %v739
      %v746 = vadd.f32 %v728, %v735
      %v747 = vadd.f32 %v729, %v739
      %vm754 = vcmask 1040384
      %v755 = vrot.slane %v742, 7
      %v756 = vrot.slane %v744, 7
      %v757 = vsel %vm754, %v755, %v756
      %v758 = vrot.slane %v743, 7
      %v759 = vrot.slane %v745, 7
      %v760 = vsel %vm754, %v758, %v759
      %v761 = vrot.slane %v746, 7
      %v762 = vsel %vm754, %v756, %v761
      %v763 = vrot.slane %v747, 7
      %v764 = vsel %vm754, %v759, %v763
      %769 = vst [vmem:[#allocation2 + $0x28] sm:$0xff] %v757
      %770 = vst [vmem:[#allocation2 + $0x30] sm:$0xff] %v760
      %771 = vst [vmem:[#allocation2 + $0x48] sm:$0xff] %v762
      %772 = vst [vmem:[#allocation2 + $0x50] sm:$0xff] %v764
      %v773 = vld [vmem:[%s5] sm:$0x1f]
      %v774 = vld [vmem:[%s5 + $0x8] sm:$0x1f]
      %v775 = vld [vmem:[#allocation2 + $0x20] sm:$0xff]
      %v776 = vld [vmem:[#allocation2 + $0x28] sm:$0xff]
      %v777 = vld [vmem:[#allocation2 + $0x30] sm:$0xff]
      %v778 = vld [vmem:[#allocation2 + $0x40] sm:$0xff]
      %v779 = vld [vmem:[#allocation2 + $0x48] sm:$0xff]
      %v780 = vld [vmem:[#allocation2 + $0x50] sm:$0xff]
      %v781 = vlaneseq
      %v782 = vshrl.u32 %v781, 7
      %v783 = vsub.s32 0, %v782
      %v784 = vrot.slane %v773, %v783
      %v785 = vlaneseq
      %v786 = vshrl.u32 %v785, 7
      %v787 = vsub.s32 0, %v786
      %v788 = vrot.slane %v774, %v787
      %791 = vrot.lane.b32.xlu0 %v784, 64
      %v792 = vpop.permute.xlu0 %791
      %793 = vrot.lane.b32.xlu0 %v788, 64
      %v794 = vpop.permute.xlu0 %793
      %vm795 = vcmask 523264
      %v796 = vsel %vm795, %v792, %v794
      %v800 = vmul.f32 %v775, %v792
      %v801 = vmul.f32 %v776, %v796
      %v802 = vmul.f32 %v777, %v794
      %v803 = vmul.f32 %v778, %v792
      %v804 = vmul.f32 %v779, %v796
      %v805 = vmul.f32 %v780, %v794
      %v806 = vadd.f32 %v800, 0.0
      %v807 = vadd.f32 %v801, 0.0
      %v808 = vadd.f32 %v802, 0.0
      %v809 = vadd.f32 %v803, 0.0
      %v810 = vadd.f32 %v804, 0.0
      %v811 = vadd.f32 %v805, 0.0
      %v812 = vlaneseq
      %v813 = vshrl.u32 %v812, 7
      %v814 = vsub.s32 1, %v813
      %v815 = vrot.slane %v773, %v814
      %v816 = vlaneseq
      %v817 = vshrl.u32 %v816, 7
      %v818 = vsub.s32 1, %v817
      %v819 = vrot.slane %v774, %v818
      %822 = vrot.lane.b32.xlu0 %v815, 96
      %v823 = vpop.permute.xlu0 %822
      %824 = vrot.lane.b32.xlu0 %v819, 96
      %v825 = vpop.permute.xlu0 %824
      %v826 = vsel %vm517, %v823, %v825
      %v830 = vmul.f32 %v775, %v823
      %v831 = vmul.f32 %v776, %v826
      %v832 = vmul.f32 %v777, %v825
      %v833 = vmul.f32 %v778, %v823
      %v834 = vmul.f32 %v779, %v826
      %v835 = vmul.f32 %v780, %v825
      %842 = vrot.lane.b32.xlu0 %v830, 96
      %v843 = vpop.permute.xlu0 %842
      %844 = vrot.lane.b32.xlu0 %v831, 96
      %v845 = vpop.permute.xlu0 %844
      %846 = vrot.lane.b32.xlu0 %v832, 96
      %v847 = vpop.permute.xlu0 %846
      %848 = vrot.lane.b32.xlu0 %v833, 96
      %v849 = vpop.permute.xlu0 %848
      %850 = vrot.lane.b32.xlu0 %v834, 96
      %v851 = vpop.permute.xlu0 %850
      %852 = vrot.lane.b32.xlu0 %v835, 96
      %v853 = vpop.permute.xlu0 %852
      %v854 = vsel %vm517, %v843, %v845
      %v855 = vsel %vm517, %v845, %v847
      %v856 = vsel %vm517, %v849, %v851
      %v857 = vsel %vm517, %v851, %v853
      %v864 = vadd.f32 %v806, %v854
      %v865 = vadd.f32 %v807, %v855
      %v866 = vadd.f32 %v808, %v847
      %v867 = vadd.f32 %v809, %v856
      %v868 = vadd.f32 %v810, %v857
      %v869 = vadd.f32 %v811, %v853
      %v870 = vlaneseq
      %v871 = vshrl.u32 %v870, 7
      %v872 = vsub.s32 2, %v871
      %v873 = vrot.slane %v773, %v872
      %v874 = vlaneseq
      %v875 = vshrl.u32 %v874, 7
      %v876 = vsub.s32 2, %v875
      %v877 = vrot.slane %v774, %v876
      %v878 = vmul.f32 %v776, %v873
      %v879 = vmul.f32 %v777, %v877
      %v880 = vmul.f32 %v779, %v873
      %v881 = vmul.f32 %v780, %v877
      %886 = vrot.lane.b32.xlu0 %v878, 64
      %v887 = vpop.permute.xlu0 %886
      %888 = vrot.lane.b32.xlu0 %v879, 64
      %v889 = vpop.permute.xlu0 %888
      %890 = vrot.lane.b32.xlu0 %v880, 64
      %v891 = vpop.permute.xlu0 %890
      %892 = vrot.lane.b32.xlu0 %v881, 64
      %v893 = vpop.permute.xlu0 %892
      %v894 = vsel %vm795, %v887, %v889
      %v895 = vsel %vm795, %v891, %v893
      %v902 = vadd.f32 %v864, %v887
      %v903 = vadd.f32 %v865, %v894
      %v904 = vadd.f32 %v866, %v889
      %v905 = vadd.f32 %v867, %v891
      %v906 = vadd.f32 %v868, %v895
      %v907 = vadd.f32 %v869, %v893
      %v908 = vld [vmem:[#allocation2 + $0x38] sm:$0xff]
      %v909 = vld [vmem:[#allocation2 + $0x58] sm:$0xff]
      %v910 = vlaneseq
      %v911 = vshrl.u32 %v910, 7
      %v912 = vsub.s32 3, %v911
      %v913 = vrot.slane %v773, %v912
      %v914 = vlaneseq
      %v915 = vshrl.u32 %v914, 7
      %v916 = vsub.s32 3, %v915
      %v917 = vrot.slane %v774, %v916
      %920 = vrot.lane.b32.xlu0 %v913, 32
      %v921 = vpop.permute.xlu0 %920
      %922 = vrot.lane.b32.xlu0 %v917, 32
      %v923 = vpop.permute.xlu0 %922
      %vm924 = vcmask 261120
      %v925 = vsel %vm924, %v921, %v923
      %v929 = vmul.f32 %v776, %v921
      %v930 = vmul.f32 %v777, %v925
      %v931 = vmul.f32 %v908, %v923
      %v932 = vmul.f32 %v779, %v921
      %v933 = vmul.f32 %v780, %v925
      %v934 = vmul.f32 %v909, %v923
      %941 = vrot.lane.b32.xlu0 %v929, 32
      %v942 = vpop.permute.xlu0 %941
      %943 = vrot.lane.b32.xlu0 %v930, 32
      %v944 = vpop.permute.xlu0 %943
      %945 = vrot.lane.b32.xlu0 %v931, 32
      %v946 = vpop.permute.xlu0 %945
      %947 = vrot.lane.b32.xlu0 %v932, 32
      %v948 = vpop.permute.xlu0 %947
      %949 = vrot.lane.b32.xlu0 %v933, 32
      %v950 = vpop.permute.xlu0 %949
      %951 = vrot.lane.b32.xlu0 %v934, 32
      %v952 = vpop.permute.xlu0 %951
      %v953 = vsel %vm924, %v942, %v944
      %v954 = vsel %vm924, %v944, %v946
      %v955 = vsel %vm924, %v948, %v950
      %v956 = vsel %vm924, %v950, %v952
      %v963 = vadd.f32 %v902, %v942
      %v964 = vadd.f32 %v903, %v953
      %v965 = vadd.f32 %v904, %v954
      %v966 = vadd.f32 %v905, %v948
      %v967 = vadd.f32 %v906, %v955
      %v968 = vadd.f32 %v907, %v956
      %v969 = vlaneseq
      %v970 = vshrl.u32 %v969, 7
      %v971 = vsub.s32 4, %v970
      %v972 = vrot.slane %v773, %v971
      %v973 = vlaneseq
      %v974 = vshrl.u32 %v973, 7
      %v975 = vsub.s32 4, %v974
      %v976 = vrot.slane %v774, %v975
      %979 = vrot.lane.b32.xlu0 %v972, 64
      %v980 = vpop.permute.xlu0 %979
      %981 = vrot.lane.b32.xlu0 %v976, 64
      %v982 = vpop.permute.xlu0 %981
      %v983 = vsel %vm795, %v980, %v982
      %v987 = vmul.f32 %v776, %v980
      %v988 = vmul.f32 %v777, %v983
      %v989 = vmul.f32 %v908, %v982
      %v990 = vmul.f32 %v779, %v980
      %v991 = vmul.f32 %v780, %v983
      %v992 = vmul.f32 %v909, %v982
      %v993 = vadd.f32 %v963, %v987
      %v994 = vadd.f32 %v964, %v988
      %v995 = vadd.f32 %v965, %v989
      %v996 = vadd.f32 %v966, %v990
      %v997 = vadd.f32 %v967, %v991
      %v998 = vadd.f32 %v968, %v992
      %v999 = vld [vmem:[%s6] sm:$0x3]
      %v1001 = vlaneseq
      %v1002 = vshrl.u32 %v1001, 7
      %v1003 = vsub.s32 0, %v1002
      %v1004 = vrot.slane %v999, %v1003
      %v1005 = vlaneseq
      %v1006 = vshrl.u32 %v1005, 7
      %v1007 = vsub.s32 1, %v1006
      %v1008 = vrot.slane %v999, %v1007
      %1009 = vrot.lane.b32.xlu0 %v1004, 64
      %v1010 = vpop.permute.xlu0 %1009
      %1011 = vrot.lane.b32.xlu0 %v1008, 64
      %v1012 = vpop.permute.xlu0 %1011
      %v1013 = vsel %vm795, %v1010, %v1012
      %v1017 = vadd.f32 %v993, %v1010
      %v1018 = vadd.f32 %v994, %v1013
      %v1019 = vadd.f32 %v995, %v1012
      %v1020 = vadd.f32 %v996, %v1010
      %v1021 = vadd.f32 %v997, %v1013
      %v1022 = vadd.f32 %v998, %v1012
      %1029 = vrot.lane.b32.xlu0 %v1017, 64
      %v1030 = vpop.permute.xlu0 %1029
      %1031 = vrot.lane.b32.xlu0 %v1018, 64
      %v1032 = vpop.permute.xlu0 %1031
      %1033 = vrot.lane.b32.xlu0 %v1019, 64
      %v1034 = vpop.permute.xlu0 %1033
      %1035 = vrot.lane.b32.xlu0 %v1020, 64
      %v1036 = vpop.permute.xlu0 %1035
      %1037 = vrot.lane.b32.xlu0 %v1021, 64
      %v1038 = vpop.permute.xlu0 %1037
      %1039 = vrot.lane.b32.xlu0 %v1022, 64
      %v1040 = vpop.permute.xlu0 %1039
      %v1041 = vsel %vm795, %v1030, %v1032
      %v1042 = vsel %vm795, %v1032, %v1034
      %v1043 = vsel %vm795, %v1036, %v1038
      %v1044 = vsel %vm795, %v1038, %v1040
      %1049 = vst [vmem:[#allocation3 + $0x28] sm:$0xff] %v1041
      %1050 = vst [vmem:[#allocation3 + $0x30] sm:$0xff] %v1042
      %1051 = vst [vmem:[#allocation3 + $0x48] sm:$0xff] %v1043
      %1052 = vst [vmem:[#allocation3 + $0x50] sm:$0xff] %v1044
      %v1053 = vld [vmem:[%s7] sm:$0x1f]
      %v1054 = vld [vmem:[%s7 + $0x8] sm:$0x1f]
      %v1055 = vld [vmem:[#allocation3 + $0x8] sm:$0xf0]
      %v1056 = vld [vmem:[#allocation3 + $0x10] sm:$0xf0]
      %v1057 = vld [vmem:[#allocation3 + $0x28] sm:$0xff]
      %v1058 = vld [vmem:[#allocation3 + $0x30] sm:$0xff]
      %v1059 = vld [vmem:[#allocation3 + $0x48] sm:$0xf]
      %v1060 = vld [vmem:[#allocation3 + $0x50] sm:$0xf]
      %v1061 = vlaneseq
      %v1062 = vshrl.u32 %v1061, 7
      %v1063 = vsub.s32 0, %v1062
      %v1064 = vrot.slane %v1053, %v1063
      %v1065 = vlaneseq
      %v1066 = vshrl.u32 %v1065, 7
      %v1067 = vsub.s32 0, %v1066
      %v1068 = vrot.slane %v1054, %v1067
      %v1069 = vmul.f32 %v1055, %v1064
      %v1070 = vmul.f32 %v1056, %v1068
      %v1071 = vmul.f32 %v1057, %v1064
      %v1072 = vmul.f32 %v1058, %v1068
      %v1073 = vmul.f32 %v1059, %v1064
      %v1074 = vmul.f32 %v1060, %v1068
      %v1075 = vadd.f32 %v1069, 0.0
      %v1076 = vadd.f32 %v1070, 0.0
      %v1077 = vadd.f32 %v1071, 0.0
      %v1078 = vadd.f32 %v1072, 0.0
      %v1079 = vadd.f32 %v1073, 0.0
      %v1080 = vadd.f32 %v1074, 0.0
      %v1081 = vld [vmem:[#allocation3 + $0x8] sm:$0xc0]
      %v1082 = vld [vmem:[#allocation3 + $0x10] sm:$0xc0]
      %v1083 = vld [vmem:[#allocation3 + $0x48] sm:$0x3f]
      %v1084 = vld [vmem:[#allocation3 + $0x50] sm:$0x3f]
      %v1085 = vlaneseq
      %v1086 = vshrl.u32 %v1085, 7
      %v1087 = vsub.s32 1, %v1086
      %v1088 = vrot.slane %v1053, %v1087
      %v1089 = vlaneseq
      %v1090 = vshrl.u32 %v1089, 7
      %v1091 = vsub.s32 1, %v1090
      %v1092 = vrot.slane %v1054, %v1091
      %v1093 = vmul.f32 %v1081, %v1088
      %v1094 = vmul.f32 %v1082, %v1092
      %v1095 = vmul.f32 %v1057, %v1088
      %v1096 = vmul.f32 %v1058, %v1092
      %v1097 = vmul.f32 %v1083, %v1088
      %v1098 = vmul.f32 %v1084, %v1092
      %v1105 = vrot.slane %v1093, 2
      %v1106 = vrot.slane %v1095, 2
      %v1107 = vsel %vm707, %v1105, %v1106
      %v1108 = vrot.slane %v1094, 2
      %v1109 = vrot.slane %v1096, 2
      %v1110 = vsel %vm707, %v1108, %v1109
      %v1111 = vrot.slane %v1097, 2
      %v1112 = vsel %vm707, %v1106, %v1111
      %v1113 = vrot.slane %v1098, 2
      %v1114 = vsel %vm707, %v1109, %v1113
      %v1121 = vadd.f32 %v1075, %v1107
      %v1122 = vadd.f32 %v1076, %v1110
      %v1123 = vadd.f32 %v1077, %v1112
      %v1124 = vadd.f32 %v1078, %v1114
      %v1125 = vadd.f32 %v1079, %v1111
      %v1126 = vadd.f32 %v1080, %v1113
      %v1127 = vld [vmem:[#allocation3 + $0x48] sm:$0xff]
      %v1128 = vld [vmem:[#allocation3 + $0x50] sm:$0xff]
      %v1129 = vlaneseq
      %v1130 = vshrl.u32 %v1129, 7
      %v1131 = vsub.s32 2, %v1130
      %v1132 = vrot.slane %v1053, %v1131
      %v1133 = vlaneseq
      %v1134 = vshrl.u32 %v1133, 7
      %v1135 = vsub.s32 2, %v1134
      %v1136 = vrot.slane %v1054, %v1135
      %v1137 = vmul.f32 %v1057, %v1132
      %v1138 = vmul.f32 %v1058, %v1136
      %v1139 = vmul.f32 %v1127, %v1132
      %v1140 = vmul.f32 %v1128, %v1136
      %vm1145 = vcmask 1043456
      %v1146 = vrot.slane %v1137, 4
      %v1147 = vrot.slane %v1138, 4
      %v1148 = vrot.slane %v1139, 4
      %v1149 = vsel %vm1145, %v1146, %v1148
      %v1150 = vrot.slane %v1140, 4
      %v1151 = vsel %vm1145, %v1147, %v1150
      %v1158 = vadd.f32 %v1121, %v1146
      %v1159 = vadd.f32 %v1122, %v1147
      %v1160 = vadd.f32 %v1123, %v1149
      %v1161 = vadd.f32 %v1124, %v1151
      %v1162 = vadd.f32 %v1125, %v1148
      %v1163 = vadd.f32 %v1126, %v1150
      %v1164 = vld [vmem:[#allocation3 + $0x28] sm:$0xfc]
      %v1165 = vld [vmem:[#allocation3 + $0x30] sm:$0xfc]
      %v1166 = vld [vmem:[#allocation3 + $0x68] sm:$0x3]
      %v1167 = vld [vmem:[#allocation3 + $0x70] sm:$0x3]
      %v1168 = vlaneseq
      %v1169 = vshrl.u32 %v1168, 7
      %v1170 = vsub.s32 3, %v1169
      %v1171 = vrot.slane %v1053, %v1170
      %v1172 = vlaneseq
      %v1173 = vshrl.u32 %v1172, 7
      %v1174 = vsub.s32 3, %v1173
      %v1175 = vrot.slane %v1054, %v1174
      %v1176 = vmul.f32 %v1164, %v1171
      %v1177 = vmul.f32 %v1165, %v1175
      %v1178 = vmul.f32 %v1127, %v1171
      %v1179 = vmul.f32 %v1128, %v1175
      %v1180 = vmul.f32 %v1166, %v1171
      %v1181 = vmul.f32 %v1167, %v1175
      %vm1188 = vcmask 1041408
      %v1189 = vrot.slane %v1176, 6
      %v1190 = vrot.slane %v1177, 6
      %v1191 = vrot.slane %v1178, 6
      %v1192 = vsel %vm1188, %v1189, %v1191
      %v1193 = vrot.slane %v1179, 6
      %v1194 = vsel %vm1188, %v1190, %v1193
      %v1195 = vrot.slane %v1180, 6
      %v1196 = vsel %vm1188, %v1191, %v1195
      %v1197 = vrot.slane %v1181, 6
      %v1198 = vsel %vm1188, %v1193, %v1197
      %v1205 = vadd.f32 %v1158, %v1189
      %v1206 = vadd.f32 %v1159, %v1190
      %v1207 = vadd.f32 %v1160, %v1192
      %v1208 = vadd.f32 %v1161, %v1194
      %v1209 = vadd.f32 %v1162, %v1196
      %v1210 = vadd.f32 %v1163, %v1198
      %v1211 = vld [vmem:[#allocation3 + $0x28] sm:$0xf0]
      %v1212 = vld [vmem:[#allocation3 + $0x30] sm:$0xf0]
      %v1213 = vld [vmem:[#allocation3 + $0x68] sm:$0xf]
      %v1214 = vld [vmem:[#allocation3 + $0x70] sm:$0xf]
      %v1215 = vlaneseq
      %v1216 = vshrl.u32 %v1215, 7
      %v1217 = vsub.s32 4, %v1216
      %v1218 = vrot.slane %v1053, %v1217
      %v1219 = vlaneseq
      %v1220 = vshrl.u32 %v1219, 7
      %v1221 = vsub.s32 4, %v1220
      %v1222 = vrot.slane %v1054, %v1221
      %v1223 = vmul.f32 %v1211, %v1218
      %v1224 = vmul.f32 %v1212, %v1222
      %v1225 = vmul.f32 %v1127, %v1218
      %v1226 = vmul.f32 %v1128, %v1222
      %v1227 = vmul.f32 %v1213, %v1218
      %v1228 = vmul.f32 %v1214, %v1222
      %v1229 = vadd.f32 %v1205, %v1223
      %v1230 = vadd.f32 %v1206, %v1224
      %v1231 = vadd.f32 %v1207, %v1225
      %v1232 = vadd.f32 %v1208, %v1226
      %v1233 = vadd.f32 %v1209, %v1227
      %v1234 = vadd.f32 %v1210, %v1228
      %v1235 = vld [vmem:[%s8] sm:$0x3]
      %v1237 = vlaneseq
      %v1238 = vshrl.u32 %v1237, 7
      %v1239 = vsub.s32 0, %v1238
      %v1240 = vrot.slane %v1235, %v1239
      %v1241 = vlaneseq
      %v1242 = vshrl.u32 %v1241, 7
      %v1243 = vsub.s32 1, %v1242
      %v1244 = vrot.slane %v1235, %v1243
      %v1247 = vadd.f32 %v1229, %v1240
      %v1248 = vadd.f32 %v1230, %v1244
      %v1249 = vadd.f32 %v1231, %v1240
      %v1250 = vadd.f32 %v1232, %v1244
      %v1251 = vadd.f32 %v1233, %v1240
      %v1252 = vadd.f32 %v1234, %v1244
      %v1259 = vrot.slane %v1247, 4
      %v1260 = vrot.slane %v1249, 4
      %v1261 = vsel %vm1145, %v1259, %v1260
      %v1262 = vrot.slane %v1248, 4
      %v1263 = vrot.slane %v1250, 4
      %v1264 = vsel %vm1145, %v1262, %v1263
      %v1265 = vrot.slane %v1251, 4
      %v1266 = vsel %vm1145, %v1260, %v1265
      %v1267 = vrot.slane %v1252, 4
      %v1268 = vsel %vm1145, %v1263, %v1267
      %1273 = vst [vmem:[%s332] sm:$0xff] %v1261
      %1274 = vst [vmem:[%s332 + $0x8] sm:$0xff] %v1264
      %1275 = vst [vmem:[%s332 + $0x10] sm:$0xff] %v1266
      %1276 = vst [vmem:[%s332 + $0x18] sm:$0xff] %v1268
      %p1277 = scmp.lt.s32.totalorder %s20, 1
      %s1278 = scalar_select %p1277, %s20, 1
      %s1279 = smul.addr %s1278, 4
      %s1280 = smul.addr %s1279, 8
      %s1281 = scalar_lea.vmem %s9, %s1280
      // Predicated region
      $region57: #{_lambda_.6} parent=55 // pred_check
        %p1282 = pneg %p232
      $region58: #{_lambda_.6} parent=55 // pred_check_branch
        %1284 = sbr.rel (%p1282) target = $region60
      $region59: #{_lambda_.6} parent=55 // pred_region
        _
      $region60: #{_lambda_.6} parent=55 // pred_fallthru
        _
    $region56: #{_lambda_.6} parent=5 // pred_fallthru
      _
    %p1285 = scmp.le.s32.totalorder 2, %s15
    // Predicated region
    $region61: #{_lambda_.6} parent=5 // pred_check
      %p1286 = pneg %p1285
    $region62: #{_lambda_.6} parent=5 // pred_check_branch
      %1288 = sbr.rel (%p1286) target = $region64
    $region63: #{_lambda_.6} parent=5 // pred_region
      %s1289 = ssub.s32 %s15, 2
      // Predicated region
      $region65: #{_lambda_.6} parent=63 // pred_check
        %p1290 = pneg %p238
      $region66: #{_lambda_.6} parent=63 // pred_check_branch
        %1292 = sbr.rel (%p1290) target = $region68
      $region67: #{_lambda_.6} parent=63 // pred_region
        %p1293 = scmp.lt.s32.totalorder %s21, 1
        %s1294 = scalar_select %p1293, %s21, 1
        %s1295 = smul.addr %s1294, 4
        %s1296 = smul.addr %s1295, 8
        %s1297 = scalar_lea.vmem %s9, %s1296
      $region68: #{_lambda_.6} parent=63 // pred_fallthru
        _
    $region64: #{_lambda_.6} parent=5 // pred_fallthru
      _
  $region6: #{_lambda_.6} parent=0 // loop_footer
    %s19 = sadd.s32 1, %s15
  $region7: #{_lambda_.6} parent=0 // loop_footer_branch
    %14 = sbr.rel target = $region3
  $region8: #{_lambda_.6} parent=0 // loop_exit
    _

// kernel: _lambda_.7
$region0: #{_lambda_.7}
  #allocation0 [shape = 'u32[]', space=smem, size = 0x4, offset = 0x4, fixed_abs, tag = 'smem constant byte address 0x4 - core index']
  #allocation1 [shape = 'u32[144,128]{1,0:T(1,128)}', space=vmem, size = 0x12000, scoped, tag = 'internal scratch']
  #allocation2 [shape = 'f32[48,768]{1,0:T(8,128)}', space=vmem, size = 0x24000, scoped, tag = 'scratch operand']
  #allocation3 [shape = 'f32[48,768]{1,0:T(8,128)}', space=vmem, size = 0x24000, scoped, tag = 'scratch operand']
  %s0 = inlined_call_operand.vmem [shape: f32[2,16,256], index: 0, kind: input, shape index: {}]
  %s1 = inlined_call_operand.vmem [shape: f32[5,256], index: 1, kind: input, shape index: {}]
  %s2 = inlined_call_operand.vmem [shape: f32[1,256], index: 2, kind: input, shape index: {}]
  %s3 = inlined_call_operand.vmem [shape: f32[5,256], index: 3, kind: input, shape index: {}]
  %s4 = inlined_call_operand.vmem [shape: f32[1,256], index: 4, kind: input, shape index: {}]
  %s5 = inlined_call_operand.vmem [shape: f32[7,256], index: 5, kind: input, shape index: {}]
  %s6 = inlined_call_operand.vmem [shape: f32[1,256], index: 6, kind: input, shape index: {}]
  %s7 = inlined_call_operand.vmem [shape: f32[7,256], index: 7, kind: input, shape index: {}]
  %s8 = inlined_call_operand.vmem [shape: f32[1,256], index: 8, kind: input, shape index: {}]
  %s9 = inlined_call_operand.vmem [shape: f32[2,16,256], index: 9, kind: output, shape index: {}]
  %s10 = sld [smem:[#allocation0]]
  $region69: #{_lambda_.7} parent=0
    _
  %s12 = ssub.s32 1, %s10
  %s13 = scalar_select 0, %s12, %s10
  loop: start=0, step=1, limit=4
  $region2: #{_lambda_.7} parent=0 // loop_pre_header
    _
  $region3: #{_lambda_.7} parent=0 // loop_header
    %s15 = sphi 0, %s19
    %p16 = scmp.ge.s32.totalorder %s15, 4
    %s25 = sphi 0, %s27
    %s28 = sphi 0, %s25
    %s29 = sphi 0, %s28
    %s45 = sphi 0, %s29
    %s49 = sphi 0, %s49
    %s51 = sphi 0, %s49
    %s52 = sphi 0, %s51
    %s66 = sphi 0, %s52
    %s70 = sphi 0, %s70
    %s72 = sphi 0, %s70
    %s73 = sphi 0, %s72
    %s87 = sphi 0, %s73
    %s91 = sphi 0, %s91
    %s93 = sphi 0, %s91
    %s94 = sphi 0, %s93
    %s108 = sphi 0, %s94
    %s112 = sphi 0, %s112
    %s114 = sphi 0, %s112
    %s115 = sphi 0, %s114
    %s129 = sphi 0, %s115
    %s133 = sphi 0, %s133
    %s135 = sphi 0, %s133
    %s136 = sphi 0, %s135
    %s150 = sphi 0, %s136
    %s154 = sphi 0, %s154
    %s156 = sphi 0, %s154
    %s157 = sphi 0, %s156
    %s171 = sphi 0, %s157
    %s175 = sphi 0, %s175
    %s177 = sphi 0, %s175
    %s178 = sphi 0, %s177
    %s192 = sphi 0, %s178
    %s196 = sphi 0, %s196
    %s198 = sphi 0, %s196
    %s199 = sphi 0, %s198
    %s213 = sphi 0, %s199
    %s219 = sphi 0, %s221
    %s222 = sphi 0, %s219
    %s223 = sphi 0, %s222
    %s239 = sphi 0, %s223
  $region4: #{_lambda_.7} parent=0 // loop_header_branch
    %18 = sbr.rel (%p16) target = $region8
  $region5: #{_lambda_.7} parent=0 // loop_body
    %s20 = ssub.s32 %s15, 1
    %s21 = ssub.s32 %s15, 2
    %s22 = sadd.s32 %s15, 1
    %s23 = ssub.s32 %s15, %s22
    %p24 = scmp.eq.s32.totalorder %s23, 0
    %s26 = sadd.s32 %s25, 1
    %s27 = scalar_select %p24, %s25, %s26
    %p30 = pneg %p24
    %p31 = scmp.eq.s32.totalorder %s15, 1
    %p32 = por %p30, %p31
    %p33 = scmp.ne.s32.totalorder %s25, %s28
    %p34 = scmp.eq.s32.totalorder %s15, 0
    %p35 = por %p33, %p34
    %p36 = scmp.ne.s32.totalorder %s25, %s28
    %p37 = scmp.eq.s32.totalorder %s20, 1
    %p38 = por %p36, %p37
    %p39 = scmp.ne.s32.totalorder %s28, %s29
    %p40 = scmp.eq.s32.totalorder %s20, 0
    %p41 = por %p39, %p40
    %p42 = scmp.ne.s32.totalorder %s28, %s29
    %p43 = scmp.eq.s32.totalorder %s21, 1
    %p44 = por %p42, %p43
    %p46 = scmp.ne.s32.totalorder %s29, %s45
    %p47 = scmp.eq.s32.totalorder %s21, 0
    %p48 = por %p46, %p47
    %s50 = sadd.s32 %s49, 1
    %p53 = scmp.eq.s32.totalorder %s15, 1
    %p54 = scmp.ne.s32.totalorder %s49, %s51
    %p55 = scmp.eq.s32.totalorder %s15, 0
    %p56 = por %p54, %p55
    %p57 = scmp.ne.s32.totalorder %s49, %s51
    %p58 = scmp.eq.s32.totalorder %s20, 1
    %p59 = por %p57, %p58
    %p60 = scmp.ne.s32.totalorder %s51, %s52
    %p61 = scmp.eq.s32.totalorder %s20, 0
    %p62 = por %p60, %p61
    %p63 = scmp.ne.s32.totalorder %s51, %s52
    %p64 = scmp.eq.s32.totalorder %s21, 1
    %p65 = por %p63, %p64
    %p67 = scmp.ne.s32.totalorder %s52, %s66
    %p68 = scmp.eq.s32.totalorder %s21, 0
    %p69 = por %p67, %p68
    %s71 = sadd.s32 %s70, 1
    %p74 = scmp.eq.s32.totalorder %s15, 1
    %p75 = scmp.ne.s32.totalorder %s70, %s72
    %p76 = scmp.eq.s32.totalorder %s15, 0
    %p77 = por %p75, %p76
    %p78 = scmp.ne.s32.totalorder %s70, %s72
    %p79 = scmp.eq.s32.totalorder %s20, 1
    %p80 = por %p78, %p79
    %p81 = scmp.ne.s32.totalorder %s72, %s73
    %p82 = scmp.eq.s32.totalorder %s20, 0
    %p83 = por %p81, %p82
    %p84 = scmp.ne.s32.totalorder %s72, %s73
    %p85 = scmp.eq.s32.totalorder %s21, 1
    %p86 = por %p84, %p85
    %p88 = scmp.ne.s32.totalorder %s73, %s87
    %p89 = scmp.eq.s32.totalorder %s21, 0
    %p90 = por %p88, %p89
    %s92 = sadd.s32 %s91, 1
    %p95 = scmp.eq.s32.totalorder %s15, 1
    %p96 = scmp.ne.s32.totalorder %s91, %s93
    %p97 = scmp.eq.s32.totalorder %s15, 0
    %p98 = por %p96, %p97
    %p99 = scmp.ne.s32.totalorder %s91, %s93
    %p100 = scmp.eq.s32.totalorder %s20, 1
    %p101 = por %p99, %p100
    %p102 = scmp.ne.s32.totalorder %s93, %s94
    %p103 = scmp.eq.s32.totalorder %s20, 0
    %p104 = por %p102, %p103
    %p105 = scmp.ne.s32.totalorder %s93, %s94
    %p106 = scmp.eq.s32.totalorder %s21, 1
    %p107 = por %p105, %p106
    %p109 = scmp.ne.s32.totalorder %s94, %s108
    %p110 = scmp.eq.s32.totalorder %s21, 0
    %p111 = por %p109, %p110
    %s113 = sadd.s32 %s112, 1
    %p116 = scmp.eq.s32.totalorder %s15, 1
    %p117 = scmp.ne.s32.totalorder %s112, %s114
    %p118 = scmp.eq.s32.totalorder %s15, 0
    %p119 = por %p117, %p118
    %p120 = scmp.ne.s32.totalorder %s112, %s114
    %p121 = scmp.eq.s32.totalorder %s20, 1
    %p122 = por %p120, %p121
    %p123 = scmp.ne.s32.totalorder %s114, %s115
    %p124 = scmp.eq.s32.totalorder %s20, 0
    %p125 = por %p123, %p124
    %p126 = scmp.ne.s32.totalorder %s114, %s115
    %p127 = scmp.eq.s32.totalorder %s21, 1
    %p128 = por %p126, %p127
    %p130 = scmp.ne.s32.totalorder %s115, %s129
    %p131 = scmp.eq.s32.totalorder %s21, 0
    %p132 = por %p130, %p131
    %s134 = sadd.s32 %s133, 1
    %p137 = scmp.eq.s32.totalorder %s15, 1
    %p138 = scmp.ne.s32.totalorder %s133, %s135
    %p139 = scmp.eq.s32.totalorder %s15, 0
    %p140 = por %p138, %p139
    %p141 = scmp.ne.s32.totalorder %s133, %s135
    %p142 = scmp.eq.s32.totalorder %s20, 1
    %p143 = por %p141, %p142
    %p144 = scmp.ne.s32.totalorder %s135, %s136
    %p145 = scmp.eq.s32.totalorder %s20, 0
    %p146 = por %p144, %p145
    %p147 = scmp.ne.s32.totalorder %s135, %s136
    %p148 = scmp.eq.s32.totalorder %s21, 1
    %p149 = por %p147, %p148
    %p151 = scmp.ne.s32.totalorder %s136, %s150
    %p152 = scmp.eq.s32.totalorder %s21, 0
    %p153 = por %p151, %p152
    %s155 = sadd.s32 %s154, 1
    %p158 = scmp.eq.s32.totalorder %s15, 1
    %p159 = scmp.ne.s32.totalorder %s154, %s156
    %p160 = scmp.eq.s32.totalorder %s15, 0
    %p161 = por %p159, %p160
    %p162 = scmp.ne.s32.totalorder %s154, %s156
    %p163 = scmp.eq.s32.totalorder %s20, 1
    %p164 = por %p162, %p163
    %p165 = scmp.ne.s32.totalorder %s156, %s157
    %p166 = scmp.eq.s32.totalorder %s20, 0
    %p167 = por %p165, %p166
    %p168 = scmp.ne.s32.totalorder %s156, %s157
    %p169 = scmp.eq.s32.totalorder %s21, 1
    %p170 = por %p168, %p169
    %p172 = scmp.ne.s32.totalorder %s157, %s171
    %p173 = scmp.eq.s32.totalorder %s21, 0
    %p174 = por %p172, %p173
    %s176 = sadd.s32 %s175, 1
    %p179 = scmp.eq.s32.totalorder %s15, 1
    %p180 = scmp.ne.s32.totalorder %s175, %s177
    %p181 = scmp.eq.s32.totalorder %s15, 0
    %p182 = por %p180, %p181
    %p183 = scmp.ne.s32.totalorder %s175, %s177
    %p184 = scmp.eq.s32.totalorder %s20, 1
    %p185 = por %p183, %p184
    %p186 = scmp.ne.s32.totalorder %s177, %s178
    %p187 = scmp.eq.s32.totalorder %s20, 0
    %p188 = por %p186, %p187
    %p189 = scmp.ne.s32.totalorder %s177, %s178
    %p190 = scmp.eq.s32.totalorder %s21, 1
    %p191 = por %p189, %p190
    %p193 = scmp.ne.s32.totalorder %s178, %s192
    %p194 = scmp.eq.s32.totalorder %s21, 0
    %p195 = por %p193, %p194
    %s197 = sadd.s32 %s196, 1
    %p200 = scmp.eq.s32.totalorder %s15, 1
    %p201 = scmp.ne.s32.totalorder %s196, %s198
    %p202 = scmp.eq.s32.totalorder %s15, 0
    %p203 = por %p201, %p202
    %p204 = scmp.ne.s32.totalorder %s196, %s198
    %p205 = scmp.eq.s32.totalorder %s20, 1
    %p206 = por %p204, %p205
    %p207 = scmp.ne.s32.totalorder %s198, %s199
    %p208 = scmp.eq.s32.totalorder %s20, 0
    %p209 = por %p207, %p208
    %p210 = scmp.ne.s32.totalorder %s198, %s199
    %p211 = scmp.eq.s32.totalorder %s21, 1
    %p212 = por %p210, %p211
    %p214 = scmp.ne.s32.totalorder %s199, %s213
    %p215 = scmp.eq.s32.totalorder %s21, 0
    %p216 = por %p214, %p215
    %s217 = ssub.s32 %s15, %s22
    %p218 = scmp.eq.s32.totalorder %s217, 0
    %s220 = sadd.s32 %s219, 1
    %s221 = scalar_select %p218, %s219, %s220
    %p224 = pneg %p218
    %p225 = scmp.eq.s32.totalorder %s15, 1
    %p226 = por %p224, %p225
    %p227 = scmp.ne.s32.totalorder %s219, %s222
    %p228 = scmp.eq.s32.totalorder %s15, 0
    %p229 = por %p227, %p228
    %p230 = scmp.ne.s32.totalorder %s219, %s222
    %p231 = scmp.eq.s32.totalorder %s20, 1
    %p232 = por %p230, %p231
    %p233 = scmp.ne.s32.totalorder %s222, %s223
    %p234 = scmp.eq.s32.totalorder %s20, 0
    %p235 = por %p233, %p234
    %p236 = scmp.ne.s32.totalorder %s222, %s223
    %p237 = scmp.eq.s32.totalorder %s21, 1
    %p238 = por %p236, %p237
    %p240 = scmp.ne.s32.totalorder %s223, %s239
    %p241 = scmp.eq.s32.totalorder %s21, 0
    %p242 = por %p240, %p241
    %p243 = scmp.le.s32.totalorder 1, %s15
    %p244 = scmp.lt.s32.totalorder %s15, 3
    %p245 = pnand %p243, %p244
    %p246 = pneg %p245
    // Predicated region
    $region9: #{_lambda_.7} parent=5 // pred_check
      _
    $region10: #{_lambda_.7} parent=5 // pred_check_branch
      %248 = sbr.rel (%p245) target = $region12
    $region11: #{_lambda_.7} parent=5 // pred_region
      %s249 = ssub.s32 %s15, 1
      // Predicated region
      $region13: #{_lambda_.7} parent=11 // pred_check
        %p250 = pneg %p62
      $region14: #{_lambda_.7} parent=11 // pred_check_branch
        %252 = sbr.rel (%p250) target = $region16
      $region15: #{_lambda_.7} parent=11 // pred_region
        _
      $region16: #{_lambda_.7} parent=11 // pred_fallthru
        _
      // Predicated region
      $region17: #{_lambda_.7} parent=11 // pred_check
        %p253 = pneg %p83
      $region18: #{_lambda_.7} parent=11 // pred_check_branch
        %255 = sbr.rel (%p253) target = $region20
      $region19: #{_lambda_.7} parent=11 // pred_region
        _
      $region20: #{_lambda_.7} parent=11 // pred_fallthru
        _
      // Predicated region
      $region21: #{_lambda_.7} parent=11 // pred_check
        %p256 = pneg %p104
      $region22: #{_lambda_.7} parent=11 // pred_check_branch
        %258 = sbr.rel (%p256) target = $region24
      $region23: #{_lambda_.7} parent=11 // pred_region
        _
      $region24: #{_lambda_.7} parent=11 // pred_fallthru
        _
      // Predicated region
      $region25: #{_lambda_.7} parent=11 // pred_check
        %p259 = pneg %p125
      $region26: #{_lambda_.7} parent=11 // pred_check_branch
        %261 = sbr.rel (%p259) target = $region28
      $region27: #{_lambda_.7} parent=11 // pred_region
        _
      $region28: #{_lambda_.7} parent=11 // pred_fallthru
        _
      // Predicated region
      $region29: #{_lambda_.7} parent=11 // pred_check
        %p262 = pneg %p146
      $region30: #{_lambda_.7} parent=11 // pred_check_branch
        %264 = sbr.rel (%p262) target = $region32
      $region31: #{_lambda_.7} parent=11 // pred_region
        _
      $region32: #{_lambda_.7} parent=11 // pred_fallthru
        _
      // Predicated region
      $region33: #{_lambda_.7} parent=11 // pred_check
        %p265 = pneg %p167
      $region34: #{_lambda_.7} parent=11 // pred_check_branch
        %267 = sbr.rel (%p265) target = $region36
      $region35: #{_lambda_.7} parent=11 // pred_region
        _
      $region36: #{_lambda_.7} parent=11 // pred_fallthru
        _
      // Predicated region
      $region37: #{_lambda_.7} parent=11 // pred_check
        %p268 = pneg %p188
      $region38: #{_lambda_.7} parent=11 // pred_check_branch
        %270 = sbr.rel (%p268) target = $region40
      $region39: #{_lambda_.7} parent=11 // pred_region
        _
      $region40: #{_lambda_.7} parent=11 // pred_fallthru
        _
      // Predicated region
      $region41: #{_lambda_.7} parent=11 // pred_check
        %p271 = pneg %p209
      $region42: #{_lambda_.7} parent=11 // pred_check_branch
        %273 = sbr.rel (%p271) target = $region44
      $region43: #{_lambda_.7} parent=11 // pred_region
        _
      $region44: #{_lambda_.7} parent=11 // pred_fallthru
        _
    $region12: #{_lambda_.7} parent=5 // pred_fallthru
      _
    %p274 = scmp.lt.s32.totalorder %s15, 2
    // Predicated region
    $region45: #{_lambda_.7} parent=5 // pred_check
      %p275 = pneg %p274
    $region46: #{_lambda_.7} parent=5 // pred_check_branch
      %277 = sbr.rel (%p275) target = $region48
    $region47: #{_lambda_.7} parent=5 // pred_region
      // Predicated region
      $region49: #{_lambda_.7} parent=47 // pred_check
        %p278 = pneg %p35
      $region50: #{_lambda_.7} parent=47 // pred_check_branch
        %280 = sbr.rel (%p278) target = $region52
      $region51: #{_lambda_.7} parent=47 // pred_region
        %p281 = scmp.lt.s32.totalorder %s15, 1
        %s282 = scalar_select %p281, %s15, 1
        %s283 = smul.addr %s282, 4
        %s284 = smul.addr %s283, 8
        %s285 = scalar_lea.vmem %s0, %s284
      $region52: #{_lambda_.7} parent=47 // pred_fallthru
        _
    $region48: #{_lambda_.7} parent=5 // pred_fallthru
      _
    %p286 = scmp.le.s32.totalorder 1, %s15
    %p287 = scmp.lt.s32.totalorder %s15, 3
    %p288 = pnand %p286, %p287
    %p289 = pneg %p288
    // Predicated region
    $region53: #{_lambda_.7} parent=5 // pred_check
      _
    $region54: #{_lambda_.7} parent=5 // pred_check_branch
      %291 = sbr.rel (%p288) target = $region56
    $region55: #{_lambda_.7} parent=5 // pred_region
      %s292 = ssub.s32 %s15, 1
      %p293 = scmp.lt.s32.totalorder %s20, 1
      %s294 = scalar_select %p293, %s20, 1
      %s295 = smul.addr %s294, 4
      %s296 = smul.addr %s295, 8
      %s297 = scalar_lea.vmem %s0, %s296
      %p298 = pneg %p41
      %p299 = pneg %p38
      %p300 = pneg %p62
      %p301 = pneg %p59
      %p302 = pneg %p83
      %p303 = pneg %p80
      %p304 = pneg %p104
      %p305 = pneg %p101
      %p306 = pneg %p125
      %p307 = pneg %p122
      %p308 = pneg %p146
      %p309 = pneg %p143
      %p310 = pneg %p167
      %p311 = pneg %p164
      %p312 = pneg %p188
      %p313 = pneg %p185
      %p314 = pneg %p209
      %p315 = pneg %p206
      %p316 = pneg %p235
      %p317 = pneg %p232
      %p318 = scmp.lt.s32.totalorder %s20, 1
      %s319 = scalar_select %p318, %s20, 1
      %s320 = smul.addr %s319, 4
      %s321 = smul.addr %s320, 8
      %s322 = scalar_lea.vmem %s9, %s321
      %p323 = scmp.lt.s32.totalorder %s20, 1
      %s324 = scalar_select %p323, %s20, 1
      %s325 = smul.addr %s324, 4
      %s326 = smul.addr %s325, 8
      %s327 = scalar_lea.vmem %s0, %s326
      %p328 = scmp.lt.s32.totalorder %s20, 1
      %s329 = scalar_select %p328, %s20, 1
      %s330 = smul.addr %s329, 4
      %s331 = smul.addr %s330, 8
      %s332 = scalar_lea.vmem %s9, %s331
      %333 = vst [vmem:[#allocation2] sm:$0xff] 0.0
      %334 = vst [vmem:[#allocation2 + $0x8] sm:$0xff] 0.0
      %335 = vst [vmem:[#allocation2 + $0x10] sm:$0xff] 0.0
      %336 = vst [vmem:[#allocation2 + $0x18] sm:$0xff] 0.0
      %337 = vst [vmem:[#allocation2 + $0x20] sm:$0xff] 0.0
      %338 = vst [vmem:[#allocation2 + $0x28] sm:$0xff] 0.0
      %339 = vst [vmem:[#allocation2 + $0x30] sm:$0xff] 0.0
      %340 = vst [vmem:[#allocation2 + $0x38] sm:$0xff] 0.0
      %341 = vst [vmem:[#allocation2 + $0x40] sm:$0xff] 0.0
      %342 = vst [vmem:[#allocation2 + $0x48] sm:$0xff] 0.0
      %343 = vst [vmem:[#allocation2 + $0x50] sm:$0xff] 0.0
      %344 = vst [vmem:[#allocation2 + $0x58] sm:$0xff] 0.0
      %345 = vst [vmem:[#allocation2 + $0xc0] sm:$0xff] 0.0
      %346 = vst [vmem:[#allocation2 + $0xc8] sm:$0xff] 0.0
      %347 = vst [vmem:[#allocation2 + $0xd0] sm:$0xff] 0.0
      %348 = vst [vmem:[#allocation2 + $0xd8] sm:$0xff] 0.0
      %349 = vst [vmem:[#allocation2 + $0xe0] sm:$0xff] 0.0
      %350 = vst [vmem:[#allocation2 + $0xe8] sm:$0xff] 0.0
      %351 = vst [vmem:[#allocation2 + $0xf0] sm:$0xff] 0.0
      %352 = vst [vmem:[#allocation2 + $0xf8] sm:$0xff] 0.0
      %353 = vst [vmem:[#allocation2 + $0x100] sm:$0xff] 0.0
      %354 = vst [vmem:[#allocation2 + $0x108] sm:$0xff] 0.0
      %355 = vst [vmem:[#allocation2 + $0x110] sm:$0xff] 0.0
      %356 = vst [vmem:[#allocation2 + $0x118] sm:$0xff] 0.0
      %357 = vst [vmem:[#allocation2 + $0x60] sm:$0xff] 0.0
      %358 = vst [vmem:[#allocation2 + $0x68] sm:$0xff] 0.0
      %359 = vst [vmem:[#allocation2 + $0x90] sm:$0xff] 0.0
      %360 = vst [vmem:[#allocation2 + $0x98] sm:$0xff] 0.0
      %361 = vst [vmem:[#allocation2 + $0x80] sm:$0xff] 0.0
      %362 = vst [vmem:[#allocation2 + $0x88] sm:$0xff] 0.0
      %363 = vst [vmem:[#allocation2 + $0xb0] sm:$0xff] 0.0
      %364 = vst [vmem:[#allocation2 + $0xb8] sm:$0xff] 0.0
      %365 = vst [vmem:[#allocation3] sm:$0xff] 0.0
      %366 = vst [vmem:[#allocation3 + $0x8] sm:$0xff] 0.0
      %367 = vst [vmem:[#allocation3 + $0x10] sm:$0xff] 0.0
      %368 = vst [vmem:[#allocation3 + $0x18] sm:$0xff] 0.0
      %369 = vst [vmem:[#allocation3 + $0x20] sm:$0xff] 0.0
      %370 = vst [vmem:[#allocation3 + $0x28] sm:$0xff] 0.0
      %371 = vst [vmem:[#allocation3 + $0x30] sm:$0xff] 0.0
      %372 = vst [vmem:[#allocation3 + $0x38] sm:$0xff] 0.0
      %373 = vst [vmem:[#allocation3 + $0x40] sm:$0xff] 0.0
      %374 = vst [vmem:[#allocation3 + $0x48] sm:$0xff] 0.0
      %375 = vst [vmem:[#allocation3 + $0x50] sm:$0xff] 0.0
      %376 = vst [vmem:[#allocation3 + $0x58] sm:$0xff] 0.0
      %377 = vst [vmem:[#allocation3 + $0xc0] sm:$0xff] 0.0
      %378 = vst [vmem:[#allocation3 + $0xc8] sm:$0xff] 0.0
      %379 = vst [vmem:[#allocation3 + $0xd0] sm:$0xff] 0.0
      %380 = vst [vmem:[#allocation3 + $0xd8] sm:$0xff] 0.0
      %381 = vst [vmem:[#allocation3 + $0xe0] sm:$0xff] 0.0
      %382 = vst [vmem:[#allocation3 + $0xe8] sm:$0xff] 0.0
      %383 = vst [vmem:[#allocation3 + $0xf0] sm:$0xff] 0.0
      %384 = vst [vmem:[#allocation3 + $0xf8] sm:$0xff] 0.0
      %385 = vst [vmem:[#allocation3 + $0x100] sm:$0xff] 0.0
      %386 = vst [vmem:[#allocation3 + $0x108] sm:$0xff] 0.0
      %387 = vst [vmem:[#allocation3 + $0x110] sm:$0xff] 0.0
      %388 = vst [vmem:[#allocation3 + $0x118] sm:$0xff] 0.0
      %389 = vst [vmem:[#allocation3 + $0x60] sm:$0xff] 0.0
      %390 = vst [vmem:[#allocation3 + $0x68] sm:$0xff] 0.0
      %391 = vst [vmem:[#allocation3 + $0x90] sm:$0xff] 0.0
      %392 = vst [vmem:[#allocation3 + $0x98] sm:$0xff] 0.0
      %393 = vst [vmem:[#allocation3 + $0x80] sm:$0xff] 0.0
      %394 = vst [vmem:[#allocation3 + $0x88] sm:$0xff] 0.0
      %395 = vst [vmem:[#allocation3 + $0xb0] sm:$0xff] 0.0
      %396 = vst [vmem:[#allocation3 + $0xb8] sm:$0xff] 0.0
      %v397 = vld [vmem:[%s327] sm:$0xff]
      %v398 = vld [vmem:[%s327 + $0x8] sm:$0xff]
      %v399 = vld [vmem:[%s327 + $0x10] sm:$0xff]
      %v400 = vld [vmem:[%s327 + $0x18] sm:$0xff]
      %401 = vst [vmem:[#allocation2 + $0x70] sm:$0xff] %v397
      %402 = vst [vmem:[#allocation2 + $0x78] sm:$0xff] %v398
      %403 = vst [vmem:[#allocation2 + $0xa0] sm:$0xff] %v399
      %404 = vst [vmem:[#allocation2 + $0xa8] sm:$0xff] %v400
      %v405 = vld [vmem:[%s1] sm:$0x1f]
      %v406 = vld [vmem:[%s1 + $0x8] sm:$0x1f]
      %v407 = vld [vmem:[#allocation2 + $0x68] sm:$0xff]
      %v408 = vld [vmem:[#allocation2 + $0x70] sm:$0xff]
      %v409 = vld [vmem:[#allocation2 + $0x78] sm:$0xff]
      %v410 = vld [vmem:[#allocation2 + $0x98] sm:$0xff]
      %v411 = vld [vmem:[#allocation2 + $0xa0] sm:$0xff]
      %v412 = vld [vmem:[#allocation2 + $0xa8] sm:$0xff]
      %v413 = vlaneseq
      %v414 = vshrl.u32 %v413, 7
      %v415 = vsub.s32 0, %v414
      %v416 = vrot.slane %v405, %v415
      %v417 = vlaneseq
      %v418 = vshrl.u32 %v417, 7
      %v419 = vsub.s32 0, %v418
      %v420 = vrot.slane %v406, %v419
      %423 = vrot.lane.b32.xlu0 %v416, 96
      %v424 = vpop.permute.xlu0 %423
      %425 = vrot.lane.b32.xlu0 %v420, 96
      %v426 = vpop.permute.xlu0 %425
      %vm427 = vcmask 785408
      %v428 = vsel %vm427, %v424, %v426
      %v432 = vmul.f32 %v407, %v424
      %v433 = vmul.f32 %v408, %v428
      %v434 = vmul.f32 %v409, %v426
      %v435 = vmul.f32 %v410, %v424
      %v436 = vmul.f32 %v411, %v428
      %v437 = vmul.f32 %v412, %v426
      %v438 = vadd.f32 %v432, 0.0
      %v439 = vadd.f32 %v433, 0.0
      %v440 = vadd.f32 %v434, 0.0
      %v441 = vadd.f32 %v435, 0.0
      %v442 = vadd.f32 %v436, 0.0
      %v443 = vadd.f32 %v437, 0.0
      %v444 = vlaneseq
      %v445 = vshrl.u32 %v444, 7
      %v446 = vsub.s32 1, %v445
      %v447 = vrot.slane %v405, %v446
      %v448 = vlaneseq
      %v449 = vshrl.u32 %v448, 7
      %v450 = vsub.s32 1, %v449
      %v451 = vrot.slane %v406, %v450
      %454 = vrot.lane.b32.xlu0 %v447, 112
      %v455 = vpop.permute.xlu0 %454
      %456 = vrot.lane.b32.xlu0 %v451, 112
      %v457 = vpop.permute.xlu0 %456
      %vm458 = vcmask 916480
      %v459 = vsel %vm458, %v455, %v457
      %v463 = vmul.f32 %v407, %v455
      %v464 = vmul.f32 %v408, %v459
      %v465 = vmul.f32 %v409, %v457
      %v466 = vmul.f32 %v410, %v455
      %v467 = vmul.f32 %v411, %v459
      %v468 = vmul.f32 %v412, %v457
      %475 = vrot.lane.b32.xlu0 %v463, 112
      %v476 = vpop.permute.xlu0 %475
      %477 = vrot.lane.b32.xlu0 %v464, 112
      %v478 = vpop.permute.xlu0 %477
      %479 = vrot.lane.b32.xlu0 %v465, 112
      %v480 = vpop.permute.xlu0 %479
      %481 = vrot.lane.b32.xlu0 %v466, 112
      %v482 = vpop.permute.xlu0 %481
      %483 = vrot.lane.b32.xlu0 %v467, 112
      %v484 = vpop.permute.xlu0 %483
      %485 = vrot.lane.b32.xlu0 %v468, 112
      %v486 = vpop.permute.xlu0 %485
      %v487 = vsel %vm458, %v476, %v478
      %v488 = vsel %vm458, %v478, %v480
      %v489 = vsel %vm458, %v482, %v484
      %v490 = vsel %vm458, %v484, %v486
      %v497 = vadd.f32 %v438, %v487
      %v498 = vadd.f32 %v439, %v488
      %v499 = vadd.f32 %v440, %v480
      %v500 = vadd.f32 %v441, %v489
      %v501 = vadd.f32 %v442, %v490
      %v502 = vadd.f32 %v443, %v486
      %v503 = vlaneseq
      %v504 = vshrl.u32 %v503, 7
      %v505 = vsub.s32 2, %v504
      %v506 = vrot.slane %v405, %v505
      %v507 = vlaneseq
      %v508 = vshrl.u32 %v507, 7
      %v509 = vsub.s32 2, %v508
      %v510 = vrot.slane %v406, %v509
      %v511 = vmul.f32 %v408, %v506
      %v512 = vmul.f32 %v409, %v510
      %v513 = vmul.f32 %v411, %v506
      %v514 = vmul.f32 %v412, %v510
      %519 = vrot.lane.b32.xlu0 %v511, 96
      %v520 = vpop.permute.xlu0 %519
      %521 = vrot.lane.b32.xlu0 %v512, 96
      %v522 = vpop.permute.xlu0 %521
      %523 = vrot.lane.b32.xlu0 %v513, 96
      %v524 = vpop.permute.xlu0 %523
      %525 = vrot.lane.b32.xlu0 %v514, 96
      %v526 = vpop.permute.xlu0 %525
      %v527 = vsel %vm427, %v520, %v522
      %v528 = vsel %vm427, %v524, %v526
      %v535 = vadd.f32 %v497, %v520
      %v536 = vadd.f32 %v498, %v527
      %v537 = vadd.f32 %v499, %v522
      %v538 = vadd.f32 %v500, %v524
      %v539 = vadd.f32 %v501, %v528
      %v540 = vadd.f32 %v502, %v526
      %v541 = vld [vmem:[#allocation2 + $0x80] sm:$0xff]
      %v542 = vld [vmem:[#allocation2 + $0xb0] sm:$0xff]
      %v543 = vlaneseq
      %v544 = vshrl.u32 %v543, 7
      %v545 = vsub.s32 3, %v544
      %v546 = vrot.slane %v405, %v545
      %v547 = vlaneseq
      %v548 = vshrl.u32 %v547, 7
      %v549 = vsub.s32 3, %v548
      %v550 = vrot.slane %v406, %v549
      %553 = vrot.lane.b32.xlu0 %v546, 16
      %v554 = vpop.permute.xlu0 %553
      %555 = vrot.lane.b32.xlu0 %v550, 16
      %v556 = vpop.permute.xlu0 %555
      %vm557 = vcmask 130048
      %v558 = vsel %vm557, %v554, %v556
      %v562 = vmul.f32 %v408, %v554
      %v563 = vmul.f32 %v409, %v558
      %v564 = vmul.f32 %v541, %v556
      %v565 = vmul.f32 %v411, %v554
      %v566 = vmul.f32 %v412, %v558
      %v567 = vmul.f32 %v542, %v556
      %574 = vrot.lane.b32.xlu0 %v562, 80
      %v575 = vpop.permute.xlu0 %574
      %576 = vrot.lane.b32.xlu0 %v563, 80
      %v577 = vpop.permute.xlu0 %576
      %578 = vrot.lane.b32.xlu0 %v564, 80
      %v579 = vpop.permute.xlu0 %578
      %580 = vrot.lane.b32.xlu0 %v565, 80
      %v581 = vpop.permute.xlu0 %580
      %582 = vrot.lane.b32.xlu0 %v566, 80
      %v583 = vpop.permute.xlu0 %582
      %584 = vrot.lane.b32.xlu0 %v567, 80
      %v585 = vpop.permute.xlu0 %584
      %vm586 = vcmask 654336
      %v587 = vsel %vm586, %v575, %v577
      %v588 = vsel %vm586, %v577, %v579
      %v589 = vsel %vm586, %v581, %v583
      %v590 = vsel %vm586, %v583, %v585
      %v597 = vadd.f32 %v535, %v575
      %v598 = vadd.f32 %v536, %v587
      %v599 = vadd.f32 %v537, %v588
      %v600 = vadd.f32 %v538, %v581
      %v601 = vadd.f32 %v539, %v589
      %v602 = vadd.f32 %v540, %v590
      %v603 = vlaneseq
      %v604 = vshrl.u32 %v603, 7
      %v605 = vsub.s32 4, %v604
      %v606 = vrot.slane %v405, %v605
      %v607 = vlaneseq
      %v608 = vshrl.u32 %v607, 7
      %v609 = vsub.s32 4, %v608
      %v610 = vrot.slane %v406, %v609
      %613 = vrot.lane.b32.xlu0 %v606, 32
      %v614 = vpop.permute.xlu0 %613
      %615 = vrot.lane.b32.xlu0 %v610, 32
      %v616 = vpop.permute.xlu0 %615
      %vm617 = vcmask 261120
      %v618 = vsel %vm617, %v614, %v616
      %v622 = vmul.f32 %v408, %v614
      %v623 = vmul.f32 %v409, %v618
      %v624 = vmul.f32 %v541, %v616
      %v625 = vmul.f32 %v411, %v614
      %v626 = vmul.f32 %v412, %v618
      %v627 = vmul.f32 %v542, %v616
      %634 = vrot.lane.b32.xlu0 %v622, 64
      %v635 = vpop.permute.xlu0 %634
      %636 = vrot.lane.b32.xlu0 %v623, 64
      %v637 = vpop.permute.xlu0 %636
      %638 = vrot.lane.b32.xlu0 %v624, 64
      %v639 = vpop.permute.xlu0 %638
      %640 = vrot.lane.b32.xlu0 %v625, 64
      %v641 = vpop.permute.xlu0 %640
      %642 = vrot.lane.b32.xlu0 %v626, 64
      %v643 = vpop.permute.xlu0 %642
      %644 = vrot.lane.b32.xlu0 %v627, 64
      %v645 = vpop.permute.xlu0 %644
      %vm646 = vcmask 523264
      %v647 = vsel %vm646, %v635, %v637
      %v648 = vsel %vm646, %v637, %v639
      %v649 = vsel %vm646, %v641, %v643
      %v650 = vsel %vm646, %v643, %v645
      %v657 = vadd.f32 %v597, %v635
      %v658 = vadd.f32 %v598, %v647
      %v659 = vadd.f32 %v599, %v648
      %v660 = vadd.f32 %v600, %v641
      %v661 = vadd.f32 %v601, %v649
      %v662 = vadd.f32 %v602, %v650
      %v663 = vld [vmem:[%s2] sm:$0x3]
      %v665 = vlaneseq
      %v666 = vshrl.u32 %v665, 7
      %v667 = vsub.s32 0, %v666
      %v668 = vrot.slane %v663, %v667
      %v669 = vlaneseq
      %v670 = vshrl.u32 %v669, 7
      %v671 = vsub.s32 1, %v670
      %v672 = vrot.slane %v663, %v671
      %673 = vrot.lane.b32.xlu0 %v668, 96
      %v674 = vpop.permute.xlu0 %673
      %675 = vrot.lane.b32.xlu0 %v672, 96
      %v676 = vpop.permute.xlu0 %675
      %v677 = vsel %vm427, %v674, %v676
      %v681 = vadd.f32 %v657, %v674
      %v682 = vadd.f32 %v658, %v677
      %v683 = vadd.f32 %v659, %v676
      %v684 = vadd.f32 %v660, %v674
      %v685 = vadd.f32 %v661, %v677
      %v686 = vadd.f32 %v662, %v676
      %693 = vrot.lane.b32.xlu0 %v681, 32
      %v694 = vpop.permute.xlu0 %693
      %695 = vrot.lane.b32.xlu0 %v682, 32
      %v696 = vpop.permute.xlu0 %695
      %697 = vrot.lane.b32.xlu0 %v683, 32
      %v698 = vpop.permute.xlu0 %697
      %699 = vrot.lane.b32.xlu0 %v684, 32
      %v700 = vpop.permute.xlu0 %699
      %701 = vrot.lane.b32.xlu0 %v685, 32
      %v702 = vpop.permute.xlu0 %701
      %703 = vrot.lane.b32.xlu0 %v686, 32
      %v704 = vpop.permute.xlu0 %703
      %v705 = vsel %vm617, %v694, %v696
      %v706 = vsel %vm617, %v696, %v698
      %v707 = vsel %vm617, %v700, %v702
      %v708 = vsel %vm617, %v702, %v704
      %713 = vst [vmem:[#allocation3 + $0x70] sm:$0xff] %v705
      %714 = vst [vmem:[#allocation3 + $0x78] sm:$0xff] %v706
      %715 = vst [vmem:[#allocation3 + $0xa0] sm:$0xff] %v707
      %716 = vst [vmem:[#allocation3 + $0xa8] sm:$0xff] %v708
      %v717 = vld [vmem:[%s3] sm:$0x1f]
      %v718 = vld [vmem:[%s3 + $0x8] sm:$0x1f]
      %v719 = vld [vmem:[#allocation3 + $0x40] sm:$0xc0]
      %v720 = vld [vmem:[#allocation3 + $0x48] sm:$0xc0]
      %v721 = vld [vmem:[#allocation3 + $0x70] sm:$0xff]
      %v722 = vld [vmem:[#allocation3 + $0x78] sm:$0xff]
      %v723 = vld [vmem:[#allocation3 + $0xa0] sm:$0x3f]
      %v724 = vld [vmem:[#allocation3 + $0xa8] sm:$0x3f]
      %v725 = vlaneseq
      %v726 = vshrl.u32 %v725, 7
      %v727 = vsub.s32 0, %v726
      %v728 = vrot.slane %v717, %v727
      %v729 = vlaneseq
      %v730 = vshrl.u32 %v729, 7
      %v731 = vsub.s32 0, %v730
      %v732 = vrot.slane %v718, %v731
      %v733 = vmul.f32 %v719, %v728
      %v734 = vmul.f32 %v720, %v732
      %v735 = vmul.f32 %v721, %v728
      %v736 = vmul.f32 %v722, %v732
      %v737 = vmul.f32 %v723, %v728
      %v738 = vmul.f32 %v724, %v732
      %v739 = vadd.f32 %v733, 0.0
      %v740 = vadd.f32 %v734, 0.0
      %v741 = vadd.f32 %v735, 0.0
      %v742 = vadd.f32 %v736, 0.0
      %v743 = vadd.f32 %v737, 0.0
      %v744 = vadd.f32 %v738, 0.0
      %v745 = vld [vmem:[#allocation3 + $0x40] sm:$0x80]
      %v746 = vld [vmem:[#allocation3 + $0x48] sm:$0x80]
      %v747 = vld [vmem:[#allocation3 + $0xa0] sm:$0x7f]
      %v748 = vld [vmem:[#allocation3 + $0xa8] sm:$0x7f]
      %v749 = vlaneseq
      %v750 = vshrl.u32 %v749, 7
      %v751 = vsub.s32 1, %v750
      %v752 = vrot.slane %v717, %v751
      %v753 = vlaneseq
      %v754 = vshrl.u32 %v753, 7
      %v755 = vsub.s32 1, %v754
      %v756 = vrot.slane %v718, %v755
      %v757 = vmul.f32 %v745, %v752
      %v758 = vmul.f32 %v746, %v756
      %v759 = vmul.f32 %v721, %v752
      %v760 = vmul.f32 %v722, %v756
      %v761 = vmul.f32 %v747, %v752
      %v762 = vmul.f32 %v748, %v756
      %vm769 = vcmask 1046528
      %v770 = vrot.slane %v757, 1
      %v771 = vrot.slane %v759, 1
      %v772 = vsel %vm769, %v770, %v771
      %v773 = vrot.slane %v758, 1
      %v774 = vrot.slane %v760, 1
      %v775 = vsel %vm769, %v773, %v774
      %v776 = vrot.slane %v761, 1
      %v777 = vsel %vm769, %v771, %v776
      %v778 = vrot.slane %v762, 1
      %v779 = vsel %vm769, %v774, %v778
      %v786 = vadd.f32 %v739, %v772
      %v787 = vadd.f32 %v740, %v775
      %v788 = vadd.f32 %v741, %v777
      %v789 = vadd.f32 %v742, %v779
      %v790 = vadd.f32 %v743, %v776
      %v791 = vadd.f32 %v744, %v778
      %v792 = vld [vmem:[#allocation3 + $0xa0] sm:$0xff]
      %v793 = vld [vmem:[#allocation3 + $0xa8] sm:$0xff]
      %v794 = vlaneseq
      %v795 = vshrl.u32 %v794, 7
      %v796 = vsub.s32 2, %v795
      %v797 = vrot.slane %v717, %v796
      %v798 = vlaneseq
      %v799 = vshrl.u32 %v798, 7
      %v800 = vsub.s32 2, %v799
      %v801 = vrot.slane %v718, %v800
      %v802 = vmul.f32 %v721, %v797
      %v803 = vmul.f32 %v722, %v801
      %v804 = vmul.f32 %v792, %v797
      %v805 = vmul.f32 %v793, %v801
      %vm810 = vcmask 1045504
      %v811 = vrot.slane %v802, 2
      %v812 = vrot.slane %v803, 2
      %v813 = vrot.slane %v804, 2
      %v814 = vsel %vm810, %v811, %v813
      %v815 = vrot.slane %v805, 2
      %v816 = vsel %vm810, %v812, %v815
      %v823 = vadd.f32 %v786, %v811
      %v824 = vadd.f32 %v787, %v812
      %v825 = vadd.f32 %v788, %v814
      %v826 = vadd.f32 %v789, %v816
      %v827 = vadd.f32 %v790, %v813
      %v828 = vadd.f32 %v791, %v815
      %v829 = vld [vmem:[#allocation3 + $0x70] sm:$0xfe]
      %v830 = vld [vmem:[#allocation3 + $0x78] sm:$0xfe]
      %v831 = vld [vmem:[#allocation3 + $0xd0] sm:$0x1]
      %v832 = vld [vmem:[#allocation3 + $0xd8] sm:$0x1]
      %v833 = vlaneseq
      %v834 = vshrl.u32 %v833, 7
      %v835 = vsub.s32 3, %v834
      %v836 = vrot.slane %v717, %v835
      %v837 = vlaneseq
      %v838 = vshrl.u32 %v837, 7
      %v839 = vsub.s32 3, %v838
      %v840 = vrot.slane %v718, %v839
      %v841 = vmul.f32 %v829, %v836
      %v842 = vmul.f32 %v830, %v840
      %v843 = vmul.f32 %v792, %v836
      %v844 = vmul.f32 %v793, %v840
      %v845 = vmul.f32 %v831, %v836
      %v846 = vmul.f32 %v832, %v840
      %vm853 = vcmask 1044480
      %v854 = vrot.slane %v841, 3
      %v855 = vrot.slane %v842, 3
      %v856 = vrot.slane %v843, 3
      %v857 = vsel %vm853, %v854, %v856
      %v858 = vrot.slane %v844, 3
      %v859 = vsel %vm853, %v855, %v858
      %v860 = vrot.slane %v845, 3
      %v861 = vsel %vm853, %v856, %v860
      %v862 = vrot.slane %v846, 3
      %v863 = vsel %vm853, %v858, %v862
      %v870 = vadd.f32 %v823, %v854
      %v871 = vadd.f32 %v824, %v855
      %v872 = vadd.f32 %v825, %v857
      %v873 = vadd.f32 %v826, %v859
      %v874 = vadd.f32 %v827, %v861
      %v875 = vadd.f32 %v828, %v863
      %v876 = vld [vmem:[#allocation3 + $0x70] sm:$0xfc]
      %v877 = vld [vmem:[#allocation3 + $0x78] sm:$0xfc]
      %v878 = vld [vmem:[#allocation3 + $0xd0] sm:$0x3]
      %v879 = vld [vmem:[#allocation3 + $0xd8] sm:$0x3]
      %v880 = vlaneseq
      %v881 = vshrl.u32 %v880, 7
      %v882 = vsub.s32 4, %v881
      %v883 = vrot.slane %v717, %v882
      %v884 = vlaneseq
      %v885 = vshrl.u32 %v884, 7
      %v886 = vsub.s32 4, %v885
      %v887 = vrot.slane %v718, %v886
      %v888 = vmul.f32 %v876, %v883
      %v889 = vmul.f32 %v877, %v887
      %v890 = vmul.f32 %v792, %v883
      %v891 = vmul.f32 %v793, %v887
      %v892 = vmul.f32 %v878, %v883
      %v893 = vmul.f32 %v879, %v887
      %vm900 = vcmask 1043456
      %v901 = vrot.slane %v888, 4
      %v902 = vrot.slane %v889, 4
      %v903 = vrot.slane %v890, 4
      %v904 = vsel %vm900, %v901, %v903
      %v905 = vrot.slane %v891, 4
      %v906 = vsel %vm900, %v902, %v905
      %v907 = vrot.slane %v892, 4
      %v908 = vsel %vm900, %v903, %v907
      %v909 = vrot.slane %v893, 4
      %v910 = vsel %vm900, %v905, %v909
      %v917 = vadd.f32 %v870, %v901
      %v918 = vadd.f32 %v871, %v902
      %v919 = vadd.f32 %v872, %v904
      %v920 = vadd.f32 %v873, %v906
      %v921 = vadd.f32 %v874, %v908
      %v922 = vadd.f32 %v875, %v910
      %v923 = vld [vmem:[%s4] sm:$0x3]
      %v925 = vlaneseq
      %v926 = vshrl.u32 %v925, 7
      %v927 = vsub.s32 0, %v926
      %v928 = vrot.slane %v923, %v927
      %v929 = vlaneseq
      %v930 = vshrl.u32 %v929, 7
      %v931 = vsub.s32 1, %v930
      %v932 = vrot.slane %v923, %v931
      %v935 = vadd.f32 %v917, %v928
      %v936 = vadd.f32 %v918, %v932
      %v937 = vadd.f32 %v919, %v928
      %v938 = vadd.f32 %v920, %v932
      %v939 = vadd.f32 %v921, %v928
      %v940 = vadd.f32 %v922, %v932
      %vm947 = vcmask 1041408
      %v948 = vrot.slane %v935, 6
      %v949 = vrot.slane %v937, 6
      %v950 = vsel %vm947, %v948, %v949
      %v951 = vrot.slane %v936, 6
      %v952 = vrot.slane %v938, 6
      %v953 = vsel %vm947, %v951, %v952
      %v954 = vrot.slane %v939, 6
      %v955 = vsel %vm947, %v949, %v954
      %v956 = vrot.slane %v940, 6
      %v957 = vsel %vm947, %v952, %v956
      %962 = vst [vmem:[#allocation2 + $0x70] sm:$0xff] %v950
      %963 = vst [vmem:[#allocation2 + $0x78] sm:$0xff] %v953
      %964 = vst [vmem:[#allocation2 + $0xa0] sm:$0xff] %v955
      %965 = vst [vmem:[#allocation2 + $0xa8] sm:$0xff] %v957
      %v966 = vld [vmem:[%s5] sm:$0x7f]
      %v967 = vld [vmem:[%s5 + $0x8] sm:$0x7f]
      %v968 = vld [vmem:[#allocation2 + $0x60] sm:$0xff]
      %v969 = vld [vmem:[#allocation2 + $0x68] sm:$0xff]
      %v970 = vld [vmem:[#allocation2 + $0x70] sm:$0xff]
      %v971 = vld [vmem:[#allocation2 + $0x90] sm:$0xff]
      %v972 = vld [vmem:[#allocation2 + $0x98] sm:$0xff]
      %v973 = vld [vmem:[#allocation2 + $0xa0] sm:$0xff]
      %v974 = vlaneseq
      %v975 = vshrl.u32 %v974, 7
      %v976 = vsub.s32 0, %v975
      %v977 = vrot.slane %v966, %v976
      %v978 = vlaneseq
      %v979 = vshrl.u32 %v978, 7
      %v980 = vsub.s32 0, %v979
      %v981 = vrot.slane %v967, %v980
      %984 = vrot.lane.b32.xlu0 %v977, 112
      %v985 = vpop.permute.xlu0 %984
      %986 = vrot.lane.b32.xlu0 %v981, 112
      %v987 = vpop.permute.xlu0 %986
      %v988 = vsel %vm458, %v985, %v987
      %v992 = vmul.f32 %v968, %v985
      %v993 = vmul.f32 %v969, %v988
      %v994 = vmul.f32 %v970, %v987
      %v995 = vmul.f32 %v971, %v985
      %v996 = vmul.f32 %v972, %v988
      %v997 = vmul.f32 %v973, %v987
      %v998 = vadd.f32 %v992, 0.0
      %v999 = vadd.f32 %v993, 0.0
      %v1000 = vadd.f32 %v994, 0.0
      %v1001 = vadd.f32 %v995, 0.0
      %v1002 = vadd.f32 %v996, 0.0
      %v1003 = vadd.f32 %v997, 0.0
      %v1004 = vld [vmem:[#allocation2 + $0x78] sm:$0xff]
      %v1005 = vld [vmem:[#allocation2 + $0xa8] sm:$0xff]
      %v1006 = vlaneseq
      %v1007 = vshrl.u32 %v1006, 7
      %v1008 = vsub.s32 1, %v1007
      %v1009 = vrot.slane %v966, %v1008
      %v1010 = vlaneseq
      %v1011 = vshrl.u32 %v1010, 7
      %v1012 = vsub.s32 1, %v1011
      %v1013 = vrot.slane %v967, %v1012
      %1016 = vrot.lane.b32.xlu0 %v1009, 32
      %v1017 = vpop.permute.xlu0 %1016
      %1018 = vrot.lane.b32.xlu0 %v1013, 32
      %v1019 = vpop.permute.xlu0 %1018
      %v1020 = vsel %vm617, %v1017, %v1019
      %v1024 = vmul.f32 %v969, %v1017
      %v1025 = vmul.f32 %v970, %v1020
      %v1026 = vmul.f32 %v1004, %v1019
      %v1027 = vmul.f32 %v972, %v1017
      %v1028 = vmul.f32 %v973, %v1020
      %v1029 = vmul.f32 %v1005, %v1019
      %1036 = vrot.lane.b32.xlu0 %v1024, 80
      %v1037 = vpop.permute.xlu0 %1036
      %1038 = vrot.lane.b32.xlu0 %v1025, 80
      %v1039 = vpop.permute.xlu0 %1038
      %1040 = vrot.lane.b32.xlu0 %v1026, 80
      %v1041 = vpop.permute.xlu0 %1040
      %1042 = vrot.lane.b32.xlu0 %v1027, 80
      %v1043 = vpop.permute.xlu0 %1042
      %1044 = vrot.lane.b32.xlu0 %v1028, 80
      %v1045 = vpop.permute.xlu0 %1044
      %1046 = vrot.lane.b32.xlu0 %v1029, 80
      %v1047 = vpop.permute.xlu0 %1046
      %v1048 = vsel %vm586, %v1037, %v1039
      %v1049 = vsel %vm586, %v1039, %v1041
      %v1050 = vsel %vm586, %v1043, %v1045
      %v1051 = vsel %vm586, %v1045, %v1047
      %v1058 = vadd.f32 %v998, %v1037
      %v1059 = vadd.f32 %v999, %v1048
      %v1060 = vadd.f32 %v1000, %v1049
      %v1061 = vadd.f32 %v1001, %v1043
      %v1062 = vadd.f32 %v1002, %v1050
      %v1063 = vadd.f32 %v1003, %v1051
      %v1064 = vlaneseq
      %v1065 = vshrl.u32 %v1064, 7
      %v1066 = vsub.s32 2, %v1065
      %v1067 = vrot.slane %v966, %v1066
      %v1068 = vlaneseq
      %v1069 = vshrl.u32 %v1068, 7
      %v1070 = vsub.s32 2, %v1069
      %v1071 = vrot.slane %v967, %v1070
      %1074 = vrot.lane.b32.xlu0 %v1067, 80
      %v1075 = vpop.permute.xlu0 %1074
      %1076 = vrot.lane.b32.xlu0 %v1071, 80
      %v1077 = vpop.permute.xlu0 %1076
      %v1078 = vsel %vm586, %v1075, %v1077
      %v1082 = vmul.f32 %v969, %v1075
      %v1083 = vmul.f32 %v970, %v1078
      %v1084 = vmul.f32 %v1004, %v1077
      %v1085 = vmul.f32 %v972, %v1075
      %v1086 = vmul.f32 %v973, %v1078
      %v1087 = vmul.f32 %v1005, %v1077
      %1094 = vrot.lane.b32.xlu0 %v1082, 32
      %v1095 = vpop.permute.xlu0 %1094
      %1096 = vrot.lane.b32.xlu0 %v1083, 32
      %v1097 = vpop.permute.xlu0 %1096
      %1098 = vrot.lane.b32.xlu0 %v1084, 32
      %v1099 = vpop.permute.xlu0 %1098
      %1100 = vrot.lane.b32.xlu0 %v1085, 32
      %v1101 = vpop.permute.xlu0 %1100
      %1102 = vrot.lane.b32.xlu0 %v1086, 32
      %v1103 = vpop.permute.xlu0 %1102
      %1104 = vrot.lane.b32.xlu0 %v1087, 32
      %v1105 = vpop.permute.xlu0 %1104
      %v1106 = vsel %vm617, %v1095, %v1097
      %v1107 = vsel %vm617, %v1097, %v1099
      %v1108 = vsel %vm617, %v1101, %v1103
      %v1109 = vsel %vm617, %v1103, %v1105
      %v1116 = vadd.f32 %v1058, %v1095
      %v1117 = vadd.f32 %v1059, %v1106
      %v1118 = vadd.f32 %v1060, %v1107
      %v1119 = vadd.f32 %v1061, %v1101
      %v1120 = vadd.f32 %v1062, %v1108
      %v1121 = vadd.f32 %v1063, %v1109
      %v1122 = vlaneseq
      %v1123 = vshrl.u32 %v1122, 7
      %v1124 = vsub.s32 3, %v1123
      %v1125 = vrot.slane %v966, %v1124
      %v1126 = vlaneseq
      %v1127 = vshrl.u32 %v1126, 7
      %v1128 = vsub.s32 3, %v1127
      %v1129 = vrot.slane %v967, %v1128
      %v1130 = vmul.f32 %v970, %v1125
      %v1131 = vmul.f32 %v1004, %v1129
      %v1132 = vmul.f32 %v973, %v1125
      %v1133 = vmul.f32 %v1005, %v1129
      %1138 = vrot.lane.b32.xlu0 %v1130, 112
      %v1139 = vpop.permute.xlu0 %1138
      %1140 = vrot.lane.b32.xlu0 %v1131, 112
      %v1141 = vpop.permute.xlu0 %1140
      %1142 = vrot.lane.b32.xlu0 %v1132, 112
      %v1143 = vpop.permute.xlu0 %1142
      %1144 = vrot.lane.b32.xlu0 %v1133, 112
      %v1145 = vpop.permute.xlu0 %1144
      %v1146 = vsel %vm458, %v1139, %v1141
      %v1147 = vsel %vm458, %v1143, %v1145
      %v1154 = vadd.f32 %v1116, %v1139
      %v1155 = vadd.f32 %v1117, %v1146
      %v1156 = vadd.f32 %v1118, %v1141
      %v1157 = vadd.f32 %v1119, %v1143
      %v1158 = vadd.f32 %v1120, %v1147
      %v1159 = vadd.f32 %v1121, %v1145
      %v1160 = vld [vmem:[#allocation2 + $0x80] sm:$0xff]
      %v1161 = vld [vmem:[#allocation2 + $0xb0] sm:$0xff]
      %v1162 = vlaneseq
      %v1163 = vshrl.u32 %v1162, 7
      %v1164 = vsub.s32 4, %v1163
      %v1165 = vrot.slane %v966, %v1164
      %v1166 = vlaneseq
      %v1167 = vshrl.u32 %v1166, 7
      %v1168 = vsub.s32 4, %v1167
      %v1169 = vrot.slane %v967, %v1168
      %1172 = vrot.lane.b32.xlu0 %v1165, 48
      %v1173 = vpop.permute.xlu0 %1172
      %1174 = vrot.lane.b32.xlu0 %v1169, 48
      %v1175 = vpop.permute.xlu0 %1174
      %vm1176 = vcmask 392192
      %v1177 = vsel %vm1176, %v1173, %v1175
      %v1181 = vmul.f32 %v970, %v1173
      %v1182 = vmul.f32 %v1004, %v1177
      %v1183 = vmul.f32 %v1160, %v1175
      %v1184 = vmul.f32 %v973, %v1173
      %v1185 = vmul.f32 %v1005, %v1177
      %v1186 = vmul.f32 %v1161, %v1175
      %1193 = vrot.lane.b32.xlu0 %v1181, 64
      %v1194 = vpop.permute.xlu0 %1193
      %1195 = vrot.lane.b32.xlu0 %v1182, 64
      %v1196 = vpop.permute.xlu0 %1195
      %1197 = vrot.lane.b32.xlu0 %v1183, 64
      %v1198 = vpop.permute.xlu0 %1197
      %1199 = vrot.lane.b32.xlu0 %v1184, 64
      %v1200 = vpop.permute.xlu0 %1199
      %1201 = vrot.lane.b32.xlu0 %v1185, 64
      %v1202 = vpop.permute.xlu0 %1201
      %1203 = vrot.lane.b32.xlu0 %v1186, 64
      %v1204 = vpop.permute.xlu0 %1203
      %v1205 = vsel %vm646, %v1194, %v1196
      %v1206 = vsel %vm646, %v1196, %v1198
      %v1207 = vsel %vm646, %v1200, %v1202
      %v1208 = vsel %vm646, %v1202, %v1204
      %v1215 = vadd.f32 %v1154, %v1194
      %v1216 = vadd.f32 %v1155, %v1205
      %v1217 = vadd.f32 %v1156, %v1206
      %v1218 = vadd.f32 %v1157, %v1200
      %v1219 = vadd.f32 %v1158, %v1207
      %v1220 = vadd.f32 %v1159, %v1208
      %v1221 = vlaneseq
      %v1222 = vshrl.u32 %v1221, 7
      %v1223 = vsub.s32 5, %v1222
      %v1224 = vrot.slane %v966, %v1223
      %v1225 = vlaneseq
      %v1226 = vshrl.u32 %v1225, 7
      %v1227 = vsub.s32 5, %v1226
      %v1228 = vrot.slane %v967, %v1227
      %1231 = vrot.lane.b32.xlu0 %v1224, 96
      %v1232 = vpop.permute.xlu0 %1231
      %1233 = vrot.lane.b32.xlu0 %v1228, 96
      %v1234 = vpop.permute.xlu0 %1233
      %v1235 = vsel %vm427, %v1232, %v1234
      %v1239 = vmul.f32 %v970, %v1232
      %v1240 = vmul.f32 %v1004, %v1235
      %v1241 = vmul.f32 %v1160, %v1234
      %v1242 = vmul.f32 %v973, %v1232
      %v1243 = vmul.f32 %v1005, %v1235
      %v1244 = vmul.f32 %v1161, %v1234
      %1251 = vrot.lane.b32.xlu0 %v1239, 16
      %v1252 = vpop.permute.xlu0 %1251
      %1253 = vrot.lane.b32.xlu0 %v1240, 16
      %v1254 = vpop.permute.xlu0 %1253
      %1255 = vrot.lane.b32.xlu0 %v1241, 16
      %v1256 = vpop.permute.xlu0 %1255
      %1257 = vrot.lane.b32.xlu0 %v1242, 16
      %v1258 = vpop.permute.xlu0 %1257
      %1259 = vrot.lane.b32.xlu0 %v1243, 16
      %v1260 = vpop.permute.xlu0 %1259
      %1261 = vrot.lane.b32.xlu0 %v1244, 16
      %v1262 = vpop.permute.xlu0 %1261
      %v1263 = vsel %vm557, %v1252, %v1254
      %v1264 = vsel %vm557, %v1254, %v1256
      %v1265 = vsel %vm557, %v1258, %v1260
      %v1266 = vsel %vm557, %v1260, %v1262
      %v1273 = vadd.f32 %v1215, %v1252
      %v1274 = vadd.f32 %v1216, %v1263
      %v1275 = vadd.f32 %v1217, %v1264
      %v1276 = vadd.f32 %v1218, %v1258
      %v1277 = vadd.f32 %v1219, %v1265
      %v1278 = vadd.f32 %v1220, %v1266
      %v1279 = vld [vmem:[#allocation2 + $0x88] sm:$0xff]
      %v1280 = vld [vmem:[#allocation2 + $0xb8] sm:$0xff]
      %v1281 = vlaneseq
      %v1282 = vshrl.u32 %v1281, 7
      %v1283 = vsub.s32 6, %v1282
      %v1284 = vrot.slane %v966, %v1283
      %v1285 = vlaneseq
      %v1286 = vshrl.u32 %v1285, 7
      %v1287 = vsub.s32 6, %v1286
      %v1288 = vrot.slane %v967, %v1287
      %1291 = vrot.lane.b32.xlu0 %v1284, 16
      %v1292 = vpop.permute.xlu0 %1291
      %1293 = vrot.lane.b32.xlu0 %v1288, 16
      %v1294 = vpop.permute.xlu0 %1293
      %v1295 = vsel %vm557, %v1292, %v1294
      %v1299 = vmul.f32 %v1004, %v1292
      %v1300 = vmul.f32 %v1160, %v1295
      %v1301 = vmul.f32 %v1279, %v1294
      %v1302 = vmul.f32 %v1005, %v1292
      %v1303 = vmul.f32 %v1161, %v1295
      %v1304 = vmul.f32 %v1280, %v1294
      %1311 = vrot.lane.b32.xlu0 %v1299, 96
      %v1312 = vpop.permute.xlu0 %1311
      %1313 = vrot.lane.b32.xlu0 %v1300, 96
      %v1314 = vpop.permute.xlu0 %1313
      %1315 = vrot.lane.b32.xlu0 %v1301, 96
      %v1316 = vpop.permute.xlu0 %1315
      %1317 = vrot.lane.b32.xlu0 %v1302, 96
      %v1318 = vpop.permute.xlu0 %1317
      %1319 = vrot.lane.b32.xlu0 %v1303, 96
      %v1320 = vpop.permute.xlu0 %1319
      %1321 = vrot.lane.b32.xlu0 %v1304, 96
      %v1322 = vpop.permute.xlu0 %1321
      %v1323 = vsel %vm427, %v1312, %v1314
      %v1324 = vsel %vm427, %v1314, %v1316
      %v1325 = vsel %vm427, %v1318, %v1320
      %v1326 = vsel %vm427, %v1320, %v1322
      %v1333 = vadd.f32 %v1273, %v1312
      %v1334 = vadd.f32 %v1274, %v1323
      %v1335 = vadd.f32 %v1275, %v1324
      %v1336 = vadd.f32 %v1276, %v1318
      %v1337 = vadd.f32 %v1277, %v1325
      %v1338 = vadd.f32 %v1278, %v1326
      %v1339 = vld [vmem:[%s6] sm:$0x3]
      %v1341 = vlaneseq
      %v1342 = vshrl.u32 %v1341, 7
      %v1343 = vsub.s32 0, %v1342
      %v1344 = vrot.slane %v1339, %v1343
      %v1345 = vlaneseq
      %v1346 = vshrl.u32 %v1345, 7
      %v1347 = vsub.s32 1, %v1346
      %v1348 = vrot.slane %v1339, %v1347
      %1349 = vrot.lane.b32.xlu0 %v1344, 112
      %v1350 = vpop.permute.xlu0 %1349
      %1351 = vrot.lane.b32.xlu0 %v1348, 112
      %v1352 = vpop.permute.xlu0 %1351
      %v1353 = vsel %vm458, %v1350, %v1352
      %v1357 = vadd.f32 %v1333, %v1350
      %v1358 = vadd.f32 %v1334, %v1353
      %v1359 = vadd.f32 %v1335, %v1352
      %v1360 = vadd.f32 %v1336, %v1350
      %v1361 = vadd.f32 %v1337, %v1353
      %v1362 = vadd.f32 %v1338, %v1352
      %1369 = vrot.lane.b32.xlu0 %v1357, 16
      %v1370 = vpop.permute.xlu0 %1369
      %1371 = vrot.lane.b32.xlu0 %v1358, 16
      %v1372 = vpop.permute.xlu0 %1371
      %1373 = vrot.lane.b32.xlu0 %v1359, 16
      %v1374 = vpop.permute.xlu0 %1373
      %1375 = vrot.lane.b32.xlu0 %v1360, 16
      %v1376 = vpop.permute.xlu0 %1375
      %1377 = vrot.lane.b32.xlu0 %v1361, 16
      %v1378 = vpop.permute.xlu0 %1377
      %1379 = vrot.lane.b32.xlu0 %v1362, 16
      %v1380 = vpop.permute.xlu0 %1379
      %v1381 = vsel %vm557, %v1370, %v1372
      %v1382 = vsel %vm557, %v1372, %v1374
      %v1383 = vsel %vm557, %v1376, %v1378
      %v1384 = vsel %vm557, %v1378, %v1380
      %1389 = vst [vmem:[#allocation3 + $0x70] sm:$0xff] %v1381
      %1390 = vst [vmem:[#allocation3 + $0x78] sm:$0xff] %v1382
      %1391 = vst [vmem:[#allocation3 + $0xa0] sm:$0xff] %v1383
      %1392 = vst [vmem:[#allocation3 + $0xa8] sm:$0xff] %v1384
      %v1393 = vld [vmem:[%s7] sm:$0x7f]
      %v1394 = vld [vmem:[%s7 + $0x8] sm:$0x7f]
      %v1395 = vld [vmem:[#allocation3 + $0x10] sm:$0x80]
      %v1396 = vld [vmem:[#allocation3 + $0x18] sm:$0x80]
      %v1397 = vld [vmem:[#allocation3 + $0x40] sm:$0xff]
      %v1398 = vld [vmem:[#allocation3 + $0x48] sm:$0xff]
      %v1399 = vld [vmem:[#allocation3 + $0x70] sm:$0x7f]
      %v1400 = vld [vmem:[#allocation3 + $0x78] sm:$0x7f]
      %v1401 = vlaneseq
      %v1402 = vshrl.u32 %v1401, 7
      %v1403 = vsub.s32 0, %v1402
      %v1404 = vrot.slane %v1393, %v1403
      %v1405 = vlaneseq
      %v1406 = vshrl.u32 %v1405, 7
      %v1407 = vsub.s32 0, %v1406
      %v1408 = vrot.slane %v1394, %v1407
      %v1409 = vmul.f32 %v1395, %v1404
      %v1410 = vmul.f32 %v1396, %v1408
      %v1411 = vmul.f32 %v1397, %v1404
      %v1412 = vmul.f32 %v1398, %v1408
      %v1413 = vmul.f32 %v1399, %v1404
      %v1414 = vmul.f32 %v1400, %v1408
      %v1415 = vadd.f32 %v1409, 0.0
      %v1416 = vadd.f32 %v1410, 0.0
      %v1417 = vadd.f32 %v1411, 0.0
      %v1418 = vadd.f32 %v1412, 0.0
      %v1419 = vadd.f32 %v1413, 0.0
      %v1420 = vadd.f32 %v1414, 0.0
      %v1421 = vld [vmem:[#allocation3 + $0x40] sm:$0xfc]
      %v1422 = vld [vmem:[#allocation3 + $0x48] sm:$0xfc]
      %v1423 = vld [vmem:[#allocation3 + $0x70] sm:$0xff]
      %v1424 = vld [vmem:[#allocation3 + $0x78] sm:$0xff]
      %v1425 = vld [vmem:[#allocation3 + $0xa0] sm:$0x3]
      %v1426 = vld [vmem:[#allocation3 + $0xa8] sm:$0x3]
      %v1427 = vlaneseq
      %v1428 = vshrl.u32 %v1427, 7
      %v1429 = vsub.s32 1, %v1428
      %v1430 = vrot.slane %v1393, %v1429
      %v1431 = vlaneseq
      %v1432 = vshrl.u32 %v1431, 7
      %v1433 = vsub.s32 1, %v1432
      %v1434 = vrot.slane %v1394, %v1433
      %v1435 = vmul.f32 %v1421, %v1430
      %v1436 = vmul.f32 %v1422, %v1434
      %v1437 = vmul.f32 %v1423, %v1430
      %v1438 = vmul.f32 %v1424, %v1434
      %v1439 = vmul.f32 %v1425, %v1430
      %v1440 = vmul.f32 %v1426, %v1434
      %v1447 = vrot.slane %v1435, 3
      %v1448 = vrot.slane %v1436, 3
      %v1449 = vrot.slane %v1437, 3
      %v1450 = vsel %vm853, %v1447, %v1449
      %v1451 = vrot.slane %v1438, 3
      %v1452 = vsel %vm853, %v1448, %v1451
      %v1453 = vrot.slane %v1439, 3
      %v1454 = vsel %vm853, %v1449, %v1453
      %v1455 = vrot.slane %v1440, 3
      %v1456 = vsel %vm853, %v1451, %v1455
      %v1463 = vadd.f32 %v1415, %v1447
      %v1464 = vadd.f32 %v1416, %v1448
      %v1465 = vadd.f32 %v1417, %v1450
      %v1466 = vadd.f32 %v1418, %v1452
      %v1467 = vadd.f32 %v1419, %v1454
      %v1468 = vadd.f32 %v1420, %v1456
      %v1469 = vld [vmem:[#allocation3 + $0x40] sm:$0xe0]
      %v1470 = vld [vmem:[#allocation3 + $0x48] sm:$0xe0]
      %v1471 = vld [vmem:[#allocation3 + $0xa0] sm:$0x1f]
      %v1472 = vld [vmem:[#allocation3 + $0xa8] sm:$0x1f]
      %v1473 = vlaneseq
      %v1474 = vshrl.u32 %v1473, 7
      %v1475 = vsub.s32 2, %v1474
      %v1476 = vrot.slane %v1393, %v1475
      %v1477 = vlaneseq
      %v1478 = vshrl.u32 %v1477, 7
      %v1479 = vsub.s32 2, %v1478
      %v1480 = vrot.slane %v1394, %v1479
      %v1481 = vmul.f32 %v1469, %v1476
      %v1482 = vmul.f32 %v1470, %v1480
      %v1483 = vmul.f32 %v1423, %v1476
      %v1484 = vmul.f32 %v1424, %v1480
      %v1485 = vmul.f32 %v1471, %v1476
      %v1486 = vmul.f32 %v1472, %v1480
      %v1493 = vrot.slane %v1481, 6
      %v1494 = vrot.slane %v1482, 6
      %v1495 = vrot.slane %v1483, 6
      %v1496 = vsel %vm947, %v1493, %v1495
      %v1497 = vrot.slane %v1484, 6
      %v1498 = vsel %vm947, %v1494, %v1497
      %v1499 = vrot.slane %v1485, 6
      %v1500 = vsel %vm947, %v1495, %v1499
      %v1501 = vrot.slane %v1486, 6
      %v1502 = vsel %vm947, %v1497, %v1501
      %v1509 = vadd.f32 %v1463, %v1493
      %v1510 = vadd.f32 %v1464, %v1494
      %v1511 = vadd.f32 %v1465, %v1496
      %v1512 = vadd.f32 %v1466, %v1498
      %v1513 = vadd.f32 %v1467, %v1500
      %v1514 = vadd.f32 %v1468, %v1502
      %v1515 = vld [vmem:[#allocation3 + $0xa0] sm:$0xff]
      %v1516 = vld [vmem:[#allocation3 + $0xa8] sm:$0xff]
      %v1517 = vlaneseq
      %v1518 = vshrl.u32 %v1517, 7
      %v1519 = vsub.s32 3, %v1518
      %v1520 = vrot.slane %v1393, %v1519
      %v1521 = vlaneseq
      %v1522 = vshrl.u32 %v1521, 7
      %v1523 = vsub.s32 3, %v1522
      %v1524 = vrot.slane %v1394, %v1523
      %v1525 = vmul.f32 %v1423, %v1520
      %v1526 = vmul.f32 %v1424, %v1524
      %v1527 = vmul.f32 %v1515, %v1520
      %v1528 = vmul.f32 %v1516, %v1524
      %v1533 = vrot.slane %v1525, 1
      %v1534 = vrot.slane %v1526, 1
      %v1535 = vrot.slane %v1527, 1
      %v1536 = vsel %vm769, %v1533, %v1535
      %v1537 = vrot.slane %v1528, 1
      %v1538 = vsel %vm769, %v1534, %v1537
      %v1545 = vadd.f32 %v1509, %v1533
      %v1546 = vadd.f32 %v1510, %v1534
      %v1547 = vadd.f32 %v1511, %v1536
      %v1548 = vadd.f32 %v1512, %v1538
      %v1549 = vadd.f32 %v1513, %v1535
      %v1550 = vadd.f32 %v1514, %v1537
      %v1551 = vld [vmem:[#allocation3 + $0x70] sm:$0xf8]
      %v1552 = vld [vmem:[#allocation3 + $0x78] sm:$0xf8]
      %v1553 = vld [vmem:[#allocation3 + $0xd0] sm:$0x7]
      %v1554 = vld [vmem:[#allocation3 + $0xd8] sm:$0x7]
      %v1555 = vlaneseq
      %v1556 = vshrl.u32 %v1555, 7
      %v1557 = vsub.s32 4, %v1556
      %v1558 = vrot.slane %v1393, %v1557
      %v1559 = vlaneseq
      %v1560 = vshrl.u32 %v1559, 7
      %v1561 = vsub.s32 4, %v1560
      %v1562 = vrot.slane %v1394, %v1561
      %v1563 = vmul.f32 %v1551, %v1558
      %v1564 = vmul.f32 %v1552, %v1562
      %v1565 = vmul.f32 %v1515, %v1558
      %v1566 = vmul.f32 %v1516, %v1562
      %v1567 = vmul.f32 %v1553, %v1558
      %v1568 = vmul.f32 %v1554, %v1562
      %v1575 = vrot.slane %v1563, 4
      %v1576 = vrot.slane %v1564, 4
      %v1577 = vrot.slane %v1565, 4
      %v1578 = vsel %vm900, %v1575, %v1577
      %v1579 = vrot.slane %v1566, 4
      %v1580 = vsel %vm900, %v1576, %v1579
      %v1581 = vrot.slane %v1567, 4
      %v1582 = vsel %vm900, %v1577, %v1581
      %v1583 = vrot.slane %v1568, 4
      %v1584 = vsel %vm900, %v1579, %v1583
      %v1591 = vadd.f32 %v1545, %v1575
      %v1592 = vadd.f32 %v1546, %v1576
      %v1593 = vadd.f32 %v1547, %v1578
      %v1594 = vadd.f32 %v1548, %v1580
      %v1595 = vadd.f32 %v1549, %v1582
      %v1596 = vadd.f32 %v1550, %v1584
      %v1597 = vld [vmem:[#allocation3 + $0x70] sm:$0xc0]
      %v1598 = vld [vmem:[#allocation3 + $0x78] sm:$0xc0]
      %v1599 = vld [vmem:[#allocation3 + $0xd0] sm:$0x3f]
      %v1600 = vld [vmem:[#allocation3 + $0xd8] sm:$0x3f]
      %v1601 = vlaneseq
      %v1602 = vshrl.u32 %v1601, 7
      %v1603 = vsub.s32 5, %v1602
      %v1604 = vrot.slane %v1393, %v1603
      %v1605 = vlaneseq
      %v1606 = vshrl.u32 %v1605, 7
      %v1607 = vsub.s32 5, %v1606
      %v1608 = vrot.slane %v1394, %v1607
      %v1609 = vmul.f32 %v1597, %v1604
      %v1610 = vmul.f32 %v1598, %v1608
      %v1611 = vmul.f32 %v1515, %v1604
      %v1612 = vmul.f32 %v1516, %v1608
      %v1613 = vmul.f32 %v1599, %v1604
      %v1614 = vmul.f32 %v1600, %v1608
      %vm1621 = vcmask 1040384
      %v1622 = vrot.slane %v1609, 7
      %v1623 = vrot.slane %v1610, 7
      %v1624 = vrot.slane %v1611, 7
      %v1625 = vsel %vm1621, %v1622, %v1624
      %v1626 = vrot.slane %v1612, 7
      %v1627 = vsel %vm1621, %v1623, %v1626
      %v1628 = vrot.slane %v1613, 7
      %v1629 = vsel %vm1621, %v1624, %v1628
      %v1630 = vrot.slane %v1614, 7
      %v1631 = vsel %vm1621, %v1626, %v1630
      %v1638 = vadd.f32 %v1591, %v1622
      %v1639 = vadd.f32 %v1592, %v1623
      %v1640 = vadd.f32 %v1593, %v1625
      %v1641 = vadd.f32 %v1594, %v1627
      %v1642 = vadd.f32 %v1595, %v1629
      %v1643 = vadd.f32 %v1596, %v1631
      %v1644 = vld [vmem:[#allocation3 + $0xa0] sm:$0xfe]
      %v1645 = vld [vmem:[#allocation3 + $0xa8] sm:$0xfe]
      %v1646 = vld [vmem:[#allocation3 + $0xd0] sm:$0xff]
      %v1647 = vld [vmem:[#allocation3 + $0xd8] sm:$0xff]
      %v1648 = vld [vmem:[#allocation3 + $0x100] sm:$0x1]
      %v1649 = vld [vmem:[#allocation3 + $0x108] sm:$0x1]
      %v1650 = vlaneseq
      %v1651 = vshrl.u32 %v1650, 7
      %v1652 = vsub.s32 6, %v1651
      %v1653 = vrot.slane %v1393, %v1652
      %v1654 = vlaneseq
      %v1655 = vshrl.u32 %v1654, 7
      %v1656 = vsub.s32 6, %v1655
      %v1657 = vrot.slane %v1394, %v1656
      %v1658 = vmul.f32 %v1644, %v1653
      %v1659 = vmul.f32 %v1645, %v1657
      %v1660 = vmul.f32 %v1646, %v1653
      %v1661 = vmul.f32 %v1647, %v1657
      %v1662 = vmul.f32 %v1648, %v1653
      %v1663 = vmul.f32 %v1649, %v1657
      %v1670 = vrot.slane %v1658, 2
      %v1671 = vrot.slane %v1659, 2
      %v1672 = vrot.slane %v1660, 2
      %v1673 = vsel %vm810, %v1670, %v1672
      %v1674 = vrot.slane %v1661, 2
      %v1675 = vsel %vm810, %v1671, %v1674
      %v1676 = vrot.slane %v1662, 2
      %v1677 = vsel %vm810, %v1672, %v1676
      %v1678 = vrot.slane %v1663, 2
      %v1679 = vsel %vm810, %v1674, %v1678
      %v1686 = vadd.f32 %v1638, %v1670
      %v1687 = vadd.f32 %v1639, %v1671
      %v1688 = vadd.f32 %v1640, %v1673
      %v1689 = vadd.f32 %v1641, %v1675
      %v1690 = vadd.f32 %v1642, %v1677
      %v1691 = vadd.f32 %v1643, %v1679
      %v1692 = vld [vmem:[%s8] sm:$0x3]
      %v1694 = vlaneseq
      %v1695 = vshrl.u32 %v1694, 7
      %v1696 = vsub.s32 0, %v1695
      %v1697 = vrot.slane %v1692, %v1696
      %v1698 = vlaneseq
      %v1699 = vshrl.u32 %v1698, 7
      %v1700 = vsub.s32 1, %v1699
      %v1701 = vrot.slane %v1692, %v1700
      %v1704 = vadd.f32 %v1686, %v1697
      %v1705 = vadd.f32 %v1687, %v1701
      %v1706 = vadd.f32 %v1688, %v1697
      %v1707 = vadd.f32 %v1689, %v1701
      %v1708 = vadd.f32 %v1690, %v1697
      %v1709 = vadd.f32 %v1691, %v1701
      %v1716 = vrot.slane %v1704, 7
      %v1717 = vrot.slane %v1706, 7
      %v1718 = vsel %vm1621, %v1716, %v1717
      %v1719 = vrot.slane %v1705, 7
      %v1720 = vrot.slane %v1707, 7
      %v1721 = vsel %vm1621, %v1719, %v1720
      %v1722 = vrot.slane %v1708, 7
      %v1723 = vsel %vm1621, %v1717, %v1722
      %v1724 = vrot.slane %v1709, 7
      %v1725 = vsel %vm1621, %v1720, %v1724
      %1730 = vst [vmem:[%s332] sm:$0xff] %v1718
      %1731 = vst [vmem:[%s332 + $0x8] sm:$0xff] %v1721
      %1732 = vst [vmem:[%s332 + $0x10] sm:$0xff] %v1723
      %1733 = vst [vmem:[%s332 + $0x18] sm:$0xff] %v1725
      %p1734 = scmp.lt.s32.totalorder %s20, 1
      %s1735 = scalar_select %p1734, %s20, 1
      %s1736 = smul.addr %s1735, 4
      %s1737 = smul.addr %s1736, 8
      %s1738 = scalar_lea.vmem %s9, %s1737
      // Predicated region
      $region57: #{_lambda_.7} parent=55 // pred_check
        %p1739 = pneg %p232
      $region58: #{_lambda_.7} parent=55 // pred_check_branch
        %1741 = sbr.rel (%p1739) target = $region60
      $region59: #{_lambda_.7} parent=55 // pred_region
        _
      $region60: #{_lambda_.7} parent=55 // pred_fallthru
        _
    $region56: #{_lambda_.7} parent=5 // pred_fallthru
      _
    %p1742 = scmp.le.s32.totalorder 2, %s15
    // Predicated region
    $region61: #{_lambda_.7} parent=5 // pred_check
      %p1743 = pneg %p1742
    $region62: #{_lambda_.7} parent=5 // pred_check_branch
      %1745 = sbr.rel (%p1743) target = $region64
    $region63: #{_lambda_.7} parent=5 // pred_region
      %s1746 = ssub.s32 %s15, 2
      // Predicated region
      $region65: #{_lambda_.7} parent=63 // pred_check
        %p1747 = pneg %p238
      $region66: #{_lambda_.7} parent=63 // pred_check_branch
        %1749 = sbr.rel (%p1747) target = $region68
      $region67: #{_lambda_.7} parent=63 // pred_region
        %p1750 = scmp.lt.s32.totalorder %s21, 1
        %s1751 = scalar_select %p1750, %s21, 1
        %s1752 = smul.addr %s1751, 4
        %s1753 = smul.addr %s1752, 8
        %s1754 = scalar_lea.vmem %s9, %s1753
      $region68: #{_lambda_.7} parent=63 // pred_fallthru
        _
    $region64: #{_lambda_.7} parent=5 // pred_fallthru
      _
  $region6: #{_lambda_.7} parent=0 // loop_footer
    %s19 = sadd.s32 1, %s15
  $region7: #{_lambda_.7} parent=0 // loop_footer_branch
    %14 = sbr.rel target = $region3
  $region8: #{_lambda_.7} parent=0 // loop_exit
    _

// kernel: _lambda_.5
$region0: #{_lambda_.5}
  #allocation0 [shape = 'u32[]', space=smem, size = 0x4, offset = 0x4, fixed_abs, tag = 'smem constant byte address 0x4 - core index']
  #allocation1 [shape = 'u32[144,128]{1,0:T(1,128)}', space=vmem, size = 0x12000, scoped, tag = 'internal scratch']
  %s0 = inlined_call_operand.vmem [shape: f32[512,64], index: 0, kind: input, shape index: {}]
  %s1 = inlined_call_operand.vmem [shape: f32[1,64], index: 1, kind: input, shape index: {}]
  %s2 = inlined_call_operand.vmem [shape: f32[1,64], index: 2, kind: input, shape index: {}]
  %s3 = inlined_call_operand.vmem [shape: bf16[64,128], index: 3, kind: input, shape index: {}]
  %s4 = inlined_call_operand.vmem [shape: f32[1,128], index: 4, kind: input, shape index: {}]
  %s5 = inlined_call_operand.vmem [shape: f32[512,16], index: 5, kind: output, shape index: {0}]
  %s6 = inlined_call_operand.vmem [shape: f32[512,16], index: 6, kind: output, shape index: {1}]
  %s7 = inlined_call_operand.vmem [shape: f32[512,16], index: 7, kind: output, shape index: {2}]
  %s8 = inlined_call_operand.vmem [shape: f32[512,16], index: 8, kind: output, shape index: {3}]
  %s9 = inlined_call_operand.vmem [shape: f32[512,64], index: 9, kind: output, shape index: {4}]
  %10 = xla_tuple %s5, %s6, %s7, %s8, %s9
  %s11 = sld [smem:[#allocation0]]
  $region85: #{_lambda_.5} parent=0
    _
  %s13 = ssub.s32 1, %s11
  %s14 = scalar_select 0, %s13, %s11
  loop: start=0, step=1, limit=4
  $region2: #{_lambda_.5} parent=0 // loop_pre_header
    _
  $region3: #{_lambda_.5} parent=0 // loop_header
    %s16 = sphi 0, %s20
    %p17 = scmp.ge.s32.totalorder %s16, 4
    %s26 = sphi 0, %s28
    %s29 = sphi 0, %s26
    %s30 = sphi 0, %s29
    %s46 = sphi 0, %s30
    %s50 = sphi 0, %s50
    %s52 = sphi 0, %s50
    %s53 = sphi 0, %s52
    %s67 = sphi 0, %s53
    %s71 = sphi 0, %s71
    %s73 = sphi 0, %s71
    %s74 = sphi 0, %s73
    %s88 = sphi 0, %s74
    %s92 = sphi 0, %s92
    %s94 = sphi 0, %s92
    %s95 = sphi 0, %s94
    %s109 = sphi 0, %s95
    %s113 = sphi 0, %s113
    %s115 = sphi 0, %s113
    %s116 = sphi 0, %s115
    %s130 = sphi 0, %s116
    %s136 = sphi 0, %s138
    %s139 = sphi 0, %s136
    %s140 = sphi 0, %s139
    %s156 = sphi 0, %s140
    %s162 = sphi 0, %s164
    %s165 = sphi 0, %s162
    %s166 = sphi 0, %s165
    %s182 = sphi 0, %s166
    %s188 = sphi 0, %s190
    %s191 = sphi 0, %s188
    %s192 = sphi 0, %s191
    %s208 = sphi 0, %s192
    %s214 = sphi 0, %s216
    %s217 = sphi 0, %s214
    %s218 = sphi 0, %s217
    %s234 = sphi 0, %s218
    %s240 = sphi 0, %s242
    %s243 = sphi 0, %s240
    %s244 = sphi 0, %s243
    %s260 = sphi 0, %s244
  $region4: #{_lambda_.5} parent=0 // loop_header_branch
    %19 = sbr.rel (%p17) target = $region8
  $region5: #{_lambda_.5} parent=0 // loop_body
    %s21 = ssub.s32 %s16, 1
    %s22 = ssub.s32 %s16, 2
    %s23 = sadd.s32 %s16, 1
    %s24 = ssub.s32 %s16, %s23
    %p25 = scmp.eq.s32.totalorder %s24, 0
    %s27 = sadd.s32 %s26, 1
    %s28 = scalar_select %p25, %s26, %s27
    %p31 = pneg %p25
    %p32 = scmp.eq.s32.totalorder %s16, 1
    %p33 = por %p31, %p32
    %p34 = scmp.ne.s32.totalorder %s26, %s29
    %p35 = scmp.eq.s32.totalorder %s16, 0
    %p36 = por %p34, %p35
    %p37 = scmp.ne.s32.totalorder %s26, %s29
    %p38 = scmp.eq.s32.totalorder %s21, 1
    %p39 = por %p37, %p38
    %p40 = scmp.ne.s32.totalorder %s29, %s30
    %p41 = scmp.eq.s32.totalorder %s21, 0
    %p42 = por %p40, %p41
    %p43 = scmp.ne.s32.totalorder %s29, %s30
    %p44 = scmp.eq.s32.totalorder %s22, 1
    %p45 = por %p43, %p44
    %p47 = scmp.ne.s32.totalorder %s30, %s46
    %p48 = scmp.eq.s32.totalorder %s22, 0
    %p49 = por %p47, %p48
    %s51 = sadd.s32 %s50, 1
    %p54 = scmp.eq.s32.totalorder %s16, 1
    %p55 = scmp.ne.s32.totalorder %s50, %s52
    %p56 = scmp.eq.s32.totalorder %s16, 0
    %p57 = por %p55, %p56
    %p58 = scmp.ne.s32.totalorder %s50, %s52
    %p59 = scmp.eq.s32.totalorder %s21, 1
    %p60 = por %p58, %p59
    %p61 = scmp.ne.s32.totalorder %s52, %s53
    %p62 = scmp.eq.s32.totalorder %s21, 0
    %p63 = por %p61, %p62
    %p64 = scmp.ne.s32.totalorder %s52, %s53
    %p65 = scmp.eq.s32.totalorder %s22, 1
    %p66 = por %p64, %p65
    %p68 = scmp.ne.s32.totalorder %s53, %s67
    %p69 = scmp.eq.s32.totalorder %s22, 0
    %p70 = por %p68, %p69
    %s72 = sadd.s32 %s71, 1
    %p75 = scmp.eq.s32.totalorder %s16, 1
    %p76 = scmp.ne.s32.totalorder %s71, %s73
    %p77 = scmp.eq.s32.totalorder %s16, 0
    %p78 = por %p76, %p77
    %p79 = scmp.ne.s32.totalorder %s71, %s73
    %p80 = scmp.eq.s32.totalorder %s21, 1
    %p81 = por %p79, %p80
    %p82 = scmp.ne.s32.totalorder %s73, %s74
    %p83 = scmp.eq.s32.totalorder %s21, 0
    %p84 = por %p82, %p83
    %p85 = scmp.ne.s32.totalorder %s73, %s74
    %p86 = scmp.eq.s32.totalorder %s22, 1
    %p87 = por %p85, %p86
    %p89 = scmp.ne.s32.totalorder %s74, %s88
    %p90 = scmp.eq.s32.totalorder %s22, 0
    %p91 = por %p89, %p90
    %s93 = sadd.s32 %s92, 1
    %p96 = scmp.eq.s32.totalorder %s16, 1
    %p97 = scmp.ne.s32.totalorder %s92, %s94
    %p98 = scmp.eq.s32.totalorder %s16, 0
    %p99 = por %p97, %p98
    %p100 = scmp.ne.s32.totalorder %s92, %s94
    %p101 = scmp.eq.s32.totalorder %s21, 1
    %p102 = por %p100, %p101
    %p103 = scmp.ne.s32.totalorder %s94, %s95
    %p104 = scmp.eq.s32.totalorder %s21, 0
    %p105 = por %p103, %p104
    %p106 = scmp.ne.s32.totalorder %s94, %s95
    %p107 = scmp.eq.s32.totalorder %s22, 1
    %p108 = por %p106, %p107
    %p110 = scmp.ne.s32.totalorder %s95, %s109
    %p111 = scmp.eq.s32.totalorder %s22, 0
    %p112 = por %p110, %p111
    %s114 = sadd.s32 %s113, 1
    %p117 = scmp.eq.s32.totalorder %s16, 1
    %p118 = scmp.ne.s32.totalorder %s113, %s115
    %p119 = scmp.eq.s32.totalorder %s16, 0
    %p120 = por %p118, %p119
    %p121 = scmp.ne.s32.totalorder %s113, %s115
    %p122 = scmp.eq.s32.totalorder %s21, 1
    %p123 = por %p121, %p122
    %p124 = scmp.ne.s32.totalorder %s115, %s116
    %p125 = scmp.eq.s32.totalorder %s21, 0
    %p126 = por %p124, %p125
    %p127 = scmp.ne.s32.totalorder %s115, %s116
    %p128 = scmp.eq.s32.totalorder %s22, 1
    %p129 = por %p127, %p128
    %p131 = scmp.ne.s32.totalorder %s116, %s130
    %p132 = scmp.eq.s32.totalorder %s22, 0
    %p133 = por %p131, %p132
    %s134 = ssub.s32 %s16, %s23
    %p135 = scmp.eq.s32.totalorder %s134, 0
    %s137 = sadd.s32 %s136, 1
    %s138 = scalar_select %p135, %s136, %s137
    %p141 = pneg %p135
    %p142 = scmp.eq.s32.totalorder %s16, 1
    %p143 = por %p141, %p142
    %p144 = scmp.ne.s32.totalorder %s136, %s139
    %p145 = scmp.eq.s32.totalorder %s16, 0
    %p146 = por %p144, %p145
    %p147 = scmp.ne.s32.totalorder %s136, %s139
    %p148 = scmp.eq.s32.totalorder %s21, 1
    %p149 = por %p147, %p148
    %p150 = scmp.ne.s32.totalorder %s139, %s140
    %p151 = scmp.eq.s32.totalorder %s21, 0
    %p152 = por %p150, %p151
    %p153 = scmp.ne.s32.totalorder %s139, %s140
    %p154 = scmp.eq.s32.totalorder %s22, 1
    %p155 = por %p153, %p154
    %p157 = scmp.ne.s32.totalorder %s140, %s156
    %p158 = scmp.eq.s32.totalorder %s22, 0
    %p159 = por %p157, %p158
    %s160 = ssub.s32 %s16, %s23
    %p161 = scmp.eq.s32.totalorder %s160, 0
    %s163 = sadd.s32 %s162, 1
    %s164 = scalar_select %p161, %s162, %s163
    %p167 = pneg %p161
    %p168 = scmp.eq.s32.totalorder %s16, 1
    %p169 = por %p167, %p168
    %p170 = scmp.ne.s32.totalorder %s162, %s165
    %p171 = scmp.eq.s32.totalorder %s16, 0
    %p172 = por %p170, %p171
    %p173 = scmp.ne.s32.totalorder %s162, %s165
    %p174 = scmp.eq.s32.totalorder %s21, 1
    %p175 = por %p173, %p174
    %p176 = scmp.ne.s32.totalorder %s165, %s166
    %p177 = scmp.eq.s32.totalorder %s21, 0
    %p178 = por %p176, %p177
    %p179 = scmp.ne.s32.totalorder %s165, %s166
    %p180 = scmp.eq.s32.totalorder %s22, 1
    %p181 = por %p179, %p180
    %p183 = scmp.ne.s32.totalorder %s166, %s182
    %p184 = scmp.eq.s32.totalorder %s22, 0
    %p185 = por %p183, %p184
    %s186 = ssub.s32 %s16, %s23
    %p187 = scmp.eq.s32.totalorder %s186, 0
    %s189 = sadd.s32 %s188, 1
    %s190 = scalar_select %p187, %s188, %s189
    %p193 = pneg %p187
    %p194 = scmp.eq.s32.totalorder %s16, 1
    %p195 = por %p193, %p194
    %p196 = scmp.ne.s32.totalorder %s188, %s191
    %p197 = scmp.eq.s32.totalorder %s16, 0
    %p198 = por %p196, %p197
    %p199 = scmp.ne.s32.totalorder %s188, %s191
    %p200 = scmp.eq.s32.totalorder %s21, 1
    %p201 = por %p199, %p200
    %p202 = scmp.ne.s32.totalorder %s191, %s192
    %p203 = scmp.eq.s32.totalorder %s21, 0
    %p204 = por %p202, %p203
    %p205 = scmp.ne.s32.totalorder %s191, %s192
    %p206 = scmp.eq.s32.totalorder %s22, 1
    %p207 = por %p205, %p206
    %p209 = scmp.ne.s32.totalorder %s192, %s208
    %p210 = scmp.eq.s32.totalorder %s22, 0
    %p211 = por %p209, %p210
    %s212 = ssub.s32 %s16, %s23
    %p213 = scmp.eq.s32.totalorder %s212, 0
    %s215 = sadd.s32 %s214, 1
    %s216 = scalar_select %p213, %s214, %s215
    %p219 = pneg %p213
    %p220 = scmp.eq.s32.totalorder %s16, 1
    %p221 = por %p219, %p220
    %p222 = scmp.ne.s32.totalorder %s214, %s217
    %p223 = scmp.eq.s32.totalorder %s16, 0
    %p224 = por %p222, %p223
    %p225 = scmp.ne.s32.totalorder %s214, %s217
    %p226 = scmp.eq.s32.totalorder %s21, 1
    %p227 = por %p225, %p226
    %p228 = scmp.ne.s32.totalorder %s217, %s218
    %p229 = scmp.eq.s32.totalorder %s21, 0
    %p230 = por %p228, %p229
    %p231 = scmp.ne.s32.totalorder %s217, %s218
    %p232 = scmp.eq.s32.totalorder %s22, 1
    %p233 = por %p231, %p232
    %p235 = scmp.ne.s32.totalorder %s218, %s234
    %p236 = scmp.eq.s32.totalorder %s22, 0
    %p237 = por %p235, %p236
    %s238 = ssub.s32 %s16, %s23
    %p239 = scmp.eq.s32.totalorder %s238, 0
    %s241 = sadd.s32 %s240, 1
    %s242 = scalar_select %p239, %s240, %s241
    %p245 = pneg %p239
    %p246 = scmp.eq.s32.totalorder %s16, 1
    %p247 = por %p245, %p246
    %p248 = scmp.ne.s32.totalorder %s240, %s243
    %p249 = scmp.eq.s32.totalorder %s16, 0
    %p250 = por %p248, %p249
    %p251 = scmp.ne.s32.totalorder %s240, %s243
    %p252 = scmp.eq.s32.totalorder %s21, 1
    %p253 = por %p251, %p252
    %p254 = scmp.ne.s32.totalorder %s243, %s244
    %p255 = scmp.eq.s32.totalorder %s21, 0
    %p256 = por %p254, %p255
    %p257 = scmp.ne.s32.totalorder %s243, %s244
    %p258 = scmp.eq.s32.totalorder %s22, 1
    %p259 = por %p257, %p258
    %p261 = scmp.ne.s32.totalorder %s244, %s260
    %p262 = scmp.eq.s32.totalorder %s22, 0
    %p263 = por %p261, %p262
    %p264 = scmp.le.s32.totalorder 1, %s16
    %p265 = scmp.lt.s32.totalorder %s16, 3
    %p266 = pnand %p264, %p265
    %p267 = pneg %p266
    // Predicated region
    $region9: #{_lambda_.5} parent=5 // pred_check
      _
    $region10: #{_lambda_.5} parent=5 // pred_check_branch
      %269 = sbr.rel (%p266) target = $region12
    $region11: #{_lambda_.5} parent=5 // pred_region
      %s270 = ssub.s32 %s16, 1
      // Predicated region
      $region13: #{_lambda_.5} parent=11 // pred_check
        %p271 = pneg %p63
      $region14: #{_lambda_.5} parent=11 // pred_check_branch
        %273 = sbr.rel (%p271) target = $region16
      $region15: #{_lambda_.5} parent=11 // pred_region
        _
      $region16: #{_lambda_.5} parent=11 // pred_fallthru
        _
      // Predicated region
      $region17: #{_lambda_.5} parent=11 // pred_check
        %p274 = pneg %p84
      $region18: #{_lambda_.5} parent=11 // pred_check_branch
        %276 = sbr.rel (%p274) target = $region20
      $region19: #{_lambda_.5} parent=11 // pred_region
        _
      $region20: #{_lambda_.5} parent=11 // pred_fallthru
        _
      // Predicated region
      $region21: #{_lambda_.5} parent=11 // pred_check
        %p277 = pneg %p105
      $region22: #{_lambda_.5} parent=11 // pred_check_branch
        %279 = sbr.rel (%p277) target = $region24
      $region23: #{_lambda_.5} parent=11 // pred_region
        _
      $region24: #{_lambda_.5} parent=11 // pred_fallthru
        _
      // Predicated region
      $region25: #{_lambda_.5} parent=11 // pred_check
        %p280 = pneg %p126
      $region26: #{_lambda_.5} parent=11 // pred_check_branch
        %282 = sbr.rel (%p280) target = $region28
      $region27: #{_lambda_.5} parent=11 // pred_region
        _
      $region28: #{_lambda_.5} parent=11 // pred_fallthru
        _
    $region12: #{_lambda_.5} parent=5 // pred_fallthru
      _
    %p283 = scmp.lt.s32.totalorder %s16, 2
    // Predicated region
    $region29: #{_lambda_.5} parent=5 // pred_check
      %p284 = pneg %p283
    $region30: #{_lambda_.5} parent=5 // pred_check_branch
      %286 = sbr.rel (%p284) target = $region32
    $region31: #{_lambda_.5} parent=5 // pred_region
      // Predicated region
      $region33: #{_lambda_.5} parent=31 // pred_check
        %p287 = pneg %p36
      $region34: #{_lambda_.5} parent=31 // pred_check_branch
        %289 = sbr.rel (%p287) target = $region36
      $region35: #{_lambda_.5} parent=31 // pred_region
        %s290 = smul.u32 32, %s16
        %p291 = scmp.lt.s32.totalorder %s290, 63
        %s292 = scalar_select %p291, %s290, 63
        %s293 = smul.addr %s292, 8
        %s294 = scalar_lea.vmem %s0, %s293
        %s295 = smul.u32 32, %s16
      $region36: #{_lambda_.5} parent=31 // pred_fallthru
        _
    $region32: #{_lambda_.5} parent=5 // pred_fallthru
      _
    %p296 = scmp.le.s32.totalorder 1, %s16
    %p297 = scmp.lt.s32.totalorder %s16, 3
    %p298 = pnand %p296, %p297
    %p299 = pneg %p298
    // Predicated region
    $region37: #{_lambda_.5} parent=5 // pred_check
      _
    $region38: #{_lambda_.5} parent=5 // pred_check_branch
      %301 = sbr.rel (%p298) target = $region40
    $region39: #{_lambda_.5} parent=5 // pred_region
      %s302 = ssub.s32 %s16, 1
      %s303 = smul.u32 32, %s21
      %p304 = scmp.lt.s32.totalorder %s303, 63
      %s305 = scalar_select %p304, %s303, 63
      %s306 = smul.addr %s305, 8
      %s307 = scalar_lea.vmem %s0, %s306
      %p308 = pneg %p42
      %p309 = pneg %p39
      %p310 = pneg %p63
      %p311 = pneg %p60
      %p312 = pneg %p84
      %p313 = pneg %p81
      %p314 = pneg %p105
      %p315 = pneg %p102
      %p316 = pneg %p126
      %p317 = pneg %p123
      %p318 = pneg %p152
      %p319 = pneg %p149
      %s320 = smul.u32 32, %s21
      %p321 = scmp.lt.s32.totalorder %s320, 63
      %s322 = scalar_select %p321, %s320, 63
      %s323 = smul.addr %s322, 8
      %s324 = scalar_lea.vmem %s5, %s323
      %p325 = pneg %p178
      %p326 = pneg %p175
      %s327 = smul.u32 32, %s21
      %p328 = scmp.lt.s32.totalorder %s327, 63
      %s329 = scalar_select %p328, %s327, 63
      %s330 = smul.addr %s329, 8
      %s331 = scalar_lea.vmem %s6, %s330
      %p332 = pneg %p204
      %p333 = pneg %p201
      %s334 = smul.u32 32, %s21
      %p335 = scmp.lt.s32.totalorder %s334, 63
      %s336 = scalar_select %p335, %s334, 63
      %s337 = smul.addr %s336, 8
      %s338 = scalar_lea.vmem %s7, %s337
      %p339 = pneg %p230
      %p340 = pneg %p227
      %s341 = smul.u32 32, %s21
      %p342 = scmp.lt.s32.totalorder %s341, 63
      %s343 = scalar_select %p342, %s341, 63
      %s344 = smul.addr %s343, 8
      %s345 = scalar_lea.vmem %s8, %s344
      %p346 = pneg %p256
      %p347 = pneg %p253
      %s348 = smul.u32 32, %s21
      %p349 = scmp.lt.s32.totalorder %s348, 63
      %s350 = scalar_select %p349, %s348, 63
      %s351 = smul.addr %s350, 8
      %s352 = scalar_lea.vmem %s9, %s351
      %s353 = smul.u32 32, %s21
      %p354 = scmp.lt.s32.totalorder %s353, 63
      %s355 = scalar_select %p354, %s353, 63
      %s356 = smul.addr %s355, 8
      %s357 = scalar_lea.vmem %s0, %s356
      %s358 = smul.u32 32, %s21
      %s359 = smul.u32 32, %s21
      %p360 = scmp.lt.s32.totalorder %s359, 63
      %s361 = scalar_select %p360, %s359, 63
      %s362 = smul.addr %s361, 8
      %s363 = scalar_lea.vmem %s5, %s362
      %s364 = smul.u32 32, %s21
      %s365 = smul.u32 32, %s21
      %p366 = scmp.lt.s32.totalorder %s365, 63
      %s367 = scalar_select %p366, %s365, 63
      %s368 = smul.addr %s367, 8
      %s369 = scalar_lea.vmem %s6, %s368
      %s370 = smul.u32 32, %s21
      %s371 = smul.u32 32, %s21
      %p372 = scmp.lt.s32.totalorder %s371, 63
      %s373 = scalar_select %p372, %s371, 63
      %s374 = smul.addr %s373, 8
      %s375 = scalar_lea.vmem %s7, %s374
      %s376 = smul.u32 32, %s21
      %s377 = smul.u32 32, %s21
      %p378 = scmp.lt.s32.totalorder %s377, 63
      %s379 = scalar_select %p378, %s377, 63
      %s380 = smul.addr %s379, 8
      %s381 = scalar_lea.vmem %s8, %s380
      %s382 = smul.u32 32, %s21
      %s383 = smul.u32 32, %s21
      %p384 = scmp.lt.s32.totalorder %s383, 63
      %s385 = scalar_select %p384, %s383, 63
      %s386 = smul.addr %s385, 8
      %s387 = scalar_lea.vmem %s9, %s386
      %s388 = smul.u32 32, %s21
      %v390 = vld [vmem:[%s357] sm:$0xff]
      %v391 = vld [vmem:[%s357 + $0x8] sm:$0xff]
      %v392 = vld [vmem:[%s357 + $0x10] sm:$0xff]
      %v393 = vld [vmem:[%s357 + $0x18] sm:$0xff]
      %v394 = vld [vmem:[%s357 + $0x20] sm:$0xff]
      %v395 = vld [vmem:[%s357 + $0x28] sm:$0xff]
      %v396 = vld [vmem:[%s357 + $0x30] sm:$0xff]
      %v397 = vld [vmem:[%s357 + $0x38] sm:$0xff]
      %v398 = vld [vmem:[%s357 + $0x40] sm:$0xff]
      %v399 = vld [vmem:[%s357 + $0x48] sm:$0xff]
      %v400 = vld [vmem:[%s357 + $0x50] sm:$0xff]
      %v401 = vld [vmem:[%s357 + $0x58] sm:$0xff]
      %v402 = vld [vmem:[%s357 + $0x60] sm:$0xff]
      %v403 = vld [vmem:[%s357 + $0x68] sm:$0xff]
      %v404 = vld [vmem:[%s357 + $0x70] sm:$0xff]
      %v405 = vld [vmem:[%s357 + $0x78] sm:$0xff]
      %v406 = vld [vmem:[%s357 + $0x80] sm:$0xff]
      %v407 = vld [vmem:[%s357 + $0x88] sm:$0xff]
      %v408 = vld [vmem:[%s357 + $0x90] sm:$0xff]
      %v409 = vld [vmem:[%s357 + $0x98] sm:$0xff]
      %v410 = vld [vmem:[%s357 + $0xa0] sm:$0xff]
      %v411 = vld [vmem:[%s357 + $0xa8] sm:$0xff]
      %v412 = vld [vmem:[%s357 + $0xb0] sm:$0xff]
      %v413 = vld [vmem:[%s357 + $0xb8] sm:$0xff]
      %v414 = vld [vmem:[%s357 + $0xc0] sm:$0xff]
      %v415 = vld [vmem:[%s357 + $0xc8] sm:$0xff]
      %v416 = vld [vmem:[%s357 + $0xd0] sm:$0xff]
      %v417 = vld [vmem:[%s357 + $0xd8] sm:$0xff]
      %v418 = vld [vmem:[%s357 + $0xe0] sm:$0xff]
      %v419 = vld [vmem:[%s357 + $0xe8] sm:$0xff]
      %v420 = vld [vmem:[%s357 + $0xf0] sm:$0xff]
      %v421 = vld [vmem:[%s357 + $0xf8] sm:$0xff]
      %vm422 = vcmask 523264
      %v423 = vsel %vm422, %v390, 0.0
      %424 = vadd.xlane.f32.xlu0 %v423
      %v425 = vpop.xlane.xlu0 %424
      %v426 = vsel %vm422, %v391, 0.0
      %427 = vadd.xlane.f32.xlu0 %v426
      %v428 = vpop.xlane.xlu0 %427
      %v429 = vsel %vm422, %v392, 0.0
      %430 = vadd.xlane.f32.xlu0 %v429
      %v431 = vpop.xlane.xlu0 %430
      %v432 = vsel %vm422, %v393, 0.0
      %433 = vadd.xlane.f32.xlu0 %v432
      %v434 = vpop.xlane.xlu0 %433
      %v435 = vsel %vm422, %v394, 0.0
      %436 = vadd.xlane.f32.xlu0 %v435
      %v437 = vpop.xlane.xlu0 %436
      %v438 = vsel %vm422, %v395, 0.0
      %439 = vadd.xlane.f32.xlu0 %v438
      %v440 = vpop.xlane.xlu0 %439
      %v441 = vsel %vm422, %v396, 0.0
      %442 = vadd.xlane.f32.xlu0 %v441
      %v443 = vpop.xlane.xlu0 %442
      %v444 = vsel %vm422, %v397, 0.0
      %445 = vadd.xlane.f32.xlu0 %v444
      %v446 = vpop.xlane.xlu0 %445
      %v447 = vsel %vm422, %v398, 0.0
      %448 = vadd.xlane.f32.xlu0 %v447
      %v449 = vpop.xlane.xlu0 %448
      %v450 = vsel %vm422, %v399, 0.0
      %451 = vadd.xlane.f32.xlu0 %v450
      %v452 = vpop.xlane.xlu0 %451
      %v453 = vsel %vm422, %v400, 0.0
      %454 = vadd.xlane.f32.xlu0 %v453
      %v455 = vpop.xlane.xlu0 %454
      %v456 = vsel %vm422, %v401, 0.0
      %457 = vadd.xlane.f32.xlu0 %v456
      %v458 = vpop.xlane.xlu0 %457
      %v459 = vsel %vm422, %v402, 0.0
      %460 = vadd.xlane.f32.xlu0 %v459
      %v461 = vpop.xlane.xlu0 %460
      %v462 = vsel %vm422, %v403, 0.0
      %463 = vadd.xlane.f32.xlu0 %v462
      %v464 = vpop.xlane.xlu0 %463
      %v465 = vsel %vm422, %v404, 0.0
      %466 = vadd.xlane.f32.xlu0 %v465
      %v467 = vpop.xlane.xlu0 %466
      %v468 = vsel %vm422, %v405, 0.0
      %469 = vadd.xlane.f32.xlu0 %v468
      %v470 = vpop.xlane.xlu0 %469
      %v471 = vsel %vm422, %v406, 0.0
      %472 = vadd.xlane.f32.xlu0 %v471
      %v473 = vpop.xlane.xlu0 %472
      %v474 = vsel %vm422, %v407, 0.0
      %475 = vadd.xlane.f32.xlu0 %v474
      %v476 = vpop.xlane.xlu0 %475
      %v477 = vsel %vm422, %v408, 0.0
      %478 = vadd.xlane.f32.xlu0 %v477
      %v479 = vpop.xlane.xlu0 %478
      %v480 = vsel %vm422, %v409, 0.0
      %481 = vadd.xlane.f32.xlu0 %v480
      %v482 = vpop.xlane.xlu0 %481
      %v483 = vsel %vm422, %v410, 0.0
      %484 = vadd.xlane.f32.xlu0 %v483
      %v485 = vpop.xlane.xlu0 %484
      %v486 = vsel %vm422, %v411, 0.0
      %487 = vadd.xlane.f32.xlu0 %v486
      %v488 = vpop.xlane.xlu0 %487
      %v489 = vsel %vm422, %v412, 0.0
      %490 = vadd.xlane.f32.xlu0 %v489
      %v491 = vpop.xlane.xlu0 %490
      %v492 = vsel %vm422, %v413, 0.0
      %493 = vadd.xlane.f32.xlu0 %v492
      %v494 = vpop.xlane.xlu0 %493
      %v495 = vsel %vm422, %v414, 0.0
      %496 = vadd.xlane.f32.xlu0 %v495
      %v497 = vpop.xlane.xlu0 %496
      %v498 = vsel %vm422, %v415, 0.0
      %499 = vadd.xlane.f32.xlu0 %v498
      %v500 = vpop.xlane.xlu0 %499
      %v501 = vsel %vm422, %v416, 0.0
      %502 = vadd.xlane.f32.xlu0 %v501
      %v503 = vpop.xlane.xlu0 %502
      %v504 = vsel %vm422, %v417, 0.0
      %505 = vadd.xlane.f32.xlu0 %v504
      %v506 = vpop.xlane.xlu0 %505
      %v507 = vsel %vm422, %v418, 0.0
      %508 = vadd.xlane.f32.xlu0 %v507
      %v509 = vpop.xlane.xlu0 %508
      %v510 = vsel %vm422, %v419, 0.0
      %511 = vadd.xlane.f32.xlu0 %v510
      %v512 = vpop.xlane.xlu0 %511
      %v513 = vsel %vm422, %v420, 0.0
      %514 = vadd.xlane.f32.xlu0 %v513
      %v515 = vpop.xlane.xlu0 %514
      %v516 = vsel %vm422, %v421, 0.0
      %517 = vadd.xlane.f32.xlu0 %v516
      %v518 = vpop.xlane.xlu0 %517
      %v519 = vrcp.pop 64.0
      %v520 = vmul.f32 %v425, %v519
      %v521 = vmul.f32 %v428, %v519
      %v522 = vmul.f32 %v431, %v519
      %v523 = vmul.f32 %v434, %v519
      %v524 = vmul.f32 %v437, %v519
      %v525 = vmul.f32 %v440, %v519
      %v526 = vmul.f32 %v443, %v519
      %v527 = vmul.f32 %v446, %v519
      %v528 = vmul.f32 %v449, %v519
      %v529 = vmul.f32 %v452, %v519
      %v530 = vmul.f32 %v455, %v519
      %v531 = vmul.f32 %v458, %v519
      %v532 = vmul.f32 %v461, %v519
      %v533 = vmul.f32 %v464, %v519
      %v534 = vmul.f32 %v467, %v519
      %v535 = vmul.f32 %v470, %v519
      %v536 = vmul.f32 %v473, %v519
      %v537 = vmul.f32 %v476, %v519
      %v538 = vmul.f32 %v479, %v519
      %v539 = vmul.f32 %v482, %v519
      %v540 = vmul.f32 %v485, %v519
      %v541 = vmul.f32 %v488, %v519
      %v542 = vmul.f32 %v491, %v519
      %v543 = vmul.f32 %v494, %v519
      %v544 = vmul.f32 %v497, %v519
      %v545 = vmul.f32 %v500, %v519
      %v546 = vmul.f32 %v503, %v519
      %v547 = vmul.f32 %v506, %v519
      %v548 = vmul.f32 %v509, %v519
      %v549 = vmul.f32 %v512, %v519
      %v550 = vmul.f32 %v515, %v519
      %v551 = vmul.f32 %v518, %v519
      %v552 = vsub.f32 %v390, %v520
      %v553 = vsub.f32 %v391, %v521
      %v554 = vsub.f32 %v392, %v522
      %v555 = vsub.f32 %v393, %v523
      %v556 = vsub.f32 %v394, %v524
      %v557 = vsub.f32 %v395, %v525
      %v558 = vsub.f32 %v396, %v526
      %v559 = vsub.f32 %v397, %v527
      %v560 = vsub.f32 %v398, %v528
      %v561 = vsub.f32 %v399, %v529
      %v562 = vsub.f32 %v400, %v530
      %v563 = vsub.f32 %v401, %v531
      %v564 = vsub.f32 %v402, %v532
      %v565 = vsub.f32 %v403, %v533
      %v566 = vsub.f32 %v404, %v534
      %v567 = vsub.f32 %v405, %v535
      %v568 = vsub.f32 %v406, %v536
      %v569 = vsub.f32 %v407, %v537
      %v570 = vsub.f32 %v408, %v538
      %v571 = vsub.f32 %v409, %v539
      %v572 = vsub.f32 %v410, %v540
      %v573 = vsub.f32 %v411, %v541
      %v574 = vsub.f32 %v412, %v542
      %v575 = vsub.f32 %v413, %v543
      %v576 = vsub.f32 %v414, %v544
      %v577 = vsub.f32 %v415, %v545
      %v578 = vsub.f32 %v416, %v546
      %v579 = vsub.f32 %v417, %v547
      %v580 = vsub.f32 %v418, %v548
      %v581 = vsub.f32 %v419, %v549
      %v582 = vsub.f32 %v420, %v550
      %v583 = vsub.f32 %v421, %v551
      %v584 = vmul.f32 %v552, %v552
      %v585 = vmul.f32 %v553, %v553
      %v586 = vmul.f32 %v554, %v554
      %v587 = vmul.f32 %v555, %v555
      %v588 = vmul.f32 %v556, %v556
      %v589 = vmul.f32 %v557, %v557
      %v590 = vmul.f32 %v558, %v558
      %v591 = vmul.f32 %v559, %v559
      %v592 = vmul.f32 %v560, %v560
      %v593 = vmul.f32 %v561, %v561
      %v594 = vmul.f32 %v562, %v562
      %v595 = vmul.f32 %v563, %v563
      %v596 = vmul.f32 %v564, %v564
      %v597 = vmul.f32 %v565, %v565
      %v598 = vmul.f32 %v566, %v566
      %v599 = vmul.f32 %v567, %v567
      %v600 = vmul.f32 %v568, %v568
      %v601 = vmul.f32 %v569, %v569
      %v602 = vmul.f32 %v570, %v570
      %v603 = vmul.f32 %v571, %v571
      %v604 = vmul.f32 %v572, %v572
      %v605 = vmul.f32 %v573, %v573
      %v606 = vmul.f32 %v574, %v574
      %v607 = vmul.f32 %v575, %v575
      %v608 = vmul.f32 %v576, %v576
      %v609 = vmul.f32 %v577, %v577
      %v610 = vmul.f32 %v578, %v578
      %v611 = vmul.f32 %v579, %v579
      %v612 = vmul.f32 %v580, %v580
      %v613 = vmul.f32 %v581, %v581
      %v614 = vmul.f32 %v582, %v582
      %v615 = vmul.f32 %v583, %v583
      %v616 = vsel %vm422, %v584, 0.0
      %617 = vadd.xlane.f32.xlu0 %v616
      %v618 = vpop.xlane.xlu0 %617
      %v619 = vsel %vm422, %v585, 0.0
      %620 = vadd.xlane.f32.xlu0 %v619
      %v621 = vpop.xlane.xlu0 %620
      %v622 = vsel %vm422, %v586, 0.0
      %623 = vadd.xlane.f32.xlu0 %v622
      %v624 = vpop.xlane.xlu0 %623
      %v625 = vsel %vm422, %v587, 0.0
      %626 = vadd.xlane.f32.xlu0 %v625
      %v627 = vpop.xlane.xlu0 %626
      %v628 = vsel %vm422, %v588, 0.0
      %629 = vadd.xlane.f32.xlu0 %v628
      %v630 = vpop.xlane.xlu0 %629
      %v631 = vsel %vm422, %v589, 0.0
      %632 = vadd.xlane.f32.xlu0 %v631
      %v633 = vpop.xlane.xlu0 %632
      %v634 = vsel %vm422, %v590, 0.0
      %635 = vadd.xlane.f32.xlu0 %v634
      %v636 = vpop.xlane.xlu0 %635
      %v637 = vsel %vm422, %v591, 0.0
      %638 = vadd.xlane.f32.xlu0 %v637
      %v639 = vpop.xlane.xlu0 %638
      %v640 = vsel %vm422, %v592, 0.0
      %641 = vadd.xlane.f32.xlu0 %v640
      %v642 = vpop.xlane.xlu0 %641
      %v643 = vsel %vm422, %v593, 0.0
      %644 = vadd.xlane.f32.xlu0 %v643
      %v645 = vpop.xlane.xlu0 %644
      %v646 = vsel %vm422, %v594, 0.0
      %647 = vadd.xlane.f32.xlu0 %v646
      %v648 = vpop.xlane.xlu0 %647
      %v649 = vsel %vm422, %v595, 0.0
      %650 = vadd.xlane.f32.xlu0 %v649
      %v651 = vpop.xlane.xlu0 %650
      %v652 = vsel %vm422, %v596, 0.0
      %653 = vadd.xlane.f32.xlu0 %v652
      %v654 = vpop.xlane.xlu0 %653
      %v655 = vsel %vm422, %v597, 0.0
      %656 = vadd.xlane.f32.xlu0 %v655
      %v657 = vpop.xlane.xlu0 %656
      %v658 = vsel %vm422, %v598, 0.0
      %659 = vadd.xlane.f32.xlu0 %v658
      %v660 = vpop.xlane.xlu0 %659
      %v661 = vsel %vm422, %v599, 0.0
      %662 = vadd.xlane.f32.xlu0 %v661
      %v663 = vpop.xlane.xlu0 %662
      %v664 = vsel %vm422, %v600, 0.0
      %665 = vadd.xlane.f32.xlu0 %v664
      %v666 = vpop.xlane.xlu0 %665
      %v667 = vsel %vm422, %v601, 0.0
      %668 = vadd.xlane.f32.xlu0 %v667
      %v669 = vpop.xlane.xlu0 %668
      %v670 = vsel %vm422, %v602, 0.0
      %671 = vadd.xlane.f32.xlu0 %v670
      %v672 = vpop.xlane.xlu0 %671
      %v673 = vsel %vm422, %v603, 0.0
      %674 = vadd.xlane.f32.xlu0 %v673
      %v675 = vpop.xlane.xlu0 %674
      %v676 = vsel %vm422, %v604, 0.0
      %677 = vadd.xlane.f32.xlu0 %v676
      %v678 = vpop.xlane.xlu0 %677
      %v679 = vsel %vm422, %v605, 0.0
      %680 = vadd.xlane.f32.xlu0 %v679
      %v681 = vpop.xlane.xlu0 %680
      %v682 = vsel %vm422, %v606, 0.0
      %683 = vadd.xlane.f32.xlu0 %v682
      %v684 = vpop.xlane.xlu0 %683
      %v685 = vsel %vm422, %v607, 0.0
      %686 = vadd.xlane.f32.xlu0 %v685
      %v687 = vpop.xlane.xlu0 %686
      %v688 = vsel %vm422, %v608, 0.0
      %689 = vadd.xlane.f32.xlu0 %v688
      %v690 = vpop.xlane.xlu0 %689
      %v691 = vsel %vm422, %v609, 0.0
      %692 = vadd.xlane.f32.xlu0 %v691
      %v693 = vpop.xlane.xlu0 %692
      %v694 = vsel %vm422, %v610, 0.0
      %695 = vadd.xlane.f32.xlu0 %v694
      %v696 = vpop.xlane.xlu0 %695
      %v697 = vsel %vm422, %v611, 0.0
      %698 = vadd.xlane.f32.xlu0 %v697
      %v699 = vpop.xlane.xlu0 %698
      %v700 = vsel %vm422, %v612, 0.0
      %701 = vadd.xlane.f32.xlu0 %v700
      %v702 = vpop.xlane.xlu0 %701
      %v703 = vsel %vm422, %v613, 0.0
      %704 = vadd.xlane.f32.xlu0 %v703
      %v705 = vpop.xlane.xlu0 %704
      %v706 = vsel %vm422, %v614, 0.0
      %707 = vadd.xlane.f32.xlu0 %v706
      %v708 = vpop.xlane.xlu0 %707
      %v709 = vsel %vm422, %v615, 0.0
      %710 = vadd.xlane.f32.xlu0 %v709
      %v711 = vpop.xlane.xlu0 %710
      %v712 = vmul.f32 %v618, %v519
      %v713 = vmul.f32 %v621, %v519
      %v714 = vmul.f32 %v624, %v519
      %v715 = vmul.f32 %v627, %v519
      %v716 = vmul.f32 %v630, %v519
      %v717 = vmul.f32 %v633, %v519
      %v718 = vmul.f32 %v636, %v519
      %v719 = vmul.f32 %v639, %v519
      %v720 = vmul.f32 %v642, %v519
      %v721 = vmul.f32 %v645, %v519
      %v722 = vmul.f32 %v648, %v519
      %v723 = vmul.f32 %v651, %v519
      %v724 = vmul.f32 %v654, %v519
      %v725 = vmul.f32 %v657, %v519
      %v726 = vmul.f32 %v660, %v519
      %v727 = vmul.f32 %v663, %v519
      %v728 = vmul.f32 %v666, %v519
      %v729 = vmul.f32 %v669, %v519
      %v730 = vmul.f32 %v672, %v519
      %v731 = vmul.f32 %v675, %v519
      %v732 = vmul.f32 %v678, %v519
      %v733 = vmul.f32 %v681, %v519
      %v734 = vmul.f32 %v684, %v519
      %v735 = vmul.f32 %v687, %v519
      %v736 = vmul.f32 %v690, %v519
      %v737 = vmul.f32 %v693, %v519
      %v738 = vmul.f32 %v696, %v519
      %v739 = vmul.f32 %v699, %v519
      %v740 = vmul.f32 %v702, %v519
      %v741 = vmul.f32 %v705, %v519
      %v742 = vmul.f32 %v708, %v519
      %v743 = vmul.f32 %v711, %v519
      %v744 = vadd.f32 %v712, 1e-06
      %v745 = vadd.f32 %v713, 1e-06
      %v746 = vadd.f32 %v714, 1e-06
      %v747 = vadd.f32 %v715, 1e-06
      %v748 = vadd.f32 %v716, 1e-06
      %v749 = vadd.f32 %v717, 1e-06
      %v750 = vadd.f32 %v718, 1e-06
      %v751 = vadd.f32 %v719, 1e-06
      %v752 = vadd.f32 %v720, 1e-06
      %v753 = vadd.f32 %v721, 1e-06
      %v754 = vadd.f32 %v722, 1e-06
      %v755 = vadd.f32 %v723, 1e-06
      %v756 = vadd.f32 %v724, 1e-06
      %v757 = vadd.f32 %v725, 1e-06
      %v758 = vadd.f32 %v726, 1e-06
      %v759 = vadd.f32 %v727, 1e-06
      %v760 = vadd.f32 %v728, 1e-06
      %v761 = vadd.f32 %v729, 1e-06
      %v762 = vadd.f32 %v730, 1e-06
      %v763 = vadd.f32 %v731, 1e-06
      %v764 = vadd.f32 %v732, 1e-06
      %v765 = vadd.f32 %v733, 1e-06
      %v766 = vadd.f32 %v734, 1e-06
      %v767 = vadd.f32 %v735, 1e-06
      %v768 = vadd.f32 %v736, 1e-06
      %v769 = vadd.f32 %v737, 1e-06
      %v770 = vadd.f32 %v738, 1e-06
      %v771 = vadd.f32 %v739, 1e-06
      %v772 = vadd.f32 %v740, 1e-06
      %v773 = vadd.f32 %v741, 1e-06
      %v774 = vadd.f32 %v742, 1e-06
      %v775 = vadd.f32 %v743, 1e-06
      %v776 = vrsqrt.pop %v744
      %v777 = vrsqrt.pop %v745
      %v778 = vrsqrt.pop %v746
      %v779 = vrsqrt.pop %v747
      %v780 = vrsqrt.pop %v748
      %v781 = vrsqrt.pop %v749
      %v782 = vrsqrt.pop %v750
      %v783 = vrsqrt.pop %v751
      %v784 = vrsqrt.pop %v752
      %v785 = vrsqrt.pop %v753
      %v786 = vrsqrt.pop %v754
      %v787 = vrsqrt.pop %v755
      %v788 = vrsqrt.pop %v756
      %v789 = vrsqrt.pop %v757
      %v790 = vrsqrt.pop %v758
      %v791 = vrsqrt.pop %v759
      %v792 = vrsqrt.pop %v760
      %v793 = vrsqrt.pop %v761
      %v794 = vrsqrt.pop %v762
      %v795 = vrsqrt.pop %v763
      %v796 = vrsqrt.pop %v764
      %v797 = vrsqrt.pop %v765
      %v798 = vrsqrt.pop %v766
      %v799 = vrsqrt.pop %v767
      %v800 = vrsqrt.pop %v768
      %v801 = vrsqrt.pop %v769
      %v802 = vrsqrt.pop %v770
      %v803 = vrsqrt.pop %v771
      %v804 = vrsqrt.pop %v772
      %v805 = vrsqrt.pop %v773
      %v806 = vrsqrt.pop %v774
      %v807 = vrsqrt.pop %v775
      %v808 = vmul.f32 %v552, %v776
      %v809 = vmul.f32 %v553, %v777
      %v810 = vmul.f32 %v554, %v778
      %v811 = vmul.f32 %v555, %v779
      %v812 = vmul.f32 %v556, %v780
      %v813 = vmul.f32 %v557, %v781
      %v814 = vmul.f32 %v558, %v782
      %v815 = vmul.f32 %v559, %v783
      %v816 = vmul.f32 %v560, %v784
      %v817 = vmul.f32 %v561, %v785
      %v818 = vmul.f32 %v562, %v786
      %v819 = vmul.f32 %v563, %v787
      %v820 = vmul.f32 %v564, %v788
      %v821 = vmul.f32 %v565, %v789
      %v822 = vmul.f32 %v566, %v790
      %v823 = vmul.f32 %v567, %v791
      %v824 = vmul.f32 %v568, %v792
      %v825 = vmul.f32 %v569, %v793
      %v826 = vmul.f32 %v570, %v794
      %v827 = vmul.f32 %v571, %v795
      %v828 = vmul.f32 %v572, %v796
      %v829 = vmul.f32 %v573, %v797
      %v830 = vmul.f32 %v574, %v798
      %v831 = vmul.f32 %v575, %v799
      %v832 = vmul.f32 %v576, %v800
      %v833 = vmul.f32 %v577, %v801
      %v834 = vmul.f32 %v578, %v802
      %v835 = vmul.f32 %v579, %v803
      %v836 = vmul.f32 %v580, %v804
      %v837 = vmul.f32 %v581, %v805
      %v838 = vmul.f32 %v582, %v806
      %v839 = vmul.f32 %v583, %v807
      %v840 = vld [vmem:[%s1] sm:$0x1]
      %v842 = vlaneseq
      %v843 = vshrl.u32 %v842, 7
      %v844 = vsub.s32 0, %v843
      %v845 = vrot.slane %v840, %v844
      %v847 = vmul.f32 %v808, %v845
      %v848 = vmul.f32 %v809, %v845
      %v849 = vmul.f32 %v810, %v845
      %v850 = vmul.f32 %v811, %v845
      %v851 = vmul.f32 %v812, %v845
      %v852 = vmul.f32 %v813, %v845
      %v853 = vmul.f32 %v814, %v845
      %v854 = vmul.f32 %v815, %v845
      %v855 = vmul.f32 %v816, %v845
      %v856 = vmul.f32 %v817, %v845
      %v857 = vmul.f32 %v818, %v845
      %v858 = vmul.f32 %v819, %v845
      %v859 = vmul.f32 %v820, %v845
      %v860 = vmul.f32 %v821, %v845
      %v861 = vmul.f32 %v822, %v845
      %v862 = vmul.f32 %v823, %v845
      %v863 = vmul.f32 %v824, %v845
      %v864 = vmul.f32 %v825, %v845
      %v865 = vmul.f32 %v826, %v845
      %v866 = vmul.f32 %v827, %v845
      %v867 = vmul.f32 %v828, %v845
      %v868 = vmul.f32 %v829, %v845
      %v869 = vmul.f32 %v830, %v845
      %v870 = vmul.f32 %v831, %v845
      %v871 = vmul.f32 %v832, %v845
      %v872 = vmul.f32 %v833, %v845
      %v873 = vmul.f32 %v834, %v845
      %v874 = vmul.f32 %v835, %v845
      %v875 = vmul.f32 %v836, %v845
      %v876 = vmul.f32 %v837, %v845
      %v877 = vmul.f32 %v838, %v845
      %v878 = vmul.f32 %v839, %v845
      %v879 = vld [vmem:[%s2] sm:$0x1]
      %v881 = vlaneseq
      %v882 = vshrl.u32 %v881, 7
      %v883 = vsub.s32 0, %v882
      %v884 = vrot.slane %v879, %v883
      %v886 = vadd.f32 %v847, %v884
      %v887 = vadd.f32 %v848, %v884
      %v888 = vadd.f32 %v849, %v884
      %v889 = vadd.f32 %v850, %v884
      %v890 = vadd.f32 %v851, %v884
      %v891 = vadd.f32 %v852, %v884
      %v892 = vadd.f32 %v853, %v884
      %v893 = vadd.f32 %v854, %v884
      %v894 = vadd.f32 %v855, %v884
      %v895 = vadd.f32 %v856, %v884
      %v896 = vadd.f32 %v857, %v884
      %v897 = vadd.f32 %v858, %v884
      %v898 = vadd.f32 %v859, %v884
      %v899 = vadd.f32 %v860, %v884
      %v900 = vadd.f32 %v861, %v884
      %v901 = vadd.f32 %v862, %v884
      %v902 = vadd.f32 %v863, %v884
      %v903 = vadd.f32 %v864, %v884
      %v904 = vadd.f32 %v865, %v884
      %v905 = vadd.f32 %v866, %v884
      %v906 = vadd.f32 %v867, %v884
      %v907 = vadd.f32 %v868, %v884
      %v908 = vadd.f32 %v869, %v884
      %v909 = vadd.f32 %v870, %v884
      %v910 = vadd.f32 %v871, %v884
      %v911 = vadd.f32 %v872, %v884
      %v912 = vadd.f32 %v873, %v884
      %v913 = vadd.f32 %v874, %v884
      %v914 = vadd.f32 %v875, %v884
      %v915 = vadd.f32 %v876, %v884
      %v916 = vadd.f32 %v877, %v884
      %v917 = vadd.f32 %v878, %v884
      %v918 = vpack.c.bf16 %v887, %v886
      %v919 = vpack.c.bf16 %v889, %v888
      %v920 = vpack.c.bf16 %v891, %v890
      %v921 = vpack.c.bf16 %v893, %v892
      %v922 = vpack.c.bf16 %v895, %v894
      %v923 = vpack.c.bf16 %v897, %v896
      %v924 = vpack.c.bf16 %v899, %v898
      %v925 = vpack.c.bf16 %v901, %v900
      %v926 = vpack.c.bf16 %v903, %v902
      %v927 = vpack.c.bf16 %v905, %v904
      %v928 = vpack.c.bf16 %v907, %v906
      %v929 = vpack.c.bf16 %v909, %v908
      %v930 = vpack.c.bf16 %v911, %v910
      %v931 = vpack.c.bf16 %v913, %v912
      %v932 = vpack.c.bf16 %v915, %v914
      %v933 = vpack.c.bf16 %v917, %v916
      %v934 = vld [vmem:[%s3] sm:$0xf]
      %v935 = vld [vmem:[%s3 + $0x4] sm:$0xf]
      %v936 = vld [vmem:[%s3 + $0x8] sm:$0xf]
      %v937 = vld [vmem:[%s3 + $0xc] sm:$0xf]
      %v938 = vld [vmem:[%s3 + $0x10] sm:$0xf]
      %v939 = vld [vmem:[%s3 + $0x14] sm:$0xf]
      %v940 = vld [vmem:[%s3 + $0x18] sm:$0xf]
      %v941 = vld [vmem:[%s3 + $0x1c] sm:$0xf]
      %v942 = vld [vmem:[%s4] sm:$0x1]
      %v944 = vlaneseq
      %v945 = vshrl.u32 %v944, 7
      %v946 = vsub.s32 0, %v945
      %v947 = vrot.slane %v942, %v946
      %v957 = vunpack.c.l.b16 %v934
      %v958 = vunpack.c.l.b16 %v935
      %v959 = vunpack.c.l.b16 %v936
      %v960 = vunpack.c.l.b16 %v937
      %v961 = vunpack.c.l.b16 %v938
      %v962 = vunpack.c.l.b16 %v939
      %v963 = vunpack.c.l.b16 %v940
      %v964 = vunpack.c.l.b16 %v941
      %v965 = vpack.c.b16 %v958, %v957
      %v966 = vpack.c.b16 %v960, %v959
      %v967 = vpack.c.b16 %v962, %v961
      %v968 = vpack.c.b16 %v964, %v963
      %v974 = vsel %vm422, %v918, 0
      %v977 = vsel %vm422, %v919, 0
      %v980 = vsel %vm422, %v920, 0
      %v983 = vsel %vm422, %v921, 0
      %v986 = vsel %vm422, %v922, 0
      %v989 = vsel %vm422, %v923, 0
      %v992 = vsel %vm422, %v924, 0
      %v995 = vsel %vm422, %v925, 0
      %v998 = vsel %vm422, %v926, 0
      %v1001 = vsel %vm422, %v927, 0
      %v1004 = vsel %vm422, %v928, 0
      %v1007 = vsel %vm422, %v929, 0
      %v1010 = vsel %vm422, %v930, 0
      %v1013 = vsel %vm422, %v931, 0
      %v1016 = vsel %vm422, %v932, 0
      %v1019 = vsel %vm422, %v933, 0
      %1021 = vmatprep.subr.bf16.mxu0 0
      %1022 = vmatpush1.bf16.msra.mxu0 0
      %1023 = vmatprep.subr.bf16.mxu0 0
      %1024 = vmatpush1.bf16.msra.mxu0 0
      %1025 = vmatprep.subr.bf16.mxu0 0
      %1026 = vmatpush1.bf16.msra.mxu0 0
      %1027 = vmatprep.subr.bf16.mxu0 0
      %1028 = vmatpush1.bf16.msra.mxu0 0
      %1029 = vmatprep.subr.bf16.mxu0 0
      %1030 = vmatpush1.bf16.msra.mxu0 %v968
      %1031 = vmatprep.subr.bf16.mxu0 0
      %1032 = vmatpush1.bf16.msra.mxu0 %v967
      %1033 = vmatprep.subr.bf16.mxu0 0
      %1034 = vmatpush1.bf16.msra.mxu0 %v966
      %1035 = vmatprep.subr.bf16.mxu0 0
      %1036 = vmatpush1.bf16.msra.mxu0 %v965
      %1037 = vmatprep.subr.bf16.mxu0 0
      %1038 = vmatpush2.bf16.msra.mxu0 0
      %1039 = vmatprep.subr.bf16.mxu0 0
      %1040 = vmatpush2.bf16.msra.mxu0 0
      %1041 = vmatprep.subr.bf16.mxu0 0
      %1042 = vmatpush2.bf16.msra.mxu0 0
      %1043 = vmatprep.subr.bf16.mxu0 0
      %1044 = vmatpush2.bf16.msra.mxu0 0
      %1045 = vmatprep.subr.bf16.mxu0 0
      %1046 = vmatpush2.bf16.msra.mxu0 0
      %1047 = vmatprep.subr.bf16.mxu0 0
      %1048 = vmatpush2.bf16.msra.mxu0 0
      %1049 = vmatprep.subr.bf16.mxu0 0
      %1050 = vmatpush2.bf16.msra.mxu0 0
      %1051 = vmatprep.subr.bf16.mxu0 0
      %1052 = vmatpush2.bf16.msra.mxu0 0
      %1053 = vmatprep.mubr.bf16.mxu0 0
      %1054 = vmatmul.mubr.bf16.gmra.mxu0 %v974
      %v1055 = vpop.f32.mrf.mxu0
      %v1056 = vadd.f32 %v947, %v1055
      %v1057 = vpop.f32.mrf.mxu0
      %v1058 = vpop.f32.mrf.mxu0
      %v1059 = vadd.f32 %v947, %v1058
      %v1060 = vpop.f32.mrf.mxu0
      %1061 = vmatprep.mubr.bf16.mxu0 0
      %1062 = vmatmul.mubr.bf16.gmra.mxu0 %v977
      %v1063 = vpop.f32.mrf.mxu0
      %v1064 = vadd.f32 %v947, %v1063
      %v1065 = vpop.f32.mrf.mxu0
      %v1066 = vpop.f32.mrf.mxu0
      %v1067 = vadd.f32 %v947, %v1066
      %v1068 = vpop.f32.mrf.mxu0
      %1069 = vmatprep.mubr.bf16.mxu0 0
      %1070 = vmatmul.mubr.bf16.gmra.mxu0 %v980
      %v1071 = vpop.f32.mrf.mxu0
      %v1072 = vadd.f32 %v947, %v1071
      %v1073 = vpop.f32.mrf.mxu0
      %v1074 = vpop.f32.mrf.mxu0
      %v1075 = vadd.f32 %v947, %v1074
      %v1076 = vpop.f32.mrf.mxu0
      %1077 = vmatprep.mubr.bf16.mxu0 0
      %1078 = vmatmul.mubr.bf16.gmra.mxu0 %v983
      %v1079 = vpop.f32.mrf.mxu0
      %v1080 = vadd.f32 %v947, %v1079
      %v1081 = vpop.f32.mrf.mxu0
      %v1082 = vpop.f32.mrf.mxu0
      %v1083 = vadd.f32 %v947, %v1082
      %v1084 = vpop.f32.mrf.mxu0
      %1085 = vmatprep.mubr.bf16.mxu0 0
      %1086 = vmatmul.mubr.bf16.gmra.mxu0 %v986
      %v1087 = vpop.f32.mrf.mxu0
      %v1088 = vadd.f32 %v947, %v1087
      %v1089 = vpop.f32.mrf.mxu0
      %v1090 = vpop.f32.mrf.mxu0
      %v1091 = vadd.f32 %v947, %v1090
      %v1092 = vpop.f32.mrf.mxu0
      %1093 = vmatprep.mubr.bf16.mxu0 0
      %1094 = vmatmul.mubr.bf16.gmra.mxu0 %v989
      %v1095 = vpop.f32.mrf.mxu0
      %v1096 = vadd.f32 %v947, %v1095
      %v1097 = vpop.f32.mrf.mxu0
      %v1098 = vpop.f32.mrf.mxu0
      %v1099 = vadd.f32 %v947, %v1098
      %v1100 = vpop.f32.mrf.mxu0
      %1101 = vmatprep.mubr.bf16.mxu0 0
      %1102 = vmatmul.mubr.bf16.gmra.mxu0 %v992
      %v1103 = vpop.f32.mrf.mxu0
      %v1104 = vadd.f32 %v947, %v1103
      %v1105 = vpop.f32.mrf.mxu0
      %v1106 = vpop.f32.mrf.mxu0
      %v1107 = vadd.f32 %v947, %v1106
      %v1108 = vpop.f32.mrf.mxu0
      %1109 = vmatprep.mubr.bf16.mxu0 0
      %1110 = vmatmul.mubr.bf16.gmra.mxu0 %v995
      %v1111 = vpop.f32.mrf.mxu0
      %v1112 = vadd.f32 %v947, %v1111
      %v1113 = vpop.f32.mrf.mxu0
      %v1114 = vpop.f32.mrf.mxu0
      %v1115 = vadd.f32 %v947, %v1114
      %v1116 = vpop.f32.mrf.mxu0
      %1117 = vmatprep.mubr.bf16.mxu0 0
      %1118 = vmatmul.mubr.bf16.gmra.mxu0 %v998
      %v1119 = vpop.f32.mrf.mxu0
      %v1120 = vadd.f32 %v947, %v1119
      %v1121 = vpop.f32.mrf.mxu0
      %v1122 = vpop.f32.mrf.mxu0
      %v1123 = vadd.f32 %v947, %v1122
      %v1124 = vpop.f32.mrf.mxu0
      %1125 = vmatprep.mubr.bf16.mxu0 0
      %1126 = vmatmul.mubr.bf16.gmra.mxu0 %v1001
      %v1127 = vpop.f32.mrf.mxu0
      %v1128 = vadd.f32 %v947, %v1127
      %v1129 = vpop.f32.mrf.mxu0
      %v1130 = vpop.f32.mrf.mxu0
      %v1131 = vadd.f32 %v947, %v1130
      %v1132 = vpop.f32.mrf.mxu0
      %1133 = vmatprep.mubr.bf16.mxu0 0
      %1134 = vmatmul.mubr.bf16.gmra.mxu0 %v1004
      %v1135 = vpop.f32.mrf.mxu0
      %v1136 = vadd.f32 %v947, %v1135
      %v1137 = vpop.f32.mrf.mxu0
      %v1138 = vpop.f32.mrf.mxu0
      %v1139 = vadd.f32 %v947, %v1138
      %v1140 = vpop.f32.mrf.mxu0
      %1141 = vmatprep.mubr.bf16.mxu0 0
      %1142 = vmatmul.mubr.bf16.gmra.mxu0 %v1007
      %v1143 = vpop.f32.mrf.mxu0
      %v1144 = vadd.f32 %v947, %v1143
      %v1145 = vpop.f32.mrf.mxu0
      %v1146 = vpop.f32.mrf.mxu0
      %v1147 = vadd.f32 %v947, %v1146
      %v1148 = vpop.f32.mrf.mxu0
      %1149 = vmatprep.mubr.bf16.mxu0 0
      %1150 = vmatmul.mubr.bf16.gmra.mxu0 %v1010
      %v1151 = vpop.f32.mrf.mxu0
      %v1152 = vadd.f32 %v947, %v1151
      %v1153 = vpop.f32.mrf.mxu0
      %v1154 = vpop.f32.mrf.mxu0
      %v1155 = vadd.f32 %v947, %v1154
      %v1156 = vpop.f32.mrf.mxu0
      %1157 = vmatprep.mubr.bf16.mxu0 0
      %1158 = vmatmul.mubr.bf16.gmra.mxu0 %v1013
      %v1159 = vpop.f32.mrf.mxu0
      %v1160 = vadd.f32 %v947, %v1159
      %v1161 = vpop.f32.mrf.mxu0
      %v1162 = vpop.f32.mrf.mxu0
      %v1163 = vadd.f32 %v947, %v1162
      %v1164 = vpop.f32.mrf.mxu0
      %1165 = vmatprep.mubr.bf16.mxu0 0
      %1166 = vmatmul.mubr.bf16.gmra.mxu0 %v1016
      %v1167 = vpop.f32.mrf.mxu0
      %v1168 = vadd.f32 %v947, %v1167
      %v1169 = vpop.f32.mrf.mxu0
      %v1170 = vpop.f32.mrf.mxu0
      %v1171 = vadd.f32 %v947, %v1170
      %v1172 = vpop.f32.mrf.mxu0
      %1173 = vmatprep.mubr.bf16.mxu0 0
      %1174 = vmatmul.mubr.bf16.gmra.mxu0 %v1019
      %v1175 = vpop.f32.mrf.mxu0
      %v1176 = vadd.f32 %v947, %v1175
      %v1177 = vpop.f32.mrf.mxu0
      %v1178 = vpop.f32.mrf.mxu0
      %v1179 = vadd.f32 %v947, %v1178
      %v1180 = vpop.f32.mrf.mxu0
      %1181 = vdwg.mxu0
      %v1182 = vmul.f32 %v1056, 0.5
      %v1183 = vmul.f32 %v1059, 0.5
      %v1184 = vmul.f32 %v1064, 0.5
      %v1185 = vmul.f32 %v1067, 0.5
      %v1186 = vmul.f32 %v1072, 0.5
      %v1187 = vmul.f32 %v1075, 0.5
      %v1188 = vmul.f32 %v1080, 0.5
      %v1189 = vmul.f32 %v1083, 0.5
      %v1190 = vmul.f32 %v1088, 0.5
      %v1191 = vmul.f32 %v1091, 0.5
      %v1192 = vmul.f32 %v1096, 0.5
      %v1193 = vmul.f32 %v1099, 0.5
      %v1194 = vmul.f32 %v1104, 0.5
      %v1195 = vmul.f32 %v1107, 0.5
      %v1196 = vmul.f32 %v1112, 0.5
      %v1197 = vmul.f32 %v1115, 0.5
      %v1198 = vmul.f32 %v1120, 0.5
      %v1199 = vmul.f32 %v1123, 0.5
      %v1200 = vmul.f32 %v1128, 0.5
      %v1201 = vmul.f32 %v1131, 0.5
      %v1202 = vmul.f32 %v1136, 0.5
      %v1203 = vmul.f32 %v1139, 0.5
      %v1204 = vmul.f32 %v1144, 0.5
      %v1205 = vmul.f32 %v1147, 0.5
      %v1206 = vmul.f32 %v1152, 0.5
      %v1207 = vmul.f32 %v1155, 0.5
      %v1208 = vmul.f32 %v1160, 0.5
      %v1209 = vmul.f32 %v1163, 0.5
      %v1210 = vmul.f32 %v1168, 0.5
      %v1211 = vmul.f32 %v1171, 0.5
      %v1212 = vmul.f32 %v1176, 0.5
      %v1213 = vmul.f32 %v1179, 0.5
      %v1214 = vmul.f32 %v1056, 0.70710677
      %v1215 = vmul.f32 %v1059, 0.70710677
      %v1216 = vmul.f32 %v1064, 0.70710677
      %v1217 = vmul.f32 %v1067, 0.70710677
      %v1218 = vmul.f32 %v1072, 0.70710677
      %v1219 = vmul.f32 %v1075, 0.70710677
      %v1220 = vmul.f32 %v1080, 0.70710677
      %v1221 = vmul.f32 %v1083, 0.70710677
      %v1222 = vmul.f32 %v1088, 0.70710677
      %v1223 = vmul.f32 %v1091, 0.70710677
      %v1224 = vmul.f32 %v1096, 0.70710677
      %v1225 = vmul.f32 %v1099, 0.70710677
      %v1226 = vmul.f32 %v1104, 0.70710677
      %v1227 = vmul.f32 %v1107, 0.70710677
      %v1228 = vmul.f32 %v1112, 0.70710677
      %v1229 = vmul.f32 %v1115, 0.70710677
      %v1230 = vmul.f32 %v1120, 0.70710677
      %v1231 = vmul.f32 %v1123, 0.70710677
      %v1232 = vmul.f32 %v1128, 0.70710677
      %v1233 = vmul.f32 %v1131, 0.70710677
      %v1234 = vmul.f32 %v1136, 0.70710677
      %v1235 = vmul.f32 %v1139, 0.70710677
      %v1236 = vmul.f32 %v1144, 0.70710677
      %v1237 = vmul.f32 %v1147, 0.70710677
      %v1238 = vmul.f32 %v1152, 0.70710677
      %v1239 = vmul.f32 %v1155, 0.70710677
      %v1240 = vmul.f32 %v1160, 0.70710677
      %v1241 = vmul.f32 %v1163, 0.70710677
      %v1242 = vmul.f32 %v1168, 0.70710677
      %v1243 = vmul.f32 %v1171, 0.70710677
      %v1244 = vmul.f32 %v1176, 0.70710677
      %v1245 = vmul.f32 %v1179, 0.70710677
      %v1246 = verf.f32.pop %v1214
      %v1247 = verf.f32.pop %v1215
      %v1248 = verf.f32.pop %v1216
      %v1249 = verf.f32.pop %v1217
      %v1250 = verf.f32.pop %v1218
      %v1251 = verf.f32.pop %v1219
      %v1252 = verf.f32.pop %v1220
      %v1253 = verf.f32.pop %v1221
      %v1254 = verf.f32.pop %v1222
      %v1255 = verf.f32.pop %v1223
      %v1256 = verf.f32.pop %v1224
      %v1257 = verf.f32.pop %v1225
      %v1258 = verf.f32.pop %v1226
      %v1259 = verf.f32.pop %v1227
      %v1260 = verf.f32.pop %v1228
      %v1261 = verf.f32.pop %v1229
      %v1262 = verf.f32.pop %v1230
      %v1263 = verf.f32.pop %v1231
      %v1264 = verf.f32.pop %v1232
      %v1265 = verf.f32.pop %v1233
      %v1266 = verf.f32.pop %v1234
      %v1267 = verf.f32.pop %v1235
      %v1268 = verf.f32.pop %v1236
      %v1269 = verf.f32.pop %v1237
      %v1270 = verf.f32.pop %v1238
      %v1271 = verf.f32.pop %v1239
      %v1272 = verf.f32.pop %v1240
      %v1273 = verf.f32.pop %v1241
      %v1274 = verf.f32.pop %v1242
      %v1275 = verf.f32.pop %v1243
      %v1276 = verf.f32.pop %v1244
      %v1277 = verf.f32.pop %v1245
      %v1278 = vadd.f32 %v1246, 1.0
      %v1279 = vadd.f32 %v1247, 1.0
      %v1280 = vadd.f32 %v1248, 1.0
      %v1281 = vadd.f32 %v1249, 1.0
      %v1282 = vadd.f32 %v1250, 1.0
      %v1283 = vadd.f32 %v1251, 1.0
      %v1284 = vadd.f32 %v1252, 1.0
      %v1285 = vadd.f32 %v1253, 1.0
      %v1286 = vadd.f32 %v1254, 1.0
      %v1287 = vadd.f32 %v1255, 1.0
      %v1288 = vadd.f32 %v1256, 1.0
      %v1289 = vadd.f32 %v1257, 1.0
      %v1290 = vadd.f32 %v1258, 1.0
      %v1291 = vadd.f32 %v1259, 1.0
      %v1292 = vadd.f32 %v1260, 1.0
      %v1293 = vadd.f32 %v1261, 1.0
      %v1294 = vadd.f32 %v1262, 1.0
      %v1295 = vadd.f32 %v1263, 1.0
      %v1296 = vadd.f32 %v1264, 1.0
      %v1297 = vadd.f32 %v1265, 1.0
      %v1298 = vadd.f32 %v1266, 1.0
      %v1299 = vadd.f32 %v1267, 1.0
      %v1300 = vadd.f32 %v1268, 1.0
      %v1301 = vadd.f32 %v1269, 1.0
      %v1302 = vadd.f32 %v1270, 1.0
      %v1303 = vadd.f32 %v1271, 1.0
      %v1304 = vadd.f32 %v1272, 1.0
      %v1305 = vadd.f32 %v1273, 1.0
      %v1306 = vadd.f32 %v1274, 1.0
      %v1307 = vadd.f32 %v1275, 1.0
      %v1308 = vadd.f32 %v1276, 1.0
      %v1309 = vadd.f32 %v1277, 1.0
      %v1310 = vmul.f32 %v1182, %v1278
      %v1311 = vmul.f32 %v1183, %v1279
      %v1312 = vmul.f32 %v1184, %v1280
      %v1313 = vmul.f32 %v1185, %v1281
      %v1314 = vmul.f32 %v1186, %v1282
      %v1315 = vmul.f32 %v1187, %v1283
      %v1316 = vmul.f32 %v1188, %v1284
      %v1317 = vmul.f32 %v1189, %v1285
      %v1318 = vmul.f32 %v1190, %v1286
      %v1319 = vmul.f32 %v1191, %v1287
      %v1320 = vmul.f32 %v1192, %v1288
      %v1321 = vmul.f32 %v1193, %v1289
      %v1322 = vmul.f32 %v1194, %v1290
      %v1323 = vmul.f32 %v1195, %v1291
      %v1324 = vmul.f32 %v1196, %v1292
      %v1325 = vmul.f32 %v1197, %v1293
      %v1326 = vmul.f32 %v1198, %v1294
      %v1327 = vmul.f32 %v1199, %v1295
      %v1328 = vmul.f32 %v1200, %v1296
      %v1329 = vmul.f32 %v1201, %v1297
      %v1330 = vmul.f32 %v1202, %v1298
      %v1331 = vmul.f32 %v1203, %v1299
      %v1332 = vmul.f32 %v1204, %v1300
      %v1333 = vmul.f32 %v1205, %v1301
      %v1334 = vmul.f32 %v1206, %v1302
      %v1335 = vmul.f32 %v1207, %v1303
      %v1336 = vmul.f32 %v1208, %v1304
      %v1337 = vmul.f32 %v1209, %v1305
      %v1338 = vmul.f32 %v1210, %v1306
      %v1339 = vmul.f32 %v1211, %v1307
      %v1340 = vmul.f32 %v1212, %v1308
      %v1341 = vmul.f32 %v1213, %v1309
      %vm1342 = vcmask 130048
      %1343 = vst.msk [vmem:[%s363] sm:$0xff] %vm1342, %v1310
      %1344 = vst.msk [vmem:[%s363 + $0x8] sm:$0xff] %vm1342, %v1311
      %1345 = vst.msk [vmem:[%s363 + $0x10] sm:$0xff] %vm1342, %v1312
      %1346 = vst.msk [vmem:[%s363 + $0x18] sm:$0xff] %vm1342, %v1313
      %1347 = vst.msk [vmem:[%s363 + $0x20] sm:$0xff] %vm1342, %v1314
      %1348 = vst.msk [vmem:[%s363 + $0x28] sm:$0xff] %vm1342, %v1315
      %1349 = vst.msk [vmem:[%s363 + $0x30] sm:$0xff] %vm1342, %v1316
      %1350 = vst.msk [vmem:[%s363 + $0x38] sm:$0xff] %vm1342, %v1317
      %1351 = vst.msk [vmem:[%s363 + $0x40] sm:$0xff] %vm1342, %v1318
      %1352 = vst.msk [vmem:[%s363 + $0x48] sm:$0xff] %vm1342, %v1319
      %1353 = vst.msk [vmem:[%s363 + $0x50] sm:$0xff] %vm1342, %v1320
      %1354 = vst.msk [vmem:[%s363 + $0x58] sm:$0xff] %vm1342, %v1321
      %1355 = vst.msk [vmem:[%s363 + $0x60] sm:$0xff] %vm1342, %v1322
      %1356 = vst.msk [vmem:[%s363 + $0x68] sm:$0xff] %vm1342, %v1323
      %1357 = vst.msk [vmem:[%s363 + $0x70] sm:$0xff] %vm1342, %v1324
      %1358 = vst.msk [vmem:[%s363 + $0x78] sm:$0xff] %vm1342, %v1325
      %1359 = vst.msk [vmem:[%s363 + $0x80] sm:$0xff] %vm1342, %v1326
      %1360 = vst.msk [vmem:[%s363 + $0x88] sm:$0xff] %vm1342, %v1327
      %1361 = vst.msk [vmem:[%s363 + $0x90] sm:$0xff] %vm1342, %v1328
      %1362 = vst.msk [vmem:[%s363 + $0x98] sm:$0xff] %vm1342, %v1329
      %1363 = vst.msk [vmem:[%s363 + $0xa0] sm:$0xff] %vm1342, %v1330
      %1364 = vst.msk [vmem:[%s363 + $0xa8] sm:$0xff] %vm1342, %v1331
      %1365 = vst.msk [vmem:[%s363 + $0xb0] sm:$0xff] %vm1342, %v1332
      %1366 = vst.msk [vmem:[%s363 + $0xb8] sm:$0xff] %vm1342, %v1333
      %1367 = vst.msk [vmem:[%s363 + $0xc0] sm:$0xff] %vm1342, %v1334
      %1368 = vst.msk [vmem:[%s363 + $0xc8] sm:$0xff] %vm1342, %v1335
      %1369 = vst.msk [vmem:[%s363 + $0xd0] sm:$0xff] %vm1342, %v1336
      %1370 = vst.msk [vmem:[%s363 + $0xd8] sm:$0xff] %vm1342, %v1337
      %1371 = vst.msk [vmem:[%s363 + $0xe0] sm:$0xff] %vm1342, %v1338
      %1372 = vst.msk [vmem:[%s363 + $0xe8] sm:$0xff] %vm1342, %v1339
      %1373 = vst.msk [vmem:[%s363 + $0xf0] sm:$0xff] %vm1342, %v1340
      %1374 = vst.msk [vmem:[%s363 + $0xf8] sm:$0xff] %vm1342, %v1341
      %1407 = vrot.lane.b32.xlu0 %v1310, 112
      %v1408 = vpop.permute.xlu0 %1407
      %1409 = vrot.lane.b32.xlu0 %v1311, 112
      %v1410 = vpop.permute.xlu0 %1409
      %1411 = vrot.lane.b32.xlu0 %v1312, 112
      %v1412 = vpop.permute.xlu0 %1411
      %1413 = vrot.lane.b32.xlu0 %v1313, 112
      %v1414 = vpop.permute.xlu0 %1413
      %1415 = vrot.lane.b32.xlu0 %v1314, 112
      %v1416 = vpop.permute.xlu0 %1415
      %1417 = vrot.lane.b32.xlu0 %v1315, 112
      %v1418 = vpop.permute.xlu0 %1417
      %1419 = vrot.lane.b32.xlu0 %v1316, 112
      %v1420 = vpop.permute.xlu0 %1419
      %1421 = vrot.lane.b32.xlu0 %v1317, 112
      %v1422 = vpop.permute.xlu0 %1421
      %1423 = vrot.lane.b32.xlu0 %v1318, 112
      %v1424 = vpop.permute.xlu0 %1423
      %1425 = vrot.lane.b32.xlu0 %v1319, 112
      %v1426 = vpop.permute.xlu0 %1425
      %1427 = vrot.lane.b32.xlu0 %v1320, 112
      %v1428 = vpop.permute.xlu0 %1427
      %1429 = vrot.lane.b32.xlu0 %v1321, 112
      %v1430 = vpop.permute.xlu0 %1429
      %1431 = vrot.lane.b32.xlu0 %v1322, 112
      %v1432 = vpop.permute.xlu0 %1431
      %1433 = vrot.lane.b32.xlu0 %v1323, 112
      %v1434 = vpop.permute.xlu0 %1433
      %1435 = vrot.lane.b32.xlu0 %v1324, 112
      %v1436 = vpop.permute.xlu0 %1435
      %1437 = vrot.lane.b32.xlu0 %v1325, 112
      %v1438 = vpop.permute.xlu0 %1437
      %1439 = vrot.lane.b32.xlu0 %v1326, 112
      %v1440 = vpop.permute.xlu0 %1439
      %1441 = vrot.lane.b32.xlu0 %v1327, 112
      %v1442 = vpop.permute.xlu0 %1441
      %1443 = vrot.lane.b32.xlu0 %v1328, 112
      %v1444 = vpop.permute.xlu0 %1443
      %1445 = vrot.lane.b32.xlu0 %v1329, 112
      %v1446 = vpop.permute.xlu0 %1445
      %1447 = vrot.lane.b32.xlu0 %v1330, 112
      %v1448 = vpop.permute.xlu0 %1447
      %1449 = vrot.lane.b32.xlu0 %v1331, 112
      %v1450 = vpop.permute.xlu0 %1449
      %1451 = vrot.lane.b32.xlu0 %v1332, 112
      %v1452 = vpop.permute.xlu0 %1451
      %1453 = vrot.lane.b32.xlu0 %v1333, 112
      %v1454 = vpop.permute.xlu0 %1453
      %1455 = vrot.lane.b32.xlu0 %v1334, 112
      %v1456 = vpop.permute.xlu0 %1455
      %1457 = vrot.lane.b32.xlu0 %v1335, 112
      %v1458 = vpop.permute.xlu0 %1457
      %1459 = vrot.lane.b32.xlu0 %v1336, 112
      %v1460 = vpop.permute.xlu0 %1459
      %1461 = vrot.lane.b32.xlu0 %v1337, 112
      %v1462 = vpop.permute.xlu0 %1461
      %1463 = vrot.lane.b32.xlu0 %v1338, 112
      %v1464 = vpop.permute.xlu0 %1463
      %1465 = vrot.lane.b32.xlu0 %v1339, 112
      %v1466 = vpop.permute.xlu0 %1465
      %1467 = vrot.lane.b32.xlu0 %v1340, 112
      %v1468 = vpop.permute.xlu0 %1467
      %1469 = vrot.lane.b32.xlu0 %v1341, 112
      %v1470 = vpop.permute.xlu0 %1469
      %1503 = vst.msk [vmem:[%s369] sm:$0xff] %vm1342, %v1408
      %1504 = vst.msk [vmem:[%s369 + $0x8] sm:$0xff] %vm1342, %v1410
      %1505 = vst.msk [vmem:[%s369 + $0x10] sm:$0xff] %vm1342, %v1412
      %1506 = vst.msk [vmem:[%s369 + $0x18] sm:$0xff] %vm1342, %v1414
      %1507 = vst.msk [vmem:[%s369 + $0x20] sm:$0xff] %vm1342, %v1416
      %1508 = vst.msk [vmem:[%s369 + $0x28] sm:$0xff] %vm1342, %v1418
      %1509 = vst.msk [vmem:[%s369 + $0x30] sm:$0xff] %vm1342, %v1420
      %1510 = vst.msk [vmem:[%s369 + $0x38] sm:$0xff] %vm1342, %v1422
      %1511 = vst.msk [vmem:[%s369 + $0x40] sm:$0xff] %vm1342, %v1424
      %1512 = vst.msk [vmem:[%s369 + $0x48] sm:$0xff] %vm1342, %v1426
      %1513 = vst.msk [vmem:[%s369 + $0x50] sm:$0xff] %vm1342, %v1428
      %1514 = vst.msk [vmem:[%s369 + $0x58] sm:$0xff] %vm1342, %v1430
      %1515 = vst.msk [vmem:[%s369 + $0x60] sm:$0xff] %vm1342, %v1432
      %1516 = vst.msk [vmem:[%s369 + $0x68] sm:$0xff] %vm1342, %v1434
      %1517 = vst.msk [vmem:[%s369 + $0x70] sm:$0xff] %vm1342, %v1436
      %1518 = vst.msk [vmem:[%s369 + $0x78] sm:$0xff] %vm1342, %v1438
      %1519 = vst.msk [vmem:[%s369 + $0x80] sm:$0xff] %vm1342, %v1440
      %1520 = vst.msk [vmem:[%s369 + $0x88] sm:$0xff] %vm1342, %v1442
      %1521 = vst.msk [vmem:[%s369 + $0x90] sm:$0xff] %vm1342, %v1444
      %1522 = vst.msk [vmem:[%s369 + $0x98] sm:$0xff] %vm1342, %v1446
      %1523 = vst.msk [vmem:[%s369 + $0xa0] sm:$0xff] %vm1342, %v1448
      %1524 = vst.msk [vmem:[%s369 + $0xa8] sm:$0xff] %vm1342, %v1450
      %1525 = vst.msk [vmem:[%s369 + $0xb0] sm:$0xff] %vm1342, %v1452
      %1526 = vst.msk [vmem:[%s369 + $0xb8] sm:$0xff] %vm1342, %v1454
      %1527 = vst.msk [vmem:[%s369 + $0xc0] sm:$0xff] %vm1342, %v1456
      %1528 = vst.msk [vmem:[%s369 + $0xc8] sm:$0xff] %vm1342, %v1458
      %1529 = vst.msk [vmem:[%s369 + $0xd0] sm:$0xff] %vm1342, %v1460
      %1530 = vst.msk [vmem:[%s369 + $0xd8] sm:$0xff] %vm1342, %v1462
      %1531 = vst.msk [vmem:[%s369 + $0xe0] sm:$0xff] %vm1342, %v1464
      %1532 = vst.msk [vmem:[%s369 + $0xe8] sm:$0xff] %vm1342, %v1466
      %1533 = vst.msk [vmem:[%s369 + $0xf0] sm:$0xff] %vm1342, %v1468
      %1534 = vst.msk [vmem:[%s369 + $0xf8] sm:$0xff] %vm1342, %v1470
      %1535 = vrot.lane.b32.xlu0 %v1310, 96
      %v1536 = vpop.permute.xlu0 %1535
      %1537 = vrot.lane.b32.xlu0 %v1311, 96
      %v1538 = vpop.permute.xlu0 %1537
      %1539 = vrot.lane.b32.xlu0 %v1312, 96
      %v1540 = vpop.permute.xlu0 %1539
      %1541 = vrot.lane.b32.xlu0 %v1313, 96
      %v1542 = vpop.permute.xlu0 %1541
      %1543 = vrot.lane.b32.xlu0 %v1314, 96
      %v1544 = vpop.permute.xlu0 %1543
      %1545 = vrot.lane.b32.xlu0 %v1315, 96
      %v1546 = vpop.permute.xlu0 %1545
      %1547 = vrot.lane.b32.xlu0 %v1316, 96
      %v1548 = vpop.permute.xlu0 %1547
      %1549 = vrot.lane.b32.xlu0 %v1317, 96
      %v1550 = vpop.permute.xlu0 %1549
      %1551 = vrot.lane.b32.xlu0 %v1318, 96
      %v1552 = vpop.permute.xlu0 %1551
      %1553 = vrot.lane.b32.xlu0 %v1319, 96
      %v1554 = vpop.permute.xlu0 %1553
      %1555 = vrot.lane.b32.xlu0 %v1320, 96
      %v1556 = vpop.permute.xlu0 %1555
      %1557 = vrot.lane.b32.xlu0 %v1321, 96
      %v1558 = vpop.permute.xlu0 %1557
      %1559 = vrot.lane.b32.xlu0 %v1322, 96
      %v1560 = vpop.permute.xlu0 %1559
      %1561 = vrot.lane.b32.xlu0 %v1323, 96
      %v1562 = vpop.permute.xlu0 %1561
      %1563 = vrot.lane.b32.xlu0 %v1324, 96
      %v1564 = vpop.permute.xlu0 %1563
      %1565 = vrot.lane.b32.xlu0 %v1325, 96
      %v1566 = vpop.permute.xlu0 %1565
      %1567 = vrot.lane.b32.xlu0 %v1326, 96
      %v1568 = vpop.permute.xlu0 %1567
      %1569 = vrot.lane.b32.xlu0 %v1327, 96
      %v1570 = vpop.permute.xlu0 %1569
      %1571 = vrot.lane.b32.xlu0 %v1328, 96
      %v1572 = vpop.permute.xlu0 %1571
      %1573 = vrot.lane.b32.xlu0 %v1329, 96
      %v1574 = vpop.permute.xlu0 %1573
      %1575 = vrot.lane.b32.xlu0 %v1330, 96
      %v1576 = vpop.permute.xlu0 %1575
      %1577 = vrot.lane.b32.xlu0 %v1331, 96
      %v1578 = vpop.permute.xlu0 %1577
      %1579 = vrot.lane.b32.xlu0 %v1332, 96
      %v1580 = vpop.permute.xlu0 %1579
      %1581 = vrot.lane.b32.xlu0 %v1333, 96
      %v1582 = vpop.permute.xlu0 %1581
      %1583 = vrot.lane.b32.xlu0 %v1334, 96
      %v1584 = vpop.permute.xlu0 %1583
      %1585 = vrot.lane.b32.xlu0 %v1335, 96
      %v1586 = vpop.permute.xlu0 %1585
      %1587 = vrot.lane.b32.xlu0 %v1336, 96
      %v1588 = vpop.permute.xlu0 %1587
      %1589 = vrot.lane.b32.xlu0 %v1337, 96
      %v1590 = vpop.permute.xlu0 %1589
      %1591 = vrot.lane.b32.xlu0 %v1338, 96
      %v1592 = vpop.permute.xlu0 %1591
      %1593 = vrot.lane.b32.xlu0 %v1339, 96
      %v1594 = vpop.permute.xlu0 %1593
      %1595 = vrot.lane.b32.xlu0 %v1340, 96
      %v1596 = vpop.permute.xlu0 %1595
      %1597 = vrot.lane.b32.xlu0 %v1341, 96
      %v1598 = vpop.permute.xlu0 %1597
      %1631 = vst.msk [vmem:[%s375] sm:$0xff] %vm1342, %v1536
      %1632 = vst.msk [vmem:[%s375 + $0x8] sm:$0xff] %vm1342, %v1538
      %1633 = vst.msk [vmem:[%s375 + $0x10] sm:$0xff] %vm1342, %v1540
      %1634 = vst.msk [vmem:[%s375 + $0x18] sm:$0xff] %vm1342, %v1542
      %1635 = vst.msk [vmem:[%s375 + $0x20] sm:$0xff] %vm1342, %v1544
      %1636 = vst.msk [vmem:[%s375 + $0x28] sm:$0xff] %vm1342, %v1546
      %1637 = vst.msk [vmem:[%s375 + $0x30] sm:$0xff] %vm1342, %v1548
      %1638 = vst.msk [vmem:[%s375 + $0x38] sm:$0xff] %vm1342, %v1550
      %1639 = vst.msk [vmem:[%s375 + $0x40] sm:$0xff] %vm1342, %v1552
      %1640 = vst.msk [vmem:[%s375 + $0x48] sm:$0xff] %vm1342, %v1554
      %1641 = vst.msk [vmem:[%s375 + $0x50] sm:$0xff] %vm1342, %v1556
      %1642 = vst.msk [vmem:[%s375 + $0x58] sm:$0xff] %vm1342, %v1558
      %1643 = vst.msk [vmem:[%s375 + $0x60] sm:$0xff] %vm1342, %v1560
      %1644 = vst.msk [vmem:[%s375 + $0x68] sm:$0xff] %vm1342, %v1562
      %1645 = vst.msk [vmem:[%s375 + $0x70] sm:$0xff] %vm1342, %v1564
      %1646 = vst.msk [vmem:[%s375 + $0x78] sm:$0xff] %vm1342, %v1566
      %1647 = vst.msk [vmem:[%s375 + $0x80] sm:$0xff] %vm1342, %v1568
      %1648 = vst.msk [vmem:[%s375 + $0x88] sm:$0xff] %vm1342, %v1570
      %1649 = vst.msk [vmem:[%s375 + $0x90] sm:$0xff] %vm1342, %v1572
      %1650 = vst.msk [vmem:[%s375 + $0x98] sm:$0xff] %vm1342, %v1574
      %1651 = vst.msk [vmem:[%s375 + $0xa0] sm:$0xff] %vm1342, %v1576
      %1652 = vst.msk [vmem:[%s375 + $0xa8] sm:$0xff] %vm1342, %v1578
      %1653 = vst.msk [vmem:[%s375 + $0xb0] sm:$0xff] %vm1342, %v1580
      %1654 = vst.msk [vmem:[%s375 + $0xb8] sm:$0xff] %vm1342, %v1582
      %1655 = vst.msk [vmem:[%s375 + $0xc0] sm:$0xff] %vm1342, %v1584
      %1656 = vst.msk [vmem:[%s375 + $0xc8] sm:$0xff] %vm1342, %v1586
      %1657 = vst.msk [vmem:[%s375 + $0xd0] sm:$0xff] %vm1342, %v1588
      %1658 = vst.msk [vmem:[%s375 + $0xd8] sm:$0xff] %vm1342, %v1590
      %1659 = vst.msk [vmem:[%s375 + $0xe0] sm:$0xff] %vm1342, %v1592
      %1660 = vst.msk [vmem:[%s375 + $0xe8] sm:$0xff] %vm1342, %v1594
      %1661 = vst.msk [vmem:[%s375 + $0xf0] sm:$0xff] %vm1342, %v1596
      %1662 = vst.msk [vmem:[%s375 + $0xf8] sm:$0xff] %vm1342, %v1598
      %1663 = vrot.lane.b32.xlu0 %v1310, 80
      %v1664 = vpop.permute.xlu0 %1663
      %1665 = vrot.lane.b32.xlu0 %v1311, 80
      %v1666 = vpop.permute.xlu0 %1665
      %1667 = vrot.lane.b32.xlu0 %v1312, 80
      %v1668 = vpop.permute.xlu0 %1667
      %1669 = vrot.lane.b32.xlu0 %v1313, 80
      %v1670 = vpop.permute.xlu0 %1669
      %1671 = vrot.lane.b32.xlu0 %v1314, 80
      %v1672 = vpop.permute.xlu0 %1671
      %1673 = vrot.lane.b32.xlu0 %v1315, 80
      %v1674 = vpop.permute.xlu0 %1673
      %1675 = vrot.lane.b32.xlu0 %v1316, 80
      %v1676 = vpop.permute.xlu0 %1675
      %1677 = vrot.lane.b32.xlu0 %v1317, 80
      %v1678 = vpop.permute.xlu0 %1677
      %1679 = vrot.lane.b32.xlu0 %v1318, 80
      %v1680 = vpop.permute.xlu0 %1679
      %1681 = vrot.lane.b32.xlu0 %v1319, 80
      %v1682 = vpop.permute.xlu0 %1681
      %1683 = vrot.lane.b32.xlu0 %v1320, 80
      %v1684 = vpop.permute.xlu0 %1683
      %1685 = vrot.lane.b32.xlu0 %v1321, 80
      %v1686 = vpop.permute.xlu0 %1685
      %1687 = vrot.lane.b32.xlu0 %v1322, 80
      %v1688 = vpop.permute.xlu0 %1687
      %1689 = vrot.lane.b32.xlu0 %v1323, 80
      %v1690 = vpop.permute.xlu0 %1689
      %1691 = vrot.lane.b32.xlu0 %v1324, 80
      %v1692 = vpop.permute.xlu0 %1691
      %1693 = vrot.lane.b32.xlu0 %v1325, 80
      %v1694 = vpop.permute.xlu0 %1693
      %1695 = vrot.lane.b32.xlu0 %v1326, 80
      %v1696 = vpop.permute.xlu0 %1695
      %1697 = vrot.lane.b32.xlu0 %v1327, 80
      %v1698 = vpop.permute.xlu0 %1697
      %1699 = vrot.lane.b32.xlu0 %v1328, 80
      %v1700 = vpop.permute.xlu0 %1699
      %1701 = vrot.lane.b32.xlu0 %v1329, 80
      %v1702 = vpop.permute.xlu0 %1701
      %1703 = vrot.lane.b32.xlu0 %v1330, 80
      %v1704 = vpop.permute.xlu0 %1703
      %1705 = vrot.lane.b32.xlu0 %v1331, 80
      %v1706 = vpop.permute.xlu0 %1705
      %1707 = vrot.lane.b32.xlu0 %v1332, 80
      %v1708 = vpop.permute.xlu0 %1707
      %1709 = vrot.lane.b32.xlu0 %v1333, 80
      %v1710 = vpop.permute.xlu0 %1709
      %1711 = vrot.lane.b32.xlu0 %v1334, 80
      %v1712 = vpop.permute.xlu0 %1711
      %1713 = vrot.lane.b32.xlu0 %v1335, 80
      %v1714 = vpop.permute.xlu0 %1713
      %1715 = vrot.lane.b32.xlu0 %v1336, 80
      %v1716 = vpop.permute.xlu0 %1715
      %1717 = vrot.lane.b32.xlu0 %v1337, 80
      %v1718 = vpop.permute.xlu0 %1717
      %1719 = vrot.lane.b32.xlu0 %v1338, 80
      %v1720 = vpop.permute.xlu0 %1719
      %1721 = vrot.lane.b32.xlu0 %v1339, 80
      %v1722 = vpop.permute.xlu0 %1721
      %1723 = vrot.lane.b32.xlu0 %v1340, 80
      %v1724 = vpop.permute.xlu0 %1723
      %1725 = vrot.lane.b32.xlu0 %v1341, 80
      %v1726 = vpop.permute.xlu0 %1725
      %1759 = vst.msk [vmem:[%s381] sm:$0xff] %vm1342, %v1664
      %1760 = vst.msk [vmem:[%s381 + $0x8] sm:$0xff] %vm1342, %v1666
      %1761 = vst.msk [vmem:[%s381 + $0x10] sm:$0xff] %vm1342, %v1668
      %1762 = vst.msk [vmem:[%s381 + $0x18] sm:$0xff] %vm1342, %v1670
      %1763 = vst.msk [vmem:[%s381 + $0x20] sm:$0xff] %vm1342, %v1672
      %1764 = vst.msk [vmem:[%s381 + $0x28] sm:$0xff] %vm1342, %v1674
      %1765 = vst.msk [vmem:[%s381 + $0x30] sm:$0xff] %vm1342, %v1676
      %1766 = vst.msk [vmem:[%s381 + $0x38] sm:$0xff] %vm1342, %v1678
      %1767 = vst.msk [vmem:[%s381 + $0x40] sm:$0xff] %vm1342, %v1680
      %1768 = vst.msk [vmem:[%s381 + $0x48] sm:$0xff] %vm1342, %v1682
      %1769 = vst.msk [vmem:[%s381 + $0x50] sm:$0xff] %vm1342, %v1684
      %1770 = vst.msk [vmem:[%s381 + $0x58] sm:$0xff] %vm1342, %v1686
      %1771 = vst.msk [vmem:[%s381 + $0x60] sm:$0xff] %vm1342, %v1688
      %1772 = vst.msk [vmem:[%s381 + $0x68] sm:$0xff] %vm1342, %v1690
      %1773 = vst.msk [vmem:[%s381 + $0x70] sm:$0xff] %vm1342, %v1692
      %1774 = vst.msk [vmem:[%s381 + $0x78] sm:$0xff] %vm1342, %v1694
      %1775 = vst.msk [vmem:[%s381 + $0x80] sm:$0xff] %vm1342, %v1696
      %1776 = vst.msk [vmem:[%s381 + $0x88] sm:$0xff] %vm1342, %v1698
      %1777 = vst.msk [vmem:[%s381 + $0x90] sm:$0xff] %vm1342, %v1700
      %1778 = vst.msk [vmem:[%s381 + $0x98] sm:$0xff] %vm1342, %v1702
      %1779 = vst.msk [vmem:[%s381 + $0xa0] sm:$0xff] %vm1342, %v1704
      %1780 = vst.msk [vmem:[%s381 + $0xa8] sm:$0xff] %vm1342, %v1706
      %1781 = vst.msk [vmem:[%s381 + $0xb0] sm:$0xff] %vm1342, %v1708
      %1782 = vst.msk [vmem:[%s381 + $0xb8] sm:$0xff] %vm1342, %v1710
      %1783 = vst.msk [vmem:[%s381 + $0xc0] sm:$0xff] %vm1342, %v1712
      %1784 = vst.msk [vmem:[%s381 + $0xc8] sm:$0xff] %vm1342, %v1714
      %1785 = vst.msk [vmem:[%s381 + $0xd0] sm:$0xff] %vm1342, %v1716
      %1786 = vst.msk [vmem:[%s381 + $0xd8] sm:$0xff] %vm1342, %v1718
      %1787 = vst.msk [vmem:[%s381 + $0xe0] sm:$0xff] %vm1342, %v1720
      %1788 = vst.msk [vmem:[%s381 + $0xe8] sm:$0xff] %vm1342, %v1722
      %1789 = vst.msk [vmem:[%s381 + $0xf0] sm:$0xff] %vm1342, %v1724
      %1790 = vst.msk [vmem:[%s381 + $0xf8] sm:$0xff] %vm1342, %v1726
      %1823 = vrot.lane.b32.xlu0 %v1056, 64
      %v1824 = vpop.permute.xlu0 %1823
      %1825 = vrot.lane.b32.xlu0 %v1059, 64
      %v1826 = vpop.permute.xlu0 %1825
      %1827 = vrot.lane.b32.xlu0 %v1064, 64
      %v1828 = vpop.permute.xlu0 %1827
      %1829 = vrot.lane.b32.xlu0 %v1067, 64
      %v1830 = vpop.permute.xlu0 %1829
      %1831 = vrot.lane.b32.xlu0 %v1072, 64
      %v1832 = vpop.permute.xlu0 %1831
      %1833 = vrot.lane.b32.xlu0 %v1075, 64
      %v1834 = vpop.permute.xlu0 %1833
      %1835 = vrot.lane.b32.xlu0 %v1080, 64
      %v1836 = vpop.permute.xlu0 %1835
      %1837 = vrot.lane.b32.xlu0 %v1083, 64
      %v1838 = vpop.permute.xlu0 %1837
      %1839 = vrot.lane.b32.xlu0 %v1088, 64
      %v1840 = vpop.permute.xlu0 %1839
      %1841 = vrot.lane.b32.xlu0 %v1091, 64
      %v1842 = vpop.permute.xlu0 %1841
      %1843 = vrot.lane.b32.xlu0 %v1096, 64
      %v1844 = vpop.permute.xlu0 %1843
      %1845 = vrot.lane.b32.xlu0 %v1099, 64
      %v1846 = vpop.permute.xlu0 %1845
      %1847 = vrot.lane.b32.xlu0 %v1104, 64
      %v1848 = vpop.permute.xlu0 %1847
      %1849 = vrot.lane.b32.xlu0 %v1107, 64
      %v1850 = vpop.permute.xlu0 %1849
      %1851 = vrot.lane.b32.xlu0 %v1112, 64
      %v1852 = vpop.permute.xlu0 %1851
      %1853 = vrot.lane.b32.xlu0 %v1115, 64
      %v1854 = vpop.permute.xlu0 %1853
      %1855 = vrot.lane.b32.xlu0 %v1120, 64
      %v1856 = vpop.permute.xlu0 %1855
      %1857 = vrot.lane.b32.xlu0 %v1123, 64
      %v1858 = vpop.permute.xlu0 %1857
      %1859 = vrot.lane.b32.xlu0 %v1128, 64
      %v1860 = vpop.permute.xlu0 %1859
      %1861 = vrot.lane.b32.xlu0 %v1131, 64
      %v1862 = vpop.permute.xlu0 %1861
      %1863 = vrot.lane.b32.xlu0 %v1136, 64
      %v1864 = vpop.permute.xlu0 %1863
      %1865 = vrot.lane.b32.xlu0 %v1139, 64
      %v1866 = vpop.permute.xlu0 %1865
      %1867 = vrot.lane.b32.xlu0 %v1144, 64
      %v1868 = vpop.permute.xlu0 %1867
      %1869 = vrot.lane.b32.xlu0 %v1147, 64
      %v1870 = vpop.permute.xlu0 %1869
      %1871 = vrot.lane.b32.xlu0 %v1152, 64
      %v1872 = vpop.permute.xlu0 %1871
      %1873 = vrot.lane.b32.xlu0 %v1155, 64
      %v1874 = vpop.permute.xlu0 %1873
      %1875 = vrot.lane.b32.xlu0 %v1160, 64
      %v1876 = vpop.permute.xlu0 %1875
      %1877 = vrot.lane.b32.xlu0 %v1163, 64
      %v1878 = vpop.permute.xlu0 %1877
      %1879 = vrot.lane.b32.xlu0 %v1168, 64
      %v1880 = vpop.permute.xlu0 %1879
      %1881 = vrot.lane.b32.xlu0 %v1171, 64
      %v1882 = vpop.permute.xlu0 %1881
      %1883 = vrot.lane.b32.xlu0 %v1176, 64
      %v1884 = vpop.permute.xlu0 %1883
      %1885 = vrot.lane.b32.xlu0 %v1179, 64
      %v1886 = vpop.permute.xlu0 %1885
      %1919 = vst.msk [vmem:[%s387] sm:$0xff] %vm422, %v1824
      %1920 = vst.msk [vmem:[%s387 + $0x8] sm:$0xff] %vm422, %v1826
      %1921 = vst.msk [vmem:[%s387 + $0x10] sm:$0xff] %vm422, %v1828
      %1922 = vst.msk [vmem:[%s387 + $0x18] sm:$0xff] %vm422, %v1830
      %1923 = vst.msk [vmem:[%s387 + $0x20] sm:$0xff] %vm422, %v1832
      %1924 = vst.msk [vmem:[%s387 + $0x28] sm:$0xff] %vm422, %v1834
      %1925 = vst.msk [vmem:[%s387 + $0x30] sm:$0xff] %vm422, %v1836
      %1926 = vst.msk [vmem:[%s387 + $0x38] sm:$0xff] %vm422, %v1838
      %1927 = vst.msk [vmem:[%s387 + $0x40] sm:$0xff] %vm422, %v1840
      %1928 = vst.msk [vmem:[%s387 + $0x48] sm:$0xff] %vm422, %v1842
      %1929 = vst.msk [vmem:[%s387 + $0x50] sm:$0xff] %vm422, %v1844
      %1930 = vst.msk [vmem:[%s387 + $0x58] sm:$0xff] %vm422, %v1846
      %1931 = vst.msk [vmem:[%s387 + $0x60] sm:$0xff] %vm422, %v1848
      %1932 = vst.msk [vmem:[%s387 + $0x68] sm:$0xff] %vm422, %v1850
      %1933 = vst.msk [vmem:[%s387 + $0x70] sm:$0xff] %vm422, %v1852
      %1934 = vst.msk [vmem:[%s387 + $0x78] sm:$0xff] %vm422, %v1854
      %1935 = vst.msk [vmem:[%s387 + $0x80] sm:$0xff] %vm422, %v1856
      %1936 = vst.msk [vmem:[%s387 + $0x88] sm:$0xff] %vm422, %v1858
      %1937 = vst.msk [vmem:[%s387 + $0x90] sm:$0xff] %vm422, %v1860
      %1938 = vst.msk [vmem:[%s387 + $0x98] sm:$0xff] %vm422, %v1862
      %1939 = vst.msk [vmem:[%s387 + $0xa0] sm:$0xff] %vm422, %v1864
      %1940 = vst.msk [vmem:[%s387 + $0xa8] sm:$0xff] %vm422, %v1866
      %1941 = vst.msk [vmem:[%s387 + $0xb0] sm:$0xff] %vm422, %v1868
      %1942 = vst.msk [vmem:[%s387 + $0xb8] sm:$0xff] %vm422, %v1870
      %1943 = vst.msk [vmem:[%s387 + $0xc0] sm:$0xff] %vm422, %v1872
      %1944 = vst.msk [vmem:[%s387 + $0xc8] sm:$0xff] %vm422, %v1874
      %1945 = vst.msk [vmem:[%s387 + $0xd0] sm:$0xff] %vm422, %v1876
      %1946 = vst.msk [vmem:[%s387 + $0xd8] sm:$0xff] %vm422, %v1878
      %1947 = vst.msk [vmem:[%s387 + $0xe0] sm:$0xff] %vm422, %v1880
      %1948 = vst.msk [vmem:[%s387 + $0xe8] sm:$0xff] %vm422, %v1882
      %1949 = vst.msk [vmem:[%s387 + $0xf0] sm:$0xff] %vm422, %v1884
      %1950 = vst.msk [vmem:[%s387 + $0xf8] sm:$0xff] %vm422, %v1886
      %s1951 = smul.u32 32, %s21
      %p1952 = scmp.lt.s32.totalorder %s1951, 63
      %s1953 = scalar_select %p1952, %s1951, 63
      %s1954 = smul.addr %s1953, 8
      %s1955 = scalar_lea.vmem %s5, %s1954
      %s1956 = smul.u32 32, %s21
      %p1957 = scmp.lt.s32.totalorder %s1956, 63
      %s1958 = scalar_select %p1957, %s1956, 63
      %s1959 = smul.addr %s1958, 8
      %s1960 = scalar_lea.vmem %s6, %s1959
      %s1961 = smul.u32 32, %s21
      %p1962 = scmp.lt.s32.totalorder %s1961, 63
      %s1963 = scalar_select %p1962, %s1961, 63
      %s1964 = smul.addr %s1963, 8
      %s1965 = scalar_lea.vmem %s7, %s1964
      %s1966 = smul.u32 32, %s21
      %p1967 = scmp.lt.s32.totalorder %s1966, 63
      %s1968 = scalar_select %p1967, %s1966, 63
      %s1969 = smul.addr %s1968, 8
      %s1970 = scalar_lea.vmem %s8, %s1969
      %s1971 = smul.u32 32, %s21
      %p1972 = scmp.lt.s32.totalorder %s1971, 63
      %s1973 = scalar_select %p1972, %s1971, 63
      %s1974 = smul.addr %s1973, 8
      %s1975 = scalar_lea.vmem %s9, %s1974
      // Predicated region
      $region41: #{_lambda_.5} parent=39 // pred_check
        %p1976 = pneg %p149
      $region42: #{_lambda_.5} parent=39 // pred_check_branch
        %1978 = sbr.rel (%p1976) target = $region44
      $region43: #{_lambda_.5} parent=39 // pred_region
        %s1979 = smul.u32 32, %s21
      $region44: #{_lambda_.5} parent=39 // pred_fallthru
        _
      // Predicated region
      $region45: #{_lambda_.5} parent=39 // pred_check
        %p1980 = pneg %p175
      $region46: #{_lambda_.5} parent=39 // pred_check_branch
        %1982 = sbr.rel (%p1980) target = $region48
      $region47: #{_lambda_.5} parent=39 // pred_region
        %s1983 = smul.u32 32, %s21
      $region48: #{_lambda_.5} parent=39 // pred_fallthru
        _
      // Predicated region
      $region49: #{_lambda_.5} parent=39 // pred_check
        %p1984 = pneg %p201
      $region50: #{_lambda_.5} parent=39 // pred_check_branch
        %1986 = sbr.rel (%p1984) target = $region52
      $region51: #{_lambda_.5} parent=39 // pred_region
        %s1987 = smul.u32 32, %s21
      $region52: #{_lambda_.5} parent=39 // pred_fallthru
        _
      // Predicated region
      $region53: #{_lambda_.5} parent=39 // pred_check
        %p1988 = pneg %p227
      $region54: #{_lambda_.5} parent=39 // pred_check_branch
        %1990 = sbr.rel (%p1988) target = $region56
      $region55: #{_lambda_.5} parent=39 // pred_region
        %s1991 = smul.u32 32, %s21
      $region56: #{_lambda_.5} parent=39 // pred_fallthru
        _
      // Predicated region
      $region57: #{_lambda_.5} parent=39 // pred_check
        %p1992 = pneg %p253
      $region58: #{_lambda_.5} parent=39 // pred_check_branch
        %1994 = sbr.rel (%p1992) target = $region60
      $region59: #{_lambda_.5} parent=39 // pred_region
        %s1995 = smul.u32 32, %s21
      $region60: #{_lambda_.5} parent=39 // pred_fallthru
        _
    $region40: #{_lambda_.5} parent=5 // pred_fallthru
      _
    %p1996 = scmp.le.s32.totalorder 2, %s16
    // Predicated region
    $region61: #{_lambda_.5} parent=5 // pred_check
      %p1997 = pneg %p1996
    $region62: #{_lambda_.5} parent=5 // pred_check_branch
      %1999 = sbr.rel (%p1997) target = $region64
    $region63: #{_lambda_.5} parent=5 // pred_region
      %s2000 = ssub.s32 %s16, 2
      // Predicated region
      $region65: #{_lambda_.5} parent=63 // pred_check
        %p2001 = pneg %p155
      $region66: #{_lambda_.5} parent=63 // pred_check_branch
        %2003 = sbr.rel (%p2001) target = $region68
      $region67: #{_lambda_.5} parent=63 // pred_region
        %s2004 = smul.u32 32, %s22
        %p2005 = scmp.lt.s32.totalorder %s2004, 63
        %s2006 = scalar_select %p2005, %s2004, 63
        %s2007 = smul.addr %s2006, 8
        %s2008 = scalar_lea.vmem %s5, %s2007
      $region68: #{_lambda_.5} parent=63 // pred_fallthru
        _
      // Predicated region
      $region69: #{_lambda_.5} parent=63 // pred_check
        %p2009 = pneg %p181
      $region70: #{_lambda_.5} parent=63 // pred_check_branch
        %2011 = sbr.rel (%p2009) target = $region72
      $region71: #{_lambda_.5} parent=63 // pred_region
        %s2012 = smul.u32 32, %s22
        %p2013 = scmp.lt.s32.totalorder %s2012, 63
        %s2014 = scalar_select %p2013, %s2012, 63
        %s2015 = smul.addr %s2014, 8
        %s2016 = scalar_lea.vmem %s6, %s2015
      $region72: #{_lambda_.5} parent=63 // pred_fallthru
        _
      // Predicated region
      $region73: #{_lambda_.5} parent=63 // pred_check
        %p2017 = pneg %p207
      $region74: #{_lambda_.5} parent=63 // pred_check_branch
        %2019 = sbr.rel (%p2017) target = $region76
      $region75: #{_lambda_.5} parent=63 // pred_region
        %s2020 = smul.u32 32, %s22
        %p2021 = scmp.lt.s32.totalorder %s2020, 63
        %s2022 = scalar_select %p2021, %s2020, 63
        %s2023 = smul.addr %s2022, 8
        %s2024 = scalar_lea.vmem %s7, %s2023
      $region76: #{_lambda_.5} parent=63 // pred_fallthru
        _
      // Predicated region
      $region77: #{_lambda_.5} parent=63 // pred_check
        %p2025 = pneg %p233
      $region78: #{_lambda_.5} parent=63 // pred_check_branch
        %2027 = sbr.rel (%p2025) target = $region80
      $region79: #{_lambda_.5} parent=63 // pred_region
        %s2028 = smul.u32 32, %s22
        %p2029 = scmp.lt.s32.totalorder %s2028, 63
        %s2030 = scalar_select %p2029, %s2028, 63
        %s2031 = smul.addr %s2030, 8
        %s2032 = scalar_lea.vmem %s8, %s2031
      $region80: #{_lambda_.5} parent=63 // pred_fallthru
        _
      // Predicated region
      $region81: #{_lambda_.5} parent=63 // pred_check
        %p2033 = pneg %p259
      $region82: #{_lambda_.5} parent=63 // pred_check_branch
        %2035 = sbr.rel (%p2033) target = $region84
      $region83: #{_lambda_.5} parent=63 // pred_region
        %s2036 = smul.u32 32, %s22
        %p2037 = scmp.lt.s32.totalorder %s2036, 63
        %s2038 = scalar_select %p2037, %s2036, 63
        %s2039 = smul.addr %s2038, 8
        %s2040 = scalar_lea.vmem %s9, %s2039
      $region84: #{_lambda_.5} parent=63 // pred_fallthru
        _
    $region64: #{_lambda_.5} parent=5 // pred_fallthru
      _
  $region6: #{_lambda_.5} parent=0 // loop_footer
    %s20 = sadd.s32 1, %s16
  $region7: #{_lambda_.5} parent=0 // loop_footer_branch
    %15 = sbr.rel target = $region3
  $region8: #{_lambda_.5} parent=0 // loop_exit
    _

// kernel: _lambda_.8
$region0: #{_lambda_.8}
  #allocation0 [shape = 'u32[]', space=smem, size = 0x4, offset = 0x4, fixed_abs, tag = 'smem constant byte address 0x4 - core index']
  #allocation1 [shape = 'u32[144,128]{1,0:T(1,128)}', space=vmem, size = 0x12000, scoped, tag = 'internal scratch']
  #allocation2 [shape = 'f32[48,768]{1,0:T(8,128)}', space=vmem, size = 0x24000, scoped, tag = 'scratch operand']
  #allocation3 [shape = 'f32[48,768]{1,0:T(8,128)}', space=vmem, size = 0x24000, scoped, tag = 'scratch operand']
  %s0 = inlined_call_operand.vmem [shape: f32[2,16,256], index: 0, kind: input, shape index: {}]
  %s1 = inlined_call_operand.vmem [shape: f32[5,256], index: 1, kind: input, shape index: {}]
  %s2 = inlined_call_operand.vmem [shape: f32[1,256], index: 2, kind: input, shape index: {}]
  %s3 = inlined_call_operand.vmem [shape: f32[5,256], index: 3, kind: input, shape index: {}]
  %s4 = inlined_call_operand.vmem [shape: f32[1,256], index: 4, kind: input, shape index: {}]
  %s5 = inlined_call_operand.vmem [shape: f32[11,256], index: 5, kind: input, shape index: {}]
  %s6 = inlined_call_operand.vmem [shape: f32[1,256], index: 6, kind: input, shape index: {}]
  %s7 = inlined_call_operand.vmem [shape: f32[11,256], index: 7, kind: input, shape index: {}]
  %s8 = inlined_call_operand.vmem [shape: f32[1,256], index: 8, kind: input, shape index: {}]
  %s9 = inlined_call_operand.vmem [shape: f32[2,16,256], index: 9, kind: output, shape index: {}]
  %s10 = sld [smem:[#allocation0]]
  $region69: #{_lambda_.8} parent=0
    _
  %s12 = ssub.s32 1, %s10
  %s13 = scalar_select 0, %s12, %s10
  loop: start=0, step=1, limit=4
  $region2: #{_lambda_.8} parent=0 // loop_pre_header
    _
  $region3: #{_lambda_.8} parent=0 // loop_header
    %s15 = sphi 0, %s19
    %p16 = scmp.ge.s32.totalorder %s15, 4
    %s25 = sphi 0, %s27
    %s28 = sphi 0, %s25
    %s29 = sphi 0, %s28
    %s45 = sphi 0, %s29
    %s49 = sphi 0, %s49
    %s51 = sphi 0, %s49
    %s52 = sphi 0, %s51
    %s66 = sphi 0, %s52
    %s70 = sphi 0, %s70
    %s72 = sphi 0, %s70
    %s73 = sphi 0, %s72
    %s87 = sphi 0, %s73
    %s91 = sphi 0, %s91
    %s93 = sphi 0, %s91
    %s94 = sphi 0, %s93
    %s108 = sphi 0, %s94
    %s112 = sphi 0, %s112
    %s114 = sphi 0, %s112
    %s115 = sphi 0, %s114
    %s129 = sphi 0, %s115
    %s133 = sphi 0, %s133
    %s135 = sphi 0, %s133
    %s136 = sphi 0, %s135
    %s150 = sphi 0, %s136
    %s154 = sphi 0, %s154
    %s156 = sphi 0, %s154
    %s157 = sphi 0, %s156
    %s171 = sphi 0, %s157
    %s175 = sphi 0, %s175
    %s177 = sphi 0, %s175
    %s178 = sphi 0, %s177
    %s192 = sphi 0, %s178
    %s196 = sphi 0, %s196
    %s198 = sphi 0, %s196
    %s199 = sphi 0, %s198
    %s213 = sphi 0, %s199
    %s219 = sphi 0, %s221
    %s222 = sphi 0, %s219
    %s223 = sphi 0, %s222
    %s239 = sphi 0, %s223
  $region4: #{_lambda_.8} parent=0 // loop_header_branch
    %18 = sbr.rel (%p16) target = $region8
  $region5: #{_lambda_.8} parent=0 // loop_body
    %s20 = ssub.s32 %s15, 1
    %s21 = ssub.s32 %s15, 2
    %s22 = sadd.s32 %s15, 1
    %s23 = ssub.s32 %s15, %s22
    %p24 = scmp.eq.s32.totalorder %s23, 0
    %s26 = sadd.s32 %s25, 1
    %s27 = scalar_select %p24, %s25, %s26
    %p30 = pneg %p24
    %p31 = scmp.eq.s32.totalorder %s15, 1
    %p32 = por %p30, %p31
    %p33 = scmp.ne.s32.totalorder %s25, %s28
    %p34 = scmp.eq.s32.totalorder %s15, 0
    %p35 = por %p33, %p34
    %p36 = scmp.ne.s32.totalorder %s25, %s28
    %p37 = scmp.eq.s32.totalorder %s20, 1
    %p38 = por %p36, %p37
    %p39 = scmp.ne.s32.totalorder %s28, %s29
    %p40 = scmp.eq.s32.totalorder %s20, 0
    %p41 = por %p39, %p40
    %p42 = scmp.ne.s32.totalorder %s28, %s29
    %p43 = scmp.eq.s32.totalorder %s21, 1
    %p44 = por %p42, %p43
    %p46 = scmp.ne.s32.totalorder %s29, %s45
    %p47 = scmp.eq.s32.totalorder %s21, 0
    %p48 = por %p46, %p47
    %s50 = sadd.s32 %s49, 1
    %p53 = scmp.eq.s32.totalorder %s15, 1
    %p54 = scmp.ne.s32.totalorder %s49, %s51
    %p55 = scmp.eq.s32.totalorder %s15, 0
    %p56 = por %p54, %p55
    %p57 = scmp.ne.s32.totalorder %s49, %s51
    %p58 = scmp.eq.s32.totalorder %s20, 1
    %p59 = por %p57, %p58
    %p60 = scmp.ne.s32.totalorder %s51, %s52
    %p61 = scmp.eq.s32.totalorder %s20, 0
    %p62 = por %p60, %p61
    %p63 = scmp.ne.s32.totalorder %s51, %s52
    %p64 = scmp.eq.s32.totalorder %s21, 1
    %p65 = por %p63, %p64
    %p67 = scmp.ne.s32.totalorder %s52, %s66
    %p68 = scmp.eq.s32.totalorder %s21, 0
    %p69 = por %p67, %p68
    %s71 = sadd.s32 %s70, 1
    %p74 = scmp.eq.s32.totalorder %s15, 1
    %p75 = scmp.ne.s32.totalorder %s70, %s72
    %p76 = scmp.eq.s32.totalorder %s15, 0
    %p77 = por %p75, %p76
    %p78 = scmp.ne.s32.totalorder %s70, %s72
    %p79 = scmp.eq.s32.totalorder %s20, 1
    %p80 = por %p78, %p79
    %p81 = scmp.ne.s32.totalorder %s72, %s73
    %p82 = scmp.eq.s32.totalorder %s20, 0
    %p83 = por %p81, %p82
    %p84 = scmp.ne.s32.totalorder %s72, %s73
    %p85 = scmp.eq.s32.totalorder %s21, 1
    %p86 = por %p84, %p85
    %p88 = scmp.ne.s32.totalorder %s73, %s87
    %p89 = scmp.eq.s32.totalorder %s21, 0
    %p90 = por %p88, %p89
    %s92 = sadd.s32 %s91, 1
    %p95 = scmp.eq.s32.totalorder %s15, 1
    %p96 = scmp.ne.s32.totalorder %s91, %s93
    %p97 = scmp.eq.s32.totalorder %s15, 0
    %p98 = por %p96, %p97
    %p99 = scmp.ne.s32.totalorder %s91, %s93
    %p100 = scmp.eq.s32.totalorder %s20, 1
    %p101 = por %p99, %p100
    %p102 = scmp.ne.s32.totalorder %s93, %s94
    %p103 = scmp.eq.s32.totalorder %s20, 0
    %p104 = por %p102, %p103
    %p105 = scmp.ne.s32.totalorder %s93, %s94
    %p106 = scmp.eq.s32.totalorder %s21, 1
    %p107 = por %p105, %p106
    %p109 = scmp.ne.s32.totalorder %s94, %s108
    %p110 = scmp.eq.s32.totalorder %s21, 0
    %p111 = por %p109, %p110
    %s113 = sadd.s32 %s112, 1
    %p116 = scmp.eq.s32.totalorder %s15, 1
    %p117 = scmp.ne.s32.totalorder %s112, %s114
    %p118 = scmp.eq.s32.totalorder %s15, 0
    %p119 = por %p117, %p118
    %p120 = scmp.ne.s32.totalorder %s112, %s114
    %p121 = scmp.eq.s32.totalorder %s20, 1
    %p122 = por %p120, %p121
    %p123 = scmp.ne.s32.totalorder %s114, %s115
    %p124 = scmp.eq.s32.totalorder %s20, 0
    %p125 = por %p123, %p124
    %p126 = scmp.ne.s32.totalorder %s114, %s115
    %p127 = scmp.eq.s32.totalorder %s21, 1
    %p128 = por %p126, %p127
    %p130 = scmp.ne.s32.totalorder %s115, %s129
    %p131 = scmp.eq.s32.totalorder %s21, 0
    %p132 = por %p130, %p131
    %s134 = sadd.s32 %s133, 1
    %p137 = scmp.eq.s32.totalorder %s15, 1
    %p138 = scmp.ne.s32.totalorder %s133, %s135
    %p139 = scmp.eq.s32.totalorder %s15, 0
    %p140 = por %p138, %p139
    %p141 = scmp.ne.s32.totalorder %s133, %s135
    %p142 = scmp.eq.s32.totalorder %s20, 1
    %p143 = por %p141, %p142
    %p144 = scmp.ne.s32.totalorder %s135, %s136
    %p145 = scmp.eq.s32.totalorder %s20, 0
    %p146 = por %p144, %p145
    %p147 = scmp.ne.s32.totalorder %s135, %s136
    %p148 = scmp.eq.s32.totalorder %s21, 1
    %p149 = por %p147, %p148
    %p151 = scmp.ne.s32.totalorder %s136, %s150
    %p152 = scmp.eq.s32.totalorder %s21, 0
    %p153 = por %p151, %p152
    %s155 = sadd.s32 %s154, 1
    %p158 = scmp.eq.s32.totalorder %s15, 1
    %p159 = scmp.ne.s32.totalorder %s154, %s156
    %p160 = scmp.eq.s32.totalorder %s15, 0
    %p161 = por %p159, %p160
    %p162 = scmp.ne.s32.totalorder %s154, %s156
    %p163 = scmp.eq.s32.totalorder %s20, 1
    %p164 = por %p162, %p163
    %p165 = scmp.ne.s32.totalorder %s156, %s157
    %p166 = scmp.eq.s32.totalorder %s20, 0
    %p167 = por %p165, %p166
    %p168 = scmp.ne.s32.totalorder %s156, %s157
    %p169 = scmp.eq.s32.totalorder %s21, 1
    %p170 = por %p168, %p169
    %p172 = scmp.ne.s32.totalorder %s157, %s171
    %p173 = scmp.eq.s32.totalorder %s21, 0
    %p174 = por %p172, %p173
    %s176 = sadd.s32 %s175, 1
    %p179 = scmp.eq.s32.totalorder %s15, 1
    %p180 = scmp.ne.s32.totalorder %s175, %s177
    %p181 = scmp.eq.s32.totalorder %s15, 0
    %p182 = por %p180, %p181
    %p183 = scmp.ne.s32.totalorder %s175, %s177
    %p184 = scmp.eq.s32.totalorder %s20, 1
    %p185 = por %p183, %p184
    %p186 = scmp.ne.s32.totalorder %s177, %s178
    %p187 = scmp.eq.s32.totalorder %s20, 0
    %p188 = por %p186, %p187
    %p189 = scmp.ne.s32.totalorder %s177, %s178
    %p190 = scmp.eq.s32.totalorder %s21, 1
    %p191 = por %p189, %p190
    %p193 = scmp.ne.s32.totalorder %s178, %s192
    %p194 = scmp.eq.s32.totalorder %s21, 0
    %p195 = por %p193, %p194
    %s197 = sadd.s32 %s196, 1
    %p200 = scmp.eq.s32.totalorder %s15, 1
    %p201 = scmp.ne.s32.totalorder %s196, %s198
    %p202 = scmp.eq.s32.totalorder %s15, 0
    %p203 = por %p201, %p202
    %p204 = scmp.ne.s32.totalorder %s196, %s198
    %p205 = scmp.eq.s32.totalorder %s20, 1
    %p206 = por %p204, %p205
    %p207 = scmp.ne.s32.totalorder %s198, %s199
    %p208 = scmp.eq.s32.totalorder %s20, 0
    %p209 = por %p207, %p208
    %p210 = scmp.ne.s32.totalorder %s198, %s199
    %p211 = scmp.eq.s32.totalorder %s21, 1
    %p212 = por %p210, %p211
    %p214 = scmp.ne.s32.totalorder %s199, %s213
    %p215 = scmp.eq.s32.totalorder %s21, 0
    %p216 = por %p214, %p215
    %s217 = ssub.s32 %s15, %s22
    %p218 = scmp.eq.s32.totalorder %s217, 0
    %s220 = sadd.s32 %s219, 1
    %s221 = scalar_select %p218, %s219, %s220
    %p224 = pneg %p218
    %p225 = scmp.eq.s32.totalorder %s15, 1
    %p226 = por %p224, %p225
    %p227 = scmp.ne.s32.totalorder %s219, %s222
    %p228 = scmp.eq.s32.totalorder %s15, 0
    %p229 = por %p227, %p228
    %p230 = scmp.ne.s32.totalorder %s219, %s222
    %p231 = scmp.eq.s32.totalorder %s20, 1
    %p232 = por %p230, %p231
    %p233 = scmp.ne.s32.totalorder %s222, %s223
    %p234 = scmp.eq.s32.totalorder %s20, 0
    %p235 = por %p233, %p234
    %p236 = scmp.ne.s32.totalorder %s222, %s223
    %p237 = scmp.eq.s32.totalorder %s21, 1
    %p238 = por %p236, %p237
    %p240 = scmp.ne.s32.totalorder %s223, %s239
    %p241 = scmp.eq.s32.totalorder %s21, 0
    %p242 = por %p240, %p241
    %p243 = scmp.le.s32.totalorder 1, %s15
    %p244 = scmp.lt.s32.totalorder %s15, 3
    %p245 = pnand %p243, %p244
    %p246 = pneg %p245
    // Predicated region
    $region9: #{_lambda_.8} parent=5 // pred_check
      _
    $region10: #{_lambda_.8} parent=5 // pred_check_branch
      %248 = sbr.rel (%p245) target = $region12
    $region11: #{_lambda_.8} parent=5 // pred_region
      %s249 = ssub.s32 %s15, 1
      // Predicated region
      $region13: #{_lambda_.8} parent=11 // pred_check
        %p250 = pneg %p62
      $region14: #{_lambda_.8} parent=11 // pred_check_branch
        %252 = sbr.rel (%p250) target = $region16
      $region15: #{_lambda_.8} parent=11 // pred_region
        _
      $region16: #{_lambda_.8} parent=11 // pred_fallthru
        _
      // Predicated region
      $region17: #{_lambda_.8} parent=11 // pred_check
        %p253 = pneg %p83
      $region18: #{_lambda_.8} parent=11 // pred_check_branch
        %255 = sbr.rel (%p253) target = $region20
      $region19: #{_lambda_.8} parent=11 // pred_region
        _
      $region20: #{_lambda_.8} parent=11 // pred_fallthru
        _
      // Predicated region
      $region21: #{_lambda_.8} parent=11 // pred_check
        %p256 = pneg %p104
      $region22: #{_lambda_.8} parent=11 // pred_check_branch
        %258 = sbr.rel (%p256) target = $region24
      $region23: #{_lambda_.8} parent=11 // pred_region
        _
      $region24: #{_lambda_.8} parent=11 // pred_fallthru
        _
      // Predicated region
      $region25: #{_lambda_.8} parent=11 // pred_check
        %p259 = pneg %p125
      $region26: #{_lambda_.8} parent=11 // pred_check_branch
        %261 = sbr.rel (%p259) target = $region28
      $region27: #{_lambda_.8} parent=11 // pred_region
        _
      $region28: #{_lambda_.8} parent=11 // pred_fallthru
        _
      // Predicated region
      $region29: #{_lambda_.8} parent=11 // pred_check
        %p262 = pneg %p146
      $region30: #{_lambda_.8} parent=11 // pred_check_branch
        %264 = sbr.rel (%p262) target = $region32
      $region31: #{_lambda_.8} parent=11 // pred_region
        _
      $region32: #{_lambda_.8} parent=11 // pred_fallthru
        _
      // Predicated region
      $region33: #{_lambda_.8} parent=11 // pred_check
        %p265 = pneg %p167
      $region34: #{_lambda_.8} parent=11 // pred_check_branch
        %267 = sbr.rel (%p265) target = $region36
      $region35: #{_lambda_.8} parent=11 // pred_region
        _
      $region36: #{_lambda_.8} parent=11 // pred_fallthru
        _
      // Predicated region
      $region37: #{_lambda_.8} parent=11 // pred_check
        %p268 = pneg %p188
      $region38: #{_lambda_.8} parent=11 // pred_check_branch
        %270 = sbr.rel (%p268) target = $region40
      $region39: #{_lambda_.8} parent=11 // pred_region
        _
      $region40: #{_lambda_.8} parent=11 // pred_fallthru
        _
      // Predicated region
      $region41: #{_lambda_.8} parent=11 // pred_check
        %p271 = pneg %p209
      $region42: #{_lambda_.8} parent=11 // pred_check_branch
        %273 = sbr.rel (%p271) target = $region44
      $region43: #{_lambda_.8} parent=11 // pred_region
        _
      $region44: #{_lambda_.8} parent=11 // pred_fallthru
        _
    $region12: #{_lambda_.8} parent=5 // pred_fallthru
      _
    %p274 = scmp.lt.s32.totalorder %s15, 2
    // Predicated region
    $region45: #{_lambda_.8} parent=5 // pred_check
      %p275 = pneg %p274
    $region46: #{_lambda_.8} parent=5 // pred_check_branch
      %277 = sbr.rel (%p275) target = $region48
    $region47: #{_lambda_.8} parent=5 // pred_region
      // Predicated region
      $region49: #{_lambda_.8} parent=47 // pred_check
        %p278 = pneg %p35
      $region50: #{_lambda_.8} parent=47 // pred_check_branch
        %280 = sbr.rel (%p278) target = $region52
      $region51: #{_lambda_.8} parent=47 // pred_region
        %p281 = scmp.lt.s32.totalorder %s15, 1
        %s282 = scalar_select %p281, %s15, 1
        %s283 = smul.addr %s282, 4
        %s284 = smul.addr %s283, 8
        %s285 = scalar_lea.vmem %s0, %s284
      $region52: #{_lambda_.8} parent=47 // pred_fallthru
        _
    $region48: #{_lambda_.8} parent=5 // pred_fallthru
      _
    %p286 = scmp.le.s32.totalorder 1, %s15
    %p287 = scmp.lt.s32.totalorder %s15, 3
    %p288 = pnand %p286, %p287
    %p289 = pneg %p288
    // Predicated region
    $region53: #{_lambda_.8} parent=5 // pred_check
      _
    $region54: #{_lambda_.8} parent=5 // pred_check_branch
      %291 = sbr.rel (%p288) target = $region56
    $region55: #{_lambda_.8} parent=5 // pred_region
      %s292 = ssub.s32 %s15, 1
      %p293 = scmp.lt.s32.totalorder %s20, 1
      %s294 = scalar_select %p293, %s20, 1
      %s295 = smul.addr %s294, 4
      %s296 = smul.addr %s295, 8
      %s297 = scalar_lea.vmem %s0, %s296
      %p298 = pneg %p41
      %p299 = pneg %p38
      %p300 = pneg %p62
      %p301 = pneg %p59
      %p302 = pneg %p83
      %p303 = pneg %p80
      %p304 = pneg %p104
      %p305 = pneg %p101
      %p306 = pneg %p125
      %p307 = pneg %p122
      %p308 = pneg %p146
      %p309 = pneg %p143
      %p310 = pneg %p167
      %p311 = pneg %p164
      %p312 = pneg %p188
      %p313 = pneg %p185
      %p314 = pneg %p209
      %p315 = pneg %p206
      %p316 = pneg %p235
      %p317 = pneg %p232
      %p318 = scmp.lt.s32.totalorder %s20, 1
      %s319 = scalar_select %p318, %s20, 1
      %s320 = smul.addr %s319, 4
      %s321 = smul.addr %s320, 8
      %s322 = scalar_lea.vmem %s9, %s321
      %p323 = scmp.lt.s32.totalorder %s20, 1
      %s324 = scalar_select %p323, %s20, 1
      %s325 = smul.addr %s324, 4
      %s326 = smul.addr %s325, 8
      %s327 = scalar_lea.vmem %s0, %s326
      %p328 = scmp.lt.s32.totalorder %s20, 1
      %s329 = scalar_select %p328, %s20, 1
      %s330 = smul.addr %s329, 4
      %s331 = smul.addr %s330, 8
      %s332 = scalar_lea.vmem %s9, %s331
      %333 = vst [vmem:[#allocation2] sm:$0xff] 0.0
      %334 = vst [vmem:[#allocation2 + $0x8] sm:$0xff] 0.0
      %335 = vst [vmem:[#allocation2 + $0x10] sm:$0xff] 0.0
      %336 = vst [vmem:[#allocation2 + $0x18] sm:$0xff] 0.0
      %337 = vst [vmem:[#allocation2 + $0x20] sm:$0xff] 0.0
      %338 = vst [vmem:[#allocation2 + $0x28] sm:$0xff] 0.0
      %339 = vst [vmem:[#allocation2 + $0x30] sm:$0xff] 0.0
      %340 = vst [vmem:[#allocation2 + $0x38] sm:$0xff] 0.0
      %341 = vst [vmem:[#allocation2 + $0x40] sm:$0xff] 0.0
      %342 = vst [vmem:[#allocation2 + $0x48] sm:$0xff] 0.0
      %343 = vst [vmem:[#allocation2 + $0x50] sm:$0xff] 0.0
      %344 = vst [vmem:[#allocation2 + $0x58] sm:$0xff] 0.0
      %345 = vst [vmem:[#allocation2 + $0xc0] sm:$0xff] 0.0
      %346 = vst [vmem:[#allocation2 + $0xc8] sm:$0xff] 0.0
      %347 = vst [vmem:[#allocation2 + $0xd0] sm:$0xff] 0.0
      %348 = vst [vmem:[#allocation2 + $0xd8] sm:$0xff] 0.0
      %349 = vst [vmem:[#allocation2 + $0xe0] sm:$0xff] 0.0
      %350 = vst [vmem:[#allocation2 + $0xe8] sm:$0xff] 0.0
      %351 = vst [vmem:[#allocation2 + $0xf0] sm:$0xff] 0.0
      %352 = vst [vmem:[#allocation2 + $0xf8] sm:$0xff] 0.0
      %353 = vst [vmem:[#allocation2 + $0x100] sm:$0xff] 0.0
      %354 = vst [vmem:[#allocation2 + $0x108] sm:$0xff] 0.0
      %355 = vst [vmem:[#allocation2 + $0x110] sm:$0xff] 0.0
      %356 = vst [vmem:[#allocation2 + $0x118] sm:$0xff] 0.0
      %357 = vst [vmem:[#allocation2 + $0x60] sm:$0xff] 0.0
      %358 = vst [vmem:[#allocation2 + $0x68] sm:$0xff] 0.0
      %359 = vst [vmem:[#allocation2 + $0x90] sm:$0xff] 0.0
      %360 = vst [vmem:[#allocation2 + $0x98] sm:$0xff] 0.0
      %361 = vst [vmem:[#allocation2 + $0x80] sm:$0xff] 0.0
      %362 = vst [vmem:[#allocation2 + $0x88] sm:$0xff] 0.0
      %363 = vst [vmem:[#allocation2 + $0xb0] sm:$0xff] 0.0
      %364 = vst [vmem:[#allocation2 + $0xb8] sm:$0xff] 0.0
      %365 = vst [vmem:[#allocation3] sm:$0xff] 0.0
      %366 = vst [vmem:[#allocation3 + $0x8] sm:$0xff] 0.0
      %367 = vst [vmem:[#allocation3 + $0x10] sm:$0xff] 0.0
      %368 = vst [vmem:[#allocation3 + $0x18] sm:$0xff] 0.0
      %369 = vst [vmem:[#allocation3 + $0x20] sm:$0xff] 0.0
      %370 = vst [vmem:[#allocation3 + $0x28] sm:$0xff] 0.0
      %371 = vst [vmem:[#allocation3 + $0x30] sm:$0xff] 0.0
      %372 = vst [vmem:[#allocation3 + $0x38] sm:$0xff] 0.0
      %373 = vst [vmem:[#allocation3 + $0x40] sm:$0xff] 0.0
      %374 = vst [vmem:[#allocation3 + $0x48] sm:$0xff] 0.0
      %375 = vst [vmem:[#allocation3 + $0x50] sm:$0xff] 0.0
      %376 = vst [vmem:[#allocation3 + $0x58] sm:$0xff] 0.0
      %377 = vst [vmem:[#allocation3 + $0xc0] sm:$0xff] 0.0
      %378 = vst [vmem:[#allocation3 + $0xc8] sm:$0xff] 0.0
      %379 = vst [vmem:[#allocation3 + $0xd0] sm:$0xff] 0.0
      %380 = vst [vmem:[#allocation3 + $0xd8] sm:$0xff] 0.0
      %381 = vst [vmem:[#allocation3 + $0xe0] sm:$0xff] 0.0
      %382 = vst [vmem:[#allocation3 + $0xe8] sm:$0xff] 0.0
      %383 = vst [vmem:[#allocation3 + $0xf0] sm:$0xff] 0.0
      %384 = vst [vmem:[#allocation3 + $0xf8] sm:$0xff] 0.0
      %385 = vst [vmem:[#allocation3 + $0x100] sm:$0xff] 0.0
      %386 = vst [vmem:[#allocation3 + $0x108] sm:$0xff] 0.0
      %387 = vst [vmem:[#allocation3 + $0x110] sm:$0xff] 0.0
      %388 = vst [vmem:[#allocation3 + $0x118] sm:$0xff] 0.0
      %389 = vst [vmem:[#allocation3 + $0x60] sm:$0xff] 0.0
      %390 = vst [vmem:[#allocation3 + $0x68] sm:$0xff] 0.0
      %391 = vst [vmem:[#allocation3 + $0x90] sm:$0xff] 0.0
      %392 = vst [vmem:[#allocation3 + $0x98] sm:$0xff] 0.0
      %393 = vst [vmem:[#allocation3 + $0x80] sm:$0xff] 0.0
      %394 = vst [vmem:[#allocation3 + $0x88] sm:$0xff] 0.0
      %395 = vst [vmem:[#allocation3 + $0xb0] sm:$0xff] 0.0
      %396 = vst [vmem:[#allocation3 + $0xb8] sm:$0xff] 0.0
      %v397 = vld [vmem:[%s327] sm:$0xff]
      %v398 = vld [vmem:[%s327 + $0x8] sm:$0xff]
      %v399 = vld [vmem:[%s327 + $0x10] sm:$0xff]
      %v400 = vld [vmem:[%s327 + $0x18] sm:$0xff]
      %401 = vst [vmem:[#allocation2 + $0x70] sm:$0xff] %v397
      %402 = vst [vmem:[#allocation2 + $0x78] sm:$0xff] %v398
      %403 = vst [vmem:[#allocation2 + $0xa0] sm:$0xff] %v399
      %404 = vst [vmem:[#allocation2 + $0xa8] sm:$0xff] %v400
      %v405 = vld [vmem:[%s1] sm:$0x1f]
      %v406 = vld [vmem:[%s1 + $0x8] sm:$0x1f]
      %v407 = vld [vmem:[#allocation2 + $0x68] sm:$0xff]
      %v408 = vld [vmem:[#allocation2 + $0x70] sm:$0xff]
      %v409 = vld [vmem:[#allocation2 + $0x78] sm:$0xff]
      %v410 = vld [vmem:[#allocation2 + $0x98] sm:$0xff]
      %v411 = vld [vmem:[#allocation2 + $0xa0] sm:$0xff]
      %v412 = vld [vmem:[#allocation2 + $0xa8] sm:$0xff]
      %v413 = vlaneseq
      %v414 = vshrl.u32 %v413, 7
      %v415 = vsub.s32 0, %v414
      %v416 = vrot.slane %v405, %v415
      %v417 = vlaneseq
      %v418 = vshrl.u32 %v417, 7
      %v419 = vsub.s32 0, %v418
      %v420 = vrot.slane %v406, %v419
      %423 = vrot.lane.b32.xlu0 %v416, 96
      %v424 = vpop.permute.xlu0 %423
      %425 = vrot.lane.b32.xlu0 %v420, 96
      %v426 = vpop.permute.xlu0 %425
      %vm427 = vcmask 785408
      %v428 = vsel %vm427, %v424, %v426
      %v432 = vmul.f32 %v407, %v424
      %v433 = vmul.f32 %v408, %v428
      %v434 = vmul.f32 %v409, %v426
      %v435 = vmul.f32 %v410, %v424
      %v436 = vmul.f32 %v411, %v428
      %v437 = vmul.f32 %v412, %v426
      %v438 = vadd.f32 %v432, 0.0
      %v439 = vadd.f32 %v433, 0.0
      %v440 = vadd.f32 %v434, 0.0
      %v441 = vadd.f32 %v435, 0.0
      %v442 = vadd.f32 %v436, 0.0
      %v443 = vadd.f32 %v437, 0.0
      %v444 = vlaneseq
      %v445 = vshrl.u32 %v444, 7
      %v446 = vsub.s32 1, %v445
      %v447 = vrot.slane %v405, %v446
      %v448 = vlaneseq
      %v449 = vshrl.u32 %v448, 7
      %v450 = vsub.s32 1, %v449
      %v451 = vrot.slane %v406, %v450
      %454 = vrot.lane.b32.xlu0 %v447, 112
      %v455 = vpop.permute.xlu0 %454
      %456 = vrot.lane.b32.xlu0 %v451, 112
      %v457 = vpop.permute.xlu0 %456
      %vm458 = vcmask 916480
      %v459 = vsel %vm458, %v455, %v457
      %v463 = vmul.f32 %v407, %v455
      %v464 = vmul.f32 %v408, %v459
      %v465 = vmul.f32 %v409, %v457
      %v466 = vmul.f32 %v410, %v455
      %v467 = vmul.f32 %v411, %v459
      %v468 = vmul.f32 %v412, %v457
      %475 = vrot.lane.b32.xlu0 %v463, 112
      %v476 = vpop.permute.xlu0 %475
      %477 = vrot.lane.b32.xlu0 %v464, 112
      %v478 = vpop.permute.xlu0 %477
      %479 = vrot.lane.b32.xlu0 %v465, 112
      %v480 = vpop.permute.xlu0 %479
      %481 = vrot.lane.b32.xlu0 %v466, 112
      %v482 = vpop.permute.xlu0 %481
      %483 = vrot.lane.b32.xlu0 %v467, 112
      %v484 = vpop.permute.xlu0 %483
      %485 = vrot.lane.b32.xlu0 %v468, 112
      %v486 = vpop.permute.xlu0 %485
      %v487 = vsel %vm458, %v476, %v478
      %v488 = vsel %vm458, %v478, %v480
      %v489 = vsel %vm458, %v482, %v484
      %v490 = vsel %vm458, %v484, %v486
      %v497 = vadd.f32 %v438, %v487
      %v498 = vadd.f32 %v439, %v488
      %v499 = vadd.f32 %v440, %v480
      %v500 = vadd.f32 %v441, %v489
      %v501 = vadd.f32 %v442, %v490
      %v502 = vadd.f32 %v443, %v486
      %v503 = vlaneseq
      %v504 = vshrl.u32 %v503, 7
      %v505 = vsub.s32 2, %v504
      %v506 = vrot.slane %v405, %v505
      %v507 = vlaneseq
      %v508 = vshrl.u32 %v507, 7
      %v509 = vsub.s32 2, %v508
      %v510 = vrot.slane %v406, %v509
      %v511 = vmul.f32 %v408, %v506
      %v512 = vmul.f32 %v409, %v510
      %v513 = vmul.f32 %v411, %v506
      %v514 = vmul.f32 %v412, %v510
      %519 = vrot.lane.b32.xlu0 %v511, 96
      %v520 = vpop.permute.xlu0 %519
      %521 = vrot.lane.b32.xlu0 %v512, 96
      %v522 = vpop.permute.xlu0 %521
      %523 = vrot.lane.b32.xlu0 %v513, 96
      %v524 = vpop.permute.xlu0 %523
      %525 = vrot.lane.b32.xlu0 %v514, 96
      %v526 = vpop.permute.xlu0 %525
      %v527 = vsel %vm427, %v520, %v522
      %v528 = vsel %vm427, %v524, %v526
      %v535 = vadd.f32 %v497, %v520
      %v536 = vadd.f32 %v498, %v527
      %v537 = vadd.f32 %v499, %v522
      %v538 = vadd.f32 %v500, %v524
      %v539 = vadd.f32 %v501, %v528
      %v540 = vadd.f32 %v502, %v526
      %v541 = vld [vmem:[#allocation2 + $0x80] sm:$0xff]
      %v542 = vld [vmem:[#allocation2 + $0xb0] sm:$0xff]
      %v543 = vlaneseq
      %v544 = vshrl.u32 %v543, 7
      %v545 = vsub.s32 3, %v544
      %v546 = vrot.slane %v405, %v545
      %v547 = vlaneseq
      %v548 = vshrl.u32 %v547, 7
      %v549 = vsub.s32 3, %v548
      %v550 = vrot.slane %v406, %v549
      %553 = vrot.lane.b32.xlu0 %v546, 16
      %v554 = vpop.permute.xlu0 %553
      %555 = vrot.lane.b32.xlu0 %v550, 16
      %v556 = vpop.permute.xlu0 %555
      %vm557 = vcmask 130048
      %v558 = vsel %vm557, %v554, %v556
      %v562 = vmul.f32 %v408, %v554
      %v563 = vmul.f32 %v409, %v558
      %v564 = vmul.f32 %v541, %v556
      %v565 = vmul.f32 %v411, %v554
      %v566 = vmul.f32 %v412, %v558
      %v567 = vmul.f32 %v542, %v556
      %574 = vrot.lane.b32.xlu0 %v562, 80
      %v575 = vpop.permute.xlu0 %574
      %576 = vrot.lane.b32.xlu0 %v563, 80
      %v577 = vpop.permute.xlu0 %576
      %578 = vrot.lane.b32.xlu0 %v564, 80
      %v579 = vpop.permute.xlu0 %578
      %580 = vrot.lane.b32.xlu0 %v565, 80
      %v581 = vpop.permute.xlu0 %580
      %582 = vrot.lane.b32.xlu0 %v566, 80
      %v583 = vpop.permute.xlu0 %582
      %584 = vrot.lane.b32.xlu0 %v567, 80
      %v585 = vpop.permute.xlu0 %584
      %vm586 = vcmask 654336
      %v587 = vsel %vm586, %v575, %v577
      %v588 = vsel %vm586, %v577, %v579
      %v589 = vsel %vm586, %v581, %v583
      %v590 = vsel %vm586, %v583, %v585
      %v597 = vadd.f32 %v535, %v575
      %v598 = vadd.f32 %v536, %v587
      %v599 = vadd.f32 %v537, %v588
      %v600 = vadd.f32 %v538, %v581
      %v601 = vadd.f32 %v539, %v589
      %v602 = vadd.f32 %v540, %v590
      %v603 = vlaneseq
      %v604 = vshrl.u32 %v603, 7
      %v605 = vsub.s32 4, %v604
      %v606 = vrot.slane %v405, %v605
      %v607 = vlaneseq
      %v608 = vshrl.u32 %v607, 7
      %v609 = vsub.s32 4, %v608
      %v610 = vrot.slane %v406, %v609
      %613 = vrot.lane.b32.xlu0 %v606, 32
      %v614 = vpop.permute.xlu0 %613
      %615 = vrot.lane.b32.xlu0 %v610, 32
      %v616 = vpop.permute.xlu0 %615
      %vm617 = vcmask 261120
      %v618 = vsel %vm617, %v614, %v616
      %v622 = vmul.f32 %v408, %v614
      %v623 = vmul.f32 %v409, %v618
      %v624 = vmul.f32 %v541, %v616
      %v625 = vmul.f32 %v411, %v614
      %v626 = vmul.f32 %v412, %v618
      %v627 = vmul.f32 %v542, %v616
      %634 = vrot.lane.b32.xlu0 %v622, 64
      %v635 = vpop.permute.xlu0 %634
      %636 = vrot.lane.b32.xlu0 %v623, 64
      %v637 = vpop.permute.xlu0 %636
      %638 = vrot.lane.b32.xlu0 %v624, 64
      %v639 = vpop.permute.xlu0 %638
      %640 = vrot.lane.b32.xlu0 %v625, 64
      %v641 = vpop.permute.xlu0 %640
      %642 = vrot.lane.b32.xlu0 %v626, 64
      %v643 = vpop.permute.xlu0 %642
      %644 = vrot.lane.b32.xlu0 %v627, 64
      %v645 = vpop.permute.xlu0 %644
      %vm646 = vcmask 523264
      %v647 = vsel %vm646, %v635, %v637
      %v648 = vsel %vm646, %v637, %v639
      %v649 = vsel %vm646, %v641, %v643
      %v650 = vsel %vm646, %v643, %v645
      %v657 = vadd.f32 %v597, %v635
      %v658 = vadd.f32 %v598, %v647
      %v659 = vadd.f32 %v599, %v648
      %v660 = vadd.f32 %v600, %v641
      %v661 = vadd.f32 %v601, %v649
      %v662 = vadd.f32 %v602, %v650
      %v663 = vld [vmem:[%s2] sm:$0x3]
      %v665 = vlaneseq
      %v666 = vshrl.u32 %v665, 7
      %v667 = vsub.s32 0, %v666
      %v668 = vrot.slane %v663, %v667
      %v669 = vlaneseq
      %v670 = vshrl.u32 %v669, 7
      %v671 = vsub.s32 1, %v670
      %v672 = vrot.slane %v663, %v671
      %673 = vrot.lane.b32.xlu0 %v668, 96
      %v674 = vpop.permute.xlu0 %673
      %675 = vrot.lane.b32.xlu0 %v672, 96
      %v676 = vpop.permute.xlu0 %675
      %v677 = vsel %vm427, %v674, %v676
      %v681 = vadd.f32 %v657, %v674
      %v682 = vadd.f32 %v658, %v677
      %v683 = vadd.f32 %v659, %v676
      %v684 = vadd.f32 %v660, %v674
      %v685 = vadd.f32 %v661, %v677
      %v686 = vadd.f32 %v662, %v676
      %693 = vrot.lane.b32.xlu0 %v681, 32
      %v694 = vpop.permute.xlu0 %693
      %695 = vrot.lane.b32.xlu0 %v682, 32
      %v696 = vpop.permute.xlu0 %695
      %697 = vrot.lane.b32.xlu0 %v683, 32
      %v698 = vpop.permute.xlu0 %697
      %699 = vrot.lane.b32.xlu0 %v684, 32
      %v700 = vpop.permute.xlu0 %699
      %701 = vrot.lane.b32.xlu0 %v685, 32
      %v702 = vpop.permute.xlu0 %701
      %703 = vrot.lane.b32.xlu0 %v686, 32
      %v704 = vpop.permute.xlu0 %703
      %v705 = vsel %vm617, %v694, %v696
      %v706 = vsel %vm617, %v696, %v698
      %v707 = vsel %vm617, %v700, %v702
      %v708 = vsel %vm617, %v702, %v704
      %713 = vst [vmem:[#allocation3 + $0x70] sm:$0xff] %v705
      %714 = vst [vmem:[#allocation3 + $0x78] sm:$0xff] %v706
      %715 = vst [vmem:[#allocation3 + $0xa0] sm:$0xff] %v707
      %716 = vst [vmem:[#allocation3 + $0xa8] sm:$0xff] %v708
      %v717 = vld [vmem:[%s3] sm:$0x1f]
      %v718 = vld [vmem:[%s3 + $0x8] sm:$0x1f]
      %v719 = vld [vmem:[#allocation3 + $0x40] sm:$0xc0]
      %v720 = vld [vmem:[#allocation3 + $0x48] sm:$0xc0]
      %v721 = vld [vmem:[#allocation3 + $0x70] sm:$0xff]
      %v722 = vld [vmem:[#allocation3 + $0x78] sm:$0xff]
      %v723 = vld [vmem:[#allocation3 + $0xa0] sm:$0x3f]
      %v724 = vld [vmem:[#allocation3 + $0xa8] sm:$0x3f]
      %v725 = vlaneseq
      %v726 = vshrl.u32 %v725, 7
      %v727 = vsub.s32 0, %v726
      %v728 = vrot.slane %v717, %v727
      %v729 = vlaneseq
      %v730 = vshrl.u32 %v729, 7
      %v731 = vsub.s32 0, %v730
      %v732 = vrot.slane %v718, %v731
      %v733 = vmul.f32 %v719, %v728
      %v734 = vmul.f32 %v720, %v732
      %v735 = vmul.f32 %v721, %v728
      %v736 = vmul.f32 %v722, %v732
      %v737 = vmul.f32 %v723, %v728
      %v738 = vmul.f32 %v724, %v732
      %v739 = vadd.f32 %v733, 0.0
      %v740 = vadd.f32 %v734, 0.0
      %v741 = vadd.f32 %v735, 0.0
      %v742 = vadd.f32 %v736, 0.0
      %v743 = vadd.f32 %v737, 0.0
      %v744 = vadd.f32 %v738, 0.0
      %v745 = vld [vmem:[#allocation3 + $0x40] sm:$0x80]
      %v746 = vld [vmem:[#allocation3 + $0x48] sm:$0x80]
      %v747 = vld [vmem:[#allocation3 + $0xa0] sm:$0x7f]
      %v748 = vld [vmem:[#allocation3 + $0xa8] sm:$0x7f]
      %v749 = vlaneseq
      %v750 = vshrl.u32 %v749, 7
      %v751 = vsub.s32 1, %v750
      %v752 = vrot.slane %v717, %v751
      %v753 = vlaneseq
      %v754 = vshrl.u32 %v753, 7
      %v755 = vsub.s32 1, %v754
      %v756 = vrot.slane %v718, %v755
      %v757 = vmul.f32 %v745, %v752
      %v758 = vmul.f32 %v746, %v756
      %v759 = vmul.f32 %v721, %v752
      %v760 = vmul.f32 %v722, %v756
      %v761 = vmul.f32 %v747, %v752
      %v762 = vmul.f32 %v748, %v756
      %vm769 = vcmask 1046528
      %v770 = vrot.slane %v757, 1
      %v771 = vrot.slane %v759, 1
      %v772 = vsel %vm769, %v770, %v771
      %v773 = vrot.slane %v758, 1
      %v774 = vrot.slane %v760, 1
      %v775 = vsel %vm769, %v773, %v774
      %v776 = vrot.slane %v761, 1
      %v777 = vsel %vm769, %v771, %v776
      %v778 = vrot.slane %v762, 1
      %v779 = vsel %vm769, %v774, %v778
      %v786 = vadd.f32 %v739, %v772
      %v787 = vadd.f32 %v740, %v775
      %v788 = vadd.f32 %v741, %v777
      %v789 = vadd.f32 %v742, %v779
      %v790 = vadd.f32 %v743, %v776
      %v791 = vadd.f32 %v744, %v778
      %v792 = vld [vmem:[#allocation3 + $0xa0] sm:$0xff]
      %v793 = vld [vmem:[#allocation3 + $0xa8] sm:$0xff]
      %v794 = vlaneseq
      %v795 = vshrl.u32 %v794, 7
      %v796 = vsub.s32 2, %v795
      %v797 = vrot.slane %v717, %v796
      %v798 = vlaneseq
      %v799 = vshrl.u32 %v798, 7
      %v800 = vsub.s32 2, %v799
      %v801 = vrot.slane %v718, %v800
      %v802 = vmul.f32 %v721, %v797
      %v803 = vmul.f32 %v722, %v801
      %v804 = vmul.f32 %v792, %v797
      %v805 = vmul.f32 %v793, %v801
      %vm810 = vcmask 1045504
      %v811 = vrot.slane %v802, 2
      %v812 = vrot.slane %v803, 2
      %v813 = vrot.slane %v804, 2
      %v814 = vsel %vm810, %v811, %v813
      %v815 = vrot.slane %v805, 2
      %v816 = vsel %vm810, %v812, %v815
      %v823 = vadd.f32 %v786, %v811
      %v824 = vadd.f32 %v787, %v812
      %v825 = vadd.f32 %v788, %v814
      %v826 = vadd.f32 %v789, %v816
      %v827 = vadd.f32 %v790, %v813
      %v828 = vadd.f32 %v791, %v815
      %v829 = vld [vmem:[#allocation3 + $0x70] sm:$0xfe]
      %v830 = vld [vmem:[#allocation3 + $0x78] sm:$0xfe]
      %v831 = vld [vmem:[#allocation3 + $0xd0] sm:$0x1]
      %v832 = vld [vmem:[#allocation3 + $0xd8] sm:$0x1]
      %v833 = vlaneseq
      %v834 = vshrl.u32 %v833, 7
      %v835 = vsub.s32 3, %v834
      %v836 = vrot.slane %v717, %v835
      %v837 = vlaneseq
      %v838 = vshrl.u32 %v837, 7
      %v839 = vsub.s32 3, %v838
      %v840 = vrot.slane %v718, %v839
      %v841 = vmul.f32 %v829, %v836
      %v842 = vmul.f32 %v830, %v840
      %v843 = vmul.f32 %v792, %v836
      %v844 = vmul.f32 %v793, %v840
      %v845 = vmul.f32 %v831, %v836
      %v846 = vmul.f32 %v832, %v840
      %vm853 = vcmask 1044480
      %v854 = vrot.slane %v841, 3
      %v855 = vrot.slane %v842, 3
      %v856 = vrot.slane %v843, 3
      %v857 = vsel %vm853, %v854, %v856
      %v858 = vrot.slane %v844, 3
      %v859 = vsel %vm853, %v855, %v858
      %v860 = vrot.slane %v845, 3
      %v861 = vsel %vm853, %v856, %v860
      %v862 = vrot.slane %v846, 3
      %v863 = vsel %vm853, %v858, %v862
      %v870 = vadd.f32 %v823, %v854
      %v871 = vadd.f32 %v824, %v855
      %v872 = vadd.f32 %v825, %v857
      %v873 = vadd.f32 %v826, %v859
      %v874 = vadd.f32 %v827, %v861
      %v875 = vadd.f32 %v828, %v863
      %v876 = vld [vmem:[#allocation3 + $0x70] sm:$0xfc]
      %v877 = vld [vmem:[#allocation3 + $0x78] sm:$0xfc]
      %v878 = vld [vmem:[#allocation3 + $0xd0] sm:$0x3]
      %v879 = vld [vmem:[#allocation3 + $0xd8] sm:$0x3]
      %v880 = vlaneseq
      %v881 = vshrl.u32 %v880, 7
      %v882 = vsub.s32 4, %v881
      %v883 = vrot.slane %v717, %v882
      %v884 = vlaneseq
      %v885 = vshrl.u32 %v884, 7
      %v886 = vsub.s32 4, %v885
      %v887 = vrot.slane %v718, %v886
      %v888 = vmul.f32 %v876, %v883
      %v889 = vmul.f32 %v877, %v887
      %v890 = vmul.f32 %v792, %v883
      %v891 = vmul.f32 %v793, %v887
      %v892 = vmul.f32 %v878, %v883
      %v893 = vmul.f32 %v879, %v887
      %vm900 = vcmask 1043456
      %v901 = vrot.slane %v888, 4
      %v902 = vrot.slane %v889, 4
      %v903 = vrot.slane %v890, 4
      %v904 = vsel %vm900, %v901, %v903
      %v905 = vrot.slane %v891, 4
      %v906 = vsel %vm900, %v902, %v905
      %v907 = vrot.slane %v892, 4
      %v908 = vsel %vm900, %v903, %v907
      %v909 = vrot.slane %v893, 4
      %v910 = vsel %vm900, %v905, %v909
      %v917 = vadd.f32 %v870, %v901
      %v918 = vadd.f32 %v871, %v902
      %v919 = vadd.f32 %v872, %v904
      %v920 = vadd.f32 %v873, %v906
      %v921 = vadd.f32 %v874, %v908
      %v922 = vadd.f32 %v875, %v910
      %v923 = vld [vmem:[%s4] sm:$0x3]
      %v925 = vlaneseq
      %v926 = vshrl.u32 %v925, 7
      %v927 = vsub.s32 0, %v926
      %v928 = vrot.slane %v923, %v927
      %v929 = vlaneseq
      %v930 = vshrl.u32 %v929, 7
      %v931 = vsub.s32 1, %v930
      %v932 = vrot.slane %v923, %v931
      %v935 = vadd.f32 %v917, %v928
      %v936 = vadd.f32 %v918, %v932
      %v937 = vadd.f32 %v919, %v928
      %v938 = vadd.f32 %v920, %v932
      %v939 = vadd.f32 %v921, %v928
      %v940 = vadd.f32 %v922, %v932
      %vm947 = vcmask 1041408
      %v948 = vrot.slane %v935, 6
      %v949 = vrot.slane %v937, 6
      %v950 = vsel %vm947, %v948, %v949
      %v951 = vrot.slane %v936, 6
      %v952 = vrot.slane %v938, 6
      %v953 = vsel %vm947, %v951, %v952
      %v954 = vrot.slane %v939, 6
      %v955 = vsel %vm947, %v949, %v954
      %v956 = vrot.slane %v940, 6
      %v957 = vsel %vm947, %v952, %v956
      %962 = vst [vmem:[#allocation2 + $0x70] sm:$0xff] %v950
      %963 = vst [vmem:[#allocation2 + $0x78] sm:$0xff] %v953
      %964 = vst [vmem:[#allocation2 + $0xa0] sm:$0xff] %v955
      %965 = vst [vmem:[#allocation2 + $0xa8] sm:$0xff] %v957
      %v966 = vld [vmem:[%s5] sm:$0xff]
      %v967 = vld [vmem:[%s5 + $0x8] sm:$0xff]
      %v968 = vld [vmem:[%s5 + $0x10] sm:$0x7]
      %v969 = vld [vmem:[%s5 + $0x18] sm:$0x7]
      %v970 = vld [vmem:[#allocation2 + $0x60] sm:$0xff]
      %v971 = vld [vmem:[#allocation2 + $0x68] sm:$0xff]
      %v972 = vld [vmem:[#allocation2 + $0x70] sm:$0xff]
      %v973 = vld [vmem:[#allocation2 + $0x90] sm:$0xff]
      %v974 = vld [vmem:[#allocation2 + $0x98] sm:$0xff]
      %v975 = vld [vmem:[#allocation2 + $0xa0] sm:$0xff]
      %v976 = vlaneseq
      %v977 = vshrl.u32 %v976, 7
      %v978 = vsub.s32 0, %v977
      %v979 = vrot.slane %v966, %v978
      %v980 = vlaneseq
      %v981 = vshrl.u32 %v980, 7
      %v982 = vsub.s32 0, %v981
      %v983 = vrot.slane %v967, %v982
      %986 = vrot.lane.b32.xlu0 %v979, 16
      %v987 = vpop.permute.xlu0 %986
      %988 = vrot.lane.b32.xlu0 %v983, 16
      %v989 = vpop.permute.xlu0 %988
      %v990 = vsel %vm557, %v987, %v989
      %v994 = vmul.f32 %v970, %v987
      %v995 = vmul.f32 %v971, %v990
      %v996 = vmul.f32 %v972, %v989
      %v997 = vmul.f32 %v973, %v987
      %v998 = vmul.f32 %v974, %v990
      %v999 = vmul.f32 %v975, %v989
      %v1000 = vadd.f32 %v994, 0.0
      %v1001 = vadd.f32 %v995, 0.0
      %v1002 = vadd.f32 %v996, 0.0
      %v1003 = vadd.f32 %v997, 0.0
      %v1004 = vadd.f32 %v998, 0.0
      %v1005 = vadd.f32 %v999, 0.0
      %v1006 = vlaneseq
      %v1007 = vshrl.u32 %v1006, 7
      %v1008 = vsub.s32 1, %v1007
      %v1009 = vrot.slane %v966, %v1008
      %v1010 = vlaneseq
      %v1011 = vshrl.u32 %v1010, 7
      %v1012 = vsub.s32 1, %v1011
      %v1013 = vrot.slane %v967, %v1012
      %1016 = vrot.lane.b32.xlu0 %v1009, 64
      %v1017 = vpop.permute.xlu0 %1016
      %1018 = vrot.lane.b32.xlu0 %v1013, 64
      %v1019 = vpop.permute.xlu0 %1018
      %v1020 = vsel %vm646, %v1017, %v1019
      %v1024 = vmul.f32 %v970, %v1017
      %v1025 = vmul.f32 %v971, %v1020
      %v1026 = vmul.f32 %v972, %v1019
      %v1027 = vmul.f32 %v973, %v1017
      %v1028 = vmul.f32 %v974, %v1020
      %v1029 = vmul.f32 %v975, %v1019
      %1036 = vrot.lane.b32.xlu0 %v1024, 80
      %v1037 = vpop.permute.xlu0 %1036
      %1038 = vrot.lane.b32.xlu0 %v1025, 80
      %v1039 = vpop.permute.xlu0 %1038
      %1040 = vrot.lane.b32.xlu0 %v1026, 80
      %v1041 = vpop.permute.xlu0 %1040
      %1042 = vrot.lane.b32.xlu0 %v1027, 80
      %v1043 = vpop.permute.xlu0 %1042
      %1044 = vrot.lane.b32.xlu0 %v1028, 80
      %v1045 = vpop.permute.xlu0 %1044
      %1046 = vrot.lane.b32.xlu0 %v1029, 80
      %v1047 = vpop.permute.xlu0 %1046
      %v1048 = vsel %vm586, %v1037, %v1039
      %v1049 = vsel %vm586, %v1039, %v1041
      %v1050 = vsel %vm586, %v1043, %v1045
      %v1051 = vsel %vm586, %v1045, %v1047
      %v1058 = vadd.f32 %v1000, %v1048
      %v1059 = vadd.f32 %v1001, %v1049
      %v1060 = vadd.f32 %v1002, %v1041
      %v1061 = vadd.f32 %v1003, %v1050
      %v1062 = vadd.f32 %v1004, %v1051
      %v1063 = vadd.f32 %v1005, %v1047
      %v1064 = vlaneseq
      %v1065 = vshrl.u32 %v1064, 7
      %v1066 = vsub.s32 2, %v1065
      %v1067 = vrot.slane %v966, %v1066
      %v1068 = vlaneseq
      %v1069 = vshrl.u32 %v1068, 7
      %v1070 = vsub.s32 2, %v1069
      %v1071 = vrot.slane %v967, %v1070
      %1074 = vrot.lane.b32.xlu0 %v1067, 112
      %v1075 = vpop.permute.xlu0 %1074
      %1076 = vrot.lane.b32.xlu0 %v1071, 112
      %v1077 = vpop.permute.xlu0 %1076
      %v1078 = vsel %vm458, %v1075, %v1077
      %v1082 = vmul.f32 %v970, %v1075
      %v1083 = vmul.f32 %v971, %v1078
      %v1084 = vmul.f32 %v972, %v1077
      %v1085 = vmul.f32 %v973, %v1075
      %v1086 = vmul.f32 %v974, %v1078
      %v1087 = vmul.f32 %v975, %v1077
      %1094 = vrot.lane.b32.xlu0 %v1082, 32
      %v1095 = vpop.permute.xlu0 %1094
      %1096 = vrot.lane.b32.xlu0 %v1083, 32
      %v1097 = vpop.permute.xlu0 %1096
      %1098 = vrot.lane.b32.xlu0 %v1084, 32
      %v1099 = vpop.permute.xlu0 %1098
      %1100 = vrot.lane.b32.xlu0 %v1085, 32
      %v1101 = vpop.permute.xlu0 %1100
      %1102 = vrot.lane.b32.xlu0 %v1086, 32
      %v1103 = vpop.permute.xlu0 %1102
      %1104 = vrot.lane.b32.xlu0 %v1087, 32
      %v1105 = vpop.permute.xlu0 %1104
      %v1106 = vsel %vm617, %v1095, %v1097
      %v1107 = vsel %vm617, %v1097, %v1099
      %v1108 = vsel %vm617, %v1101, %v1103
      %v1109 = vsel %vm617, %v1103, %v1105
      %v1116 = vadd.f32 %v1058, %v1106
      %v1117 = vadd.f32 %v1059, %v1107
      %v1118 = vadd.f32 %v1060, %v1099
      %v1119 = vadd.f32 %v1061, %v1108
      %v1120 = vadd.f32 %v1062, %v1109
      %v1121 = vadd.f32 %v1063, %v1105
      %v1122 = vld [vmem:[#allocation2 + $0x78] sm:$0xff]
      %v1123 = vld [vmem:[#allocation2 + $0xa8] sm:$0xff]
      %v1124 = vlaneseq
      %v1125 = vshrl.u32 %v1124, 7
      %v1126 = vsub.s32 3, %v1125
      %v1127 = vrot.slane %v966, %v1126
      %v1128 = vlaneseq
      %v1129 = vshrl.u32 %v1128, 7
      %v1130 = vsub.s32 3, %v1129
      %v1131 = vrot.slane %v967, %v1130
      %1134 = vrot.lane.b32.xlu0 %v1127, 32
      %v1135 = vpop.permute.xlu0 %1134
      %1136 = vrot.lane.b32.xlu0 %v1131, 32
      %v1137 = vpop.permute.xlu0 %1136
      %v1138 = vsel %vm617, %v1135, %v1137
      %v1142 = vmul.f32 %v971, %v1135
      %v1143 = vmul.f32 %v972, %v1138
      %v1144 = vmul.f32 %v1122, %v1137
      %v1145 = vmul.f32 %v974, %v1135
      %v1146 = vmul.f32 %v975, %v1138
      %v1147 = vmul.f32 %v1123, %v1137
      %1154 = vrot.lane.b32.xlu0 %v1142, 112
      %v1155 = vpop.permute.xlu0 %1154
      %1156 = vrot.lane.b32.xlu0 %v1143, 112
      %v1157 = vpop.permute.xlu0 %1156
      %1158 = vrot.lane.b32.xlu0 %v1144, 112
      %v1159 = vpop.permute.xlu0 %1158
      %1160 = vrot.lane.b32.xlu0 %v1145, 112
      %v1161 = vpop.permute.xlu0 %1160
      %1162 = vrot.lane.b32.xlu0 %v1146, 112
      %v1163 = vpop.permute.xlu0 %1162
      %1164 = vrot.lane.b32.xlu0 %v1147, 112
      %v1165 = vpop.permute.xlu0 %1164
      %v1166 = vsel %vm458, %v1155, %v1157
      %v1167 = vsel %vm458, %v1157, %v1159
      %v1168 = vsel %vm458, %v1161, %v1163
      %v1169 = vsel %vm458, %v1163, %v1165
      %v1176 = vadd.f32 %v1116, %v1166
      %v1177 = vadd.f32 %v1117, %v1167
      %v1178 = vadd.f32 %v1118, %v1159
      %v1179 = vadd.f32 %v1119, %v1168
      %v1180 = vadd.f32 %v1120, %v1169
      %v1181 = vadd.f32 %v1121, %v1165
      %v1182 = vlaneseq
      %v1183 = vshrl.u32 %v1182, 7
      %v1184 = vsub.s32 4, %v1183
      %v1185 = vrot.slane %v966, %v1184
      %v1186 = vlaneseq
      %v1187 = vshrl.u32 %v1186, 7
      %v1188 = vsub.s32 4, %v1187
      %v1189 = vrot.slane %v967, %v1188
      %1192 = vrot.lane.b32.xlu0 %v1185, 80
      %v1193 = vpop.permute.xlu0 %1192
      %1194 = vrot.lane.b32.xlu0 %v1189, 80
      %v1195 = vpop.permute.xlu0 %1194
      %v1196 = vsel %vm586, %v1193, %v1195
      %v1200 = vmul.f32 %v971, %v1193
      %v1201 = vmul.f32 %v972, %v1196
      %v1202 = vmul.f32 %v1122, %v1195
      %v1203 = vmul.f32 %v974, %v1193
      %v1204 = vmul.f32 %v975, %v1196
      %v1205 = vmul.f32 %v1123, %v1195
      %1212 = vrot.lane.b32.xlu0 %v1200, 64
      %v1213 = vpop.permute.xlu0 %1212
      %1214 = vrot.lane.b32.xlu0 %v1201, 64
      %v1215 = vpop.permute.xlu0 %1214
      %1216 = vrot.lane.b32.xlu0 %v1202, 64
      %v1217 = vpop.permute.xlu0 %1216
      %1218 = vrot.lane.b32.xlu0 %v1203, 64
      %v1219 = vpop.permute.xlu0 %1218
      %1220 = vrot.lane.b32.xlu0 %v1204, 64
      %v1221 = vpop.permute.xlu0 %1220
      %1222 = vrot.lane.b32.xlu0 %v1205, 64
      %v1223 = vpop.permute.xlu0 %1222
      %v1224 = vsel %vm646, %v1213, %v1215
      %v1225 = vsel %vm646, %v1215, %v1217
      %v1226 = vsel %vm646, %v1219, %v1221
      %v1227 = vsel %vm646, %v1221, %v1223
      %v1234 = vadd.f32 %v1176, %v1224
      %v1235 = vadd.f32 %v1177, %v1225
      %v1236 = vadd.f32 %v1178, %v1217
      %v1237 = vadd.f32 %v1179, %v1226
      %v1238 = vadd.f32 %v1180, %v1227
      %v1239 = vadd.f32 %v1181, %v1223
      %v1240 = vlaneseq
      %v1241 = vshrl.u32 %v1240, 7
      %v1242 = vsub.s32 5, %v1241
      %v1243 = vrot.slane %v966, %v1242
      %v1244 = vlaneseq
      %v1245 = vshrl.u32 %v1244, 7
      %v1246 = vsub.s32 5, %v1245
      %v1247 = vrot.slane %v967, %v1246
      %v1248 = vmul.f32 %v972, %v1243
      %v1249 = vmul.f32 %v1122, %v1247
      %v1250 = vmul.f32 %v975, %v1243
      %v1251 = vmul.f32 %v1123, %v1247
      %1256 = vrot.lane.b32.xlu0 %v1248, 16
      %v1257 = vpop.permute.xlu0 %1256
      %1258 = vrot.lane.b32.xlu0 %v1249, 16
      %v1259 = vpop.permute.xlu0 %1258
      %1260 = vrot.lane.b32.xlu0 %v1250, 16
      %v1261 = vpop.permute.xlu0 %1260
      %1262 = vrot.lane.b32.xlu0 %v1251, 16
      %v1263 = vpop.permute.xlu0 %1262
      %v1264 = vsel %vm557, %v1257, %v1259
      %v1265 = vsel %vm557, %v1261, %v1263
      %v1272 = vadd.f32 %v1234, %v1257
      %v1273 = vadd.f32 %v1235, %v1264
      %v1274 = vadd.f32 %v1236, %v1259
      %v1275 = vadd.f32 %v1237, %v1261
      %v1276 = vadd.f32 %v1238, %v1265
      %v1277 = vadd.f32 %v1239, %v1263
      %v1278 = vld [vmem:[#allocation2 + $0x80] sm:$0xff]
      %v1279 = vld [vmem:[#allocation2 + $0xb0] sm:$0xff]
      %v1280 = vlaneseq
      %v1281 = vshrl.u32 %v1280, 7
      %v1282 = vsub.s32 6, %v1281
      %v1283 = vrot.slane %v966, %v1282
      %v1284 = vlaneseq
      %v1285 = vshrl.u32 %v1284, 7
      %v1286 = vsub.s32 6, %v1285
      %v1287 = vrot.slane %v967, %v1286
      %1290 = vrot.lane.b32.xlu0 %v1283, 48
      %v1291 = vpop.permute.xlu0 %1290
      %1292 = vrot.lane.b32.xlu0 %v1287, 48
      %v1293 = vpop.permute.xlu0 %1292
      %vm1294 = vcmask 392192
      %v1295 = vsel %vm1294, %v1291, %v1293
      %v1299 = vmul.f32 %v972, %v1291
      %v1300 = vmul.f32 %v1122, %v1295
      %v1301 = vmul.f32 %v1278, %v1293
      %v1302 = vmul.f32 %v975, %v1291
      %v1303 = vmul.f32 %v1123, %v1295
      %v1304 = vmul.f32 %v1279, %v1293
      %1311 = vrot.lane.b32.xlu0 %v1299, 96
      %v1312 = vpop.permute.xlu0 %1311
      %1313 = vrot.lane.b32.xlu0 %v1300, 96
      %v1314 = vpop.permute.xlu0 %1313
      %1315 = vrot.lane.b32.xlu0 %v1301, 96
      %v1316 = vpop.permute.xlu0 %1315
      %1317 = vrot.lane.b32.xlu0 %v1302, 96
      %v1318 = vpop.permute.xlu0 %1317
      %1319 = vrot.lane.b32.xlu0 %v1303, 96
      %v1320 = vpop.permute.xlu0 %1319
      %1321 = vrot.lane.b32.xlu0 %v1304, 96
      %v1322 = vpop.permute.xlu0 %1321
      %v1323 = vsel %vm427, %v1312, %v1314
      %v1324 = vsel %vm427, %v1314, %v1316
      %v1325 = vsel %vm427, %v1318, %v1320
      %v1326 = vsel %vm427, %v1320, %v1322
      %v1333 = vadd.f32 %v1272, %v1323
      %v1334 = vadd.f32 %v1273, %v1324
      %v1335 = vadd.f32 %v1274, %v1316
      %v1336 = vadd.f32 %v1275, %v1325
      %v1337 = vadd.f32 %v1276, %v1326
      %v1338 = vadd.f32 %v1277, %v1322
      %v1339 = vlaneseq
      %v1340 = vshrl.u32 %v1339, 7
      %v1341 = vsub.s32 7, %v1340
      %v1342 = vrot.slane %v966, %v1341
      %v1343 = vlaneseq
      %v1344 = vshrl.u32 %v1343, 7
      %v1345 = vsub.s32 7, %v1344
      %v1346 = vrot.slane %v967, %v1345
      %1349 = vrot.lane.b32.xlu0 %v1342, 96
      %v1350 = vpop.permute.xlu0 %1349
      %1351 = vrot.lane.b32.xlu0 %v1346, 96
      %v1352 = vpop.permute.xlu0 %1351
      %v1353 = vsel %vm427, %v1350, %v1352
      %v1357 = vmul.f32 %v972, %v1350
      %v1358 = vmul.f32 %v1122, %v1353
      %v1359 = vmul.f32 %v1278, %v1352
      %v1360 = vmul.f32 %v975, %v1350
      %v1361 = vmul.f32 %v1123, %v1353
      %v1362 = vmul.f32 %v1279, %v1352
      %1369 = vrot.lane.b32.xlu0 %v1357, 48
      %v1370 = vpop.permute.xlu0 %1369
      %1371 = vrot.lane.b32.xlu0 %v1358, 48
      %v1372 = vpop.permute.xlu0 %1371
      %1373 = vrot.lane.b32.xlu0 %v1359, 48
      %v1374 = vpop.permute.xlu0 %1373
      %1375 = vrot.lane.b32.xlu0 %v1360, 48
      %v1376 = vpop.permute.xlu0 %1375
      %1377 = vrot.lane.b32.xlu0 %v1361, 48
      %v1378 = vpop.permute.xlu0 %1377
      %1379 = vrot.lane.b32.xlu0 %v1362, 48
      %v1380 = vpop.permute.xlu0 %1379
      %v1381 = vsel %vm1294, %v1370, %v1372
      %v1382 = vsel %vm1294, %v1372, %v1374
      %v1383 = vsel %vm1294, %v1376, %v1378
      %v1384 = vsel %vm1294, %v1378, %v1380
      %v1391 = vadd.f32 %v1333, %v1381
      %v1392 = vadd.f32 %v1334, %v1382
      %v1393 = vadd.f32 %v1335, %v1374
      %v1394 = vadd.f32 %v1336, %v1383
      %v1395 = vadd.f32 %v1337, %v1384
      %v1396 = vadd.f32 %v1338, %v1380
      %v1397 = vld [vmem:[#allocation2 + $0x88] sm:$0xff]
      %v1398 = vld [vmem:[#allocation2 + $0xb8] sm:$0xff]
      %v1399 = vlaneseq
      %v1400 = vshrl.u32 %v1399, 7
      %v1401 = vsub.s32 0, %v1400
      %v1402 = vrot.slane %v968, %v1401
      %v1403 = vlaneseq
      %v1404 = vshrl.u32 %v1403, 7
      %v1405 = vsub.s32 0, %v1404
      %v1406 = vrot.slane %v969, %v1405
      %1409 = vrot.lane.b32.xlu0 %v1402, 16
      %v1410 = vpop.permute.xlu0 %1409
      %1411 = vrot.lane.b32.xlu0 %v1406, 16
      %v1412 = vpop.permute.xlu0 %1411
      %v1413 = vsel %vm557, %v1410, %v1412
      %v1417 = vmul.f32 %v1122, %v1410
      %v1418 = vmul.f32 %v1278, %v1413
      %v1419 = vmul.f32 %v1397, %v1412
      %v1420 = vmul.f32 %v1123, %v1410
      %v1421 = vmul.f32 %v1279, %v1413
      %v1422 = vmul.f32 %v1398, %v1412
      %v1423 = vadd.f32 %v1391, %v1417
      %v1424 = vadd.f32 %v1392, %v1418
      %v1425 = vadd.f32 %v1393, %v1419
      %v1426 = vadd.f32 %v1394, %v1420
      %v1427 = vadd.f32 %v1395, %v1421
      %v1428 = vadd.f32 %v1396, %v1422
      %v1429 = vlaneseq
      %v1430 = vshrl.u32 %v1429, 7
      %v1431 = vsub.s32 1, %v1430
      %v1432 = vrot.slane %v968, %v1431
      %v1433 = vlaneseq
      %v1434 = vshrl.u32 %v1433, 7
      %v1435 = vsub.s32 1, %v1434
      %v1436 = vrot.slane %v969, %v1435
      %1439 = vrot.lane.b32.xlu0 %v1432, 64
      %v1440 = vpop.permute.xlu0 %1439
      %1441 = vrot.lane.b32.xlu0 %v1436, 64
      %v1442 = vpop.permute.xlu0 %1441
      %v1443 = vsel %vm646, %v1440, %v1442
      %v1447 = vmul.f32 %v1122, %v1440
      %v1448 = vmul.f32 %v1278, %v1443
      %v1449 = vmul.f32 %v1397, %v1442
      %v1450 = vmul.f32 %v1123, %v1440
      %v1451 = vmul.f32 %v1279, %v1443
      %v1452 = vmul.f32 %v1398, %v1442
      %1459 = vrot.lane.b32.xlu0 %v1447, 80
      %v1460 = vpop.permute.xlu0 %1459
      %1461 = vrot.lane.b32.xlu0 %v1448, 80
      %v1462 = vpop.permute.xlu0 %1461
      %1463 = vrot.lane.b32.xlu0 %v1449, 80
      %v1464 = vpop.permute.xlu0 %1463
      %1465 = vrot.lane.b32.xlu0 %v1450, 80
      %v1466 = vpop.permute.xlu0 %1465
      %1467 = vrot.lane.b32.xlu0 %v1451, 80
      %v1468 = vpop.permute.xlu0 %1467
      %1469 = vrot.lane.b32.xlu0 %v1452, 80
      %v1470 = vpop.permute.xlu0 %1469
      %v1471 = vsel %vm586, %v1460, %v1462
      %v1472 = vsel %vm586, %v1462, %v1464
      %v1473 = vsel %vm586, %v1466, %v1468
      %v1474 = vsel %vm586, %v1468, %v1470
      %v1481 = vadd.f32 %v1423, %v1471
      %v1482 = vadd.f32 %v1424, %v1472
      %v1483 = vadd.f32 %v1425, %v1464
      %v1484 = vadd.f32 %v1426, %v1473
      %v1485 = vadd.f32 %v1427, %v1474
      %v1486 = vadd.f32 %v1428, %v1470
      %v1487 = vlaneseq
      %v1488 = vshrl.u32 %v1487, 7
      %v1489 = vsub.s32 2, %v1488
      %v1490 = vrot.slane %v968, %v1489
      %v1491 = vlaneseq
      %v1492 = vshrl.u32 %v1491, 7
      %v1493 = vsub.s32 2, %v1492
      %v1494 = vrot.slane %v969, %v1493
      %1497 = vrot.lane.b32.xlu0 %v1490, 112
      %v1498 = vpop.permute.xlu0 %1497
      %1499 = vrot.lane.b32.xlu0 %v1494, 112
      %v1500 = vpop.permute.xlu0 %1499
      %v1501 = vsel %vm458, %v1498, %v1500
      %v1505 = vmul.f32 %v1122, %v1498
      %v1506 = vmul.f32 %v1278, %v1501
      %v1507 = vmul.f32 %v1397, %v1500
      %v1508 = vmul.f32 %v1123, %v1498
      %v1509 = vmul.f32 %v1279, %v1501
      %v1510 = vmul.f32 %v1398, %v1500
      %1517 = vrot.lane.b32.xlu0 %v1505, 32
      %v1518 = vpop.permute.xlu0 %1517
      %1519 = vrot.lane.b32.xlu0 %v1506, 32
      %v1520 = vpop.permute.xlu0 %1519
      %1521 = vrot.lane.b32.xlu0 %v1507, 32
      %v1522 = vpop.permute.xlu0 %1521
      %1523 = vrot.lane.b32.xlu0 %v1508, 32
      %v1524 = vpop.permute.xlu0 %1523
      %1525 = vrot.lane.b32.xlu0 %v1509, 32
      %v1526 = vpop.permute.xlu0 %1525
      %1527 = vrot.lane.b32.xlu0 %v1510, 32
      %v1528 = vpop.permute.xlu0 %1527
      %v1529 = vsel %vm617, %v1518, %v1520
      %v1530 = vsel %vm617, %v1520, %v1522
      %v1531 = vsel %vm617, %v1524, %v1526
      %v1532 = vsel %vm617, %v1526, %v1528
      %v1539 = vadd.f32 %v1481, %v1529
      %v1540 = vadd.f32 %v1482, %v1530
      %v1541 = vadd.f32 %v1483, %v1522
      %v1542 = vadd.f32 %v1484, %v1531
      %v1543 = vadd.f32 %v1485, %v1532
      %v1544 = vadd.f32 %v1486, %v1528
      %v1545 = vld [vmem:[%s6] sm:$0x3]
      %v1547 = vlaneseq
      %v1548 = vshrl.u32 %v1547, 7
      %v1549 = vsub.s32 0, %v1548
      %v1550 = vrot.slane %v1545, %v1549
      %v1551 = vlaneseq
      %v1552 = vshrl.u32 %v1551, 7
      %v1553 = vsub.s32 1, %v1552
      %v1554 = vrot.slane %v1545, %v1553
      %1555 = vrot.lane.b32.xlu0 %v1550, 16
      %v1556 = vpop.permute.xlu0 %1555
      %1557 = vrot.lane.b32.xlu0 %v1554, 16
      %v1558 = vpop.permute.xlu0 %1557
      %v1559 = vsel %vm557, %v1556, %v1558
      %v1563 = vadd.f32 %v1539, %v1556
      %v1564 = vadd.f32 %v1540, %v1559
      %v1565 = vadd.f32 %v1541, %v1558
      %v1566 = vadd.f32 %v1542, %v1556
      %v1567 = vadd.f32 %v1543, %v1559
      %v1568 = vadd.f32 %v1544, %v1558
      %1575 = vrot.lane.b32.xlu0 %v1563, 112
      %v1576 = vpop.permute.xlu0 %1575
      %1577 = vrot.lane.b32.xlu0 %v1564, 112
      %v1578 = vpop.permute.xlu0 %1577
      %1579 = vrot.lane.b32.xlu0 %v1565, 112
      %v1580 = vpop.permute.xlu0 %1579
      %1581 = vrot.lane.b32.xlu0 %v1566, 112
      %v1582 = vpop.permute.xlu0 %1581
      %1583 = vrot.lane.b32.xlu0 %v1567, 112
      %v1584 = vpop.permute.xlu0 %1583
      %1585 = vrot.lane.b32.xlu0 %v1568, 112
      %v1586 = vpop.permute.xlu0 %1585
      %v1587 = vsel %vm458, %v1576, %v1578
      %v1588 = vsel %vm458, %v1578, %v1580
      %v1589 = vsel %vm458, %v1582, %v1584
      %v1590 = vsel %vm458, %v1584, %v1586
      %1595 = vst [vmem:[#allocation3 + $0x70] sm:$0xff] %v1587
      %1596 = vst [vmem:[#allocation3 + $0x78] sm:$0xff] %v1588
      %1597 = vst [vmem:[#allocation3 + $0xa0] sm:$0xff] %v1589
      %1598 = vst [vmem:[#allocation3 + $0xa8] sm:$0xff] %v1590
      %v1599 = vld [vmem:[%s7] sm:$0xff]
      %v1600 = vld [vmem:[%s7 + $0x8] sm:$0xff]
      %v1601 = vld [vmem:[%s7 + $0x10] sm:$0x7]
      %v1602 = vld [vmem:[%s7 + $0x18] sm:$0x7]
      %v1603 = vld [vmem:[#allocation3 + $0x10] sm:$0xfe]
      %v1604 = vld [vmem:[#allocation3 + $0x18] sm:$0xfe]
      %v1605 = vld [vmem:[#allocation3 + $0x40] sm:$0xff]
      %v1606 = vld [vmem:[#allocation3 + $0x48] sm:$0xff]
      %v1607 = vld [vmem:[#allocation3 + $0x70] sm:$0x1]
      %v1608 = vld [vmem:[#allocation3 + $0x78] sm:$0x1]
      %v1609 = vlaneseq
      %v1610 = vshrl.u32 %v1609, 7
      %v1611 = vsub.s32 0, %v1610
      %v1612 = vrot.slane %v1599, %v1611
      %v1613 = vlaneseq
      %v1614 = vshrl.u32 %v1613, 7
      %v1615 = vsub.s32 0, %v1614
      %v1616 = vrot.slane %v1600, %v1615
      %v1617 = vmul.f32 %v1603, %v1612
      %v1618 = vmul.f32 %v1604, %v1616
      %v1619 = vmul.f32 %v1605, %v1612
      %v1620 = vmul.f32 %v1606, %v1616
      %v1621 = vmul.f32 %v1607, %v1612
      %v1622 = vmul.f32 %v1608, %v1616
      %v1623 = vadd.f32 %v1617, 0.0
      %v1624 = vadd.f32 %v1618, 0.0
      %v1625 = vadd.f32 %v1619, 0.0
      %v1626 = vadd.f32 %v1620, 0.0
      %v1627 = vadd.f32 %v1621, 0.0
      %v1628 = vadd.f32 %v1622, 0.0
      %v1629 = vld [vmem:[#allocation3 + $0x10] sm:$0xf0]
      %v1630 = vld [vmem:[#allocation3 + $0x18] sm:$0xf0]
      %v1631 = vld [vmem:[#allocation3 + $0x70] sm:$0xf]
      %v1632 = vld [vmem:[#allocation3 + $0x78] sm:$0xf]
      %v1633 = vlaneseq
      %v1634 = vshrl.u32 %v1633, 7
      %v1635 = vsub.s32 1, %v1634
      %v1636 = vrot.slane %v1599, %v1635
      %v1637 = vlaneseq
      %v1638 = vshrl.u32 %v1637, 7
      %v1639 = vsub.s32 1, %v1638
      %v1640 = vrot.slane %v1600, %v1639
      %v1641 = vmul.f32 %v1629, %v1636
      %v1642 = vmul.f32 %v1630, %v1640
      %v1643 = vmul.f32 %v1605, %v1636
      %v1644 = vmul.f32 %v1606, %v1640
      %v1645 = vmul.f32 %v1631, %v1636
      %v1646 = vmul.f32 %v1632, %v1640
      %v1653 = vrot.slane %v1641, 3
      %v1654 = vrot.slane %v1643, 3
      %v1655 = vsel %vm853, %v1653, %v1654
      %v1656 = vrot.slane %v1642, 3
      %v1657 = vrot.slane %v1644, 3
      %v1658 = vsel %vm853, %v1656, %v1657
      %v1659 = vrot.slane %v1645, 3
      %v1660 = vsel %vm853, %v1654, %v1659
      %v1661 = vrot.slane %v1646, 3
      %v1662 = vsel %vm853, %v1657, %v1661
      %v1669 = vadd.f32 %v1623, %v1655
      %v1670 = vadd.f32 %v1624, %v1658
      %v1671 = vadd.f32 %v1625, %v1660
      %v1672 = vadd.f32 %v1626, %v1662
      %v1673 = vadd.f32 %v1627, %v1659
      %v1674 = vadd.f32 %v1628, %v1661
      %v1675 = vld [vmem:[#allocation3 + $0x10] sm:$0x80]
      %v1676 = vld [vmem:[#allocation3 + $0x18] sm:$0x80]
      %v1677 = vld [vmem:[#allocation3 + $0x70] sm:$0x7f]
      %v1678 = vld [vmem:[#allocation3 + $0x78] sm:$0x7f]
      %v1679 = vlaneseq
      %v1680 = vshrl.u32 %v1679, 7
      %v1681 = vsub.s32 2, %v1680
      %v1682 = vrot.slane %v1599, %v1681
      %v1683 = vlaneseq
      %v1684 = vshrl.u32 %v1683, 7
      %v1685 = vsub.s32 2, %v1684
      %v1686 = vrot.slane %v1600, %v1685
      %v1687 = vmul.f32 %v1675, %v1682
      %v1688 = vmul.f32 %v1676, %v1686
      %v1689 = vmul.f32 %v1605, %v1682
      %v1690 = vmul.f32 %v1606, %v1686
      %v1691 = vmul.f32 %v1677, %v1682
      %v1692 = vmul.f32 %v1678, %v1686
      %v1699 = vrot.slane %v1687, 6
      %v1700 = vrot.slane %v1689, 6
      %v1701 = vsel %vm947, %v1699, %v1700
      %v1702 = vrot.slane %v1688, 6
      %v1703 = vrot.slane %v1690, 6
      %v1704 = vsel %vm947, %v1702, %v1703
      %v1705 = vrot.slane %v1691, 6
      %v1706 = vsel %vm947, %v1700, %v1705
      %v1707 = vrot.slane %v1692, 6
      %v1708 = vsel %vm947, %v1703, %v1707
      %v1715 = vadd.f32 %v1669, %v1701
      %v1716 = vadd.f32 %v1670, %v1704
      %v1717 = vadd.f32 %v1671, %v1706
      %v1718 = vadd.f32 %v1672, %v1708
      %v1719 = vadd.f32 %v1673, %v1705
      %v1720 = vadd.f32 %v1674, %v1707
      %v1721 = vld [vmem:[#allocation3 + $0x40] sm:$0xfc]
      %v1722 = vld [vmem:[#allocation3 + $0x48] sm:$0xfc]
      %v1723 = vld [vmem:[#allocation3 + $0x70] sm:$0xff]
      %v1724 = vld [vmem:[#allocation3 + $0x78] sm:$0xff]
      %v1725 = vld [vmem:[#allocation3 + $0xa0] sm:$0x3]
      %v1726 = vld [vmem:[#allocation3 + $0xa8] sm:$0x3]
      %v1727 = vlaneseq
      %v1728 = vshrl.u32 %v1727, 7
      %v1729 = vsub.s32 3, %v1728
      %v1730 = vrot.slane %v1599, %v1729
      %v1731 = vlaneseq
      %v1732 = vshrl.u32 %v1731, 7
      %v1733 = vsub.s32 3, %v1732
      %v1734 = vrot.slane %v1600, %v1733
      %v1735 = vmul.f32 %v1721, %v1730
      %v1736 = vmul.f32 %v1722, %v1734
      %v1737 = vmul.f32 %v1723, %v1730
      %v1738 = vmul.f32 %v1724, %v1734
      %v1739 = vmul.f32 %v1725, %v1730
      %v1740 = vmul.f32 %v1726, %v1734
      %v1747 = vrot.slane %v1735, 1
      %v1748 = vrot.slane %v1737, 1
      %v1749 = vsel %vm769, %v1747, %v1748
      %v1750 = vrot.slane %v1736, 1
      %v1751 = vrot.slane %v1738, 1
      %v1752 = vsel %vm769, %v1750, %v1751
      %v1753 = vrot.slane %v1739, 1
      %v1754 = vsel %vm769, %v1748, %v1753
      %v1755 = vrot.slane %v1740, 1
      %v1756 = vsel %vm769, %v1751, %v1755
      %v1763 = vadd.f32 %v1715, %v1749
      %v1764 = vadd.f32 %v1716, %v1752
      %v1765 = vadd.f32 %v1717, %v1754
      %v1766 = vadd.f32 %v1718, %v1756
      %v1767 = vadd.f32 %v1719, %v1753
      %v1768 = vadd.f32 %v1720, %v1755
      %v1769 = vld [vmem:[#allocation3 + $0x40] sm:$0xe0]
      %v1770 = vld [vmem:[#allocation3 + $0x48] sm:$0xe0]
      %v1771 = vld [vmem:[#allocation3 + $0xa0] sm:$0x1f]
      %v1772 = vld [vmem:[#allocation3 + $0xa8] sm:$0x1f]
      %v1773 = vlaneseq
      %v1774 = vshrl.u32 %v1773, 7
      %v1775 = vsub.s32 4, %v1774
      %v1776 = vrot.slane %v1599, %v1775
      %v1777 = vlaneseq
      %v1778 = vshrl.u32 %v1777, 7
      %v1779 = vsub.s32 4, %v1778
      %v1780 = vrot.slane %v1600, %v1779
      %v1781 = vmul.f32 %v1769, %v1776
      %v1782 = vmul.f32 %v1770, %v1780
      %v1783 = vmul.f32 %v1723, %v1776
      %v1784 = vmul.f32 %v1724, %v1780
      %v1785 = vmul.f32 %v1771, %v1776
      %v1786 = vmul.f32 %v1772, %v1780
      %v1793 = vrot.slane %v1781, 4
      %v1794 = vrot.slane %v1783, 4
      %v1795 = vsel %vm900, %v1793, %v1794
      %v1796 = vrot.slane %v1782, 4
      %v1797 = vrot.slane %v1784, 4
      %v1798 = vsel %vm900, %v1796, %v1797
      %v1799 = vrot.slane %v1785, 4
      %v1800 = vsel %vm900, %v1794, %v1799
      %v1801 = vrot.slane %v1786, 4
      %v1802 = vsel %vm900, %v1797, %v1801
      %v1809 = vadd.f32 %v1763, %v1795
      %v1810 = vadd.f32 %v1764, %v1798
      %v1811 = vadd.f32 %v1765, %v1800
      %v1812 = vadd.f32 %v1766, %v1802
      %v1813 = vadd.f32 %v1767, %v1799
      %v1814 = vadd.f32 %v1768, %v1801
      %v1815 = vld [vmem:[#allocation3 + $0xa0] sm:$0xff]
      %v1816 = vld [vmem:[#allocation3 + $0xa8] sm:$0xff]
      %v1817 = vlaneseq
      %v1818 = vshrl.u32 %v1817, 7
      %v1819 = vsub.s32 5, %v1818
      %v1820 = vrot.slane %v1599, %v1819
      %v1821 = vlaneseq
      %v1822 = vshrl.u32 %v1821, 7
      %v1823 = vsub.s32 5, %v1822
      %v1824 = vrot.slane %v1600, %v1823
      %v1825 = vmul.f32 %v1723, %v1820
      %v1826 = vmul.f32 %v1724, %v1824
      %v1827 = vmul.f32 %v1815, %v1820
      %v1828 = vmul.f32 %v1816, %v1824
      %vm1833 = vcmask 1040384
      %v1834 = vrot.slane %v1825, 7
      %v1835 = vrot.slane %v1826, 7
      %v1836 = vrot.slane %v1827, 7
      %v1837 = vsel %vm1833, %v1834, %v1836
      %v1838 = vrot.slane %v1828, 7
      %v1839 = vsel %vm1833, %v1835, %v1838
      %v1846 = vadd.f32 %v1809, %v1834
      %v1847 = vadd.f32 %v1810, %v1835
      %v1848 = vadd.f32 %v1811, %v1837
      %v1849 = vadd.f32 %v1812, %v1839
      %v1850 = vadd.f32 %v1813, %v1836
      %v1851 = vadd.f32 %v1814, %v1838
      %v1852 = vld [vmem:[#allocation3 + $0x70] sm:$0xf8]
      %v1853 = vld [vmem:[#allocation3 + $0x78] sm:$0xf8]
      %v1854 = vld [vmem:[#allocation3 + $0xd0] sm:$0x7]
      %v1855 = vld [vmem:[#allocation3 + $0xd8] sm:$0x7]
      %v1856 = vlaneseq
      %v1857 = vshrl.u32 %v1856, 7
      %v1858 = vsub.s32 6, %v1857
      %v1859 = vrot.slane %v1599, %v1858
      %v1860 = vlaneseq
      %v1861 = vshrl.u32 %v1860, 7
      %v1862 = vsub.s32 6, %v1861
      %v1863 = vrot.slane %v1600, %v1862
      %v1864 = vmul.f32 %v1852, %v1859
      %v1865 = vmul.f32 %v1853, %v1863
      %v1866 = vmul.f32 %v1815, %v1859
      %v1867 = vmul.f32 %v1816, %v1863
      %v1868 = vmul.f32 %v1854, %v1859
      %v1869 = vmul.f32 %v1855, %v1863
      %v1876 = vrot.slane %v1864, 2
      %v1877 = vrot.slane %v1866, 2
      %v1878 = vsel %vm810, %v1876, %v1877
      %v1879 = vrot.slane %v1865, 2
      %v1880 = vrot.slane %v1867, 2
      %v1881 = vsel %vm810, %v1879, %v1880
      %v1882 = vrot.slane %v1868, 2
      %v1883 = vsel %vm810, %v1877, %v1882
      %v1884 = vrot.slane %v1869, 2
      %v1885 = vsel %vm810, %v1880, %v1884
      %v1892 = vadd.f32 %v1846, %v1878
      %v1893 = vadd.f32 %v1847, %v1881
      %v1894 = vadd.f32 %v1848, %v1883
      %v1895 = vadd.f32 %v1849, %v1885
      %v1896 = vadd.f32 %v1850, %v1882
      %v1897 = vadd.f32 %v1851, %v1884
      %v1898 = vld [vmem:[#allocation3 + $0x70] sm:$0xc0]
      %v1899 = vld [vmem:[#allocation3 + $0x78] sm:$0xc0]
      %v1900 = vld [vmem:[#allocation3 + $0xd0] sm:$0x3f]
      %v1901 = vld [vmem:[#allocation3 + $0xd8] sm:$0x3f]
      %v1902 = vlaneseq
      %v1903 = vshrl.u32 %v1902, 7
      %v1904 = vsub.s32 7, %v1903
      %v1905 = vrot.slane %v1599, %v1904
      %v1906 = vlaneseq
      %v1907 = vshrl.u32 %v1906, 7
      %v1908 = vsub.s32 7, %v1907
      %v1909 = vrot.slane %v1600, %v1908
      %v1910 = vmul.f32 %v1898, %v1905
      %v1911 = vmul.f32 %v1899, %v1909
      %v1912 = vmul.f32 %v1815, %v1905
      %v1913 = vmul.f32 %v1816, %v1909
      %v1914 = vmul.f32 %v1900, %v1905
      %v1915 = vmul.f32 %v1901, %v1909
      %vm1922 = vcmask 1042432
      %v1923 = vrot.slane %v1910, 5
      %v1924 = vrot.slane %v1912, 5
      %v1925 = vsel %vm1922, %v1923, %v1924
      %v1926 = vrot.slane %v1911, 5
      %v1927 = vrot.slane %v1913, 5
      %v1928 = vsel %vm1922, %v1926, %v1927
      %v1929 = vrot.slane %v1914, 5
      %v1930 = vsel %vm1922, %v1924, %v1929
      %v1931 = vrot.slane %v1915, 5
      %v1932 = vsel %vm1922, %v1927, %v1931
      %v1939 = vadd.f32 %v1892, %v1925
      %v1940 = vadd.f32 %v1893, %v1928
      %v1941 = vadd.f32 %v1894, %v1930
      %v1942 = vadd.f32 %v1895, %v1932
      %v1943 = vadd.f32 %v1896, %v1929
      %v1944 = vadd.f32 %v1897, %v1931
      %v1945 = vld [vmem:[#allocation3 + $0xa0] sm:$0xfe]
      %v1946 = vld [vmem:[#allocation3 + $0xa8] sm:$0xfe]
      %v1947 = vld [vmem:[#allocation3 + $0xd0] sm:$0xff]
      %v1948 = vld [vmem:[#allocation3 + $0xd8] sm:$0xff]
      %v1949 = vld [vmem:[#allocation3 + $0x100] sm:$0x1]
      %v1950 = vld [vmem:[#allocation3 + $0x108] sm:$0x1]
      %v1951 = vlaneseq
      %v1952 = vshrl.u32 %v1951, 7
      %v1953 = vsub.s32 0, %v1952
      %v1954 = vrot.slane %v1601, %v1953
      %v1955 = vlaneseq
      %v1956 = vshrl.u32 %v1955, 7
      %v1957 = vsub.s32 0, %v1956
      %v1958 = vrot.slane %v1602, %v1957
      %v1959 = vmul.f32 %v1945, %v1954
      %v1960 = vmul.f32 %v1946, %v1958
      %v1961 = vmul.f32 %v1947, %v1954
      %v1962 = vmul.f32 %v1948, %v1958
      %v1963 = vmul.f32 %v1949, %v1954
      %v1964 = vmul.f32 %v1950, %v1958
      %v1965 = vadd.f32 %v1939, %v1959
      %v1966 = vadd.f32 %v1940, %v1960
      %v1967 = vadd.f32 %v1941, %v1961
      %v1968 = vadd.f32 %v1942, %v1962
      %v1969 = vadd.f32 %v1943, %v1963
      %v1970 = vadd.f32 %v1944, %v1964
      %v1971 = vld [vmem:[#allocation3 + $0xa0] sm:$0xf0]
      %v1972 = vld [vmem:[#allocation3 + $0xa8] sm:$0xf0]
      %v1973 = vld [vmem:[#allocation3 + $0x100] sm:$0xf]
      %v1974 = vld [vmem:[#allocation3 + $0x108] sm:$0xf]
      %v1975 = vlaneseq
      %v1976 = vshrl.u32 %v1975, 7
      %v1977 = vsub.s32 1, %v1976
      %v1978 = vrot.slane %v1601, %v1977
      %v1979 = vlaneseq
      %v1980 = vshrl.u32 %v1979, 7
      %v1981 = vsub.s32 1, %v1980
      %v1982 = vrot.slane %v1602, %v1981
      %v1983 = vmul.f32 %v1971, %v1978
      %v1984 = vmul.f32 %v1972, %v1982
      %v1985 = vmul.f32 %v1947, %v1978
      %v1986 = vmul.f32 %v1948, %v1982
      %v1987 = vmul.f32 %v1973, %v1978
      %v1988 = vmul.f32 %v1974, %v1982
      %v1995 = vrot.slane %v1983, 3
      %v1996 = vrot.slane %v1985, 3
      %v1997 = vsel %vm853, %v1995, %v1996
      %v1998 = vrot.slane %v1984, 3
      %v1999 = vrot.slane %v1986, 3
      %v2000 = vsel %vm853, %v1998, %v1999
      %v2001 = vrot.slane %v1987, 3
      %v2002 = vsel %vm853, %v1996, %v2001
      %v2003 = vrot.slane %v1988, 3
      %v2004 = vsel %vm853, %v1999, %v2003
      %v2011 = vadd.f32 %v1965, %v1997
      %v2012 = vadd.f32 %v1966, %v2000
      %v2013 = vadd.f32 %v1967, %v2002
      %v2014 = vadd.f32 %v1968, %v2004
      %v2015 = vadd.f32 %v1969, %v2001
      %v2016 = vadd.f32 %v1970, %v2003
      %v2017 = vld [vmem:[#allocation3 + $0xa0] sm:$0x80]
      %v2018 = vld [vmem:[#allocation3 + $0xa8] sm:$0x80]
      %v2019 = vld [vmem:[#allocation3 + $0x100] sm:$0x7f]
      %v2020 = vld [vmem:[#allocation3 + $0x108] sm:$0x7f]
      %v2021 = vlaneseq
      %v2022 = vshrl.u32 %v2021, 7
      %v2023 = vsub.s32 2, %v2022
      %v2024 = vrot.slane %v1601, %v2023
      %v2025 = vlaneseq
      %v2026 = vshrl.u32 %v2025, 7
      %v2027 = vsub.s32 2, %v2026
      %v2028 = vrot.slane %v1602, %v2027
      %v2029 = vmul.f32 %v2017, %v2024
      %v2030 = vmul.f32 %v2018, %v2028
      %v2031 = vmul.f32 %v1947, %v2024
      %v2032 = vmul.f32 %v1948, %v2028
      %v2033 = vmul.f32 %v2019, %v2024
      %v2034 = vmul.f32 %v2020, %v2028
      %v2041 = vrot.slane %v2029, 6
      %v2042 = vrot.slane %v2031, 6
      %v2043 = vsel %vm947, %v2041, %v2042
      %v2044 = vrot.slane %v2030, 6
      %v2045 = vrot.slane %v2032, 6
      %v2046 = vsel %vm947, %v2044, %v2045
      %v2047 = vrot.slane %v2033, 6
      %v2048 = vsel %vm947, %v2042, %v2047
      %v2049 = vrot.slane %v2034, 6
      %v2050 = vsel %vm947, %v2045, %v2049
      %v2057 = vadd.f32 %v2011, %v2043
      %v2058 = vadd.f32 %v2012, %v2046
      %v2059 = vadd.f32 %v2013, %v2048
      %v2060 = vadd.f32 %v2014, %v2050
      %v2061 = vadd.f32 %v2015, %v2047
      %v2062 = vadd.f32 %v2016, %v2049
      %v2063 = vld [vmem:[%s8] sm:$0x3]
      %v2065 = vlaneseq
      %v2066 = vshrl.u32 %v2065, 7
      %v2067 = vsub.s32 0, %v2066
      %v2068 = vrot.slane %v2063, %v2067
      %v2069 = vlaneseq
      %v2070 = vshrl.u32 %v2069, 7
      %v2071 = vsub.s32 1, %v2070
      %v2072 = vrot.slane %v2063, %v2071
      %v2075 = vadd.f32 %v2057, %v2068
      %v2076 = vadd.f32 %v2058, %v2072
      %v2077 = vadd.f32 %v2059, %v2068
      %v2078 = vadd.f32 %v2060, %v2072
      %v2079 = vadd.f32 %v2061, %v2068
      %v2080 = vadd.f32 %v2062, %v2072
      %v2087 = vrot.slane %v2075, 1
      %v2088 = vrot.slane %v2077, 1
      %v2089 = vsel %vm769, %v2087, %v2088
      %v2090 = vrot.slane %v2076, 1
      %v2091 = vrot.slane %v2078, 1
      %v2092 = vsel %vm769, %v2090, %v2091
      %v2093 = vrot.slane %v2079, 1
      %v2094 = vsel %vm769, %v2088, %v2093
      %v2095 = vrot.slane %v2080, 1
      %v2096 = vsel %vm769, %v2091, %v2095
      %2101 = vst [vmem:[%s332] sm:$0xff] %v2089
      %2102 = vst [vmem:[%s332 + $0x8] sm:$0xff] %v2092
      %2103 = vst [vmem:[%s332 + $0x10] sm:$0xff] %v2094
      %2104 = vst [vmem:[%s332 + $0x18] sm:$0xff] %v2096
      %p2105 = scmp.lt.s32.totalorder %s20, 1
      %s2106 = scalar_select %p2105, %s20, 1
      %s2107 = smul.addr %s2106, 4
      %s2108 = smul.addr %s2107, 8
      %s2109 = scalar_lea.vmem %s9, %s2108
      // Predicated region
      $region57: #{_lambda_.8} parent=55 // pred_check
        %p2110 = pneg %p232
      $region58: #{_lambda_.8} parent=55 // pred_check_branch
        %2112 = sbr.rel (%p2110) target = $region60
      $region59: #{_lambda_.8} parent=55 // pred_region
        _
      $region60: #{_lambda_.8} parent=55 // pred_fallthru
        _
    $region56: #{_lambda_.8} parent=5 // pred_fallthru
      _
    %p2113 = scmp.le.s32.totalorder 2, %s15
    // Predicated region
    $region61: #{_lambda_.8} parent=5 // pred_check
      %p2114 = pneg %p2113
    $region62: #{_lambda_.8} parent=5 // pred_check_branch
      %2116 = sbr.rel (%p2114) target = $region64
    $region63: #{_lambda_.8} parent=5 // pred_region
      %s2117 = ssub.s32 %s15, 2
      // Predicated region
      $region65: #{_lambda_.8} parent=63 // pred_check
        %p2118 = pneg %p238
      $region66: #{_lambda_.8} parent=63 // pred_check_branch
        %2120 = sbr.rel (%p2118) target = $region68
      $region67: #{_lambda_.8} parent=63 // pred_region
        %p2121 = scmp.lt.s32.totalorder %s21, 1
        %s2122 = scalar_select %p2121, %s21, 1
        %s2123 = smul.addr %s2122, 4
        %s2124 = smul.addr %s2123, 8
        %s2125 = scalar_lea.vmem %s9, %s2124
      $region68: #{_lambda_.8} parent=63 // pred_fallthru
        _
    $region64: #{_lambda_.8} parent=5 // pred_fallthru
      _
  $region6: #{_lambda_.8} parent=0 // loop_footer
    %s19 = sadd.s32 1, %s15
  $region7: #{_lambda_.8} parent=0 // loop_footer_branch
    %14 = sbr.rel target = $region3
  $region8: #{_lambda_.8} parent=0 // loop_exit
    _

// kernel: _lambda_.9
$region0: #{_lambda_.9}
  #allocation0 [shape = 'u32[]', space=smem, size = 0x4, offset = 0x4, fixed_abs, tag = 'smem constant byte address 0x4 - core index']
  #allocation1 [shape = 'u32[144,128]{1,0:T(1,128)}', space=vmem, size = 0x12000, scoped, tag = 'internal scratch']
  %s0 = inlined_call_operand.vmem [shape: f32[512,16], index: 0, kind: input, shape index: {}]
  %s1 = inlined_call_operand.vmem [shape: f32[512,16], index: 1, kind: input, shape index: {}]
  %s2 = inlined_call_operand.vmem [shape: f32[512,16], index: 2, kind: input, shape index: {}]
  %s3 = inlined_call_operand.vmem [shape: f32[512,16], index: 3, kind: input, shape index: {}]
  %s4 = inlined_call_operand.vmem [shape: f32[512,64], index: 4, kind: input, shape index: {}]
  %s5 = inlined_call_operand.vmem [shape: bf16[16,64], index: 5, kind: input, shape index: {}]
  %s6 = inlined_call_operand.vmem [shape: bf16[16,64], index: 6, kind: input, shape index: {}]
  %s7 = inlined_call_operand.vmem [shape: bf16[16,64], index: 7, kind: input, shape index: {}]
  %s8 = inlined_call_operand.vmem [shape: bf16[16,64], index: 8, kind: input, shape index: {}]
  %s9 = inlined_call_operand.vmem [shape: f32[1,64], index: 9, kind: input, shape index: {}]
  %s10 = inlined_call_operand.hbm [shape: f32[512,64], index: 10, kind: output, shape index: {}]
  %s11 = sld [smem:[#allocation0]]
  $region73: #{_lambda_.9} parent=0
    _
  %s13 = ssub.s32 1, %s11
  %s14 = scalar_select 0, %s13, %s11
  $region1: #{_lambda_.9} parent=0
    #allocation2 [shape = 'u8[262144]{0}', space=vmem, size = 0x40000, scoped, tag = 'output window, operand 0']
    #allocation3 [shape = 's32[2]{0}', space=sflag, size = 0x8, scoped, tag = 'scoped memory for _lambda_.9']
    %15 = vsyncpa [#allocation3], 0
    %s16 = scalar_lea.sflag [#allocation3], 1
    %17 = vsyncpa %s16, 0
    loop: start=0, step=1, limit=4
    $region2: #{_lambda_.9} parent=1 // loop_pre_header
      _
    $region3: #{_lambda_.9} parent=1 // loop_header
      %s19 = sphi 0, %s23
      %p20 = scmp.ge.s32.totalorder %s19, 4
      %s29 = sphi 0, %s31
      %s32 = sphi 0, %s29
      %s33 = sphi 0, %s32
      %s49 = sphi 0, %s33
      %s55 = sphi 0, %s57
      %s58 = sphi 0, %s55
      %s59 = sphi 0, %s58
      %s75 = sphi 0, %s59
      %s81 = sphi 0, %s83
      %s84 = sphi 0, %s81
      %s85 = sphi 0, %s84
      %s101 = sphi 0, %s85
      %s107 = sphi 0, %s109
      %s110 = sphi 0, %s107
      %s111 = sphi 0, %s110
      %s127 = sphi 0, %s111
      %s133 = sphi 0, %s135
      %s136 = sphi 0, %s133
      %s137 = sphi 0, %s136
      %s153 = sphi 0, %s137
      %s157 = sphi 0, %s157
      %s159 = sphi 0, %s157
      %s160 = sphi 0, %s159
      %s174 = sphi 0, %s160
      %s178 = sphi 0, %s178
      %s180 = sphi 0, %s178
      %s181 = sphi 0, %s180
      %s195 = sphi 0, %s181
      %s199 = sphi 0, %s199
      %s201 = sphi 0, %s199
      %s202 = sphi 0, %s201
      %s216 = sphi 0, %s202
      %s220 = sphi 0, %s220
      %s222 = sphi 0, %s220
      %s223 = sphi 0, %s222
      %s237 = sphi 0, %s223
      %s241 = sphi 0, %s241
      %s243 = sphi 0, %s241
      %s244 = sphi 0, %s243
      %s258 = sphi 0, %s244
      %s264 = sphi 0, %s266
      %s267 = sphi 0, %s264
      %s268 = sphi 0, %s267
      %s284 = sphi 0, %s268
    $region4: #{_lambda_.9} parent=1 // loop_header_branch
      %22 = sbr.rel (%p20) target = $region8
    $region5: #{_lambda_.9} parent=1 // loop_body
      %s24 = ssub.s32 %s19, 1
      %s25 = ssub.s32 %s19, 2
      %s26 = sadd.s32 %s19, 1
      %s27 = ssub.s32 %s19, %s26
      %p28 = scmp.eq.s32.totalorder %s27, 0
      %s30 = sadd.s32 %s29, 1
      %s31 = scalar_select %p28, %s29, %s30
      %p34 = pneg %p28
      %p35 = scmp.eq.s32.totalorder %s19, 1
      %p36 = por %p34, %p35
      %p37 = scmp.ne.s32.totalorder %s29, %s32
      %p38 = scmp.eq.s32.totalorder %s19, 0
      %p39 = por %p37, %p38
      %p40 = scmp.ne.s32.totalorder %s29, %s32
      %p41 = scmp.eq.s32.totalorder %s24, 1
      %p42 = por %p40, %p41
      %p43 = scmp.ne.s32.totalorder %s32, %s33
      %p44 = scmp.eq.s32.totalorder %s24, 0
      %p45 = por %p43, %p44
      %p46 = scmp.ne.s32.totalorder %s32, %s33
      %p47 = scmp.eq.s32.totalorder %s25, 1
      %p48 = por %p46, %p47
      %p50 = scmp.ne.s32.totalorder %s33, %s49
      %p51 = scmp.eq.s32.totalorder %s25, 0
      %p52 = por %p50, %p51
      %s53 = ssub.s32 %s19, %s26
      %p54 = scmp.eq.s32.totalorder %s53, 0
      %s56 = sadd.s32 %s55, 1
      %s57 = scalar_select %p54, %s55, %s56
      %p60 = pneg %p54
      %p61 = scmp.eq.s32.totalorder %s19, 1
      %p62 = por %p60, %p61
      %p63 = scmp.ne.s32.totalorder %s55, %s58
      %p64 = scmp.eq.s32.totalorder %s19, 0
      %p65 = por %p63, %p64
      %p66 = scmp.ne.s32.totalorder %s55, %s58
      %p67 = scmp.eq.s32.totalorder %s24, 1
      %p68 = por %p66, %p67
      %p69 = scmp.ne.s32.totalorder %s58, %s59
      %p70 = scmp.eq.s32.totalorder %s24, 0
      %p71 = por %p69, %p70
      %p72 = scmp.ne.s32.totalorder %s58, %s59
      %p73 = scmp.eq.s32.totalorder %s25, 1
      %p74 = por %p72, %p73
      %p76 = scmp.ne.s32.totalorder %s59, %s75
      %p77 = scmp.eq.s32.totalorder %s25, 0
      %p78 = por %p76, %p77
      %s79 = ssub.s32 %s19, %s26
      %p80 = scmp.eq.s32.totalorder %s79, 0
      %s82 = sadd.s32 %s81, 1
      %s83 = scalar_select %p80, %s81, %s82
      %p86 = pneg %p80
      %p87 = scmp.eq.s32.totalorder %s19, 1
      %p88 = por %p86, %p87
      %p89 = scmp.ne.s32.totalorder %s81, %s84
      %p90 = scmp.eq.s32.totalorder %s19, 0
      %p91 = por %p89, %p90
      %p92 = scmp.ne.s32.totalorder %s81, %s84
      %p93 = scmp.eq.s32.totalorder %s24, 1
      %p94 = por %p92, %p93
      %p95 = scmp.ne.s32.totalorder %s84, %s85
      %p96 = scmp.eq.s32.totalorder %s24, 0
      %p97 = por %p95, %p96
      %p98 = scmp.ne.s32.totalorder %s84, %s85
      %p99 = scmp.eq.s32.totalorder %s25, 1
      %p100 = por %p98, %p99
      %p102 = scmp.ne.s32.totalorder %s85, %s101
      %p103 = scmp.eq.s32.totalorder %s25, 0
      %p104 = por %p102, %p103
      %s105 = ssub.s32 %s19, %s26
      %p106 = scmp.eq.s32.totalorder %s105, 0
      %s108 = sadd.s32 %s107, 1
      %s109 = scalar_select %p106, %s107, %s108
      %p112 = pneg %p106
      %p113 = scmp.eq.s32.totalorder %s19, 1
      %p114 = por %p112, %p113
      %p115 = scmp.ne.s32.totalorder %s107, %s110
      %p116 = scmp.eq.s32.totalorder %s19, 0
      %p117 = por %p115, %p116
      %p118 = scmp.ne.s32.totalorder %s107, %s110
      %p119 = scmp.eq.s32.totalorder %s24, 1
      %p120 = por %p118, %p119
      %p121 = scmp.ne.s32.totalorder %s110, %s111
      %p122 = scmp.eq.s32.totalorder %s24, 0
      %p123 = por %p121, %p122
      %p124 = scmp.ne.s32.totalorder %s110, %s111
      %p125 = scmp.eq.s32.totalorder %s25, 1
      %p126 = por %p124, %p125
      %p128 = scmp.ne.s32.totalorder %s111, %s127
      %p129 = scmp.eq.s32.totalorder %s25, 0
      %p130 = por %p128, %p129
      %s131 = ssub.s32 %s19, %s26
      %p132 = scmp.eq.s32.totalorder %s131, 0
      %s134 = sadd.s32 %s133, 1
      %s135 = scalar_select %p132, %s133, %s134
      %p138 = pneg %p132
      %p139 = scmp.eq.s32.totalorder %s19, 1
      %p140 = por %p138, %p139
      %p141 = scmp.ne.s32.totalorder %s133, %s136
      %p142 = scmp.eq.s32.totalorder %s19, 0
      %p143 = por %p141, %p142
      %p144 = scmp.ne.s32.totalorder %s133, %s136
      %p145 = scmp.eq.s32.totalorder %s24, 1
      %p146 = por %p144, %p145
      %p147 = scmp.ne.s32.totalorder %s136, %s137
      %p148 = scmp.eq.s32.totalorder %s24, 0
      %p149 = por %p147, %p148
      %p150 = scmp.ne.s32.totalorder %s136, %s137
      %p151 = scmp.eq.s32.totalorder %s25, 1
      %p152 = por %p150, %p151
      %p154 = scmp.ne.s32.totalorder %s137, %s153
      %p155 = scmp.eq.s32.totalorder %s25, 0
      %p156 = por %p154, %p155
      %s158 = sadd.s32 %s157, 1
      %p161 = scmp.eq.s32.totalorder %s19, 1
      %p162 = scmp.ne.s32.totalorder %s157, %s159
      %p163 = scmp.eq.s32.totalorder %s19, 0
      %p164 = por %p162, %p163
      %p165 = scmp.ne.s32.totalorder %s157, %s159
      %p166 = scmp.eq.s32.totalorder %s24, 1
      %p167 = por %p165, %p166
      %p168 = scmp.ne.s32.totalorder %s159, %s160
      %p169 = scmp.eq.s32.totalorder %s24, 0
      %p170 = por %p168, %p169
      %p171 = scmp.ne.s32.totalorder %s159, %s160
      %p172 = scmp.eq.s32.totalorder %s25, 1
      %p173 = por %p171, %p172
      %p175 = scmp.ne.s32.totalorder %s160, %s174
      %p176 = scmp.eq.s32.totalorder %s25, 0
      %p177 = por %p175, %p176
      %s179 = sadd.s32 %s178, 1
      %p182 = scmp.eq.s32.totalorder %s19, 1
      %p183 = scmp.ne.s32.totalorder %s178, %s180
      %p184 = scmp.eq.s32.totalorder %s19, 0
      %p185 = por %p183, %p184
      %p186 = scmp.ne.s32.totalorder %s178, %s180
      %p187 = scmp.eq.s32.totalorder %s24, 1
      %p188 = por %p186, %p187
      %p189 = scmp.ne.s32.totalorder %s180, %s181
      %p190 = scmp.eq.s32.totalorder %s24, 0
      %p191 = por %p189, %p190
      %p192 = scmp.ne.s32.totalorder %s180, %s181
      %p193 = scmp.eq.s32.totalorder %s25, 1
      %p194 = por %p192, %p193
      %p196 = scmp.ne.s32.totalorder %s181, %s195
      %p197 = scmp.eq.s32.totalorder %s25, 0
      %p198 = por %p196, %p197
      %s200 = sadd.s32 %s199, 1
      %p203 = scmp.eq.s32.totalorder %s19, 1
      %p204 = scmp.ne.s32.totalorder %s199, %s201
      %p205 = scmp.eq.s32.totalorder %s19, 0
      %p206 = por %p204, %p205
      %p207 = scmp.ne.s32.totalorder %s199, %s201
      %p208 = scmp.eq.s32.totalorder %s24, 1
      %p209 = por %p207, %p208
      %p210 = scmp.ne.s32.totalorder %s201, %s202
      %p211 = scmp.eq.s32.totalorder %s24, 0
      %p212 = por %p210, %p211
      %p213 = scmp.ne.s32.totalorder %s201, %s202
      %p214 = scmp.eq.s32.totalorder %s25, 1
      %p215 = por %p213, %p214
      %p217 = scmp.ne.s32.totalorder %s202, %s216
      %p218 = scmp.eq.s32.totalorder %s25, 0
      %p219 = por %p217, %p218
      %s221 = sadd.s32 %s220, 1
      %p224 = scmp.eq.s32.totalorder %s19, 1
      %p225 = scmp.ne.s32.totalorder %s220, %s222
      %p226 = scmp.eq.s32.totalorder %s19, 0
      %p227 = por %p225, %p226
      %p228 = scmp.ne.s32.totalorder %s220, %s222
      %p229 = scmp.eq.s32.totalorder %s24, 1
      %p230 = por %p228, %p229
      %p231 = scmp.ne.s32.totalorder %s222, %s223
      %p232 = scmp.eq.s32.totalorder %s24, 0
      %p233 = por %p231, %p232
      %p234 = scmp.ne.s32.totalorder %s222, %s223
      %p235 = scmp.eq.s32.totalorder %s25, 1
      %p236 = por %p234, %p235
      %p238 = scmp.ne.s32.totalorder %s223, %s237
      %p239 = scmp.eq.s32.totalorder %s25, 0
      %p240 = por %p238, %p239
      %s242 = sadd.s32 %s241, 1
      %p245 = scmp.eq.s32.totalorder %s19, 1
      %p246 = scmp.ne.s32.totalorder %s241, %s243
      %p247 = scmp.eq.s32.totalorder %s19, 0
      %p248 = por %p246, %p247
      %p249 = scmp.ne.s32.totalorder %s241, %s243
      %p250 = scmp.eq.s32.totalorder %s24, 1
      %p251 = por %p249, %p250
      %p252 = scmp.ne.s32.totalorder %s243, %s244
      %p253 = scmp.eq.s32.totalorder %s24, 0
      %p254 = por %p252, %p253
      %p255 = scmp.ne.s32.totalorder %s243, %s244
      %p256 = scmp.eq.s32.totalorder %s25, 1
      %p257 = por %p255, %p256
      %p259 = scmp.ne.s32.totalorder %s244, %s258
      %p260 = scmp.eq.s32.totalorder %s25, 0
      %p261 = por %p259, %p260
      %s262 = ssub.s32 %s19, %s26
      %p263 = scmp.eq.s32.totalorder %s262, 0
      %s265 = sadd.s32 %s264, 1
      %s266 = scalar_select %p263, %s264, %s265
      %p269 = pneg %p263
      %p270 = scmp.eq.s32.totalorder %s19, 1
      %p271 = por %p269, %p270
      %p272 = scmp.ne.s32.totalorder %s264, %s267
      %p273 = scmp.eq.s32.totalorder %s19, 0
      %p274 = por %p272, %p273
      %p275 = scmp.ne.s32.totalorder %s264, %s267
      %p276 = scmp.eq.s32.totalorder %s24, 1
      %p277 = por %p275, %p276
      %p278 = scmp.ne.s32.totalorder %s267, %s268
      %p279 = scmp.eq.s32.totalorder %s24, 0
      %p280 = por %p278, %p279
      %p281 = scmp.ne.s32.totalorder %s267, %s268
      %p282 = scmp.eq.s32.totalorder %s25, 1
      %p283 = por %p281, %p282
      %p285 = scmp.ne.s32.totalorder %s268, %s284
      %p286 = scmp.eq.s32.totalorder %s25, 0
      %p287 = por %p285, %p286
      %p288 = scmp.le.s32.totalorder 1, %s19
      %p289 = scmp.lt.s32.totalorder %s19, 3
      %p290 = pnand %p288, %p289
      %p291 = pneg %p290
      // Predicated region
      $region9: #{_lambda_.9} parent=5 // pred_check
        _
      $region10: #{_lambda_.9} parent=5 // pred_check_branch
        %293 = sbr.rel (%p290) target = $region12
      $region11: #{_lambda_.9} parent=5 // pred_region
        %s294 = ssub.s32 %s19, 1
        // Predicated region
        $region13: #{_lambda_.9} parent=11 // pred_check
          %p295 = pneg %p170
        $region14: #{_lambda_.9} parent=11 // pred_check_branch
          %297 = sbr.rel (%p295) target = $region16
        $region15: #{_lambda_.9} parent=11 // pred_region
          _
        $region16: #{_lambda_.9} parent=11 // pred_fallthru
          _
        // Predicated region
        $region17: #{_lambda_.9} parent=11 // pred_check
          %p298 = pneg %p191
        $region18: #{_lambda_.9} parent=11 // pred_check_branch
          %300 = sbr.rel (%p298) target = $region20
        $region19: #{_lambda_.9} parent=11 // pred_region
          _
        $region20: #{_lambda_.9} parent=11 // pred_fallthru
          _
        // Predicated region
        $region21: #{_lambda_.9} parent=11 // pred_check
          %p301 = pneg %p212
        $region22: #{_lambda_.9} parent=11 // pred_check_branch
          %303 = sbr.rel (%p301) target = $region24
        $region23: #{_lambda_.9} parent=11 // pred_region
          _
        $region24: #{_lambda_.9} parent=11 // pred_fallthru
          _
        // Predicated region
        $region25: #{_lambda_.9} parent=11 // pred_check
          %p304 = pneg %p233
        $region26: #{_lambda_.9} parent=11 // pred_check_branch
          %306 = sbr.rel (%p304) target = $region28
        $region27: #{_lambda_.9} parent=11 // pred_region
          _
        $region28: #{_lambda_.9} parent=11 // pred_fallthru
          _
        // Predicated region
        $region29: #{_lambda_.9} parent=11 // pred_check
          %p307 = pneg %p254
        $region30: #{_lambda_.9} parent=11 // pred_check_branch
          %309 = sbr.rel (%p307) target = $region32
        $region31: #{_lambda_.9} parent=11 // pred_region
          _
        $region32: #{_lambda_.9} parent=11 // pred_fallthru
          _
      $region12: #{_lambda_.9} parent=5 // pred_fallthru
        _
      %p310 = scmp.lt.s32.totalorder %s19, 2
      // Predicated region
      $region33: #{_lambda_.9} parent=5 // pred_check
        %p311 = pneg %p310
      $region34: #{_lambda_.9} parent=5 // pred_check_branch
        %313 = sbr.rel (%p311) target = $region36
      $region35: #{_lambda_.9} parent=5 // pred_region
        // Predicated region
        $region37: #{_lambda_.9} parent=35 // pred_check
          %p314 = pneg %p39
        $region38: #{_lambda_.9} parent=35 // pred_check_branch
          %316 = sbr.rel (%p314) target = $region40
        $region39: #{_lambda_.9} parent=35 // pred_region
          %s317 = smul.u32 32, %s19
          %p318 = scmp.lt.s32.totalorder %s317, 63
          %s319 = scalar_select %p318, %s317, 63
          %s320 = smul.addr %s319, 8
          %s321 = scalar_lea.vmem %s0, %s320
          %s322 = smul.u32 32, %s19
        $region40: #{_lambda_.9} parent=35 // pred_fallthru
          _
        // Predicated region
        $region41: #{_lambda_.9} parent=35 // pred_check
          %p323 = pneg %p65
        $region42: #{_lambda_.9} parent=35 // pred_check_branch
          %325 = sbr.rel (%p323) target = $region44
        $region43: #{_lambda_.9} parent=35 // pred_region
          %s326 = smul.u32 32, %s19
          %p327 = scmp.lt.s32.totalorder %s326, 63
          %s328 = scalar_select %p327, %s326, 63
          %s329 = smul.addr %s328, 8
          %s330 = scalar_lea.vmem %s1, %s329
          %s331 = smul.u32 32, %s19
        $region44: #{_lambda_.9} parent=35 // pred_fallthru
          _
        // Predicated region
        $region45: #{_lambda_.9} parent=35 // pred_check
          %p332 = pneg %p91
        $region46: #{_lambda_.9} parent=35 // pred_check_branch
          %334 = sbr.rel (%p332) target = $region48
        $region47: #{_lambda_.9} parent=35 // pred_region
          %s335 = smul.u32 32, %s19
          %p336 = scmp.lt.s32.totalorder %s335, 63
          %s337 = scalar_select %p336, %s335, 63
          %s338 = smul.addr %s337, 8
          %s339 = scalar_lea.vmem %s2, %s338
          %s340 = smul.u32 32, %s19
        $region48: #{_lambda_.9} parent=35 // pred_fallthru
          _
        // Predicated region
        $region49: #{_lambda_.9} parent=35 // pred_check
          %p341 = pneg %p117
        $region50: #{_lambda_.9} parent=35 // pred_check_branch
          %343 = sbr.rel (%p341) target = $region52
        $region51: #{_lambda_.9} parent=35 // pred_region
          %s344 = smul.u32 32, %s19
          %p345 = scmp.lt.s32.totalorder %s344, 63
          %s346 = scalar_select %p345, %s344, 63
          %s347 = smul.addr %s346, 8
          %s348 = scalar_lea.vmem %s3, %s347
          %s349 = smul.u32 32, %s19
        $region52: #{_lambda_.9} parent=35 // pred_fallthru
          _
        // Predicated region
        $region53: #{_lambda_.9} parent=35 // pred_check
          %p350 = pneg %p143
        $region54: #{_lambda_.9} parent=35 // pred_check_branch
          %352 = sbr.rel (%p350) target = $region56
        $region55: #{_lambda_.9} parent=35 // pred_region
          %s353 = smul.u32 32, %s19
          %p354 = scmp.lt.s32.totalorder %s353, 63
          %s355 = scalar_select %p354, %s353, 63
          %s356 = smul.addr %s355, 8
          %s357 = scalar_lea.vmem %s4, %s356
          %s358 = smul.u32 32, %s19
        $region56: #{_lambda_.9} parent=35 // pred_fallthru
          _
      $region36: #{_lambda_.9} parent=5 // pred_fallthru
        _
      %p359 = scmp.le.s32.totalorder 1, %s19
      %p360 = scmp.lt.s32.totalorder %s19, 3
      %p361 = pnand %p359, %p360
      %p362 = pneg %p361
      // Predicated region
      $region57: #{_lambda_.9} parent=5 // pred_check
        _
      $region58: #{_lambda_.9} parent=5 // pred_check_branch
        %364 = sbr.rel (%p361) target = $region60
      $region59: #{_lambda_.9} parent=5 // pred_region
        %s365 = ssub.s32 %s19, 1
        %s366 = smul.u32 32, %s24
        %p367 = scmp.lt.s32.totalorder %s366, 63
        %s368 = scalar_select %p367, %s366, 63
        %s369 = smul.addr %s368, 8
        %s370 = scalar_lea.vmem %s0, %s369
        %p371 = pneg %p45
        %p372 = pneg %p42
        %s373 = smul.u32 32, %s24
        %p374 = scmp.lt.s32.totalorder %s373, 63
        %s375 = scalar_select %p374, %s373, 63
        %s376 = smul.addr %s375, 8
        %s377 = scalar_lea.vmem %s1, %s376
        %p378 = pneg %p71
        %p379 = pneg %p68
        %s380 = smul.u32 32, %s24
        %p381 = scmp.lt.s32.totalorder %s380, 63
        %s382 = scalar_select %p381, %s380, 63
        %s383 = smul.addr %s382, 8
        %s384 = scalar_lea.vmem %s2, %s383
        %p385 = pneg %p97
        %p386 = pneg %p94
        %s387 = smul.u32 32, %s24
        %p388 = scmp.lt.s32.totalorder %s387, 63
        %s389 = scalar_select %p388, %s387, 63
        %s390 = smul.addr %s389, 8
        %s391 = scalar_lea.vmem %s3, %s390
        %p392 = pneg %p123
        %p393 = pneg %p120
        %s394 = smul.u32 32, %s24
        %p395 = scmp.lt.s32.totalorder %s394, 63
        %s396 = scalar_select %p395, %s394, 63
        %s397 = smul.addr %s396, 8
        %s398 = scalar_lea.vmem %s4, %s397
        %p399 = pneg %p149
        %p400 = pneg %p146
        %p401 = pneg %p170
        %p402 = pneg %p167
        %p403 = pneg %p191
        %p404 = pneg %p188
        %p405 = pneg %p212
        %p406 = pneg %p209
        %p407 = pneg %p233
        %p408 = pneg %p230
        %p409 = pneg %p254
        %p410 = pneg %p251
        %p411 = pneg %p280
        %p412 = pneg %p277
        %s413 = sand.u32 %s267, 1
        %s414 = scalar_lea.sflag [#allocation3], %s413
        %s415 = sand.u32 %s267, 1
        %s416 = smul.addr %s415, 256
        %s417 = scalar_lea.vmem [#allocation2], %s416
        %s418 = smul.u32 32, %s24
        %p419 = scmp.lt.s32.totalorder %s418, 63
        %s420 = scalar_select %p419, %s418, 63
        %s421 = smul.addr %s420, 8
        %s422 = scalar_lea.vmem %s0, %s421
        %s423 = smul.u32 32, %s24
        %s424 = smul.u32 32, %s24
        %p425 = scmp.lt.s32.totalorder %s424, 63
        %s426 = scalar_select %p425, %s424, 63
        %s427 = smul.addr %s426, 8
        %s428 = scalar_lea.vmem %s1, %s427
        %s429 = smul.u32 32, %s24
        %s430 = smul.u32 32, %s24
        %p431 = scmp.lt.s32.totalorder %s430, 63
        %s432 = scalar_select %p431, %s430, 63
        %s433 = smul.addr %s432, 8
        %s434 = scalar_lea.vmem %s2, %s433
        %s435 = smul.u32 32, %s24
        %s436 = smul.u32 32, %s24
        %p437 = scmp.lt.s32.totalorder %s436, 63
        %s438 = scalar_select %p437, %s436, 63
        %s439 = smul.addr %s438, 8
        %s440 = scalar_lea.vmem %s3, %s439
        %s441 = smul.u32 32, %s24
        %s442 = smul.u32 32, %s24
        %p443 = scmp.lt.s32.totalorder %s442, 63
        %s444 = scalar_select %p443, %s442, 63
        %s445 = smul.addr %s444, 8
        %s446 = scalar_lea.vmem %s4, %s445
        %s447 = smul.u32 32, %s24
        %s448 = smul.u32 32, %s24
        %v450 = vld [vmem:[%s446] sm:$0xff]
        %v451 = vld [vmem:[%s446 + $0x8] sm:$0xff]
        %v452 = vld [vmem:[%s446 + $0x10] sm:$0xff]
        %v453 = vld [vmem:[%s446 + $0x18] sm:$0xff]
        %v454 = vld [vmem:[%s446 + $0x20] sm:$0xff]
        %v455 = vld [vmem:[%s446 + $0x28] sm:$0xff]
        %v456 = vld [vmem:[%s446 + $0x30] sm:$0xff]
        %v457 = vld [vmem:[%s446 + $0x38] sm:$0xff]
        %v458 = vld [vmem:[%s446 + $0x40] sm:$0xff]
        %v459 = vld [vmem:[%s446 + $0x48] sm:$0xff]
        %v460 = vld [vmem:[%s446 + $0x50] sm:$0xff]
        %v461 = vld [vmem:[%s446 + $0x58] sm:$0xff]
        %v462 = vld [vmem:[%s446 + $0x60] sm:$0xff]
        %v463 = vld [vmem:[%s446 + $0x68] sm:$0xff]
        %v464 = vld [vmem:[%s446 + $0x70] sm:$0xff]
        %v465 = vld [vmem:[%s446 + $0x78] sm:$0xff]
        %v466 = vld [vmem:[%s446 + $0x80] sm:$0xff]
        %v467 = vld [vmem:[%s446 + $0x88] sm:$0xff]
        %v468 = vld [vmem:[%s446 + $0x90] sm:$0xff]
        %v469 = vld [vmem:[%s446 + $0x98] sm:$0xff]
        %v470 = vld [vmem:[%s446 + $0xa0] sm:$0xff]
        %v471 = vld [vmem:[%s446 + $0xa8] sm:$0xff]
        %v472 = vld [vmem:[%s446 + $0xb0] sm:$0xff]
        %v473 = vld [vmem:[%s446 + $0xb8] sm:$0xff]
        %v474 = vld [vmem:[%s446 + $0xc0] sm:$0xff]
        %v475 = vld [vmem:[%s446 + $0xc8] sm:$0xff]
        %v476 = vld [vmem:[%s446 + $0xd0] sm:$0xff]
        %v477 = vld [vmem:[%s446 + $0xd8] sm:$0xff]
        %v478 = vld [vmem:[%s446 + $0xe0] sm:$0xff]
        %v479 = vld [vmem:[%s446 + $0xe8] sm:$0xff]
        %v480 = vld [vmem:[%s446 + $0xf0] sm:$0xff]
        %v481 = vld [vmem:[%s446 + $0xf8] sm:$0xff]
        %v482 = vld [vmem:[%s422] sm:$0xff]
        %v483 = vld [vmem:[%s422 + $0x8] sm:$0xff]
        %v484 = vld [vmem:[%s422 + $0x10] sm:$0xff]
        %v485 = vld [vmem:[%s422 + $0x18] sm:$0xff]
        %v486 = vld [vmem:[%s422 + $0x20] sm:$0xff]
        %v487 = vld [vmem:[%s422 + $0x28] sm:$0xff]
        %v488 = vld [vmem:[%s422 + $0x30] sm:$0xff]
        %v489 = vld [vmem:[%s422 + $0x38] sm:$0xff]
        %v490 = vld [vmem:[%s422 + $0x40] sm:$0xff]
        %v491 = vld [vmem:[%s422 + $0x48] sm:$0xff]
        %v492 = vld [vmem:[%s422 + $0x50] sm:$0xff]
        %v493 = vld [vmem:[%s422 + $0x58] sm:$0xff]
        %v494 = vld [vmem:[%s422 + $0x60] sm:$0xff]
        %v495 = vld [vmem:[%s422 + $0x68] sm:$0xff]
        %v496 = vld [vmem:[%s422 + $0x70] sm:$0xff]
        %v497 = vld [vmem:[%s422 + $0x78] sm:$0xff]
        %v498 = vld [vmem:[%s422 + $0x80] sm:$0xff]
        %v499 = vld [vmem:[%s422 + $0x88] sm:$0xff]
        %v500 = vld [vmem:[%s422 + $0x90] sm:$0xff]
        %v501 = vld [vmem:[%s422 + $0x98] sm:$0xff]
        %v502 = vld [vmem:[%s422 + $0xa0] sm:$0xff]
        %v503 = vld [vmem:[%s422 + $0xa8] sm:$0xff]
        %v504 = vld [vmem:[%s422 + $0xb0] sm:$0xff]
        %v505 = vld [vmem:[%s422 + $0xb8] sm:$0xff]
        %v506 = vld [vmem:[%s422 + $0xc0] sm:$0xff]
        %v507 = vld [vmem:[%s422 + $0xc8] sm:$0xff]
        %v508 = vld [vmem:[%s422 + $0xd0] sm:$0xff]
        %v509 = vld [vmem:[%s422 + $0xd8] sm:$0xff]
        %v510 = vld [vmem:[%s422 + $0xe0] sm:$0xff]
        %v511 = vld [vmem:[%s422 + $0xe8] sm:$0xff]
        %v512 = vld [vmem:[%s422 + $0xf0] sm:$0xff]
        %v513 = vld [vmem:[%s422 + $0xf8] sm:$0xff]
        %v514 = vmul.f32 %v482, %v450
        %v515 = vmul.f32 %v483, %v451
        %v516 = vmul.f32 %v484, %v452
        %v517 = vmul.f32 %v485, %v453
        %v518 = vmul.f32 %v486, %v454
        %v519 = vmul.f32 %v487, %v455
        %v520 = vmul.f32 %v488, %v456
        %v521 = vmul.f32 %v489, %v457
        %v522 = vmul.f32 %v490, %v458
        %v523 = vmul.f32 %v491, %v459
        %v524 = vmul.f32 %v492, %v460
        %v525 = vmul.f32 %v493, %v461
        %v526 = vmul.f32 %v494, %v462
        %v527 = vmul.f32 %v495, %v463
        %v528 = vmul.f32 %v496, %v464
        %v529 = vmul.f32 %v497, %v465
        %v530 = vmul.f32 %v498, %v466
        %v531 = vmul.f32 %v499, %v467
        %v532 = vmul.f32 %v500, %v468
        %v533 = vmul.f32 %v501, %v469
        %v534 = vmul.f32 %v502, %v470
        %v535 = vmul.f32 %v503, %v471
        %v536 = vmul.f32 %v504, %v472
        %v537 = vmul.f32 %v505, %v473
        %v538 = vmul.f32 %v506, %v474
        %v539 = vmul.f32 %v507, %v475
        %v540 = vmul.f32 %v508, %v476
        %v541 = vmul.f32 %v509, %v477
        %v542 = vmul.f32 %v510, %v478
        %v543 = vmul.f32 %v511, %v479
        %v544 = vmul.f32 %v512, %v480
        %v545 = vmul.f32 %v513, %v481
        %v546 = vpack.c.bf16 %v515, %v514
        %v547 = vpack.c.bf16 %v517, %v516
        %v548 = vpack.c.bf16 %v519, %v518
        %v549 = vpack.c.bf16 %v521, %v520
        %v550 = vpack.c.bf16 %v523, %v522
        %v551 = vpack.c.bf16 %v525, %v524
        %v552 = vpack.c.bf16 %v527, %v526
        %v553 = vpack.c.bf16 %v529, %v528
        %v554 = vpack.c.bf16 %v531, %v530
        %v555 = vpack.c.bf16 %v533, %v532
        %v556 = vpack.c.bf16 %v535, %v534
        %v557 = vpack.c.bf16 %v537, %v536
        %v558 = vpack.c.bf16 %v539, %v538
        %v559 = vpack.c.bf16 %v541, %v540
        %v560 = vpack.c.bf16 %v543, %v542
        %v561 = vpack.c.bf16 %v545, %v544
        %v562 = vld [vmem:[%s5] sm:$0xf]
        %v563 = vld [vmem:[%s5 + $0x4] sm:$0xf]
        %v564 = vld [vmem:[%s428] sm:$0xff]
        %v565 = vld [vmem:[%s428 + $0x8] sm:$0xff]
        %v566 = vld [vmem:[%s428 + $0x10] sm:$0xff]
        %v567 = vld [vmem:[%s428 + $0x18] sm:$0xff]
        %v568 = vld [vmem:[%s428 + $0x20] sm:$0xff]
        %v569 = vld [vmem:[%s428 + $0x28] sm:$0xff]
        %v570 = vld [vmem:[%s428 + $0x30] sm:$0xff]
        %v571 = vld [vmem:[%s428 + $0x38] sm:$0xff]
        %v572 = vld [vmem:[%s428 + $0x40] sm:$0xff]
        %v573 = vld [vmem:[%s428 + $0x48] sm:$0xff]
        %v574 = vld [vmem:[%s428 + $0x50] sm:$0xff]
        %v575 = vld [vmem:[%s428 + $0x58] sm:$0xff]
        %v576 = vld [vmem:[%s428 + $0x60] sm:$0xff]
        %v577 = vld [vmem:[%s428 + $0x68] sm:$0xff]
        %v578 = vld [vmem:[%s428 + $0x70] sm:$0xff]
        %v579 = vld [vmem:[%s428 + $0x78] sm:$0xff]
        %v580 = vld [vmem:[%s428 + $0x80] sm:$0xff]
        %v581 = vld [vmem:[%s428 + $0x88] sm:$0xff]
        %v582 = vld [vmem:[%s428 + $0x90] sm:$0xff]
        %v583 = vld [vmem:[%s428 + $0x98] sm:$0xff]
        %v584 = vld [vmem:[%s428 + $0xa0] sm:$0xff]
        %v585 = vld [vmem:[%s428 + $0xa8] sm:$0xff]
        %v586 = vld [vmem:[%s428 + $0xb0] sm:$0xff]
        %v587 = vld [vmem:[%s428 + $0xb8] sm:$0xff]
        %v588 = vld [vmem:[%s428 + $0xc0] sm:$0xff]
        %v589 = vld [vmem:[%s428 + $0xc8] sm:$0xff]
        %v590 = vld [vmem:[%s428 + $0xd0] sm:$0xff]
        %v591 = vld [vmem:[%s428 + $0xd8] sm:$0xff]
        %v592 = vld [vmem:[%s428 + $0xe0] sm:$0xff]
        %v593 = vld [vmem:[%s428 + $0xe8] sm:$0xff]
        %v594 = vld [vmem:[%s428 + $0xf0] sm:$0xff]
        %v595 = vld [vmem:[%s428 + $0xf8] sm:$0xff]
        %628 = vrot.lane.b32.xlu0 %v450, 112
        %v629 = vpop.permute.xlu0 %628
        %630 = vrot.lane.b32.xlu0 %v451, 112
        %v631 = vpop.permute.xlu0 %630
        %632 = vrot.lane.b32.xlu0 %v452, 112
        %v633 = vpop.permute.xlu0 %632
        %634 = vrot.lane.b32.xlu0 %v453, 112
        %v635 = vpop.permute.xlu0 %634
        %636 = vrot.lane.b32.xlu0 %v454, 112
        %v637 = vpop.permute.xlu0 %636
        %638 = vrot.lane.b32.xlu0 %v455, 112
        %v639 = vpop.permute.xlu0 %638
        %640 = vrot.lane.b32.xlu0 %v456, 112
        %v641 = vpop.permute.xlu0 %640
        %642 = vrot.lane.b32.xlu0 %v457, 112
        %v643 = vpop.permute.xlu0 %642
        %644 = vrot.lane.b32.xlu0 %v458, 112
        %v645 = vpop.permute.xlu0 %644
        %646 = vrot.lane.b32.xlu0 %v459, 112
        %v647 = vpop.permute.xlu0 %646
        %648 = vrot.lane.b32.xlu0 %v460, 112
        %v649 = vpop.permute.xlu0 %648
        %650 = vrot.lane.b32.xlu0 %v461, 112
        %v651 = vpop.permute.xlu0 %650
        %652 = vrot.lane.b32.xlu0 %v462, 112
        %v653 = vpop.permute.xlu0 %652
        %654 = vrot.lane.b32.xlu0 %v463, 112
        %v655 = vpop.permute.xlu0 %654
        %656 = vrot.lane.b32.xlu0 %v464, 112
        %v657 = vpop.permute.xlu0 %656
        %658 = vrot.lane.b32.xlu0 %v465, 112
        %v659 = vpop.permute.xlu0 %658
        %660 = vrot.lane.b32.xlu0 %v466, 112
        %v661 = vpop.permute.xlu0 %660
        %662 = vrot.lane.b32.xlu0 %v467, 112
        %v663 = vpop.permute.xlu0 %662
        %664 = vrot.lane.b32.xlu0 %v468, 112
        %v665 = vpop.permute.xlu0 %664
        %666 = vrot.lane.b32.xlu0 %v469, 112
        %v667 = vpop.permute.xlu0 %666
        %668 = vrot.lane.b32.xlu0 %v470, 112
        %v669 = vpop.permute.xlu0 %668
        %670 = vrot.lane.b32.xlu0 %v471, 112
        %v671 = vpop.permute.xlu0 %670
        %672 = vrot.lane.b32.xlu0 %v472, 112
        %v673 = vpop.permute.xlu0 %672
        %674 = vrot.lane.b32.xlu0 %v473, 112
        %v675 = vpop.permute.xlu0 %674
        %676 = vrot.lane.b32.xlu0 %v474, 112
        %v677 = vpop.permute.xlu0 %676
        %678 = vrot.lane.b32.xlu0 %v475, 112
        %v679 = vpop.permute.xlu0 %678
        %680 = vrot.lane.b32.xlu0 %v476, 112
        %v681 = vpop.permute.xlu0 %680
        %682 = vrot.lane.b32.xlu0 %v477, 112
        %v683 = vpop.permute.xlu0 %682
        %684 = vrot.lane.b32.xlu0 %v478, 112
        %v685 = vpop.permute.xlu0 %684
        %686 = vrot.lane.b32.xlu0 %v479, 112
        %v687 = vpop.permute.xlu0 %686
        %688 = vrot.lane.b32.xlu0 %v480, 112
        %v689 = vpop.permute.xlu0 %688
        %690 = vrot.lane.b32.xlu0 %v481, 112
        %v691 = vpop.permute.xlu0 %690
        %v724 = vmul.f32 %v564, %v629
        %v725 = vmul.f32 %v565, %v631
        %v726 = vmul.f32 %v566, %v633
        %v727 = vmul.f32 %v567, %v635
        %v728 = vmul.f32 %v568, %v637
        %v729 = vmul.f32 %v569, %v639
        %v730 = vmul.f32 %v570, %v641
        %v731 = vmul.f32 %v571, %v643
        %v732 = vmul.f32 %v572, %v645
        %v733 = vmul.f32 %v573, %v647
        %v734 = vmul.f32 %v574, %v649
        %v735 = vmul.f32 %v575, %v651
        %v736 = vmul.f32 %v576, %v653
        %v737 = vmul.f32 %v577, %v655
        %v738 = vmul.f32 %v578, %v657
        %v739 = vmul.f32 %v579, %v659
        %v740 = vmul.f32 %v580, %v661
        %v741 = vmul.f32 %v581, %v663
        %v742 = vmul.f32 %v582, %v665
        %v743 = vmul.f32 %v583, %v667
        %v744 = vmul.f32 %v584, %v669
        %v745 = vmul.f32 %v585, %v671
        %v746 = vmul.f32 %v586, %v673
        %v747 = vmul.f32 %v587, %v675
        %v748 = vmul.f32 %v588, %v677
        %v749 = vmul.f32 %v589, %v679
        %v750 = vmul.f32 %v590, %v681
        %v751 = vmul.f32 %v591, %v683
        %v752 = vmul.f32 %v592, %v685
        %v753 = vmul.f32 %v593, %v687
        %v754 = vmul.f32 %v594, %v689
        %v755 = vmul.f32 %v595, %v691
        %v756 = vpack.c.bf16 %v725, %v724
        %v757 = vpack.c.bf16 %v727, %v726
        %v758 = vpack.c.bf16 %v729, %v728
        %v759 = vpack.c.bf16 %v731, %v730
        %v760 = vpack.c.bf16 %v733, %v732
        %v761 = vpack.c.bf16 %v735, %v734
        %v762 = vpack.c.bf16 %v737, %v736
        %v763 = vpack.c.bf16 %v739, %v738
        %v764 = vpack.c.bf16 %v741, %v740
        %v765 = vpack.c.bf16 %v743, %v742
        %v766 = vpack.c.bf16 %v745, %v744
        %v767 = vpack.c.bf16 %v747, %v746
        %v768 = vpack.c.bf16 %v749, %v748
        %v769 = vpack.c.bf16 %v751, %v750
        %v770 = vpack.c.bf16 %v753, %v752
        %v771 = vpack.c.bf16 %v755, %v754
        %v772 = vld [vmem:[%s6] sm:$0xf]
        %v773 = vld [vmem:[%s6 + $0x4] sm:$0xf]
        %v776 = vunpack.c.l.b16 %v772
        %v777 = vunpack.c.l.b16 %v773
        %v778 = vpack.c.b16 %v777, %v776
        %vm780 = vcmask 130048
        %v782 = vsel %vm780, %v756, 0
        %v785 = vsel %vm780, %v757, 0
        %v788 = vsel %vm780, %v758, 0
        %v791 = vsel %vm780, %v759, 0
        %v794 = vsel %vm780, %v760, 0
        %v797 = vsel %vm780, %v761, 0
        %v800 = vsel %vm780, %v762, 0
        %v803 = vsel %vm780, %v763, 0
        %v806 = vsel %vm780, %v764, 0
        %v809 = vsel %vm780, %v765, 0
        %v812 = vsel %vm780, %v766, 0
        %v815 = vsel %vm780, %v767, 0
        %v818 = vsel %vm780, %v768, 0
        %v821 = vsel %vm780, %v769, 0
        %v824 = vsel %vm780, %v770, 0
        %v827 = vsel %vm780, %v771, 0
        %829 = vmatprep.subr.bf16.mxu0 0
        %830 = vmatpush1.bf16.msra.mxu0 0
        %831 = vmatprep.subr.bf16.mxu0 0
        %832 = vmatpush1.bf16.msra.mxu0 0
        %833 = vmatprep.subr.bf16.mxu0 0
        %834 = vmatpush1.bf16.msra.mxu0 0
        %835 = vmatprep.subr.bf16.mxu0 0
        %836 = vmatpush1.bf16.msra.mxu0 0
        %837 = vmatprep.subr.bf16.mxu0 0
        %838 = vmatpush1.bf16.msra.mxu0 0
        %839 = vmatprep.subr.bf16.mxu0 0
        %840 = vmatpush1.bf16.msra.mxu0 0
        %841 = vmatprep.subr.bf16.mxu0 0
        %842 = vmatpush1.bf16.msra.mxu0 0
        %843 = vmatprep.subr.bf16.mxu0 0
        %844 = vmatpush1.bf16.msra.mxu0 %v778
        %845 = vmatprep.subr.bf16.mxu0 0
        %846 = vmatpush2.bf16.msra.mxu0 0
        %847 = vmatprep.subr.bf16.mxu0 0
        %848 = vmatpush2.bf16.msra.mxu0 0
        %849 = vmatprep.subr.bf16.mxu0 0
        %850 = vmatpush2.bf16.msra.mxu0 0
        %851 = vmatprep.subr.bf16.mxu0 0
        %852 = vmatpush2.bf16.msra.mxu0 0
        %853 = vmatprep.subr.bf16.mxu0 0
        %854 = vmatpush2.bf16.msra.mxu0 0
        %855 = vmatprep.subr.bf16.mxu0 0
        %856 = vmatpush2.bf16.msra.mxu0 0
        %857 = vmatprep.subr.bf16.mxu0 0
        %858 = vmatpush2.bf16.msra.mxu0 0
        %859 = vmatprep.subr.bf16.mxu0 0
        %860 = vmatpush2.bf16.msra.mxu0 0
        %861 = vmatprep.mubr.bf16.mxu0 0
        %862 = vmatmul.mubr.bf16.gmra.mxu0 %v782
        %v863 = vpop.f32.mrf.mxu0
        %v864 = vadd.f32 0.0, %v863
        %v865 = vpop.f32.mrf.mxu0
        %v866 = vpop.f32.mrf.mxu0
        %v867 = vadd.f32 0.0, %v866
        %v868 = vpop.f32.mrf.mxu0
        %869 = vmatprep.mubr.bf16.mxu0 0
        %870 = vmatmul.mubr.bf16.gmra.mxu0 %v785
        %v871 = vpop.f32.mrf.mxu0
        %v872 = vadd.f32 0.0, %v871
        %v873 = vpop.f32.mrf.mxu0
        %v874 = vpop.f32.mrf.mxu0
        %v875 = vadd.f32 0.0, %v874
        %v876 = vpop.f32.mrf.mxu0
        %877 = vmatprep.mubr.bf16.mxu0 0
        %878 = vmatmul.mubr.bf16.gmra.mxu0 %v788
        %v879 = vpop.f32.mrf.mxu0
        %v880 = vadd.f32 0.0, %v879
        %v881 = vpop.f32.mrf.mxu0
        %v882 = vpop.f32.mrf.mxu0
        %v883 = vadd.f32 0.0, %v882
        %v884 = vpop.f32.mrf.mxu0
        %885 = vmatprep.mubr.bf16.mxu0 0
        %886 = vmatmul.mubr.bf16.gmra.mxu0 %v791
        %v887 = vpop.f32.mrf.mxu0
        %v888 = vadd.f32 0.0, %v887
        %v889 = vpop.f32.mrf.mxu0
        %v890 = vpop.f32.mrf.mxu0
        %v891 = vadd.f32 0.0, %v890
        %v892 = vpop.f32.mrf.mxu0
        %893 = vmatprep.mubr.bf16.mxu0 0
        %894 = vmatmul.mubr.bf16.gmra.mxu0 %v794
        %v895 = vpop.f32.mrf.mxu0
        %v896 = vadd.f32 0.0, %v895
        %v897 = vpop.f32.mrf.mxu0
        %v898 = vpop.f32.mrf.mxu0
        %v899 = vadd.f32 0.0, %v898
        %v900 = vpop.f32.mrf.mxu0
        %901 = vmatprep.mubr.bf16.mxu0 0
        %902 = vmatmul.mubr.bf16.gmra.mxu0 %v797
        %v903 = vpop.f32.mrf.mxu0
        %v904 = vadd.f32 0.0, %v903
        %v905 = vpop.f32.mrf.mxu0
        %v906 = vpop.f32.mrf.mxu0
        %v907 = vadd.f32 0.0, %v906
        %v908 = vpop.f32.mrf.mxu0
        %909 = vmatprep.mubr.bf16.mxu0 0
        %910 = vmatmul.mubr.bf16.gmra.mxu0 %v800
        %v911 = vpop.f32.mrf.mxu0
        %v912 = vadd.f32 0.0, %v911
        %v913 = vpop.f32.mrf.mxu0
        %v914 = vpop.f32.mrf.mxu0
        %v915 = vadd.f32 0.0, %v914
        %v916 = vpop.f32.mrf.mxu0
        %917 = vmatprep.mubr.bf16.mxu0 0
        %918 = vmatmul.mubr.bf16.gmra.mxu0 %v803
        %v919 = vpop.f32.mrf.mxu0
        %v920 = vadd.f32 0.0, %v919
        %v921 = vpop.f32.mrf.mxu0
        %v922 = vpop.f32.mrf.mxu0
        %v923 = vadd.f32 0.0, %v922
        %v924 = vpop.f32.mrf.mxu0
        %925 = vmatprep.mubr.bf16.mxu0 0
        %926 = vmatmul.mubr.bf16.gmra.mxu0 %v806
        %v927 = vpop.f32.mrf.mxu0
        %v928 = vadd.f32 0.0, %v927
        %v929 = vpop.f32.mrf.mxu0
        %v930 = vpop.f32.mrf.mxu0
        %v931 = vadd.f32 0.0, %v930
        %v932 = vpop.f32.mrf.mxu0
        %933 = vmatprep.mubr.bf16.mxu0 0
        %934 = vmatmul.mubr.bf16.gmra.mxu0 %v809
        %v935 = vpop.f32.mrf.mxu0
        %v936 = vadd.f32 0.0, %v935
        %v937 = vpop.f32.mrf.mxu0
        %v938 = vpop.f32.mrf.mxu0
        %v939 = vadd.f32 0.0, %v938
        %v940 = vpop.f32.mrf.mxu0
        %941 = vmatprep.mubr.bf16.mxu0 0
        %942 = vmatmul.mubr.bf16.gmra.mxu0 %v812
        %v943 = vpop.f32.mrf.mxu0
        %v944 = vadd.f32 0.0, %v943
        %v945 = vpop.f32.mrf.mxu0
        %v946 = vpop.f32.mrf.mxu0
        %v947 = vadd.f32 0.0, %v946
        %v948 = vpop.f32.mrf.mxu0
        %949 = vmatprep.mubr.bf16.mxu0 0
        %950 = vmatmul.mubr.bf16.gmra.mxu0 %v815
        %v951 = vpop.f32.mrf.mxu0
        %v952 = vadd.f32 0.0, %v951
        %v953 = vpop.f32.mrf.mxu0
        %v954 = vpop.f32.mrf.mxu0
        %v955 = vadd.f32 0.0, %v954
        %v956 = vpop.f32.mrf.mxu0
        %957 = vmatprep.mubr.bf16.mxu0 0
        %958 = vmatmul.mubr.bf16.gmra.mxu0 %v818
        %v959 = vpop.f32.mrf.mxu0
        %v960 = vadd.f32 0.0, %v959
        %v961 = vpop.f32.mrf.mxu0
        %v962 = vpop.f32.mrf.mxu0
        %v963 = vadd.f32 0.0, %v962
        %v964 = vpop.f32.mrf.mxu0
        %965 = vmatprep.mubr.bf16.mxu0 0
        %966 = vmatmul.mubr.bf16.gmra.mxu0 %v821
        %v967 = vpop.f32.mrf.mxu0
        %v968 = vadd.f32 0.0, %v967
        %v969 = vpop.f32.mrf.mxu0
        %v970 = vpop.f32.mrf.mxu0
        %v971 = vadd.f32 0.0, %v970
        %v972 = vpop.f32.mrf.mxu0
        %973 = vmatprep.mubr.bf16.mxu0 0
        %974 = vmatmul.mubr.bf16.gmra.mxu0 %v824
        %v975 = vpop.f32.mrf.mxu0
        %v976 = vadd.f32 0.0, %v975
        %v977 = vpop.f32.mrf.mxu0
        %v978 = vpop.f32.mrf.mxu0
        %v979 = vadd.f32 0.0, %v978
        %v980 = vpop.f32.mrf.mxu0
        %981 = vmatprep.mubr.bf16.mxu0 0
        %982 = vmatmul.mubr.bf16.gmra.mxu0 %v827
        %v983 = vpop.f32.mrf.mxu0
        %v984 = vadd.f32 0.0, %v983
        %v985 = vpop.f32.mrf.mxu0
        %v986 = vpop.f32.mrf.mxu0
        %v987 = vadd.f32 0.0, %v986
        %v988 = vpop.f32.mrf.mxu0
        %989 = vdwg.mxu0
        %v992 = vunpack.c.l.b16 %v562
        %v993 = vunpack.c.l.b16 %v563
        %v994 = vpack.c.b16 %v993, %v992
        %v997 = vsel %vm780, %v546, 0
        %v1000 = vsel %vm780, %v547, 0
        %v1003 = vsel %vm780, %v548, 0
        %v1006 = vsel %vm780, %v549, 0
        %v1009 = vsel %vm780, %v550, 0
        %v1012 = vsel %vm780, %v551, 0
        %v1015 = vsel %vm780, %v552, 0
        %v1018 = vsel %vm780, %v553, 0
        %v1021 = vsel %vm780, %v554, 0
        %v1024 = vsel %vm780, %v555, 0
        %v1027 = vsel %vm780, %v556, 0
        %v1030 = vsel %vm780, %v557, 0
        %v1033 = vsel %vm780, %v558, 0
        %v1036 = vsel %vm780, %v559, 0
        %v1039 = vsel %vm780, %v560, 0
        %v1042 = vsel %vm780, %v561, 0
        %1044 = vmatprep.subr.bf16.mxu0 0
        %1045 = vmatpush1.bf16.msra.mxu0 0
        %1046 = vmatprep.subr.bf16.mxu0 0
        %1047 = vmatpush1.bf16.msra.mxu0 0
        %1048 = vmatprep.subr.bf16.mxu0 0
        %1049 = vmatpush1.bf16.msra.mxu0 0
        %1050 = vmatprep.subr.bf16.mxu0 0
        %1051 = vmatpush1.bf16.msra.mxu0 0
        %1052 = vmatprep.subr.bf16.mxu0 0
        %1053 = vmatpush1.bf16.msra.mxu0 0
        %1054 = vmatprep.subr.bf16.mxu0 0
        %1055 = vmatpush1.bf16.msra.mxu0 0
        %1056 = vmatprep.subr.bf16.mxu0 0
        %1057 = vmatpush1.bf16.msra.mxu0 0
        %1058 = vmatprep.subr.bf16.mxu0 0
        %1059 = vmatpush1.bf16.msra.mxu0 %v994
        %1060 = vmatprep.subr.bf16.mxu0 0
        %1061 = vmatpush2.bf16.msra.mxu0 0
        %1062 = vmatprep.subr.bf16.mxu0 0
        %1063 = vmatpush2.bf16.msra.mxu0 0
        %1064 = vmatprep.subr.bf16.mxu0 0
        %1065 = vmatpush2.bf16.msra.mxu0 0
        %1066 = vmatprep.subr.bf16.mxu0 0
        %1067 = vmatpush2.bf16.msra.mxu0 0
        %1068 = vmatprep.subr.bf16.mxu0 0
        %1069 = vmatpush2.bf16.msra.mxu0 0
        %1070 = vmatprep.subr.bf16.mxu0 0
        %1071 = vmatpush2.bf16.msra.mxu0 0
        %1072 = vmatprep.subr.bf16.mxu0 0
        %1073 = vmatpush2.bf16.msra.mxu0 0
        %1074 = vmatprep.subr.bf16.mxu0 0
        %1075 = vmatpush2.bf16.msra.mxu0 0
        %1076 = vmatprep.mubr.bf16.mxu0 0
        %1077 = vmatmul.mubr.bf16.gmra.mxu0 %v997
        %v1078 = vpop.f32.mrf.mxu0
        %v1079 = vadd.f32 %v864, %v1078
        %v1080 = vpop.f32.mrf.mxu0
        %v1081 = vpop.f32.mrf.mxu0
        %v1082 = vadd.f32 %v867, %v1081
        %v1083 = vpop.f32.mrf.mxu0
        %1084 = vmatprep.mubr.bf16.mxu0 0
        %1085 = vmatmul.mubr.bf16.gmra.mxu0 %v1000
        %v1086 = vpop.f32.mrf.mxu0
        %v1087 = vadd.f32 %v872, %v1086
        %v1088 = vpop.f32.mrf.mxu0
        %v1089 = vpop.f32.mrf.mxu0
        %v1090 = vadd.f32 %v875, %v1089
        %v1091 = vpop.f32.mrf.mxu0
        %1092 = vmatprep.mubr.bf16.mxu0 0
        %1093 = vmatmul.mubr.bf16.gmra.mxu0 %v1003
        %v1094 = vpop.f32.mrf.mxu0
        %v1095 = vadd.f32 %v880, %v1094
        %v1096 = vpop.f32.mrf.mxu0
        %v1097 = vpop.f32.mrf.mxu0
        %v1098 = vadd.f32 %v883, %v1097
        %v1099 = vpop.f32.mrf.mxu0
        %1100 = vmatprep.mubr.bf16.mxu0 0
        %1101 = vmatmul.mubr.bf16.gmra.mxu0 %v1006
        %v1102 = vpop.f32.mrf.mxu0
        %v1103 = vadd.f32 %v888, %v1102
        %v1104 = vpop.f32.mrf.mxu0
        %v1105 = vpop.f32.mrf.mxu0
        %v1106 = vadd.f32 %v891, %v1105
        %v1107 = vpop.f32.mrf.mxu0
        %1108 = vmatprep.mubr.bf16.mxu0 0
        %1109 = vmatmul.mubr.bf16.gmra.mxu0 %v1009
        %v1110 = vpop.f32.mrf.mxu0
        %v1111 = vadd.f32 %v896, %v1110
        %v1112 = vpop.f32.mrf.mxu0
        %v1113 = vpop.f32.mrf.mxu0
        %v1114 = vadd.f32 %v899, %v1113
        %v1115 = vpop.f32.mrf.mxu0
        %1116 = vmatprep.mubr.bf16.mxu0 0
        %1117 = vmatmul.mubr.bf16.gmra.mxu0 %v1012
        %v1118 = vpop.f32.mrf.mxu0
        %v1119 = vadd.f32 %v904, %v1118
        %v1120 = vpop.f32.mrf.mxu0
        %v1121 = vpop.f32.mrf.mxu0
        %v1122 = vadd.f32 %v907, %v1121
        %v1123 = vpop.f32.mrf.mxu0
        %1124 = vmatprep.mubr.bf16.mxu0 0
        %1125 = vmatmul.mubr.bf16.gmra.mxu0 %v1015
        %v1126 = vpop.f32.mrf.mxu0
        %v1127 = vadd.f32 %v912, %v1126
        %v1128 = vpop.f32.mrf.mxu0
        %v1129 = vpop.f32.mrf.mxu0
        %v1130 = vadd.f32 %v915, %v1129
        %v1131 = vpop.f32.mrf.mxu0
        %1132 = vmatprep.mubr.bf16.mxu0 0
        %1133 = vmatmul.mubr.bf16.gmra.mxu0 %v1018
        %v1134 = vpop.f32.mrf.mxu0
        %v1135 = vadd.f32 %v920, %v1134
        %v1136 = vpop.f32.mrf.mxu0
        %v1137 = vpop.f32.mrf.mxu0
        %v1138 = vadd.f32 %v923, %v1137
        %v1139 = vpop.f32.mrf.mxu0
        %1140 = vmatprep.mubr.bf16.mxu0 0
        %1141 = vmatmul.mubr.bf16.gmra.mxu0 %v1021
        %v1142 = vpop.f32.mrf.mxu0
        %v1143 = vadd.f32 %v928, %v1142
        %v1144 = vpop.f32.mrf.mxu0
        %v1145 = vpop.f32.mrf.mxu0
        %v1146 = vadd.f32 %v931, %v1145
        %v1147 = vpop.f32.mrf.mxu0
        %1148 = vmatprep.mubr.bf16.mxu0 0
        %1149 = vmatmul.mubr.bf16.gmra.mxu0 %v1024
        %v1150 = vpop.f32.mrf.mxu0
        %v1151 = vadd.f32 %v936, %v1150
        %v1152 = vpop.f32.mrf.mxu0
        %v1153 = vpop.f32.mrf.mxu0
        %v1154 = vadd.f32 %v939, %v1153
        %v1155 = vpop.f32.mrf.mxu0
        %1156 = vmatprep.mubr.bf16.mxu0 0
        %1157 = vmatmul.mubr.bf16.gmra.mxu0 %v1027
        %v1158 = vpop.f32.mrf.mxu0
        %v1159 = vadd.f32 %v944, %v1158
        %v1160 = vpop.f32.mrf.mxu0
        %v1161 = vpop.f32.mrf.mxu0
        %v1162 = vadd.f32 %v947, %v1161
        %v1163 = vpop.f32.mrf.mxu0
        %1164 = vmatprep.mubr.bf16.mxu0 0
        %1165 = vmatmul.mubr.bf16.gmra.mxu0 %v1030
        %v1166 = vpop.f32.mrf.mxu0
        %v1167 = vadd.f32 %v952, %v1166
        %v1168 = vpop.f32.mrf.mxu0
        %v1169 = vpop.f32.mrf.mxu0
        %v1170 = vadd.f32 %v955, %v1169
        %v1171 = vpop.f32.mrf.mxu0
        %1172 = vmatprep.mubr.bf16.mxu0 0
        %1173 = vmatmul.mubr.bf16.gmra.mxu0 %v1033
        %v1174 = vpop.f32.mrf.mxu0
        %v1175 = vadd.f32 %v960, %v1174
        %v1176 = vpop.f32.mrf.mxu0
        %v1177 = vpop.f32.mrf.mxu0
        %v1178 = vadd.f32 %v963, %v1177
        %v1179 = vpop.f32.mrf.mxu0
        %1180 = vmatprep.mubr.bf16.mxu0 0
        %1181 = vmatmul.mubr.bf16.gmra.mxu0 %v1036
        %v1182 = vpop.f32.mrf.mxu0
        %v1183 = vadd.f32 %v968, %v1182
        %v1184 = vpop.f32.mrf.mxu0
        %v1185 = vpop.f32.mrf.mxu0
        %v1186 = vadd.f32 %v971, %v1185
        %v1187 = vpop.f32.mrf.mxu0
        %1188 = vmatprep.mubr.bf16.mxu0 0
        %1189 = vmatmul.mubr.bf16.gmra.mxu0 %v1039
        %v1190 = vpop.f32.mrf.mxu0
        %v1191 = vadd.f32 %v976, %v1190
        %v1192 = vpop.f32.mrf.mxu0
        %v1193 = vpop.f32.mrf.mxu0
        %v1194 = vadd.f32 %v979, %v1193
        %v1195 = vpop.f32.mrf.mxu0
        %1196 = vmatprep.mubr.bf16.mxu0 0
        %1197 = vmatmul.mubr.bf16.gmra.mxu0 %v1042
        %v1198 = vpop.f32.mrf.mxu0
        %v1199 = vadd.f32 %v984, %v1198
        %v1200 = vpop.f32.mrf.mxu0
        %v1201 = vpop.f32.mrf.mxu0
        %v1202 = vadd.f32 %v987, %v1201
        %v1203 = vpop.f32.mrf.mxu0
        %1204 = vdwg.mxu0
        %v1205 = vld [vmem:[%s434] sm:$0xff]
        %v1206 = vld [vmem:[%s434 + $0x8] sm:$0xff]
        %v1207 = vld [vmem:[%s434 + $0x10] sm:$0xff]
        %v1208 = vld [vmem:[%s434 + $0x18] sm:$0xff]
        %v1209 = vld [vmem:[%s434 + $0x20] sm:$0xff]
        %v1210 = vld [vmem:[%s434 + $0x28] sm:$0xff]
        %v1211 = vld [vmem:[%s434 + $0x30] sm:$0xff]
        %v1212 = vld [vmem:[%s434 + $0x38] sm:$0xff]
        %v1213 = vld [vmem:[%s434 + $0x40] sm:$0xff]
        %v1214 = vld [vmem:[%s434 + $0x48] sm:$0xff]
        %v1215 = vld [vmem:[%s434 + $0x50] sm:$0xff]
        %v1216 = vld [vmem:[%s434 + $0x58] sm:$0xff]
        %v1217 = vld [vmem:[%s434 + $0x60] sm:$0xff]
        %v1218 = vld [vmem:[%s434 + $0x68] sm:$0xff]
        %v1219 = vld [vmem:[%s434 + $0x70] sm:$0xff]
        %v1220 = vld [vmem:[%s434 + $0x78] sm:$0xff]
        %v1221 = vld [vmem:[%s434 + $0x80] sm:$0xff]
        %v1222 = vld [vmem:[%s434 + $0x88] sm:$0xff]
        %v1223 = vld [vmem:[%s434 + $0x90] sm:$0xff]
        %v1224 = vld [vmem:[%s434 + $0x98] sm:$0xff]
        %v1225 = vld [vmem:[%s434 + $0xa0] sm:$0xff]
        %v1226 = vld [vmem:[%s434 + $0xa8] sm:$0xff]
        %v1227 = vld [vmem:[%s434 + $0xb0] sm:$0xff]
        %v1228 = vld [vmem:[%s434 + $0xb8] sm:$0xff]
        %v1229 = vld [vmem:[%s434 + $0xc0] sm:$0xff]
        %v1230 = vld [vmem:[%s434 + $0xc8] sm:$0xff]
        %v1231 = vld [vmem:[%s434 + $0xd0] sm:$0xff]
        %v1232 = vld [vmem:[%s434 + $0xd8] sm:$0xff]
        %v1233 = vld [vmem:[%s434 + $0xe0] sm:$0xff]
        %v1234 = vld [vmem:[%s434 + $0xe8] sm:$0xff]
        %v1235 = vld [vmem:[%s434 + $0xf0] sm:$0xff]
        %v1236 = vld [vmem:[%s434 + $0xf8] sm:$0xff]
        %1237 = vrot.lane.b32.xlu0 %v450, 96
        %v1238 = vpop.permute.xlu0 %1237
        %1239 = vrot.lane.b32.xlu0 %v451, 96
        %v1240 = vpop.permute.xlu0 %1239
        %1241 = vrot.lane.b32.xlu0 %v452, 96
        %v1242 = vpop.permute.xlu0 %1241
        %1243 = vrot.lane.b32.xlu0 %v453, 96
        %v1244 = vpop.permute.xlu0 %1243
        %1245 = vrot.lane.b32.xlu0 %v454, 96
        %v1246 = vpop.permute.xlu0 %1245
        %1247 = vrot.lane.b32.xlu0 %v455, 96
        %v1248 = vpop.permute.xlu0 %1247
        %1249 = vrot.lane.b32.xlu0 %v456, 96
        %v1250 = vpop.permute.xlu0 %1249
        %1251 = vrot.lane.b32.xlu0 %v457, 96
        %v1252 = vpop.permute.xlu0 %1251
        %1253 = vrot.lane.b32.xlu0 %v458, 96
        %v1254 = vpop.permute.xlu0 %1253
        %1255 = vrot.lane.b32.xlu0 %v459, 96
        %v1256 = vpop.permute.xlu0 %1255
        %1257 = vrot.lane.b32.xlu0 %v460, 96
        %v1258 = vpop.permute.xlu0 %1257
        %1259 = vrot.lane.b32.xlu0 %v461, 96
        %v1260 = vpop.permute.xlu0 %1259
        %1261 = vrot.lane.b32.xlu0 %v462, 96
        %v1262 = vpop.permute.xlu0 %1261
        %1263 = vrot.lane.b32.xlu0 %v463, 96
        %v1264 = vpop.permute.xlu0 %1263
        %1265 = vrot.lane.b32.xlu0 %v464, 96
        %v1266 = vpop.permute.xlu0 %1265
        %1267 = vrot.lane.b32.xlu0 %v465, 96
        %v1268 = vpop.permute.xlu0 %1267
        %1269 = vrot.lane.b32.xlu0 %v466, 96
        %v1270 = vpop.permute.xlu0 %1269
        %1271 = vrot.lane.b32.xlu0 %v467, 96
        %v1272 = vpop.permute.xlu0 %1271
        %1273 = vrot.lane.b32.xlu0 %v468, 96
        %v1274 = vpop.permute.xlu0 %1273
        %1275 = vrot.lane.b32.xlu0 %v469, 96
        %v1276 = vpop.permute.xlu0 %1275
        %1277 = vrot.lane.b32.xlu0 %v470, 96
        %v1278 = vpop.permute.xlu0 %1277
        %1279 = vrot.lane.b32.xlu0 %v471, 96
        %v1280 = vpop.permute.xlu0 %1279
        %1281 = vrot.lane.b32.xlu0 %v472, 96
        %v1282 = vpop.permute.xlu0 %1281
        %1283 = vrot.lane.b32.xlu0 %v473, 96
        %v1284 = vpop.permute.xlu0 %1283
        %1285 = vrot.lane.b32.xlu0 %v474, 96
        %v1286 = vpop.permute.xlu0 %1285
        %1287 = vrot.lane.b32.xlu0 %v475, 96
        %v1288 = vpop.permute.xlu0 %1287
        %1289 = vrot.lane.b32.xlu0 %v476, 96
        %v1290 = vpop.permute.xlu0 %1289
        %1291 = vrot.lane.b32.xlu0 %v477, 96
        %v1292 = vpop.permute.xlu0 %1291
        %1293 = vrot.lane.b32.xlu0 %v478, 96
        %v1294 = vpop.permute.xlu0 %1293
        %1295 = vrot.lane.b32.xlu0 %v479, 96
        %v1296 = vpop.permute.xlu0 %1295
        %1297 = vrot.lane.b32.xlu0 %v480, 96
        %v1298 = vpop.permute.xlu0 %1297
        %1299 = vrot.lane.b32.xlu0 %v481, 96
        %v1300 = vpop.permute.xlu0 %1299
        %v1333 = vmul.f32 %v1205, %v1238
        %v1334 = vmul.f32 %v1206, %v1240
        %v1335 = vmul.f32 %v1207, %v1242
        %v1336 = vmul.f32 %v1208, %v1244
        %v1337 = vmul.f32 %v1209, %v1246
        %v1338 = vmul.f32 %v1210, %v1248
        %v1339 = vmul.f32 %v1211, %v1250
        %v1340 = vmul.f32 %v1212, %v1252
        %v1341 = vmul.f32 %v1213, %v1254
        %v1342 = vmul.f32 %v1214, %v1256
        %v1343 = vmul.f32 %v1215, %v1258
        %v1344 = vmul.f32 %v1216, %v1260
        %v1345 = vmul.f32 %v1217, %v1262
        %v1346 = vmul.f32 %v1218, %v1264
        %v1347 = vmul.f32 %v1219, %v1266
        %v1348 = vmul.f32 %v1220, %v1268
        %v1349 = vmul.f32 %v1221, %v1270
        %v1350 = vmul.f32 %v1222, %v1272
        %v1351 = vmul.f32 %v1223, %v1274
        %v1352 = vmul.f32 %v1224, %v1276
        %v1353 = vmul.f32 %v1225, %v1278
        %v1354 = vmul.f32 %v1226, %v1280
        %v1355 = vmul.f32 %v1227, %v1282
        %v1356 = vmul.f32 %v1228, %v1284
        %v1357 = vmul.f32 %v1229, %v1286
        %v1358 = vmul.f32 %v1230, %v1288
        %v1359 = vmul.f32 %v1231, %v1290
        %v1360 = vmul.f32 %v1232, %v1292
        %v1361 = vmul.f32 %v1233, %v1294
        %v1362 = vmul.f32 %v1234, %v1296
        %v1363 = vmul.f32 %v1235, %v1298
        %v1364 = vmul.f32 %v1236, %v1300
        %v1365 = vpack.c.bf16 %v1334, %v1333
        %v1366 = vpack.c.bf16 %v1336, %v1335
        %v1367 = vpack.c.bf16 %v1338, %v1337
        %v1368 = vpack.c.bf16 %v1340, %v1339
        %v1369 = vpack.c.bf16 %v1342, %v1341
        %v1370 = vpack.c.bf16 %v1344, %v1343
        %v1371 = vpack.c.bf16 %v1346, %v1345
        %v1372 = vpack.c.bf16 %v1348, %v1347
        %v1373 = vpack.c.bf16 %v1350, %v1349
        %v1374 = vpack.c.bf16 %v1352, %v1351
        %v1375 = vpack.c.bf16 %v1354, %v1353
        %v1376 = vpack.c.bf16 %v1356, %v1355
        %v1377 = vpack.c.bf16 %v1358, %v1357
        %v1378 = vpack.c.bf16 %v1360, %v1359
        %v1379 = vpack.c.bf16 %v1362, %v1361
        %v1380 = vpack.c.bf16 %v1364, %v1363
        %v1381 = vld [vmem:[%s7] sm:$0xf]
        %v1382 = vld [vmem:[%s7 + $0x4] sm:$0xf]
        %v1385 = vunpack.c.l.b16 %v1381
        %v1386 = vunpack.c.l.b16 %v1382
        %v1387 = vpack.c.b16 %v1386, %v1385
        %v1390 = vsel %vm780, %v1365, 0
        %v1393 = vsel %vm780, %v1366, 0
        %v1396 = vsel %vm780, %v1367, 0
        %v1399 = vsel %vm780, %v1368, 0
        %v1402 = vsel %vm780, %v1369, 0
        %v1405 = vsel %vm780, %v1370, 0
        %v1408 = vsel %vm780, %v1371, 0
        %v1411 = vsel %vm780, %v1372, 0
        %v1414 = vsel %vm780, %v1373, 0
        %v1417 = vsel %vm780, %v1374, 0
        %v1420 = vsel %vm780, %v1375, 0
        %v1423 = vsel %vm780, %v1376, 0
        %v1426 = vsel %vm780, %v1377, 0
        %v1429 = vsel %vm780, %v1378, 0
        %v1432 = vsel %vm780, %v1379, 0
        %v1435 = vsel %vm780, %v1380, 0
        %1437 = vmatprep.subr.bf16.mxu0 0
        %1438 = vmatpush1.bf16.msra.mxu0 0
        %1439 = vmatprep.subr.bf16.mxu0 0
        %1440 = vmatpush1.bf16.msra.mxu0 0
        %1441 = vmatprep.subr.bf16.mxu0 0
        %1442 = vmatpush1.bf16.msra.mxu0 0
        %1443 = vmatprep.subr.bf16.mxu0 0
        %1444 = vmatpush1.bf16.msra.mxu0 0
        %1445 = vmatprep.subr.bf16.mxu0 0
        %1446 = vmatpush1.bf16.msra.mxu0 0
        %1447 = vmatprep.subr.bf16.mxu0 0
        %1448 = vmatpush1.bf16.msra.mxu0 0
        %1449 = vmatprep.subr.bf16.mxu0 0
        %1450 = vmatpush1.bf16.msra.mxu0 0
        %1451 = vmatprep.subr.bf16.mxu0 0
        %1452 = vmatpush1.bf16.msra.mxu0 %v1387
        %1453 = vmatprep.subr.bf16.mxu0 0
        %1454 = vmatpush2.bf16.msra.mxu0 0
        %1455 = vmatprep.subr.bf16.mxu0 0
        %1456 = vmatpush2.bf16.msra.mxu0 0
        %1457 = vmatprep.subr.bf16.mxu0 0
        %1458 = vmatpush2.bf16.msra.mxu0 0
        %1459 = vmatprep.subr.bf16.mxu0 0
        %1460 = vmatpush2.bf16.msra.mxu0 0
        %1461 = vmatprep.subr.bf16.mxu0 0
        %1462 = vmatpush2.bf16.msra.mxu0 0
        %1463 = vmatprep.subr.bf16.mxu0 0
        %1464 = vmatpush2.bf16.msra.mxu0 0
        %1465 = vmatprep.subr.bf16.mxu0 0
        %1466 = vmatpush2.bf16.msra.mxu0 0
        %1467 = vmatprep.subr.bf16.mxu0 0
        %1468 = vmatpush2.bf16.msra.mxu0 0
        %1469 = vmatprep.mubr.bf16.mxu0 0
        %1470 = vmatmul.mubr.bf16.gmra.mxu0 %v1390
        %v1471 = vpop.f32.mrf.mxu0
        %v1472 = vadd.f32 0.0, %v1471
        %v1473 = vpop.f32.mrf.mxu0
        %v1474 = vpop.f32.mrf.mxu0
        %v1475 = vadd.f32 0.0, %v1474
        %v1476 = vpop.f32.mrf.mxu0
        %1477 = vmatprep.mubr.bf16.mxu0 0
        %1478 = vmatmul.mubr.bf16.gmra.mxu0 %v1393
        %v1479 = vpop.f32.mrf.mxu0
        %v1480 = vadd.f32 0.0, %v1479
        %v1481 = vpop.f32.mrf.mxu0
        %v1482 = vpop.f32.mrf.mxu0
        %v1483 = vadd.f32 0.0, %v1482
        %v1484 = vpop.f32.mrf.mxu0
        %1485 = vmatprep.mubr.bf16.mxu0 0
        %1486 = vmatmul.mubr.bf16.gmra.mxu0 %v1396
        %v1487 = vpop.f32.mrf.mxu0
        %v1488 = vadd.f32 0.0, %v1487
        %v1489 = vpop.f32.mrf.mxu0
        %v1490 = vpop.f32.mrf.mxu0
        %v1491 = vadd.f32 0.0, %v1490
        %v1492 = vpop.f32.mrf.mxu0
        %1493 = vmatprep.mubr.bf16.mxu0 0
        %1494 = vmatmul.mubr.bf16.gmra.mxu0 %v1399
        %v1495 = vpop.f32.mrf.mxu0
        %v1496 = vadd.f32 0.0, %v1495
        %v1497 = vpop.f32.mrf.mxu0
        %v1498 = vpop.f32.mrf.mxu0
        %v1499 = vadd.f32 0.0, %v1498
        %v1500 = vpop.f32.mrf.mxu0
        %1501 = vmatprep.mubr.bf16.mxu0 0
        %1502 = vmatmul.mubr.bf16.gmra.mxu0 %v1402
        %v1503 = vpop.f32.mrf.mxu0
        %v1504 = vadd.f32 0.0, %v1503
        %v1505 = vpop.f32.mrf.mxu0
        %v1506 = vpop.f32.mrf.mxu0
        %v1507 = vadd.f32 0.0, %v1506
        %v1508 = vpop.f32.mrf.mxu0
        %1509 = vmatprep.mubr.bf16.mxu0 0
        %1510 = vmatmul.mubr.bf16.gmra.mxu0 %v1405
        %v1511 = vpop.f32.mrf.mxu0
        %v1512 = vadd.f32 0.0, %v1511
        %v1513 = vpop.f32.mrf.mxu0
        %v1514 = vpop.f32.mrf.mxu0
        %v1515 = vadd.f32 0.0, %v1514
        %v1516 = vpop.f32.mrf.mxu0
        %1517 = vmatprep.mubr.bf16.mxu0 0
        %1518 = vmatmul.mubr.bf16.gmra.mxu0 %v1408
        %v1519 = vpop.f32.mrf.mxu0
        %v1520 = vadd.f32 0.0, %v1519
        %v1521 = vpop.f32.mrf.mxu0
        %v1522 = vpop.f32.mrf.mxu0
        %v1523 = vadd.f32 0.0, %v1522
        %v1524 = vpop.f32.mrf.mxu0
        %1525 = vmatprep.mubr.bf16.mxu0 0
        %1526 = vmatmul.mubr.bf16.gmra.mxu0 %v1411
        %v1527 = vpop.f32.mrf.mxu0
        %v1528 = vadd.f32 0.0, %v1527
        %v1529 = vpop.f32.mrf.mxu0
        %v1530 = vpop.f32.mrf.mxu0
        %v1531 = vadd.f32 0.0, %v1530
        %v1532 = vpop.f32.mrf.mxu0
        %1533 = vmatprep.mubr.bf16.mxu0 0
        %1534 = vmatmul.mubr.bf16.gmra.mxu0 %v1414
        %v1535 = vpop.f32.mrf.mxu0
        %v1536 = vadd.f32 0.0, %v1535
        %v1537 = vpop.f32.mrf.mxu0
        %v1538 = vpop.f32.mrf.mxu0
        %v1539 = vadd.f32 0.0, %v1538
        %v1540 = vpop.f32.mrf.mxu0
        %1541 = vmatprep.mubr.bf16.mxu0 0
        %1542 = vmatmul.mubr.bf16.gmra.mxu0 %v1417
        %v1543 = vpop.f32.mrf.mxu0
        %v1544 = vadd.f32 0.0, %v1543
        %v1545 = vpop.f32.mrf.mxu0
        %v1546 = vpop.f32.mrf.mxu0
        %v1547 = vadd.f32 0.0, %v1546
        %v1548 = vpop.f32.mrf.mxu0
        %1549 = vmatprep.mubr.bf16.mxu0 0
        %1550 = vmatmul.mubr.bf16.gmra.mxu0 %v1420
        %v1551 = vpop.f32.mrf.mxu0
        %v1552 = vadd.f32 0.0, %v1551
        %v1553 = vpop.f32.mrf.mxu0
        %v1554 = vpop.f32.mrf.mxu0
        %v1555 = vadd.f32 0.0, %v1554
        %v1556 = vpop.f32.mrf.mxu0
        %1557 = vmatprep.mubr.bf16.mxu0 0
        %1558 = vmatmul.mubr.bf16.gmra.mxu0 %v1423
        %v1559 = vpop.f32.mrf.mxu0
        %v1560 = vadd.f32 0.0, %v1559
        %v1561 = vpop.f32.mrf.mxu0
        %v1562 = vpop.f32.mrf.mxu0
        %v1563 = vadd.f32 0.0, %v1562
        %v1564 = vpop.f32.mrf.mxu0
        %1565 = vmatprep.mubr.bf16.mxu0 0
        %1566 = vmatmul.mubr.bf16.gmra.mxu0 %v1426
        %v1567 = vpop.f32.mrf.mxu0
        %v1568 = vadd.f32 0.0, %v1567
        %v1569 = vpop.f32.mrf.mxu0
        %v1570 = vpop.f32.mrf.mxu0
        %v1571 = vadd.f32 0.0, %v1570
        %v1572 = vpop.f32.mrf.mxu0
        %1573 = vmatprep.mubr.bf16.mxu0 0
        %1574 = vmatmul.mubr.bf16.gmra.mxu0 %v1429
        %v1575 = vpop.f32.mrf.mxu0
        %v1576 = vadd.f32 0.0, %v1575
        %v1577 = vpop.f32.mrf.mxu0
        %v1578 = vpop.f32.mrf.mxu0
        %v1579 = vadd.f32 0.0, %v1578
        %v1580 = vpop.f32.mrf.mxu0
        %1581 = vmatprep.mubr.bf16.mxu0 0
        %1582 = vmatmul.mubr.bf16.gmra.mxu0 %v1432
        %v1583 = vpop.f32.mrf.mxu0
        %v1584 = vadd.f32 0.0, %v1583
        %v1585 = vpop.f32.mrf.mxu0
        %v1586 = vpop.f32.mrf.mxu0
        %v1587 = vadd.f32 0.0, %v1586
        %v1588 = vpop.f32.mrf.mxu0
        %1589 = vmatprep.mubr.bf16.mxu0 0
        %1590 = vmatmul.mubr.bf16.gmra.mxu0 %v1435
        %v1591 = vpop.f32.mrf.mxu0
        %v1592 = vadd.f32 0.0, %v1591
        %v1593 = vpop.f32.mrf.mxu0
        %v1594 = vpop.f32.mrf.mxu0
        %v1595 = vadd.f32 0.0, %v1594
        %v1596 = vpop.f32.mrf.mxu0
        %1597 = vdwg.mxu0
        %v1598 = vadd.f32 %v1079, %v1472
        %v1599 = vadd.f32 %v1082, %v1475
        %v1600 = vadd.f32 %v1087, %v1480
        %v1601 = vadd.f32 %v1090, %v1483
        %v1602 = vadd.f32 %v1095, %v1488
        %v1603 = vadd.f32 %v1098, %v1491
        %v1604 = vadd.f32 %v1103, %v1496
        %v1605 = vadd.f32 %v1106, %v1499
        %v1606 = vadd.f32 %v1111, %v1504
        %v1607 = vadd.f32 %v1114, %v1507
        %v1608 = vadd.f32 %v1119, %v1512
        %v1609 = vadd.f32 %v1122, %v1515
        %v1610 = vadd.f32 %v1127, %v1520
        %v1611 = vadd.f32 %v1130, %v1523
        %v1612 = vadd.f32 %v1135, %v1528
        %v1613 = vadd.f32 %v1138, %v1531
        %v1614 = vadd.f32 %v1143, %v1536
        %v1615 = vadd.f32 %v1146, %v1539
        %v1616 = vadd.f32 %v1151, %v1544
        %v1617 = vadd.f32 %v1154, %v1547
        %v1618 = vadd.f32 %v1159, %v1552
        %v1619 = vadd.f32 %v1162, %v1555
        %v1620 = vadd.f32 %v1167, %v1560
        %v1621 = vadd.f32 %v1170, %v1563
        %v1622 = vadd.f32 %v1175, %v1568
        %v1623 = vadd.f32 %v1178, %v1571
        %v1624 = vadd.f32 %v1183, %v1576
        %v1625 = vadd.f32 %v1186, %v1579
        %v1626 = vadd.f32 %v1191, %v1584
        %v1627 = vadd.f32 %v1194, %v1587
        %v1628 = vadd.f32 %v1199, %v1592
        %v1629 = vadd.f32 %v1202, %v1595
        %v1630 = vld [vmem:[%s440] sm:$0xff]
        %v1631 = vld [vmem:[%s440 + $0x8] sm:$0xff]
        %v1632 = vld [vmem:[%s440 + $0x10] sm:$0xff]
        %v1633 = vld [vmem:[%s440 + $0x18] sm:$0xff]
        %v1634 = vld [vmem:[%s440 + $0x20] sm:$0xff]
        %v1635 = vld [vmem:[%s440 + $0x28] sm:$0xff]
        %v1636 = vld [vmem:[%s440 + $0x30] sm:$0xff]
        %v1637 = vld [vmem:[%s440 + $0x38] sm:$0xff]
        %v1638 = vld [vmem:[%s440 + $0x40] sm:$0xff]
        %v1639 = vld [vmem:[%s440 + $0x48] sm:$0xff]
        %v1640 = vld [vmem:[%s440 + $0x50] sm:$0xff]
        %v1641 = vld [vmem:[%s440 + $0x58] sm:$0xff]
        %v1642 = vld [vmem:[%s440 + $0x60] sm:$0xff]
        %v1643 = vld [vmem:[%s440 + $0x68] sm:$0xff]
        %v1644 = vld [vmem:[%s440 + $0x70] sm:$0xff]
        %v1645 = vld [vmem:[%s440 + $0x78] sm:$0xff]
        %v1646 = vld [vmem:[%s440 + $0x80] sm:$0xff]
        %v1647 = vld [vmem:[%s440 + $0x88] sm:$0xff]
        %v1648 = vld [vmem:[%s440 + $0x90] sm:$0xff]
        %v1649 = vld [vmem:[%s440 + $0x98] sm:$0xff]
        %v1650 = vld [vmem:[%s440 + $0xa0] sm:$0xff]
        %v1651 = vld [vmem:[%s440 + $0xa8] sm:$0xff]
        %v1652 = vld [vmem:[%s440 + $0xb0] sm:$0xff]
        %v1653 = vld [vmem:[%s440 + $0xb8] sm:$0xff]
        %v1654 = vld [vmem:[%s440 + $0xc0] sm:$0xff]
        %v1655 = vld [vmem:[%s440 + $0xc8] sm:$0xff]
        %v1656 = vld [vmem:[%s440 + $0xd0] sm:$0xff]
        %v1657 = vld [vmem:[%s440 + $0xd8] sm:$0xff]
        %v1658 = vld [vmem:[%s440 + $0xe0] sm:$0xff]
        %v1659 = vld [vmem:[%s440 + $0xe8] sm:$0xff]
        %v1660 = vld [vmem:[%s440 + $0xf0] sm:$0xff]
        %v1661 = vld [vmem:[%s440 + $0xf8] sm:$0xff]
        %1662 = vrot.lane.b32.xlu0 %v450, 80
        %v1663 = vpop.permute.xlu0 %1662
        %1664 = vrot.lane.b32.xlu0 %v451, 80
        %v1665 = vpop.permute.xlu0 %1664
        %1666 = vrot.lane.b32.xlu0 %v452, 80
        %v1667 = vpop.permute.xlu0 %1666
        %1668 = vrot.lane.b32.xlu0 %v453, 80
        %v1669 = vpop.permute.xlu0 %1668
        %1670 = vrot.lane.b32.xlu0 %v454, 80
        %v1671 = vpop.permute.xlu0 %1670
        %1672 = vrot.lane.b32.xlu0 %v455, 80
        %v1673 = vpop.permute.xlu0 %1672
        %1674 = vrot.lane.b32.xlu0 %v456, 80
        %v1675 = vpop.permute.xlu0 %1674
        %1676 = vrot.lane.b32.xlu0 %v457, 80
        %v1677 = vpop.permute.xlu0 %1676
        %1678 = vrot.lane.b32.xlu0 %v458, 80
        %v1679 = vpop.permute.xlu0 %1678
        %1680 = vrot.lane.b32.xlu0 %v459, 80
        %v1681 = vpop.permute.xlu0 %1680
        %1682 = vrot.lane.b32.xlu0 %v460, 80
        %v1683 = vpop.permute.xlu0 %1682
        %1684 = vrot.lane.b32.xlu0 %v461, 80
        %v1685 = vpop.permute.xlu0 %1684
        %1686 = vrot.lane.b32.xlu0 %v462, 80
        %v1687 = vpop.permute.xlu0 %1686
        %1688 = vrot.lane.b32.xlu0 %v463, 80
        %v1689 = vpop.permute.xlu0 %1688
        %1690 = vrot.lane.b32.xlu0 %v464, 80
        %v1691 = vpop.permute.xlu0 %1690
        %1692 = vrot.lane.b32.xlu0 %v465, 80
        %v1693 = vpop.permute.xlu0 %1692
        %1694 = vrot.lane.b32.xlu0 %v466, 80
        %v1695 = vpop.permute.xlu0 %1694
        %1696 = vrot.lane.b32.xlu0 %v467, 80
        %v1697 = vpop.permute.xlu0 %1696
        %1698 = vrot.lane.b32.xlu0 %v468, 80
        %v1699 = vpop.permute.xlu0 %1698
        %1700 = vrot.lane.b32.xlu0 %v469, 80
        %v1701 = vpop.permute.xlu0 %1700
        %1702 = vrot.lane.b32.xlu0 %v470, 80
        %v1703 = vpop.permute.xlu0 %1702
        %1704 = vrot.lane.b32.xlu0 %v471, 80
        %v1705 = vpop.permute.xlu0 %1704
        %1706 = vrot.lane.b32.xlu0 %v472, 80
        %v1707 = vpop.permute.xlu0 %1706
        %1708 = vrot.lane.b32.xlu0 %v473, 80
        %v1709 = vpop.permute.xlu0 %1708
        %1710 = vrot.lane.b32.xlu0 %v474, 80
        %v1711 = vpop.permute.xlu0 %1710
        %1712 = vrot.lane.b32.xlu0 %v475, 80
        %v1713 = vpop.permute.xlu0 %1712
        %1714 = vrot.lane.b32.xlu0 %v476, 80
        %v1715 = vpop.permute.xlu0 %1714
        %1716 = vrot.lane.b32.xlu0 %v477, 80
        %v1717 = vpop.permute.xlu0 %1716
        %1718 = vrot.lane.b32.xlu0 %v478, 80
        %v1719 = vpop.permute.xlu0 %1718
        %1720 = vrot.lane.b32.xlu0 %v479, 80
        %v1721 = vpop.permute.xlu0 %1720
        %1722 = vrot.lane.b32.xlu0 %v480, 80
        %v1723 = vpop.permute.xlu0 %1722
        %1724 = vrot.lane.b32.xlu0 %v481, 80
        %v1725 = vpop.permute.xlu0 %1724
        %v1758 = vmul.f32 %v1630, %v1663
        %v1759 = vmul.f32 %v1631, %v1665
        %v1760 = vmul.f32 %v1632, %v1667
        %v1761 = vmul.f32 %v1633, %v1669
        %v1762 = vmul.f32 %v1634, %v1671
        %v1763 = vmul.f32 %v1635, %v1673
        %v1764 = vmul.f32 %v1636, %v1675
        %v1765 = vmul.f32 %v1637, %v1677
        %v1766 = vmul.f32 %v1638, %v1679
        %v1767 = vmul.f32 %v1639, %v1681
        %v1768 = vmul.f32 %v1640, %v1683
        %v1769 = vmul.f32 %v1641, %v1685
        %v1770 = vmul.f32 %v1642, %v1687
        %v1771 = vmul.f32 %v1643, %v1689
        %v1772 = vmul.f32 %v1644, %v1691
        %v1773 = vmul.f32 %v1645, %v1693
        %v1774 = vmul.f32 %v1646, %v1695
        %v1775 = vmul.f32 %v1647, %v1697
        %v1776 = vmul.f32 %v1648, %v1699
        %v1777 = vmul.f32 %v1649, %v1701
        %v1778 = vmul.f32 %v1650, %v1703
        %v1779 = vmul.f32 %v1651, %v1705
        %v1780 = vmul.f32 %v1652, %v1707
        %v1781 = vmul.f32 %v1653, %v1709
        %v1782 = vmul.f32 %v1654, %v1711
        %v1783 = vmul.f32 %v1655, %v1713
        %v1784 = vmul.f32 %v1656, %v1715
        %v1785 = vmul.f32 %v1657, %v1717
        %v1786 = vmul.f32 %v1658, %v1719
        %v1787 = vmul.f32 %v1659, %v1721
        %v1788 = vmul.f32 %v1660, %v1723
        %v1789 = vmul.f32 %v1661, %v1725
        %v1790 = vpack.c.bf16 %v1759, %v1758
        %v1791 = vpack.c.bf16 %v1761, %v1760
        %v1792 = vpack.c.bf16 %v1763, %v1762
        %v1793 = vpack.c.bf16 %v1765, %v1764
        %v1794 = vpack.c.bf16 %v1767, %v1766
        %v1795 = vpack.c.bf16 %v1769, %v1768
        %v1796 = vpack.c.bf16 %v1771, %v1770
        %v1797 = vpack.c.bf16 %v1773, %v1772
        %v1798 = vpack.c.bf16 %v1775, %v1774
        %v1799 = vpack.c.bf16 %v1777, %v1776
        %v1800 = vpack.c.bf16 %v1779, %v1778
        %v1801 = vpack.c.bf16 %v1781, %v1780
        %v1802 = vpack.c.bf16 %v1783, %v1782
        %v1803 = vpack.c.bf16 %v1785, %v1784
        %v1804 = vpack.c.bf16 %v1787, %v1786
        %v1805 = vpack.c.bf16 %v1789, %v1788
        %v1806 = vld [vmem:[%s8] sm:$0xf]
        %v1807 = vld [vmem:[%s8 + $0x4] sm:$0xf]
        %v1810 = vunpack.c.l.b16 %v1806
        %v1811 = vunpack.c.l.b16 %v1807
        %v1812 = vpack.c.b16 %v1811, %v1810
        %v1815 = vsel %vm780, %v1790, 0
        %v1818 = vsel %vm780, %v1791, 0
        %v1821 = vsel %vm780, %v1792, 0
        %v1824 = vsel %vm780, %v1793, 0
        %v1827 = vsel %vm780, %v1794, 0
        %v1830 = vsel %vm780, %v1795, 0
        %v1833 = vsel %vm780, %v1796, 0
        %v1836 = vsel %vm780, %v1797, 0
        %v1839 = vsel %vm780, %v1798, 0
        %v1842 = vsel %vm780, %v1799, 0
        %v1845 = vsel %vm780, %v1800, 0
        %v1848 = vsel %vm780, %v1801, 0
        %v1851 = vsel %vm780, %v1802, 0
        %v1854 = vsel %vm780, %v1803, 0
        %v1857 = vsel %vm780, %v1804, 0
        %v1860 = vsel %vm780, %v1805, 0
        %1862 = vmatprep.subr.bf16.mxu0 0
        %1863 = vmatpush1.bf16.msra.mxu0 0
        %1864 = vmatprep.subr.bf16.mxu0 0
        %1865 = vmatpush1.bf16.msra.mxu0 0
        %1866 = vmatprep.subr.bf16.mxu0 0
        %1867 = vmatpush1.bf16.msra.mxu0 0
        %1868 = vmatprep.subr.bf16.mxu0 0
        %1869 = vmatpush1.bf16.msra.mxu0 0
        %1870 = vmatprep.subr.bf16.mxu0 0
        %1871 = vmatpush1.bf16.msra.mxu0 0
        %1872 = vmatprep.subr.bf16.mxu0 0
        %1873 = vmatpush1.bf16.msra.mxu0 0
        %1874 = vmatprep.subr.bf16.mxu0 0
        %1875 = vmatpush1.bf16.msra.mxu0 0
        %1876 = vmatprep.subr.bf16.mxu0 0
        %1877 = vmatpush1.bf16.msra.mxu0 %v1812
        %1878 = vmatprep.subr.bf16.mxu0 0
        %1879 = vmatpush2.bf16.msra.mxu0 0
        %1880 = vmatprep.subr.bf16.mxu0 0
        %1881 = vmatpush2.bf16.msra.mxu0 0
        %1882 = vmatprep.subr.bf16.mxu0 0
        %1883 = vmatpush2.bf16.msra.mxu0 0
        %1884 = vmatprep.subr.bf16.mxu0 0
        %1885 = vmatpush2.bf16.msra.mxu0 0
        %1886 = vmatprep.subr.bf16.mxu0 0
        %1887 = vmatpush2.bf16.msra.mxu0 0
        %1888 = vmatprep.subr.bf16.mxu0 0
        %1889 = vmatpush2.bf16.msra.mxu0 0
        %1890 = vmatprep.subr.bf16.mxu0 0
        %1891 = vmatpush2.bf16.msra.mxu0 0
        %1892 = vmatprep.subr.bf16.mxu0 0
        %1893 = vmatpush2.bf16.msra.mxu0 0
        %1894 = vmatprep.mubr.bf16.mxu0 0
        %1895 = vmatmul.mubr.bf16.gmra.mxu0 %v1815
        %v1896 = vpop.f32.mrf.mxu0
        %v1897 = vadd.f32 0.0, %v1896
        %v1898 = vpop.f32.mrf.mxu0
        %v1899 = vpop.f32.mrf.mxu0
        %v1900 = vadd.f32 0.0, %v1899
        %v1901 = vpop.f32.mrf.mxu0
        %1902 = vmatprep.mubr.bf16.mxu0 0
        %1903 = vmatmul.mubr.bf16.gmra.mxu0 %v1818
        %v1904 = vpop.f32.mrf.mxu0
        %v1905 = vadd.f32 0.0, %v1904
        %v1906 = vpop.f32.mrf.mxu0
        %v1907 = vpop.f32.mrf.mxu0
        %v1908 = vadd.f32 0.0, %v1907
        %v1909 = vpop.f32.mrf.mxu0
        %1910 = vmatprep.mubr.bf16.mxu0 0
        %1911 = vmatmul.mubr.bf16.gmra.mxu0 %v1821
        %v1912 = vpop.f32.mrf.mxu0
        %v1913 = vadd.f32 0.0, %v1912
        %v1914 = vpop.f32.mrf.mxu0
        %v1915 = vpop.f32.mrf.mxu0
        %v1916 = vadd.f32 0.0, %v1915
        %v1917 = vpop.f32.mrf.mxu0
        %1918 = vmatprep.mubr.bf16.mxu0 0
        %1919 = vmatmul.mubr.bf16.gmra.mxu0 %v1824
        %v1920 = vpop.f32.mrf.mxu0
        %v1921 = vadd.f32 0.0, %v1920
        %v1922 = vpop.f32.mrf.mxu0
        %v1923 = vpop.f32.mrf.mxu0
        %v1924 = vadd.f32 0.0, %v1923
        %v1925 = vpop.f32.mrf.mxu0
        %1926 = vmatprep.mubr.bf16.mxu0 0
        %1927 = vmatmul.mubr.bf16.gmra.mxu0 %v1827
        %v1928 = vpop.f32.mrf.mxu0
        %v1929 = vadd.f32 0.0, %v1928
        %v1930 = vpop.f32.mrf.mxu0
        %v1931 = vpop.f32.mrf.mxu0
        %v1932 = vadd.f32 0.0, %v1931
        %v1933 = vpop.f32.mrf.mxu0
        %1934 = vmatprep.mubr.bf16.mxu0 0
        %1935 = vmatmul.mubr.bf16.gmra.mxu0 %v1830
        %v1936 = vpop.f32.mrf.mxu0
        %v1937 = vadd.f32 0.0, %v1936
        %v1938 = vpop.f32.mrf.mxu0
        %v1939 = vpop.f32.mrf.mxu0
        %v1940 = vadd.f32 0.0, %v1939
        %v1941 = vpop.f32.mrf.mxu0
        %1942 = vmatprep.mubr.bf16.mxu0 0
        %1943 = vmatmul.mubr.bf16.gmra.mxu0 %v1833
        %v1944 = vpop.f32.mrf.mxu0
        %v1945 = vadd.f32 0.0, %v1944
        %v1946 = vpop.f32.mrf.mxu0
        %v1947 = vpop.f32.mrf.mxu0
        %v1948 = vadd.f32 0.0, %v1947
        %v1949 = vpop.f32.mrf.mxu0
        %1950 = vmatprep.mubr.bf16.mxu0 0
        %1951 = vmatmul.mubr.bf16.gmra.mxu0 %v1836
        %v1952 = vpop.f32.mrf.mxu0
        %v1953 = vadd.f32 0.0, %v1952
        %v1954 = vpop.f32.mrf.mxu0
        %v1955 = vpop.f32.mrf.mxu0
        %v1956 = vadd.f32 0.0, %v1955
        %v1957 = vpop.f32.mrf.mxu0
        %1958 = vmatprep.mubr.bf16.mxu0 0
        %1959 = vmatmul.mubr.bf16.gmra.mxu0 %v1839
        %v1960 = vpop.f32.mrf.mxu0
        %v1961 = vadd.f32 0.0, %v1960
        %v1962 = vpop.f32.mrf.mxu0
        %v1963 = vpop.f32.mrf.mxu0
        %v1964 = vadd.f32 0.0, %v1963
        %v1965 = vpop.f32.mrf.mxu0
        %1966 = vmatprep.mubr.bf16.mxu0 0
        %1967 = vmatmul.mubr.bf16.gmra.mxu0 %v1842
        %v1968 = vpop.f32.mrf.mxu0
        %v1969 = vadd.f32 0.0, %v1968
        %v1970 = vpop.f32.mrf.mxu0
        %v1971 = vpop.f32.mrf.mxu0
        %v1972 = vadd.f32 0.0, %v1971
        %v1973 = vpop.f32.mrf.mxu0
        %1974 = vmatprep.mubr.bf16.mxu0 0
        %1975 = vmatmul.mubr.bf16.gmra.mxu0 %v1845
        %v1976 = vpop.f32.mrf.mxu0
        %v1977 = vadd.f32 0.0, %v1976
        %v1978 = vpop.f32.mrf.mxu0
        %v1979 = vpop.f32.mrf.mxu0
        %v1980 = vadd.f32 0.0, %v1979
        %v1981 = vpop.f32.mrf.mxu0
        %1982 = vmatprep.mubr.bf16.mxu0 0
        %1983 = vmatmul.mubr.bf16.gmra.mxu0 %v1848
        %v1984 = vpop.f32.mrf.mxu0
        %v1985 = vadd.f32 0.0, %v1984
        %v1986 = vpop.f32.mrf.mxu0
        %v1987 = vpop.f32.mrf.mxu0
        %v1988 = vadd.f32 0.0, %v1987
        %v1989 = vpop.f32.mrf.mxu0
        %1990 = vmatprep.mubr.bf16.mxu0 0
        %1991 = vmatmul.mubr.bf16.gmra.mxu0 %v1851
        %v1992 = vpop.f32.mrf.mxu0
        %v1993 = vadd.f32 0.0, %v1992
        %v1994 = vpop.f32.mrf.mxu0
        %v1995 = vpop.f32.mrf.mxu0
        %v1996 = vadd.f32 0.0, %v1995
        %v1997 = vpop.f32.mrf.mxu0
        %1998 = vmatprep.mubr.bf16.mxu0 0
        %1999 = vmatmul.mubr.bf16.gmra.mxu0 %v1854
        %v2000 = vpop.f32.mrf.mxu0
        %v2001 = vadd.f32 0.0, %v2000
        %v2002 = vpop.f32.mrf.mxu0
        %v2003 = vpop.f32.mrf.mxu0
        %v2004 = vadd.f32 0.0, %v2003
        %v2005 = vpop.f32.mrf.mxu0
        %2006 = vmatprep.mubr.bf16.mxu0 0
        %2007 = vmatmul.mubr.bf16.gmra.mxu0 %v1857
        %v2008 = vpop.f32.mrf.mxu0
        %v2009 = vadd.f32 0.0, %v2008
        %v2010 = vpop.f32.mrf.mxu0
        %v2011 = vpop.f32.mrf.mxu0
        %v2012 = vadd.f32 0.0, %v2011
        %v2013 = vpop.f32.mrf.mxu0
        %2014 = vmatprep.mubr.bf16.mxu0 0
        %2015 = vmatmul.mubr.bf16.gmra.mxu0 %v1860
        %v2016 = vpop.f32.mrf.mxu0
        %v2017 = vadd.f32 0.0, %v2016
        %v2018 = vpop.f32.mrf.mxu0
        %v2019 = vpop.f32.mrf.mxu0
        %v2020 = vadd.f32 0.0, %v2019
        %v2021 = vpop.f32.mrf.mxu0
        %2022 = vdwg.mxu0
        %v2023 = vadd.f32 %v1598, %v1897
        %v2024 = vadd.f32 %v1599, %v1900
        %v2025 = vadd.f32 %v1600, %v1905
        %v2026 = vadd.f32 %v1601, %v1908
        %v2027 = vadd.f32 %v1602, %v1913
        %v2028 = vadd.f32 %v1603, %v1916
        %v2029 = vadd.f32 %v1604, %v1921
        %v2030 = vadd.f32 %v1605, %v1924
        %v2031 = vadd.f32 %v1606, %v1929
        %v2032 = vadd.f32 %v1607, %v1932
        %v2033 = vadd.f32 %v1608, %v1937
        %v2034 = vadd.f32 %v1609, %v1940
        %v2035 = vadd.f32 %v1610, %v1945
        %v2036 = vadd.f32 %v1611, %v1948
        %v2037 = vadd.f32 %v1612, %v1953
        %v2038 = vadd.f32 %v1613, %v1956
        %v2039 = vadd.f32 %v1614, %v1961
        %v2040 = vadd.f32 %v1615, %v1964
        %v2041 = vadd.f32 %v1616, %v1969
        %v2042 = vadd.f32 %v1617, %v1972
        %v2043 = vadd.f32 %v1618, %v1977
        %v2044 = vadd.f32 %v1619, %v1980
        %v2045 = vadd.f32 %v1620, %v1985
        %v2046 = vadd.f32 %v1621, %v1988
        %v2047 = vadd.f32 %v1622, %v1993
        %v2048 = vadd.f32 %v1623, %v1996
        %v2049 = vadd.f32 %v1624, %v2001
        %v2050 = vadd.f32 %v1625, %v2004
        %v2051 = vadd.f32 %v1626, %v2009
        %v2052 = vadd.f32 %v1627, %v2012
        %v2053 = vadd.f32 %v1628, %v2017
        %v2054 = vadd.f32 %v1629, %v2020
        %v2055 = vld [vmem:[%s9] sm:$0x1]
        %v2057 = vlaneseq
        %v2058 = vshrl.u32 %v2057, 7
        %v2059 = vsub.s32 0, %v2058
        %v2060 = vrot.slane %v2055, %v2059
        %v2062 = vadd.f32 %v2023, %v2060
        %v2063 = vadd.f32 %v2024, %v2060
        %v2064 = vadd.f32 %v2025, %v2060
        %v2065 = vadd.f32 %v2026, %v2060
        %v2066 = vadd.f32 %v2027, %v2060
        %v2067 = vadd.f32 %v2028, %v2060
        %v2068 = vadd.f32 %v2029, %v2060
        %v2069 = vadd.f32 %v2030, %v2060
        %v2070 = vadd.f32 %v2031, %v2060
        %v2071 = vadd.f32 %v2032, %v2060
        %v2072 = vadd.f32 %v2033, %v2060
        %v2073 = vadd.f32 %v2034, %v2060
        %v2074 = vadd.f32 %v2035, %v2060
        %v2075 = vadd.f32 %v2036, %v2060
        %v2076 = vadd.f32 %v2037, %v2060
        %v2077 = vadd.f32 %v2038, %v2060
        %v2078 = vadd.f32 %v2039, %v2060
        %v2079 = vadd.f32 %v2040, %v2060
        %v2080 = vadd.f32 %v2041, %v2060
        %v2081 = vadd.f32 %v2042, %v2060
        %v2082 = vadd.f32 %v2043, %v2060
        %v2083 = vadd.f32 %v2044, %v2060
        %v2084 = vadd.f32 %v2045, %v2060
        %v2085 = vadd.f32 %v2046, %v2060
        %v2086 = vadd.f32 %v2047, %v2060
        %v2087 = vadd.f32 %v2048, %v2060
        %v2088 = vadd.f32 %v2049, %v2060
        %v2089 = vadd.f32 %v2050, %v2060
        %v2090 = vadd.f32 %v2051, %v2060
        %v2091 = vadd.f32 %v2052, %v2060
        %v2092 = vadd.f32 %v2053, %v2060
        %v2093 = vadd.f32 %v2054, %v2060
        %vm2094 = vcmask 523264
        %2095 = vst.msk [vmem:[%s417] sm:$0xff] %vm2094, %v2062
        %2096 = vst.msk [vmem:[%s417 + $0x8] sm:$0xff] %vm2094, %v2063
        %2097 = vst.msk [vmem:[%s417 + $0x10] sm:$0xff] %vm2094, %v2064
        %2098 = vst.msk [vmem:[%s417 + $0x18] sm:$0xff] %vm2094, %v2065
        %2099 = vst.msk [vmem:[%s417 + $0x20] sm:$0xff] %vm2094, %v2066
        %2100 = vst.msk [vmem:[%s417 + $0x28] sm:$0xff] %vm2094, %v2067
        %2101 = vst.msk [vmem:[%s417 + $0x30] sm:$0xff] %vm2094, %v2068
        %2102 = vst.msk [vmem:[%s417 + $0x38] sm:$0xff] %vm2094, %v2069
        %2103 = vst.msk [vmem:[%s417 + $0x40] sm:$0xff] %vm2094, %v2070
        %2104 = vst.msk [vmem:[%s417 + $0x48] sm:$0xff] %vm2094, %v2071
        %2105 = vst.msk [vmem:[%s417 + $0x50] sm:$0xff] %vm2094, %v2072
        %2106 = vst.msk [vmem:[%s417 + $0x58] sm:$0xff] %vm2094, %v2073
        %2107 = vst.msk [vmem:[%s417 + $0x60] sm:$0xff] %vm2094, %v2074
        %2108 = vst.msk [vmem:[%s417 + $0x68] sm:$0xff] %vm2094, %v2075
        %2109 = vst.msk [vmem:[%s417 + $0x70] sm:$0xff] %vm2094, %v2076
        %2110 = vst.msk [vmem:[%s417 + $0x78] sm:$0xff] %vm2094, %v2077
        %2111 = vst.msk [vmem:[%s417 + $0x80] sm:$0xff] %vm2094, %v2078
        %2112 = vst.msk [vmem:[%s417 + $0x88] sm:$0xff] %vm2094, %v2079
        %2113 = vst.msk [vmem:[%s417 + $0x90] sm:$0xff] %vm2094, %v2080
        %2114 = vst.msk [vmem:[%s417 + $0x98] sm:$0xff] %vm2094, %v2081
        %2115 = vst.msk [vmem:[%s417 + $0xa0] sm:$0xff] %vm2094, %v2082
        %2116 = vst.msk [vmem:[%s417 + $0xa8] sm:$0xff] %vm2094, %v2083
        %2117 = vst.msk [vmem:[%s417 + $0xb0] sm:$0xff] %vm2094, %v2084
        %2118 = vst.msk [vmem:[%s417 + $0xb8] sm:$0xff] %vm2094, %v2085
        %2119 = vst.msk [vmem:[%s417 + $0xc0] sm:$0xff] %vm2094, %v2086
        %2120 = vst.msk [vmem:[%s417 + $0xc8] sm:$0xff] %vm2094, %v2087
        %2121 = vst.msk [vmem:[%s417 + $0xd0] sm:$0xff] %vm2094, %v2088
        %2122 = vst.msk [vmem:[%s417 + $0xd8] sm:$0xff] %vm2094, %v2089
        %2123 = vst.msk [vmem:[%s417 + $0xe0] sm:$0xff] %vm2094, %v2090
        %2124 = vst.msk [vmem:[%s417 + $0xe8] sm:$0xff] %vm2094, %v2091
        %2125 = vst.msk [vmem:[%s417 + $0xf0] sm:$0xff] %vm2094, %v2092
        %2126 = vst.msk [vmem:[%s417 + $0xf8] sm:$0xff] %vm2094, %v2093
        %s2127 = sand.u32 %s267, 1
        %s2128 = scalar_lea.sflag [#allocation3], %s2127
        %s2129 = sand.u32 %s267, 1
        %s2130 = smul.addr %s2129, 256
        %s2131 = scalar_lea.vmem [#allocation2], %s2130
        // Predicated region
        $region61: #{_lambda_.9} parent=59 // pred_check
          %p2132 = pneg %p277
        $region62: #{_lambda_.9} parent=59 // pred_check_branch
          %2134 = sbr.rel (%p2132) target = $region64
        $region63: #{_lambda_.9} parent=59 // pred_region
          %s2135 = smul.u32 32, %s24
          %s2137 = ssub.s32 4096, 4096
          %2138 = vsyncadd %s2128, %s2137
          %s2139 = smul.addr %s2135, 128
          %s2140 = scalar_lea.hbm %s10, %s2139
          %s2141 = sshll.u32 %s2131, 4
          %s2142 = int_to_ptr.vmem [resolvable:$true] %s2141
          %2147 = dma.vmem_to_hbm [thread:$0]  %s2142, 4096, %s2140, %s2128, 128, 128, 8
        $region64: #{_lambda_.9} parent=59 // pred_fallthru
          _
      $region60: #{_lambda_.9} parent=5 // pred_fallthru
        _
      %p2148 = scmp.le.s32.totalorder 2, %s19
      // Predicated region
      $region65: #{_lambda_.9} parent=5 // pred_check
        %p2149 = pneg %p2148
      $region66: #{_lambda_.9} parent=5 // pred_check_branch
        %2151 = sbr.rel (%p2149) target = $region68
      $region67: #{_lambda_.9} parent=5 // pred_region
        %s2152 = ssub.s32 %s19, 2
        // Predicated region
        $region69: #{_lambda_.9} parent=67 // pred_check
          %p2153 = pneg %p283
        $region70: #{_lambda_.9} parent=67 // pred_check_branch
          %2155 = sbr.rel (%p2153) target = $region72
        $region71: #{_lambda_.9} parent=67 // pred_region
          %s2156 = sand.u32 %s268, 1
          %s2157 = scalar_lea.sflag [#allocation3], %s2156
          %s2158 = sand.u32 %s268, 1
          %s2159 = smul.addr %s2158, 256
          %s2160 = scalar_lea.vmem [#allocation2], %s2159
          %2161 = dma.done %s2157, 4096
        $region72: #{_lambda_.9} parent=67 // pred_fallthru
          _
      $region68: #{_lambda_.9} parent=5 // pred_fallthru
        _
    $region6: #{_lambda_.9} parent=1 // loop_footer
      %s23 = sadd.s32 1, %s19
    $region7: #{_lambda_.9} parent=1 // loop_footer_branch
      %18 = sbr.rel target = $region3
    $region8: #{_lambda_.9} parent=1 // loop_exit
      _
    %2162 = vsyncpa [#allocation3], 1
    %s2163 = scalar_lea.sflag [#allocation3], 1
    %2164 = vsyncpa %s2163, 1

</llo_original>
